<compile_context>
chip_gen: v7x
topology: tpu7x:2x2x1
jax: 0.10.0
libtpu: 0.0.40
codegen_flags: <defaults>
</compile_context>

<pallas_src>
import functools

import numpy as np
import jax
import jax.numpy as jnp
from jax.experimental import pallas as pl
from jax.experimental.pallas import tpu as pltpu

_NEG = -1e30                       # mask fill / running-max init
_VMEM_LIMIT = 48 * 1024 * 1024     # fits v7x (64 MiB/TC) with headroom


def _pick_tile(n, targets, prefer_two=False):
    """Largest target tile that divides n (optionally leaving >= 2 tiles)."""
    if prefer_two:
        for t in targets:
            if 2 * t <= n and n % t == 0:
                return t
    for t in targets:
        if t <= n and n % t == 0:
            return t
    # TODO(synk): pad N to a multiple of 128 in the caller for large ragged
    #             graphs; the full-N fallback only works while a full row of
    #             tiles still fits VMEM.
    return n


def _eup_supports_bf16():
    # v6e / v7x EUP accepts packed bf16 (~2x exp/tanh throughput); v5e does not.
    try:
        kind = jax.devices()[0].device_kind.lower()
    except Exception:
        return False
    return ("v6" in kind) or ("v7" in kind)


# --------------------------------------------------------------------------
# Kernel 1: fused node-wise linear
#   Z = features @ W_big + b_big
#   columns of Z: [ H (head*hd) | a (1) | s_0..s_{head-1} | c (1) | d_0.. ]
# --------------------------------------------------------------------------
def _fused_linear_kernel(x_ref, w_ref, b_ref, z_ref):
    z_ref[...] = (
        jnp.dot(x_ref[...], w_ref[...], preferred_element_type=jnp.float32)
        + b_ref[...]
    )


def fused_linear(x, w, b):
    n, f = x.shape
    k = w.shape[1]
    tn = _pick_tile(n, (1024, 512, 256, 128))
    return pl.pallas_call(
        _fused_linear_kernel,
        out_shape=jax.ShapeDtypeStruct((n, k), jnp.float32),
        grid=(n // tn,),
        in_specs=[
            pl.BlockSpec((tn, f), lambda i: (i, 0)),
            pl.BlockSpec((f, k), lambda i: (0, 0)),
            pl.BlockSpec((1, k), lambda i: (0, 0)),
        ],
        out_specs=pl.BlockSpec((tn, k), lambda i: (i, 0)),
        compiler_params=pltpu.CompilerParams(
            dimension_semantics=("parallel",),
            vmem_limit_bytes=_VMEM_LIMIT,
        ),
    )(x, w, b)


# --------------------------------------------------------------------------
# Kernel 2: Label_Propagation
#   y_hat = normalize(bi_adj * mask, p=1, dim=1) @ labels
#   tiled over (dst, src); the row-sum denominator is folded into the matmul
#   via a trailing ones column on the labels RHS; normalized on last src tile.
# --------------------------------------------------------------------------
def _label_prop_kernel(occ_ref, bi_ref, mask_ref, lab_ref, y_ref):
    i = pl.program_id(0)
    j = pl.program_id(1)
    nj = pl.num_programs(1)

    @pl.when(j == 0)
    def _():
        y_ref[...] = jnp.zeros_like(y_ref)

    @pl.when(occ_ref[i * nj + j] != 0)
    def _():
        # int8 {0,1} tiles -> the bf16 product is exact; abs() dropped (T >= 0).
        t = (bi_ref[...].astype(jnp.float32)
             * mask_ref[...].astype(jnp.float32)).astype(jnp.bfloat16)
        y_ref[...] += jnp.dot(t, lab_ref[...], preferred_element_type=jnp.float32)

    @pl.when(j == nj - 1)
    def _():
        y = y_ref[...]
        inv = pl.reciprocal(jnp.maximum(y[:, -1:], 1e-12), approx=True)
        y_ref[...] = y * inv


def label_propagation(bi_i8, mask_i8, labels_aug_bf16):
    n = bi_i8.shape[0]
    c1 = labels_aug_bf16.shape[1]              # num classes + ones column
    td = _pick_tile(n, (512, 256, 128), prefer_two=True)
    ts = _pick_tile(n, (1024, 512, 256, 128))
    ndt, nst = n // td, n // ts
    occ = jnp.logical_and(bi_i8 != 0, mask_i8 != 0)
    occ = occ.reshape(ndt, td, nst, ts).any(axis=(1, 3))
    occ = occ.reshape(-1).astype(jnp.int32)
    return pl.pallas_call(
        _label_prop_kernel,
        out_shape=jax.ShapeDtypeStruct((n, c1), jnp.float32),
        grid_spec=pltpu.PrefetchScalarGridSpec(
            num_scalar_prefetch=1,
            grid=(ndt, nst),
            in_specs=[
                pl.BlockSpec((td, ts), lambda i, j, o: (i, j)),
                pl.BlockSpec((td, ts), lambda i, j, o: (i, j)),
                pl.BlockSpec((ts, c1), lambda i, j, o: (j, 0)),
            ],
            out_specs=pl.BlockSpec((td, c1), lambda i, j, o: (i, 0)),
        ),
        compiler_params=pltpu.CompilerParams(
            dimension_semantics=("parallel", "arbitrary"),
            vmem_limit_bytes=_VMEM_LIMIT,
        ),
    )(occ, bi_i8, mask_i8, labels_aug_bf16)


# --------------------------------------------------------------------------
# Kernel 3: signed-attention aggregation (flash-style online softmax)
#   adj       : (TD, TS) int8   adjacency tile, adj[dst, src]
#   src_scal  : (1+head, TS)    row 0 = a[src], rows 1.. = s_h[src]
#   dst_scal  : (TD, 1+head)    col 0 = c[dst], cols 1.. = d_h[dst] (+biases)
#   feat      : (TS, head*hd)   bf16 projected node features (src side)
#   out       : (TD, head*hd)   f32 resident accumulator across src tiles
#   m/l       : (TD, head)      f32 running max / denominator per head
# --------------------------------------------------------------------------
def _attn_kernel(occ_ref, adj_ref, srcscal_ref, dstscal_ref, feat_ref,
                 out_ref, m_ref, l_ref, *, head, hd, eup_bf16):
    i = pl.program_id(0)
    j = pl.program_id(1)
    nj = pl.num_programs(1)
    td = out_ref.shape[0]

    @pl.when(j == 0)
    def _():
        out_ref[...] = jnp.zeros_like(out_ref)
        m_ref[...] = jnp.full(m_ref.shape, _NEG, m_ref.dtype)
        l_ref[...] = jnp.zeros_like(l_ref)

    @pl.when(occ_ref[i * nj + j] != 0)
    def _():
        edge = adj_ref[...].astype(jnp.float32) > 0.0        # int8 {0,1} tile
        a = srcscal_ref[0:1, :]                              # (1, TS)
        c = dstscal_ref[:, 0:1]                              # (TD, 1)
        ac = a + c                                           # (TD, TS)
        if eup_bf16:                                         # EUP bf16 (v6e/v7x)
            sign = jnp.tanh(ac.astype(jnp.bfloat16))
        else:
            sign = jnp.tanh(ac)

        m_prev = m_ref[...]                                  # (TD, head)
        l_prev = l_ref[...]
        m_news, l_news, corrs, dots = [], [], [], []
        for h in range(head):
            s = srcscal_ref[1 + h:2 + h, :]                  # (1, TS)
            d = dstscal_ref[:, 1 + h:2 + h]                  # (TD, 1)
            logits = sign * s + d                            # f32
            logits = jnp.maximum(logits, 0.01 * logits)      # LeakyReLU(0.01)
            logits = jnp.where(edge, logits, _NEG)

            m_h = m_prev[:, h:h + 1]
            m_new = jnp.maximum(m_h, jnp.max(logits, axis=1, keepdims=True))
            corr = jnp.exp(m_h - m_new)                      # f32 bookkeeping
            x = logits - m_new
            if eup_bf16:
                p = jnp.exp(x.astype(jnp.bfloat16)).astype(jnp.float32)
            else:
                p = jnp.exp(x)                               # masked edges -> 0
            l_news.append(corr * l_prev[:, h:h + 1]
                          + jnp.sum(p, axis=1, keepdims=True))
            m_news.append(m_new)
            corrs.append(corr)
            weighted = (p * sign).astype(jnp.bfloat16)       # (TD, TS)
            dots.append(jnp.dot(weighted, feat_ref[:, h * hd:(h + 1) * hd],
                                preferred_element_type=jnp.float32))

        m_ref[...] = jnp.concatenate(m_news, axis=1)
        l_ref[...] = jnp.concatenate(l_news, axis=1)
        # One lane-dense full-width update instead of 4 partial 32-lane stores.
        corr_full = jnp.concatenate(
            [jnp.broadcast_to(corrs[h], (td, hd)) for h in range(head)], axis=1)
        out_ref[...] = corr_full * out_ref[...] + jnp.concatenate(dots, axis=1)

    @pl.when(j == nj - 1)
    def _():
        inv = pl.reciprocal(jnp.maximum(l_ref[...], 1e-30), approx=True)
        inv_full = jnp.concatenate(
            [jnp.broadcast_to(inv[:, h:h + 1], (td, hd)) for h in range(head)],
            axis=1)
        out_ref[...] = out_ref[...] * inv_full


def attention_aggregate(adj_i8, src_scal, dst_scal, feat_bf16, head, hd,
                        eup_bf16):
    n = adj_i8.shape[0]
    hh = head * hd
    td = _pick_tile(n, (512, 384, 256, 128), prefer_two=True)
    ts = _pick_tile(n, (1024, 768, 512, 256, 128))   # K multiple of 256 if possible
    ndt, nst = n // td, n // ts
    occ = (adj_i8 != 0).reshape(ndt, td, nst, ts).any(axis=(1, 3))
    occ = occ.reshape(-1).astype(jnp.int32)
    kernel = functools.partial(_attn_kernel, head=head, hd=hd,
                               eup_bf16=eup_bf16)
    return pl.pallas_call(
        kernel,
        out_shape=jax.ShapeDtypeStruct((n, hh), jnp.float32),
        grid_spec=pltpu.PrefetchScalarGridSpec(
            num_scalar_prefetch=1,
            grid=(ndt, nst),
            in_specs=[
                pl.BlockSpec((td, ts), lambda i, j, o: (i, j)),
                pl.BlockSpec((1 + head, ts), lambda i, j, o: (0, j)),
                pl.BlockSpec((td, 1 + head), lambda i, j, o: (i, 0)),
                pl.BlockSpec((ts, hh), lambda i, j, o: (j, 0)),
            ],
            out_specs=pl.BlockSpec((td, hh), lambda i, j, o: (i, 0)),
            scratch_shapes=[
                pltpu.VMEM((td, head), jnp.float32),   # running max per head
                pltpu.VMEM((td, head), jnp.float32),   # running denom per head
            ],
        ),
        compiler_params=pltpu.CompilerParams(
            dimension_semantics=("parallel", "arbitrary"),
            vmem_limit_bytes=_VMEM_LIMIT,
        ),
    )(occ, adj_i8, src_scal, dst_scal, feat_bf16)


# --------------------------------------------------------------------------
# Aggregation.forward (Pallas-backed)
# --------------------------------------------------------------------------
@functools.partial(jax.jit, static_argnames=("head", "hd", "eup_bf16"))
def aggregation_forward(params, features, labels, si_adj, bi_adj, *, head, hd,
                        eup_bf16=False):
    n, f = features.shape
    c = labels.shape[1]
    hh = head * hd

    # ---- fold all per-node scalar projections into one linear (param-only) ----
    w1, w2, w3 = jnp.split(params["rel_fw"], 3)
    va = params["rel_dw"] @ (w1 + w3)                              # [F] src part
    vc = params["rel_dw"] @ (w2 - w3)                              # [F] dst part
    ca = params["rel_db"] @ (w1 + w3)                              # [1]
    cc = params["rel_db"] @ (w2 - w3) + params["rel_fb"]           # [1]
    wa_s, wa_d = params["atten_w"][:hd], params["atten_w"][hd:]
    lw3 = params["lin_w"].reshape(f, head, hd)
    lb3 = params["lin_b"].reshape(head, hd)
    vs = jnp.einsum("fhd,d->fh", lw3, wa_s)                        # [F, head]
    vd = jnp.einsum("fhd,d->fh", lw3, wa_d)                        # [F, head]
    cs = lb3 @ wa_s                                                # [head]
    cd = lb3 @ wa_d + params["atten_b"]                            # [head]

    w_big = jnp.concatenate(
        [params["lin_w"], va[:, None], vs, vc[:, None], vd], axis=1)
    b_big = jnp.concatenate([params["lin_b"][0], ca, cs, cc, cd])[None, :]

    # ---- one fused Pallas linear: features read from HBM exactly once ----
    z = fused_linear(features, w_big, b_big)                       # [N, hh+2+2*head]
    feat_bf16 = z[:, :hh].astype(jnp.bfloat16)                     # H, bf16 for MXU
    src_scal = jnp.transpose(z[:, hh:hh + 1 + head])               # [1+head, N]
    dst_scal = z[:, hh + 1 + head:]                                # [N, 1+head]

    # ---- O(N^2) streams in int8 ({0,1} values -> exact) ----
    # TODO(synk): for a static graph, hoist these casts + tile occupancies out
    #             of the step function; they cost one extra N^2 pass here.
    si_i8 = si_adj.astype(jnp.int8)
    bi_i8 = bi_adj.astype(jnp.int8)
    mask_i8 = params["adjacency_mask"].astype(jnp.int8)
    labels_aug = jnp.concatenate(
        [labels, jnp.ones((n, 1), labels.dtype)], axis=1).astype(jnp.bfloat16)

    # Label_Propagation branch (y_hat); last column carries the row sums.
    y_hat = label_propagation(bi_i8, mask_i8, labels_aug)[:, :c]
    # TODO(synk): `t = T[nonzero(T)]` has data-dependent length and is unused
    #             by Aggregation's returned outputs; skipped.

    # Signed-attention message passing over the etype graph (si_adj).
    out = attention_aggregate(si_i8, src_scal, dst_scal, feat_bf16,
                              head, hd, eup_bf16)
    return out, y_hat


# --------------------------------------------------------------------------
# Dense pure-JAX reference (per-edge formulation) for verification
# --------------------------------------------------------------------------
@functools.partial(jax.jit, static_argnames=("head", "hd"))
def reference_forward(params, features, labels, si_adj, bi_adj, *, head, hd):
    n = features.shape[0]
    with jax.default_matmul_precision("highest"):
        T = bi_adj * params["adjacency_mask"]
        denom = jnp.maximum(jnp.sum(jnp.abs(T), axis=1, keepdims=True), 1e-12)
        y_hat = (T / denom) @ labels

        P = features @ params["rel_dw"] + params["rel_db"]
        src = jnp.broadcast_to(P[None, :, :], (n, n, P.shape[1]))  # [dst, src, :]
        dst = jnp.broadcast_to(P[:, None, :], (n, n, P.shape[1]))
        ef = jnp.concatenate([src, dst, src - dst], axis=-1)
        sign = jnp.tanh(ef @ params["rel_fw"] + params["rel_fb"])  # [dst, src]

        H = features @ params["lin_w"] + params["lin_b"]
        Hh = H.reshape(n, head, hd)
        srcf = sign[:, :, None, None] * Hh[None, :, :, :]          # [dst, src, h, hd]
        dstf = jnp.broadcast_to(Hh[:, None, :, :], (n, n, head, hd))
        zcat = jnp.concatenate([srcf, dstf], axis=-1)
        alpha = zcat @ params["atten_w"] + params["atten_b"]       # [dst, src, h]
        alpha = jnp.where(alpha > 0, alpha, 0.01 * alpha)
        mask = si_adj > 0
        alpha = jnp.where(mask[:, :, None], alpha, -jnp.inf)
        alpha = jax.nn.softmax(alpha, axis=1)
        out = jnp.sum(alpha[:, :, :, None] * srcf, axis=1)
        out = out.reshape(n, head * hd)
    return out, y_hat


# --------------------------------------------------------------------------
if __name__ == "__main__":
    N, INPUT_DIM, HEAD, HD, C, DP = 256, 32, 4, 32, 2, 8   # head*hd = 128 lane-dense

    key = jax.random.PRNGKey(0)
    ks = jax.random.split(key, 12)

    def u(k, shape, s):
        return jax.random.uniform(k, shape, jnp.float32, -s, s)

    stdv_lin = 1.0 / np.sqrt(HEAD * HD)
    params = dict(
        lin_w=u(ks[0], (INPUT_DIM, HEAD * HD), stdv_lin),
        lin_b=u(ks[1], (1, HEAD * HD), stdv_lin),
        atten_w=u(ks[2], (2 * HD,), 1.0 / np.sqrt(2 * HD)),
        atten_b=jnp.float32(0.01),
        rel_dw=u(ks[3], (INPUT_DIM, DP), 1.0 / np.sqrt(INPUT_DIM)),
        rel_db=u(ks[4], (1, DP), 1.0 / np.sqrt(INPUT_DIM)),
        rel_fw=u(ks[5], (3 * DP,), 1.0 / np.sqrt(3 * DP)),
        rel_fb=jnp.float32(0.02),
    )

    features = jax.random.normal(ks[6], (N, INPUT_DIM), jnp.float32)
    label_ids = jax.random.randint(ks[7], (N,), 0, C)
    labels = jax.nn.one_hot(label_ids, C, dtype=jnp.float32)

    eye = jnp.eye(N, dtype=jnp.float32)
    # Sparse graphs + self-loops: some dst rows have no edge in the first src
    # tile, exercising the online-softmax rescale path.
    si_adj = jnp.maximum(
        (jax.random.uniform(ks[8], (N, N)) > 0.98).astype(jnp.float32), eye)
    bi_adj = jnp.maximum(
        (jax.random.uniform(ks[9], (N, N)) > 0.98).astype(jnp.float32), eye)
    # adjacency_mask = Parameter(si_adj.clone()); never re-initialized.
    params["adjacency_mask"] = si_adj

    eup_bf16 = _eup_supports_bf16()

    out, y_hat = aggregation_forward(
        params, features, labels, si_adj, bi_adj,
        head=HEAD, hd=HD, eup_bf16=eup_bf16)
    out = jax.block_until_ready(out)
    y_hat = jax.block_until_ready(y_hat)

    ref_out, ref_y_hat = reference_forward(
        params, features, labels, si_adj, bi_adj, head=HEAD, hd=HD)
    ref_out = jax.block_until_ready(ref_out)
    ref_y_hat = jax.block_until_ready(ref_y_hat)

    np.testing.assert_allclose(np.asarray(out), np.asarray(ref_out),
                               rtol=2e-2, atol=2e-2)
    np.testing.assert_allclose(np.asarray(y_hat), np.asarray(ref_y_hat),
                               rtol=2e-2, atol=2e-2)

    print("KERNEL_OK")
</pallas_src>

<mosaic_0001>
module attributes {stable_mosaic.version = 11 : i64} {
  func.func @_fused_linear_kernel(%arg0: i32, %arg1: memref<256x32xf32, #tpu.memory_space<vmem>>, %arg2: memref<32x138xf32, #tpu.memory_space<vmem>>, %arg3: memref<1x138xf32, #tpu.memory_space<vmem>>, %arg4: memref<256x138xf32, #tpu.memory_space<vmem>>) attributes {dimension_semantics = [#tpu.dimension_semantics<parallel>], iteration_bounds = array<i64: 1>, scalar_prefetch = 0 : i64, scratch_operands = 0 : i64, tpu.core_type = #tpu.core_type<tc>, window_params = [{transform_indices = @transform_0, window_bounds = array<i64: 256, 32>}, {pipeline_mode = #tpu.pipeline_mode<synchronous>, transform_indices = @transform_1, window_bounds = array<i64: 32, 138>}, {pipeline_mode = #tpu.pipeline_mode<synchronous>, transform_indices = @transform_2, window_bounds = array<i64: 1, 138>}, {transform_indices = @transform_3, window_bounds = array<i64: 256, 138>}]} {
    %c0 = arith.constant 0 : index
    %c0_0 = arith.constant 0 : index
    %0 = vector.load %arg1[%c0, %c0_0] : memref<256x32xf32, #tpu.memory_space<vmem>>, vector<256x32xf32>
    %c0_1 = arith.constant 0 : index
    %c0_2 = arith.constant 0 : index
    %1 = vector.load %arg2[%c0_1, %c0_2] : memref<32x138xf32, #tpu.memory_space<vmem>>, vector<32x138xf32>
    %cst = arith.constant dense<0.000000e+00> : vector<256x138xf32>
    %2 = tpu.matmul %0, %1, %cst {dimension_numbers = #tpu.dot_dimension_numbers<[1], [0], [0], [1], [0, 0, 1, 1], [], []>} : vector<256x32xf32>, vector<32x138xf32>, vector<256x138xf32> -> vector<256x138xf32>
    %c0_3 = arith.constant 0 : index
    %c0_4 = arith.constant 0 : index
    %3 = vector.load %arg3[%c0_3, %c0_4] : memref<1x138xf32, #tpu.memory_space<vmem>>, vector<1x138xf32>
    %4 = vector.broadcast %3 : vector<1x138xf32> to vector<256x138xf32>
    %5 = arith.addf %2, %4 : vector<256x138xf32>
    %c0_5 = arith.constant 0 : index
    %c0_6 = arith.constant 0 : index
    %6 = vector.load %arg4[%c0_5, %c0_6] : memref<256x138xf32, #tpu.memory_space<vmem>>, vector<256x138xf32>
    tpu.vector_store %arg4[%c0_5, %c0_6], %5 {strides = array<i32>} : memref<256x138xf32, #tpu.memory_space<vmem>>, vector<256x138xf32>,
    return
  }
  func.func @transform_0(%arg0: i32) -> (i32, i32) {
    %c0_i32 = arith.constant 0 : i32
    %c0_i32_0 = arith.constant 0 : i32
    return %arg0, %c0_i32 : i32, i32
  }
  func.func @transform_1(%arg0: i32) -> (i32, i32) {
    %c0_i32 = arith.constant 0 : i32
    %c0_i32_0 = arith.constant 0 : i32
    %c0_i32_1 = arith.constant 0 : i32
    return %c0_i32, %c0_i32_0 : i32, i32
  }
  func.func @transform_2(%arg0: i32) -> (i32, i32) {
    %c0_i32 = arith.constant 0 : i32
    %c0_i32_0 = arith.constant 0 : i32
    %c0_i32_1 = arith.constant 0 : i32
    return %c0_i32, %c0_i32_0 : i32, i32
  }
  func.func @transform_3(%arg0: i32) -> (i32, i32) {
    %c0_i32 = arith.constant 0 : i32
    %c0_i32_0 = arith.constant 0 : i32
    return %arg0, %c0_i32 : i32, i32
  }
}

module attributes {stable_mosaic.version = 11 : i64} {
  func.func @_attn_kernel(%arg0: i32, %arg1: i32, %arg2: memref<2xi32, #tpu.memory_space<smem>>, %arg3: memref<128x256xi8, #tpu.memory_space<vmem>>, %arg4: memref<5x256xf32, #tpu.memory_space<vmem>>, %arg5: memref<128x5xf32, #tpu.memory_space<vmem>>, %arg6: memref<256x128xbf16, #tpu.memory_space<vmem>>, %arg7: memref<128x128xf32, #tpu.memory_space<vmem>>, %arg8: memref<128x4xf32, #tpu.memory_space<vmem>>, %arg9: memref<128x4xf32, #tpu.memory_space<vmem>>) attributes {dimension_semantics = [#tpu.dimension_semantics<parallel>, #tpu.dimension_semantics<arbitrary>], iteration_bounds = array<i64: 2, 1>, scalar_prefetch = 1 : i64, scratch_operands = 2 : i64, tpu.core_type = #tpu.core_type<tc>, window_params = [{transform_indices = @transform_0, window_bounds = array<i64: 128, 256>}, {transform_indices = @transform_1, window_bounds = array<i64: 5, 256>}, {transform_indices = @transform_2, window_bounds = array<i64: 128, 5>}, {transform_indices = @transform_3, window_bounds = array<i64: 256, 128>}, {transform_indices = @transform_4, window_bounds = array<i64: 128, 128>}]} {
    %c0_i32 = arith.constant 0 : i32
    %0 = arith.cmpi eq, %arg1, %c0_i32 : i32
    %1 = arith.extui %0 : i1 to i32
    %c0_i32_0 = arith.constant 0 : i32
    %2 = arith.cmpi ne, %1, %c0_i32_0 : i32
    scf.if %2 {
      %cst = arith.constant 0.000000e+00 : f32
      %13 = vector.broadcast %cst : f32 to vector<128x128xf32>
      %c0 = arith.constant 0 : index
      %c0_5 = arith.constant 0 : index
      %14 = vector.load %arg7[%c0, %c0_5] : memref<128x128xf32, #tpu.memory_space<vmem>>, vector<128x128xf32>
      tpu.vector_store %arg7[%c0, %c0_5], %13 {strides = array<i32>} : memref<128x128xf32, #tpu.memory_space<vmem>>, vector<128x128xf32>,
      %cst_6 = arith.constant -1.000000e+30 : f32
      %15 = vector.broadcast %cst_6 : f32 to vector<128x4xf32>
      %c0_7 = arith.constant 0 : index
      %c0_8 = arith.constant 0 : index
      %16 = vector.load %arg8[%c0_7, %c0_8] : memref<128x4xf32, #tpu.memory_space<vmem>>, vector<128x4xf32>
      tpu.vector_store %arg8[%c0_7, %c0_8], %15 {strides = array<i32>} : memref<128x4xf32, #tpu.memory_space<vmem>>, vector<128x4xf32>,
      %cst_9 = arith.constant 0.000000e+00 : f32
      %17 = vector.broadcast %cst_9 : f32 to vector<128x4xf32>
      %c0_10 = arith.constant 0 : index
      %c0_11 = arith.constant 0 : index
      %18 = vector.load %arg9[%c0_10, %c0_11] : memref<128x4xf32, #tpu.memory_space<vmem>>, vector<128x4xf32>
      tpu.vector_store %arg9[%c0_10, %c0_11], %17 {strides = array<i32>} : memref<128x4xf32, #tpu.memory_space<vmem>>, vector<128x4xf32>,
    } else {
    }
    %c1_i32 = arith.constant 1 : i32
    %3 = arith.muli %arg0, %c1_i32 : i32
    %4 = arith.addi %3, %arg1 : i32
    %5 = arith.index_cast %4 : i32 to index
    %6 = memref.load %arg2[%5] : memref<2xi32, #tpu.memory_space<smem>>
    %c0_i32_1 = arith.constant 0 : i32
    %7 = arith.cmpi ne, %6, %c0_i32_1 : i32
    %8 = arith.extui %7 : i1 to i32
    %c0_i32_2 = arith.constant 0 : i32
    %9 = arith.cmpi ne, %8, %c0_i32_2 : i32
    scf.if %9 {
      %c0 = arith.constant 0 : index
      %c0_5 = arith.constant 0 : index
      %13 = vector.load %arg3[%c0, %c0_5] : memref<128x256xi8, #tpu.memory_space<vmem>>, vector<128x256xi8>
      %14 = arith.sitofp %13 : vector<128x256xi8> to vector<128x256xf32>
      %cst = arith.constant 0.000000e+00 : f32
      %15 = vector.broadcast %cst : f32 to vector<128x256xf32>
      %16 = arith.cmpf ogt, %14, %15 : vector<128x256xf32>
      %c0_6 = arith.constant 0 : index
      %c0_7 = arith.constant 0 : index
      %17 = vector.load %arg4[%c0_6, %c0_7] : memref<5x256xf32, #tpu.memory_space<vmem>>, vector<1x256xf32>
      %c0_8 = arith.constant 0 : index
      %c0_9 = arith.constant 0 : index
      %18 = vector.load %arg5[%c0_8, %c0_9] : memref<128x5xf32, #tpu.memory_space<vmem>>, vector<128x1xf32>
      %19 = vector.broadcast %17 : vector<1x256xf32> to vector<128x256xf32>
      %20 = vector.broadcast %18 : vector<128x1xf32> to vector<128x256xf32>
      %21 = arith.addf %19, %20 : vector<128x256xf32>
      %22 = math.tanh %21 : vector<128x256xf32>
      %c0_10 = arith.constant 0 : index
      %c0_11 = arith.constant 0 : index
      %23 = vector.load %arg8[%c0_10, %c0_11] : memref<128x4xf32, #tpu.memory_space<vmem>>, vector<128x4xf32>
      %c0_12 = arith.constant 0 : index
      %c0_13 = arith.constant 0 : index
      %24 = vector.load %arg9[%c0_12, %c0_13] : memref<128x4xf32, #tpu.memory_space<vmem>>, vector<128x4xf32>
      %c1 = arith.constant 1 : index
      %c0_14 = arith.constant 0 : index
      %25 = vector.load %arg4[%c1, %c0_14] : memref<5x256xf32, #tpu.memory_space<vmem>>, vector<1x256xf32>
      %c0_15 = arith.constant 0 : index
      %c1_16 = arith.constant 1 : index
      %26 = vector.load %arg5[%c0_15, %c1_16] : memref<128x5xf32, #tpu.memory_space<vmem>>, vector<128x1xf32>
      %27 = vector.broadcast %25 : vector<1x256xf32> to vector<128x256xf32>
      %28 = arith.mulf %22, %27 : vector<128x256xf32>
      %29 = vector.broadcast %26 : vector<128x1xf32> to vector<128x256xf32>
      %30 = arith.addf %28, %29 : vector<128x256xf32>
      %cst_17 = arith.constant 0.00999999977 : f32
      %31 = vector.broadcast %cst_17 : f32 to vector<128x256xf32>
      %32 = arith.mulf %31, %30 : vector<128x256xf32>
      %33 = arith.maximumf %30, %32 : vector<128x256xf32>
      %cst_18 = arith.constant -1.000000e+30 : f32
      %34 = vector.broadcast %cst_18 : f32 to vector<128x256xf32>
      %35 = arith.select %16, %33, %34 : vector<128x256xi1>, vector<128x256xf32>
      %36 = vector.extract_strided_slice %23 {offsets = [0, 0], sizes = [128, 1], strides = [1, 1]} : vector<128x4xf32> to vector<128x1xf32>
      %cst_19 = arith.constant dense<0xFF800000> : vector<128xf32>
      %37 = vector.multi_reduction <maximumf>, %35, %cst_19 [1] : vector<128x256xf32> to vector<128xf32>
      %38 = vector.shape_cast %37 : vector<128xf32> to vector<128x1xf32>
      %39 = arith.maximumf %36, %38 : vector<128x1xf32>
      %40 = arith.subf %36, %39 : vector<128x1xf32>
      %41 = math.exp %40 : vector<128x1xf32>
      %42 = vector.broadcast %39 : vector<128x1xf32> to vector<128x256xf32>
      %43 = arith.subf %35, %42 : vector<128x256xf32>
      %44 = math.exp %43 : vector<128x256xf32>
      %45 = vector.extract_strided_slice %24 {offsets = [0, 0], sizes = [128, 1], strides = [1, 1]} : vector<128x4xf32> to vector<128x1xf32>
      %46 = arith.mulf %41, %45 : vector<128x1xf32>
      %cst_20 = arith.constant dense<0.000000e+00> : vector<128xf32>
      %47 = vector.multi_reduction <add>, %44, %cst_20 [1] : vector<128x256xf32> to vector<128xf32>
      %48 = vector.shape_cast %47 : vector<128xf32> to vector<128x1xf32>
      %49 = arith.addf %46, %48 : vector<128x1xf32>
      %50 = arith.mulf %44, %22 : vector<128x256xf32>
      %51 = arith.truncf %50 : vector<128x256xf32> to vector<128x256xbf16>
      %c0_21 = arith.constant 0 : index
      %c0_22 = arith.constant 0 : index
      %52 = vector.load %arg6[%c0_21, %c0_22] : memref<256x128xbf16, #tpu.memory_space<vmem>>, vector<256x32xbf16>
      %cst_23 = arith.constant dense<0.000000e+00> : vector<128x32xf32>
      %53 = tpu.matmul %51, %52, %cst_23 {dimension_numbers = #tpu.dot_dimension_numbers<[1], [0], [0], [1], [0, 0, 1, 1], [], []>} : vector<128x256xbf16>, vector<256x32xbf16>, vector<128x32xf32> -> vector<128x32xf32>
      %c2 = arith.constant 2 : index
      %c0_24 = arith.constant 0 : index
      %54 = vector.load %arg4[%c2, %c0_24] : memref<5x256xf32, #tpu.memory_space<vmem>>, vector<1x256xf32>
      %c0_25 = arith.constant 0 : index
      %c2_26 = arith.constant 2 : index
      %55 = vector.load %arg5[%c0_25, %c2_26] : memref<128x5xf32, #tpu.memory_space<vmem>>, vector<128x1xf32>
      %56 = vector.broadcast %54 : vector<1x256xf32> to vector<128x256xf32>
      %57 = arith.mulf %22, %56 : vector<128x256xf32>
      %58 = vector.broadcast %55 : vector<128x1xf32> to vector<128x256xf32>
      %59 = arith.addf %57, %58 : vector<128x256xf32>
      %cst_27 = arith.constant 0.00999999977 : f32
      %60 = vector.broadcast %cst_27 : f32 to vector<128x256xf32>
      %61 = arith.mulf %60, %59 : vector<128x256xf32>
      %62 = arith.maximumf %59, %61 : vector<128x256xf32>
      %cst_28 = arith.constant -1.000000e+30 : f32
      %63 = vector.broadcast %cst_28 : f32 to vector<128x256xf32>
      %64 = arith.select %16, %62, %63 : vector<128x256xi1>, vector<128x256xf32>
      %65 = vector.extract_strided_slice %23 {offsets = [0, 1], sizes = [128, 1], strides = [1, 1]} : vector<128x4xf32> to vector<128x1xf32>
      %cst_29 = arith.constant dense<0xFF800000> : vector<128xf32>
      %66 = vector.multi_reduction <maximumf>, %64, %cst_29 [1] : vector<128x256xf32> to vector<128xf32>
      %67 = vector.shape_cast %66 : vector<128xf32> to vector<128x1xf32>
      %68 = arith.maximumf %65, %67 : vector<128x1xf32>
      %69 = arith.subf %65, %68 : vector<128x1xf32>
      %70 = math.exp %69 : vector<128x1xf32>
      %71 = vector.broadcast %68 : vector<128x1xf32> to vector<128x256xf32>
      %72 = arith.subf %64, %71 : vector<128x256xf32>
      %73 = math.exp %72 : vector<128x256xf32>
      %74 = vector.extract_strided_slice %24 {offsets = [0, 1], sizes = [128, 1], strides = [1, 1]} : vector<128x4xf32> to vector<128x1xf32>
      %75 = arith.mulf %70, %74 : vector<128x1xf32>
      %cst_30 = arith.constant dense<0.000000e+00> : vector<128xf32>
      %76 = vector.multi_reduction <add>, %73, %cst_30 [1] : vector<128x256xf32> to vector<128xf32>
      %77 = vector.shape_cast %76 : vector<128xf32> to vector<128x1xf32>
      %78 = arith.addf %75, %77 : vector<128x1xf32>
      %79 = arith.mulf %73, %22 : vector<128x256xf32>
      %80 = arith.truncf %79 : vector<128x256xf32> to vector<128x256xbf16>
      %c0_31 = arith.constant 0 : index
      %c32 = arith.constant 32 : index
      %81 = vector.load %arg6[%c0_31, %c32] : memref<256x128xbf16, #tpu.memory_space<vmem>>, vector<256x32xbf16>
      %cst_32 = arith.constant dense<0.000000e+00> : vector<128x32xf32>
      %82 = tpu.matmul %80, %81, %cst_32 {dimension_numbers = #tpu.dot_dimension_numbers<[1], [0], [0], [1], [0, 0, 1, 1], [], []>} : vector<128x256xbf16>, vector<256x32xbf16>, vector<128x32xf32> -> vector<128x32xf32>
      %c3 = arith.constant 3 : index
      %c0_33 = arith.constant 0 : index
      %83 = vector.load %arg4[%c3, %c0_33] : memref<5x256xf32, #tpu.memory_space<vmem>>, vector<1x256xf32>
      %c0_34 = arith.constant 0 : index
      %c3_35 = arith.constant 3 : index
      %84 = vector.load %arg5[%c0_34, %c3_35] : memref<128x5xf32, #tpu.memory_space<vmem>>, vector<128x1xf32>
      %85 = vector.broadcast %83 : vector<1x256xf32> to vector<128x256xf32>
      %86 = arith.mulf %22, %85 : vector<128x256xf32>
      %87 = vector.broadcast %84 : vector<128x1xf32> to vector<128x256xf32>
      %88 = arith.addf %86, %87 : vector<128x256xf32>
      %cst_36 = arith.constant 0.00999999977 : f32
      %89 = vector.broadcast %cst_36 : f32 to vector<128x256xf32>
      %90 = arith.mulf %89, %88 : vector<128x256xf32>
      %91 = arith.maximumf %88, %90 : vector<128x256xf32>
      %cst_37 = arith.constant -1.000000e+30 : f32
      %92 = vector.broadcast %cst_37 : f32 to vector<128x256xf32>
      %93 = arith.select %16, %91, %92 : vector<128x256xi1>, vector<128x256xf32>
      %94 = vector.extract_strided_slice %23 {offsets = [0, 2], sizes = [128, 1], strides = [1, 1]} : vector<128x4xf32> to vector<128x1xf32>
      %cst_38 = arith.constant dense<0xFF800000> : vector<128xf32>
      %95 = vector.multi_reduction <maximumf>, %93, %cst_38 [1] : vector<128x256xf32> to vector<128xf32>
      %96 = vector.shape_cast %95 : vector<128xf32> to vector<128x1xf32>
      %97 = arith.maximumf %94, %96 : vector<128x1xf32>
      %98 = arith.subf %94, %97 : vector<128x1xf32>
      %99 = math.exp %98 : vector<128x1xf32>
      %100 = vector.broadcast %97 : vector<128x1xf32> to vector<128x256xf32>
      %101 = arith.subf %93, %100 : vector<128x256xf32>
      %102 = math.exp %101 : vector<128x256xf32>
      %103 = vector.extract_strided_slice %24 {offsets = [0, 2], sizes = [128, 1], strides = [1, 1]} : vector<128x4xf32> to vector<128x1xf32>
      %104 = arith.mulf %99, %103 : vector<128x1xf32>
      %cst_39 = arith.constant dense<0.000000e+00> : vector<128xf32>
      %105 = vector.multi_reduction <add>, %102, %cst_39 [1] : vector<128x256xf32> to vector<128xf32>
      %106 = vector.shape_cast %105 : vector<128xf32> to vector<128x1xf32>
      %107 = arith.addf %104, %106 : vector<128x1xf32>
      %108 = arith.mulf %102, %22 : vector<128x256xf32>
      %109 = arith.truncf %108 : vector<128x256xf32> to vector<128x256xbf16>
      %c0_40 = arith.constant 0 : index
      %c64 = arith.constant 64 : index
      %110 = vector.load %arg6[%c0_40, %c64] : memref<256x128xbf16, #tpu.memory_space<vmem>>, vector<256x32xbf16>
      %cst_41 = arith.constant dense<0.000000e+00> : vector<128x32xf32>
      %111 = tpu.matmul %109, %110, %cst_41 {dimension_numbers = #tpu.dot_dimension_numbers<[1], [0], [0], [1], [0, 0, 1, 1], [], []>} : vector<128x256xbf16>, vector<256x32xbf16>, vector<128x32xf32> -> vector<128x32xf32>
      %c4 = arith.constant 4 : index
      %c0_42 = arith.constant 0 : index
      %112 = vector.load %arg4[%c4, %c0_42] : memref<5x256xf32, #tpu.memory_space<vmem>>, vector<1x256xf32>
      %c0_43 = arith.constant 0 : index
      %c4_44 = arith.constant 4 : index
      %113 = vector.load %arg5[%c0_43, %c4_44] : memref<128x5xf32, #tpu.memory_space<vmem>>, vector<128x1xf32>
      %114 = vector.broadcast %112 : vector<1x256xf32> to vector<128x256xf32>
      %115 = arith.mulf %22, %114 : vector<128x256xf32>
      %116 = vector.broadcast %113 : vector<128x1xf32> to vector<128x256xf32>
      %117 = arith.addf %115, %116 : vector<128x256xf32>
      %cst_45 = arith.constant 0.00999999977 : f32
      %118 = vector.broadcast %cst_45 : f32 to vector<128x256xf32>
      %119 = arith.mulf %118, %117 : vector<128x256xf32>
      %120 = arith.maximumf %117, %119 : vector<128x256xf32>
      %cst_46 = arith.constant -1.000000e+30 : f32
      %121 = vector.broadcast %cst_46 : f32 to vector<128x256xf32>
      %122 = arith.select %16, %120, %121 : vector<128x256xi1>, vector<128x256xf32>
      %123 = vector.extract_strided_slice %23 {offsets = [0, 3], sizes = [128, 1], strides = [1, 1]} : vector<128x4xf32> to vector<128x1xf32>
      %cst_47 = arith.constant dense<0xFF800000> : vector<128xf32>
      %124 = vector.multi_reduction <maximumf>, %122, %cst_47 [1] : vector<128x256xf32> to vector<128xf32>
      %125 = vector.shape_cast %124 : vector<128xf32> to vector<128x1xf32>
      %126 = arith.maximumf %123, %125 : vector<128x1xf32>
      %127 = arith.subf %123, %126 : vector<128x1xf32>
      %128 = math.exp %127 : vector<128x1xf32>
      %129 = vector.broadcast %126 : vector<128x1xf32> to vector<128x256xf32>
      %130 = arith.subf %122, %129 : vector<128x256xf32>
      %131 = math.exp %130 : vector<128x256xf32>
      %132 = vector.extract_strided_slice %24 {offsets = [0, 3], sizes = [128, 1], strides = [1, 1]} : vector<128x4xf32> to vector<128x1xf32>
      %133 = arith.mulf %128, %132 : vector<128x1xf32>
      %cst_48 = arith.constant dense<0.000000e+00> : vector<128xf32>
      %134 = vector.multi_reduction <add>, %131, %cst_48 [1] : vector<128x256xf32> to vector<128xf32>
      %135 = vector.shape_cast %134 : vector<128xf32> to vector<128x1xf32>
      %136 = arith.addf %133, %135 : vector<128x1xf32>
      %137 = arith.mulf %131, %22 : vector<128x256xf32>
      %138 = arith.truncf %137 : vector<128x256xf32> to vector<128x256xbf16>
      %c0_49 = arith.constant 0 : index
      %c96 = arith.constant 96 : index
      %139 = vector.load %arg6[%c0_49, %c96] : memref<256x128xbf16, #tpu.memory_space<vmem>>, vector<256x32xbf16>
      %cst_50 = arith.constant dense<0.000000e+00> : vector<128x32xf32>
      %140 = tpu.matmul %138, %139, %cst_50 {dimension_numbers = #tpu.dot_dimension_numbers<[1], [0], [0], [1], [0, 0, 1, 1], [], []>} : vector<128x256xbf16>, vector<256x32xbf16>, vector<128x32xf32> -> vector<128x32xf32>
      %141 = tpu.concatenate %39, %68, %97, %126 in 1 : vector<128x1xf32>, vector<128x1xf32>, vector<128x1xf32>, vector<128x1xf32> -> vector<128x4xf32>
      %c0_51 = arith.constant 0 : index
      %c0_52 = arith.constant 0 : index
      %142 = vector.load %arg8[%c0_51, %c0_52] : memref<128x4xf32, #tpu.memory_space<vmem>>, vector<128x4xf32>
      tpu.vector_store %arg8[%c0_51, %c0_52], %141 {strides = array<i32>} : memref<128x4xf32, #tpu.memory_space<vmem>>, vector<128x4xf32>,
      %143 = tpu.concatenate %49, %78, %107, %136 in 1 : vector<128x1xf32>, vector<128x1xf32>, vector<128x1xf32>, vector<128x1xf32> -> vector<128x4xf32>
      %c0_53 = arith.constant 0 : index
      %c0_54 = arith.constant 0 : index
      %144 = vector.load %arg9[%c0_53, %c0_54] : memref<128x4xf32, #tpu.memory_space<vmem>>, vector<128x4xf32>
      tpu.vector_store %arg9[%c0_53, %c0_54], %143 {strides = array<i32>} : memref<128x4xf32, #tpu.memory_space<vmem>>, vector<128x4xf32>,
      %145 = vector.shape_cast %41 : vector<128x1xf32> to vector<128x1xf32>
      %146 = vector.broadcast %145 : vector<128x1xf32> to vector<128x32xf32>
      %147 = vector.shape_cast %70 : vector<128x1xf32> to vector<128x1xf32>
      %148 = vector.broadcast %147 : vector<128x1xf32> to vector<128x32xf32>
      %149 = vector.shape_cast %99 : vector<128x1xf32> to vector<128x1xf32>
      %150 = vector.broadcast %149 : vector<128x1xf32> to vector<128x32xf32>
      %151 = vector.shape_cast %128 : vector<128x1xf32> to vector<128x1xf32>
      %152 = vector.broadcast %151 : vector<128x1xf32> to vector<128x32xf32>
      %153 = tpu.concatenate %146, %148, %150, %152 in 1 : vector<128x32xf32>, vector<128x32xf32>, vector<128x32xf32>, vector<128x32xf32> -> vector<128x128xf32>
      %c0_55 = arith.constant 0 : index
      %c0_56 = arith.constant 0 : index
      %154 = vector.load %arg7[%c0_55, %c0_56] : memref<128x128xf32, #tpu.memory_space<vmem>>, vector<128x128xf32>
      %155 = arith.mulf %153, %154 : vector<128x128xf32>
      %156 = tpu.concatenate %53, %82, %111, %140 in 1 : vector<128x32xf32>, vector<128x32xf32>, vector<128x32xf32>, vector<128x32xf32> -> vector<128x128xf32>
      %157 = arith.addf %155, %156 : vector<128x128xf32>
      %c0_57 = arith.constant 0 : index
      %c0_58 = arith.constant 0 : index
      %158 = vector.load %arg7[%c0_57, %c0_58] : memref<128x128xf32, #tpu.memory_space<vmem>>, vector<128x128xf32>
      tpu.vector_store %arg7[%c0_57, %c0_58], %157 {strides = array<i32>} : memref<128x128xf32, #tpu.memory_space<vmem>>, vector<128x128xf32>,
    } else {
    }
    %c0_i32_3 = arith.constant 0 : i32
    %10 = arith.cmpi eq, %arg1, %c0_i32_3 : i32
    %11 = arith.extui %10 : i1 to i32
    %c0_i32_4 = arith.constant 0 : i32
    %12 = arith.cmpi ne, %11, %c0_i32_4 : i32
    scf.if %12 {
      %c0 = arith.constant 0 : index
      %c0_5 = arith.constant 0 : index
      %13 = vector.load %arg9[%c0, %c0_5] : memref<128x4xf32, #tpu.memory_space<vmem>>, vector<128x4xf32>
      %cst = arith.constant 1.000000e-30 : f32
      %14 = vector.broadcast %cst : f32 to vector<128x4xf32>
      %15 = arith.maximumf %13, %14 : vector<128x4xf32>
      %16 = tpu.reciprocal %15 {approx = true} : vector<128x4xf32> -> vector<128x4xf32>
      %17 = vector.extract_strided_slice %16 {offsets = [0, 0], sizes = [128, 1], strides = [1, 1]} : vector<128x4xf32> to vector<128x1xf32>
      %18 = vector.shape_cast %17 : vector<128x1xf32> to vector<128x1xf32>
      %19 = vector.broadcast %18 : vector<128x1xf32> to vector<128x32xf32>
      %20 = vector.extract_strided_slice %16 {offsets = [0, 1], sizes = [128, 1], strides = [1, 1]} : vector<128x4xf32> to vector<128x1xf32>
      %21 = vector.shape_cast %20 : vector<128x1xf32> to vector<128x1xf32>
      %22 = vector.broadcast %21 : vector<128x1xf32> to vector<128x32xf32>
      %23 = vector.extract_strided_slice %16 {offsets = [0, 2], sizes = [128, 1], strides = [1, 1]} : vector<128x4xf32> to vector<128x1xf32>
      %24 = vector.shape_cast %23 : vector<128x1xf32> to vector<128x1xf32>
      %25 = vector.broadcast %24 : vector<128x1xf32> to vector<128x32xf32>
      %26 = vector.extract_strided_slice %16 {offsets = [0, 3], sizes = [128, 1], strides = [1, 1]} : vector<128x4xf32> to vector<128x1xf32>
      %27 = vector.shape_cast %26 : vector<128x1xf32> to vector<128x1xf32>
      %28 = vector.broadcast %27 : vector<128x1xf32> to vector<128x32xf32>
      %29 = tpu.concatenate %19, %22, %25, %28 in 1 : vector<128x32xf32>, vector<128x32xf32>, vector<128x32xf32>, vector<128x32xf32> -> vector<128x128xf32>
      %c0_6 = arith.constant 0 : index
      %c0_7 = arith.constant 0 : index
      %30 = vector.load %arg7[%c0_6, %c0_7] : memref<128x128xf32, #tpu.memory_space<vmem>>, vector<128x128xf32>
      %31 = arith.mulf %30, %29 : vector<128x128xf32>
      %c0_8 = arith.constant 0 : index
      %c0_9 = arith.constant 0 : index
      %32 = vector.load %arg7[%c0_8, %c0_9] : memref<128x128xf32, #tpu.memory_space<vmem>>, vector<128x128xf32>
      tpu.vector_store %arg7[%c0_8, %c0_9], %31 {strides = array<i32>} : memref<128x128xf32, #tpu.memory_space<vmem>>, vector<128x128xf32>,
    } else {
    }
    return
  }
  func.func @transform_0(%arg0: i32, %arg1: i32, %arg2: memref<2xi32, #tpu.memory_space<smem>>) -> (i32, i32) {
    %c0_i32 = arith.constant 0 : i32
    return %arg0, %arg1 : i32, i32
  }
  func.func @transform_1(%arg0: i32, %arg1: i32, %arg2: memref<2xi32, #tpu.memory_space<smem>>) -> (i32, i32) {
    %c0_i32 = arith.constant 0 : i32
    %c0_i32_0 = arith.constant 0 : i32
    return %c0_i32, %arg1 : i32, i32
  }
  func.func @transform_2(%arg0: i32, %arg1: i32, %arg2: memref<2xi32, #tpu.memory_space<smem>>) -> (i32, i32) {
    %c0_i32 = arith.constant 0 : i32
    %c0_i32_0 = arith.constant 0 : i32
    return %arg0, %c0_i32 : i32, i32
  }
  func.func @transform_3(%arg0: i32, %arg1: i32, %arg2: memref<2xi32, #tpu.memory_space<smem>>) -> (i32, i32) {
    %c0_i32 = arith.constant 0 : i32
    %c0_i32_0 = arith.constant 0 : i32
    return %arg1, %c0_i32 : i32, i32
  }
  func.func @transform_4(%arg0: i32, %arg1: i32, %arg2: memref<2xi32, #tpu.memory_space<smem>>) -> (i32, i32) {
    %c0_i32 = arith.constant 0 : i32
    %c0_i32_0 = arith.constant 0 : i32
    return %arg0, %c0_i32 : i32, i32
  }
}

module attributes {stable_mosaic.version = 11 : i64} {
  func.func @_label_prop_kernel(%arg0: i32, %arg1: i32, %arg2: memref<2xi32, #tpu.memory_space<smem>>, %arg3: memref<128x256xi8, #tpu.memory_space<vmem>>, %arg4: memref<128x256xi8, #tpu.memory_space<vmem>>, %arg5: memref<256x3xbf16, #tpu.memory_space<vmem>>, %arg6: memref<128x3xf32, #tpu.memory_space<vmem>>) attributes {dimension_semantics = [#tpu.dimension_semantics<parallel>, #tpu.dimension_semantics<arbitrary>], iteration_bounds = array<i64: 2, 1>, scalar_prefetch = 1 : i64, scratch_operands = 0 : i64, tpu.core_type = #tpu.core_type<tc>, window_params = [{transform_indices = @transform_0, window_bounds = array<i64: 128, 256>}, {transform_indices = @transform_1, window_bounds = array<i64: 128, 256>}, {transform_indices = @transform_2, window_bounds = array<i64: 256, 3>}, {transform_indices = @transform_3, window_bounds = array<i64: 128, 3>}]} {
    %c0_i32 = arith.constant 0 : i32
    %0 = arith.cmpi eq, %arg1, %c0_i32 : i32
    %1 = arith.extui %0 : i1 to i32
    %c0_i32_0 = arith.constant 0 : i32
    %2 = arith.cmpi ne, %1, %c0_i32_0 : i32
    scf.if %2 {
      %cst = arith.constant 0.000000e+00 : f32
      %13 = vector.broadcast %cst : f32 to vector<128x3xf32>
      %c0 = arith.constant 0 : index
      %c0_5 = arith.constant 0 : index
      %14 = vector.load %arg6[%c0, %c0_5] : memref<128x3xf32, #tpu.memory_space<vmem>>, vector<128x3xf32>
      tpu.vector_store %arg6[%c0, %c0_5], %13 {strides = array<i32>} : memref<128x3xf32, #tpu.memory_space<vmem>>, vector<128x3xf32>,
    } else {
    }
    %c1_i32 = arith.constant 1 : i32
    %3 = arith.muli %arg0, %c1_i32 : i32
    %4 = arith.addi %3, %arg1 : i32
    %5 = arith.index_cast %4 : i32 to index
    %6 = memref.load %arg2[%5] : memref<2xi32, #tpu.memory_space<smem>>
    %c0_i32_1 = arith.constant 0 : i32
    %7 = arith.cmpi ne, %6, %c0_i32_1 : i32
    %8 = arith.extui %7 : i1 to i32
    %c0_i32_2 = arith.constant 0 : i32
    %9 = arith.cmpi ne, %8, %c0_i32_2 : i32
    scf.if %9 {
      %c0 = arith.constant 0 : index
      %c0_5 = arith.constant 0 : index
      %13 = vector.load %arg3[%c0, %c0_5] : memref<128x256xi8, #tpu.memory_space<vmem>>, vector<128x256xi8>
      %14 = arith.sitofp %13 : vector<128x256xi8> to vector<128x256xf32>
      %c0_6 = arith.constant 0 : index
      %c0_7 = arith.constant 0 : index
      %15 = vector.load %arg4[%c0_6, %c0_7] : memref<128x256xi8, #tpu.memory_space<vmem>>, vector<128x256xi8>
      %16 = arith.sitofp %15 : vector<128x256xi8> to vector<128x256xf32>
      %17 = arith.mulf %14, %16 : vector<128x256xf32>
      %18 = arith.truncf %17 : vector<128x256xf32> to vector<128x256xbf16>
      %c0_8 = arith.constant 0 : index
      %c0_9 = arith.constant 0 : index
      %19 = vector.load %arg6[%c0_8, %c0_9] : memref<128x3xf32, #tpu.memory_space<vmem>>, vector<128x3xf32>
      %c0_10 = arith.constant 0 : index
      %c0_11 = arith.constant 0 : index
      %20 = vector.load %arg5[%c0_10, %c0_11] : memref<256x3xbf16, #tpu.memory_space<vmem>>, vector<256x3xbf16>
      %cst = arith.constant dense<0.000000e+00> : vector<128x3xf32>
      %21 = tpu.matmul %18, %20, %cst {dimension_numbers = #tpu.dot_dimension_numbers<[1], [0], [0], [1], [0, 0, 1, 1], [], []>} : vector<128x256xbf16>, vector<256x3xbf16>, vector<128x3xf32> -> vector<128x3xf32>
      %22 = arith.addf %19, %21 : vector<128x3xf32>
      %c0_12 = arith.constant 0 : index
      %c0_13 = arith.constant 0 : index
      %23 = vector.load %arg6[%c0_12, %c0_13] : memref<128x3xf32, #tpu.memory_space<vmem>>, vector<128x3xf32>
      tpu.vector_store %arg6[%c0_12, %c0_13], %22 {strides = array<i32>} : memref<128x3xf32, #tpu.memory_space<vmem>>, vector<128x3xf32>,
    } else {
    }
    %c0_i32_3 = arith.constant 0 : i32
    %10 = arith.cmpi eq, %arg1, %c0_i32_3 : i32
    %11 = arith.extui %10 : i1 to i32
    %c0_i32_4 = arith.constant 0 : i32
    %12 = arith.cmpi ne, %11, %c0_i32_4 : i32
    scf.if %12 {
      %c0 = arith.constant 0 : index
      %c0_5 = arith.constant 0 : index
      %13 = vector.load %arg6[%c0, %c0_5] : memref<128x3xf32, #tpu.memory_space<vmem>>, vector<128x3xf32>
      %14 = vector.extract_strided_slice %13 {offsets = [0, 2], sizes = [128, 1], strides = [1, 1]} : vector<128x3xf32> to vector<128x1xf32>
      %cst = arith.constant 9.99999996E-13 : f32
      %15 = vector.broadcast %cst : f32 to vector<128x1xf32>
      %16 = arith.maximumf %14, %15 : vector<128x1xf32>
      %17 = tpu.reciprocal %16 {approx = true} : vector<128x1xf32> -> vector<128x1xf32>
      %18 = vector.broadcast %17 : vector<128x1xf32> to vector<128x3xf32>
      %19 = arith.mulf %13, %18 : vector<128x3xf32>
      %c0_6 = arith.constant 0 : index
      %c0_7 = arith.constant 0 : index
      %20 = vector.load %arg6[%c0_6, %c0_7] : memref<128x3xf32, #tpu.memory_space<vmem>>, vector<128x3xf32>
      tpu.vector_store %arg6[%c0_6, %c0_7], %19 {strides = array<i32>} : memref<128x3xf32, #tpu.memory_space<vmem>>, vector<128x3xf32>,
    } else {
    }
    return
  }
  func.func @transform_0(%arg0: i32, %arg1: i32, %arg2: memref<2xi32, #tpu.memory_space<smem>>) -> (i32, i32) {
    %c0_i32 = arith.constant 0 : i32
    return %arg0, %arg1 : i32, i32
  }
  func.func @transform_1(%arg0: i32, %arg1: i32, %arg2: memref<2xi32, #tpu.memory_space<smem>>) -> (i32, i32) {
    %c0_i32 = arith.constant 0 : i32
    return %arg0, %arg1 : i32, i32
  }
  func.func @transform_2(%arg0: i32, %arg1: i32, %arg2: memref<2xi32, #tpu.memory_space<smem>>) -> (i32, i32) {
    %c0_i32 = arith.constant 0 : i32
    %c0_i32_0 = arith.constant 0 : i32
    return %arg1, %c0_i32 : i32, i32
  }
  func.func @transform_3(%arg0: i32, %arg1: i32, %arg2: memref<2xi32, #tpu.memory_space<smem>>) -> (i32, i32) {
    %c0_i32 = arith.constant 0 : i32
    %c0_i32_0 = arith.constant 0 : i32
    return %arg0, %c0_i32 : i32, i32
  }
}

</mosaic_0001>

<llo_original>
// kernel: aggregation_forward.3
$region0: #{aggregation_forward.3}
  #allocation0 [shape = 'u32[]', space=smem, size = 0x4, offset = 0x4, fixed_abs, tag = 'smem constant byte address 0x4 - core index']
  #allocation1 [shape = 'u32[144,128]{1,0:T(1,128)}', space=vmem, size = 0x12000, scoped, tag = 'internal scratch']
  %s0 = inlined_call_operand.vmem [shape: f32[256,32], index: 0, kind: input, shape index: {}]
  %s1 = inlined_call_operand.vmem [shape: f32[32,138], index: 1, kind: input, shape index: {}]
  %s2 = inlined_call_operand.vmem [shape: f32[1,138], index: 2, kind: input, shape index: {}]
  %s3 = inlined_call_operand.vmem [shape: f32[256,138], index: 3, kind: output, shape index: {}]
  %s4 = sld [smem:[#allocation0]]
  $region22: #{aggregation_forward.3} parent=0
    _
  %s6 = ssub.s32 1, %s4
  %s7 = scalar_select 0, %s6, %s4
  // Predicated region
  $region2: #{aggregation_forward.3} parent=0 // pred_check
    _
  $region3: #{aggregation_forward.3} parent=0 // pred_check_branch
    %9 = sbr.rel (0) target = $region5
  $region4: #{aggregation_forward.3} parent=0 // pred_region
    _
  $region5: #{aggregation_forward.3} parent=0 // pred_fallthru
    _
  // Predicated region
  $region6: #{aggregation_forward.3} parent=0 // pred_check
    _
  $region7: #{aggregation_forward.3} parent=0 // pred_check_branch
    %11 = sbr.rel (0) target = $region9
  $region8: #{aggregation_forward.3} parent=0 // pred_region
    _
  $region9: #{aggregation_forward.3} parent=0 // pred_fallthru
    _
  // Predicated region
  $region10: #{aggregation_forward.3} parent=0 // pred_check
    _
  $region11: #{aggregation_forward.3} parent=0 // pred_check_branch
    %13 = sbr.rel (0) target = $region13
  $region12: #{aggregation_forward.3} parent=0 // pred_region
    _
  $region13: #{aggregation_forward.3} parent=0 // pred_fallthru
    _
  %v14 = vld [vmem:[%s0] sm:$0xff]
  %v15 = vld [vmem:[%s0 + $0x8] sm:$0xff]
  %v16 = vld [vmem:[%s0 + $0x10] sm:$0xff]
  %v17 = vld [vmem:[%s0 + $0x18] sm:$0xff]
  %v18 = vld [vmem:[%s0 + $0x20] sm:$0xff]
  %v19 = vld [vmem:[%s0 + $0x28] sm:$0xff]
  %v20 = vld [vmem:[%s0 + $0x30] sm:$0xff]
  %v21 = vld [vmem:[%s0 + $0x38] sm:$0xff]
  %v22 = vld [vmem:[%s0 + $0x40] sm:$0xff]
  %v23 = vld [vmem:[%s0 + $0x48] sm:$0xff]
  %v24 = vld [vmem:[%s0 + $0x50] sm:$0xff]
  %v25 = vld [vmem:[%s0 + $0x58] sm:$0xff]
  %v26 = vld [vmem:[%s0 + $0x60] sm:$0xff]
  %v27 = vld [vmem:[%s0 + $0x68] sm:$0xff]
  %v28 = vld [vmem:[%s0 + $0x70] sm:$0xff]
  %v29 = vld [vmem:[%s0 + $0x78] sm:$0xff]
  %v30 = vld [vmem:[%s0 + $0x80] sm:$0xff]
  %v31 = vld [vmem:[%s0 + $0x88] sm:$0xff]
  %v32 = vld [vmem:[%s0 + $0x90] sm:$0xff]
  %v33 = vld [vmem:[%s0 + $0x98] sm:$0xff]
  %v34 = vld [vmem:[%s0 + $0xa0] sm:$0xff]
  %v35 = vld [vmem:[%s0 + $0xa8] sm:$0xff]
  %v36 = vld [vmem:[%s0 + $0xb0] sm:$0xff]
  %v37 = vld [vmem:[%s0 + $0xb8] sm:$0xff]
  %v38 = vld [vmem:[%s0 + $0xc0] sm:$0xff]
  %v39 = vld [vmem:[%s0 + $0xc8] sm:$0xff]
  %v40 = vld [vmem:[%s0 + $0xd0] sm:$0xff]
  %v41 = vld [vmem:[%s0 + $0xd8] sm:$0xff]
  %v42 = vld [vmem:[%s0 + $0xe0] sm:$0xff]
  %v43 = vld [vmem:[%s0 + $0xe8] sm:$0xff]
  %v44 = vld [vmem:[%s0 + $0xf0] sm:$0xff]
  %v45 = vld [vmem:[%s0 + $0xf8] sm:$0xff]
  %v46 = vld [vmem:[%s1] sm:$0xff]
  %v47 = vld [vmem:[%s1 + $0x8] sm:$0xff]
  %v48 = vld [vmem:[%s1 + $0x10] sm:$0xff]
  %v49 = vld [vmem:[%s1 + $0x18] sm:$0xff]
  %v50 = vld [vmem:[%s1 + $0x20] sm:$0xff]
  %v51 = vld [vmem:[%s1 + $0x28] sm:$0xff]
  %v52 = vld [vmem:[%s1 + $0x30] sm:$0xff]
  %v53 = vld [vmem:[%s1 + $0x38] sm:$0xff]
  %v54 = vld [vmem:[%s2] sm:$0x3]
  %v56 = vlaneseq
  %v57 = vshrl.u32 %v56, 7
  %v58 = vsub.s32 0, %v57
  %v59 = vrot.slane %v54, %v58
  %v60 = vlaneseq
  %v61 = vshrl.u32 %v60, 7
  %v62 = vsub.s32 1, %v61
  %v63 = vrot.slane %v54, %v62
  %vm66 = vcmask 261120
  %v68 = vsel %vm66, %v14, 0
  %v71 = vsel %vm66, %v15, 0
  %v74 = vsel %vm66, %v16, 0
  %v77 = vsel %vm66, %v17, 0
  %v80 = vsel %vm66, %v18, 0
  %v83 = vsel %vm66, %v19, 0
  %v86 = vsel %vm66, %v20, 0
  %v89 = vsel %vm66, %v21, 0
  %v92 = vsel %vm66, %v22, 0
  %v95 = vsel %vm66, %v23, 0
  %v98 = vsel %vm66, %v24, 0
  %v101 = vsel %vm66, %v25, 0
  %v104 = vsel %vm66, %v26, 0
  %v107 = vsel %vm66, %v27, 0
  %v110 = vsel %vm66, %v28, 0
  %v113 = vsel %vm66, %v29, 0
  %v116 = vsel %vm66, %v30, 0
  %v119 = vsel %vm66, %v31, 0
  %v122 = vsel %vm66, %v32, 0
  %v125 = vsel %vm66, %v33, 0
  %v128 = vsel %vm66, %v34, 0
  %v131 = vsel %vm66, %v35, 0
  %v134 = vsel %vm66, %v36, 0
  %v137 = vsel %vm66, %v37, 0
  %v140 = vsel %vm66, %v38, 0
  %v143 = vsel %vm66, %v39, 0
  %v146 = vsel %vm66, %v40, 0
  %v149 = vsel %vm66, %v41, 0
  %v152 = vsel %vm66, %v42, 0
  %v155 = vsel %vm66, %v43, 0
  %v158 = vsel %vm66, %v44, 0
  %v161 = vsel %vm66, %v45, 0
  %163 = vmatprep.subr.mxu0 %v47
  %164 = vmatpush1.msra.mxu0 %v46
  %165 = vmatprep.subr.mxu0 %v49
  %166 = vmatpush1.msra.mxu0 %v48
  %167 = vmatprep.subr.mxu0 %v51
  %168 = vmatpush1.msra.mxu0 %v50
  %169 = vmatprep.subr.mxu0 %v53
  %170 = vmatpush1.msra.mxu0 %v52
  %171 = vmatprep.subr.mxu0 0.0
  %172 = vmatpush1.msra.mxu0 0.0
  %173 = vmatprep.subr.mxu0 0.0
  %174 = vmatpush1.msra.mxu0 0.0
  %175 = vmatprep.subr.mxu0 0.0
  %176 = vmatpush1.msra.mxu0 0.0
  %177 = vmatprep.subr.mxu0 0.0
  %178 = vmatpush1.msra.mxu0 0.0
  %179 = vmatprep.subr.mxu0 0.0
  %180 = vmatpush1.msra.mxu0 0.0
  %181 = vmatprep.subr.mxu0 0.0
  %182 = vmatpush1.msra.mxu0 0.0
  %183 = vmatprep.subr.mxu0 0.0
  %184 = vmatpush1.msra.mxu0 0.0
  %185 = vmatprep.subr.mxu0 0.0
  %186 = vmatpush1.msra.mxu0 0.0
  %187 = vmatprep.subr.mxu0 0.0
  %188 = vmatpush1.msra.mxu0 0.0
  %189 = vmatprep.subr.mxu0 0.0
  %190 = vmatpush1.msra.mxu0 0.0
  %191 = vmatprep.subr.mxu0 0.0
  %192 = vmatpush1.msra.mxu0 0.0
  %193 = vmatprep.subr.mxu0 0.0
  %194 = vmatpush1.msra.mxu0 0.0
  %195 = vmatprep.subr.mxu0 0.0
  %196 = vmatpush1.msra.mxu0 0.0
  %197 = vmatprep.subr.mxu0 0.0
  %198 = vmatpush1.msra.mxu0 0.0
  %199 = vmatprep.subr.mxu0 0.0
  %200 = vmatpush1.msra.mxu0 0.0
  %201 = vmatprep.subr.mxu0 0.0
  %202 = vmatpush1.msra.mxu0 0.0
  %203 = vmatprep.subr.mxu0 0.0
  %204 = vmatpush1.msra.mxu0 0.0
  %205 = vmatprep.subr.mxu0 0.0
  %206 = vmatpush1.msra.mxu0 0.0
  %207 = vmatprep.subr.mxu0 0.0
  %208 = vmatpush1.msra.mxu0 0.0
  %209 = vmatprep.subr.mxu0 0.0
  %210 = vmatpush1.msra.mxu0 0.0
  %211 = vmatprep.subr.mxu0 0.0
  %212 = vmatpush1.msra.mxu0 0.0
  %213 = vmatprep.subr.mxu0 0.0
  %214 = vmatpush1.msra.mxu0 0.0
  %215 = vmatprep.subr.mxu0 0.0
  %216 = vmatpush1.msra.mxu0 0.0
  %217 = vmatprep.subr.mxu0 0.0
  %218 = vmatpush1.msra.mxu0 0.0
  %219 = vmatprep.subr.mxu0 0.0
  %220 = vmatpush1.msra.mxu0 0.0
  %221 = vmatprep.subr.mxu0 0.0
  %222 = vmatpush1.msra.mxu0 0.0
  %223 = vmatprep.subr.mxu0 0.0
  %224 = vmatpush1.msra.mxu0 0.0
  %225 = vmatprep.subr.mxu0 0.0
  %226 = vmatpush1.msra.mxu0 0.0
  %227 = vmatprep.mubr.f32.mxu0 0.0
  %228 = vmatmul.mubr.f32.gmra.mrb[0].mxu0 %v68
  %v229 = vpop.f32.mrb[0].mxu0
  %v230 = vadd.f32 %v59, %v229
  %v231 = vpop.f32.mrb[0].mxu0
  %v232 = vadd.f32 %v63, %v231
  %233 = vmatprep.mubr.f32.mxu0 0.0
  %234 = vmatmul.mubr.f32.gmra.mrb[0].mxu0 %v71
  %v235 = vpop.f32.mrb[0].mxu0
  %v236 = vadd.f32 %v59, %v235
  %v237 = vpop.f32.mrb[0].mxu0
  %v238 = vadd.f32 %v63, %v237
  %239 = vmatprep.mubr.f32.mxu0 0.0
  %240 = vmatmul.mubr.f32.gmra.mrb[0].mxu0 %v74
  %v241 = vpop.f32.mrb[0].mxu0
  %v242 = vadd.f32 %v59, %v241
  %v243 = vpop.f32.mrb[0].mxu0
  %v244 = vadd.f32 %v63, %v243
  %245 = vmatprep.mubr.f32.mxu0 0.0
  %246 = vmatmul.mubr.f32.gmra.mrb[0].mxu0 %v77
  %v247 = vpop.f32.mrb[0].mxu0
  %v248 = vadd.f32 %v59, %v247
  %v249 = vpop.f32.mrb[0].mxu0
  %v250 = vadd.f32 %v63, %v249
  %251 = vmatprep.mubr.f32.mxu0 0.0
  %252 = vmatmul.mubr.f32.gmra.mrb[0].mxu0 %v80
  %v253 = vpop.f32.mrb[0].mxu0
  %v254 = vadd.f32 %v59, %v253
  %v255 = vpop.f32.mrb[0].mxu0
  %v256 = vadd.f32 %v63, %v255
  %257 = vmatprep.mubr.f32.mxu0 0.0
  %258 = vmatmul.mubr.f32.gmra.mrb[0].mxu0 %v83
  %v259 = vpop.f32.mrb[0].mxu0
  %v260 = vadd.f32 %v59, %v259
  %v261 = vpop.f32.mrb[0].mxu0
  %v262 = vadd.f32 %v63, %v261
  %263 = vmatprep.mubr.f32.mxu0 0.0
  %264 = vmatmul.mubr.f32.gmra.mrb[0].mxu0 %v86
  %v265 = vpop.f32.mrb[0].mxu0
  %v266 = vadd.f32 %v59, %v265
  %v267 = vpop.f32.mrb[0].mxu0
  %v268 = vadd.f32 %v63, %v267
  %269 = vmatprep.mubr.f32.mxu0 0.0
  %270 = vmatmul.mubr.f32.gmra.mrb[0].mxu0 %v89
  %v271 = vpop.f32.mrb[0].mxu0
  %v272 = vadd.f32 %v59, %v271
  %v273 = vpop.f32.mrb[0].mxu0
  %v274 = vadd.f32 %v63, %v273
  %275 = vmatprep.mubr.f32.mxu0 0.0
  %276 = vmatmul.mubr.f32.gmra.mrb[0].mxu0 %v92
  %v277 = vpop.f32.mrb[0].mxu0
  %v278 = vadd.f32 %v59, %v277
  %v279 = vpop.f32.mrb[0].mxu0
  %v280 = vadd.f32 %v63, %v279
  %281 = vmatprep.mubr.f32.mxu0 0.0
  %282 = vmatmul.mubr.f32.gmra.mrb[0].mxu0 %v95
  %v283 = vpop.f32.mrb[0].mxu0
  %v284 = vadd.f32 %v59, %v283
  %v285 = vpop.f32.mrb[0].mxu0
  %v286 = vadd.f32 %v63, %v285
  %287 = vmatprep.mubr.f32.mxu0 0.0
  %288 = vmatmul.mubr.f32.gmra.mrb[0].mxu0 %v98
  %v289 = vpop.f32.mrb[0].mxu0
  %v290 = vadd.f32 %v59, %v289
  %v291 = vpop.f32.mrb[0].mxu0
  %v292 = vadd.f32 %v63, %v291
  %293 = vmatprep.mubr.f32.mxu0 0.0
  %294 = vmatmul.mubr.f32.gmra.mrb[0].mxu0 %v101
  %v295 = vpop.f32.mrb[0].mxu0
  %v296 = vadd.f32 %v59, %v295
  %v297 = vpop.f32.mrb[0].mxu0
  %v298 = vadd.f32 %v63, %v297
  %299 = vmatprep.mubr.f32.mxu0 0.0
  %300 = vmatmul.mubr.f32.gmra.mrb[0].mxu0 %v104
  %v301 = vpop.f32.mrb[0].mxu0
  %v302 = vadd.f32 %v59, %v301
  %v303 = vpop.f32.mrb[0].mxu0
  %v304 = vadd.f32 %v63, %v303
  %305 = vmatprep.mubr.f32.mxu0 0.0
  %306 = vmatmul.mubr.f32.gmra.mrb[0].mxu0 %v107
  %v307 = vpop.f32.mrb[0].mxu0
  %v308 = vadd.f32 %v59, %v307
  %v309 = vpop.f32.mrb[0].mxu0
  %v310 = vadd.f32 %v63, %v309
  %311 = vmatprep.mubr.f32.mxu0 0.0
  %312 = vmatmul.mubr.f32.gmra.mrb[0].mxu0 %v110
  %v313 = vpop.f32.mrb[0].mxu0
  %v314 = vadd.f32 %v59, %v313
  %v315 = vpop.f32.mrb[0].mxu0
  %v316 = vadd.f32 %v63, %v315
  %317 = vmatprep.mubr.f32.mxu0 0.0
  %318 = vmatmul.mubr.f32.gmra.mrb[0].mxu0 %v113
  %v319 = vpop.f32.mrb[0].mxu0
  %v320 = vadd.f32 %v59, %v319
  %v321 = vpop.f32.mrb[0].mxu0
  %v322 = vadd.f32 %v63, %v321
  %323 = vmatprep.mubr.f32.mxu0 0.0
  %324 = vmatmul.mubr.f32.gmra.mrb[0].mxu0 %v116
  %v325 = vpop.f32.mrb[0].mxu0
  %v326 = vadd.f32 %v59, %v325
  %v327 = vpop.f32.mrb[0].mxu0
  %v328 = vadd.f32 %v63, %v327
  %329 = vmatprep.mubr.f32.mxu0 0.0
  %330 = vmatmul.mubr.f32.gmra.mrb[0].mxu0 %v119
  %v331 = vpop.f32.mrb[0].mxu0
  %v332 = vadd.f32 %v59, %v331
  %v333 = vpop.f32.mrb[0].mxu0
  %v334 = vadd.f32 %v63, %v333
  %335 = vmatprep.mubr.f32.mxu0 0.0
  %336 = vmatmul.mubr.f32.gmra.mrb[0].mxu0 %v122
  %v337 = vpop.f32.mrb[0].mxu0
  %v338 = vadd.f32 %v59, %v337
  %v339 = vpop.f32.mrb[0].mxu0
  %v340 = vadd.f32 %v63, %v339
  %341 = vmatprep.mubr.f32.mxu0 0.0
  %342 = vmatmul.mubr.f32.gmra.mrb[0].mxu0 %v125
  %v343 = vpop.f32.mrb[0].mxu0
  %v344 = vadd.f32 %v59, %v343
  %v345 = vpop.f32.mrb[0].mxu0
  %v346 = vadd.f32 %v63, %v345
  %347 = vmatprep.mubr.f32.mxu0 0.0
  %348 = vmatmul.mubr.f32.gmra.mrb[0].mxu0 %v128
  %v349 = vpop.f32.mrb[0].mxu0
  %v350 = vadd.f32 %v59, %v349
  %v351 = vpop.f32.mrb[0].mxu0
  %v352 = vadd.f32 %v63, %v351
  %353 = vmatprep.mubr.f32.mxu0 0.0
  %354 = vmatmul.mubr.f32.gmra.mrb[0].mxu0 %v131
  %v355 = vpop.f32.mrb[0].mxu0
  %v356 = vadd.f32 %v59, %v355
  %v357 = vpop.f32.mrb[0].mxu0
  %v358 = vadd.f32 %v63, %v357
  %359 = vmatprep.mubr.f32.mxu0 0.0
  %360 = vmatmul.mubr.f32.gmra.mrb[0].mxu0 %v134
  %v361 = vpop.f32.mrb[0].mxu0
  %v362 = vadd.f32 %v59, %v361
  %v363 = vpop.f32.mrb[0].mxu0
  %v364 = vadd.f32 %v63, %v363
  %365 = vmatprep.mubr.f32.mxu0 0.0
  %366 = vmatmul.mubr.f32.gmra.mrb[0].mxu0 %v137
  %v367 = vpop.f32.mrb[0].mxu0
  %v368 = vadd.f32 %v59, %v367
  %v369 = vpop.f32.mrb[0].mxu0
  %v370 = vadd.f32 %v63, %v369
  %371 = vmatprep.mubr.f32.mxu0 0.0
  %372 = vmatmul.mubr.f32.gmra.mrb[0].mxu0 %v140
  %v373 = vpop.f32.mrb[0].mxu0
  %v374 = vadd.f32 %v59, %v373
  %v375 = vpop.f32.mrb[0].mxu0
  %v376 = vadd.f32 %v63, %v375
  %377 = vmatprep.mubr.f32.mxu0 0.0
  %378 = vmatmul.mubr.f32.gmra.mrb[0].mxu0 %v143
  %v379 = vpop.f32.mrb[0].mxu0
  %v380 = vadd.f32 %v59, %v379
  %v381 = vpop.f32.mrb[0].mxu0
  %v382 = vadd.f32 %v63, %v381
  %383 = vmatprep.mubr.f32.mxu0 0.0
  %384 = vmatmul.mubr.f32.gmra.mrb[0].mxu0 %v146
  %v385 = vpop.f32.mrb[0].mxu0
  %v386 = vadd.f32 %v59, %v385
  %v387 = vpop.f32.mrb[0].mxu0
  %v388 = vadd.f32 %v63, %v387
  %389 = vmatprep.mubr.f32.mxu0 0.0
  %390 = vmatmul.mubr.f32.gmra.mrb[0].mxu0 %v149
  %v391 = vpop.f32.mrb[0].mxu0
  %v392 = vadd.f32 %v59, %v391
  %v393 = vpop.f32.mrb[0].mxu0
  %v394 = vadd.f32 %v63, %v393
  %395 = vmatprep.mubr.f32.mxu0 0.0
  %396 = vmatmul.mubr.f32.gmra.mrb[0].mxu0 %v152
  %v397 = vpop.f32.mrb[0].mxu0
  %v398 = vadd.f32 %v59, %v397
  %v399 = vpop.f32.mrb[0].mxu0
  %v400 = vadd.f32 %v63, %v399
  %401 = vmatprep.mubr.f32.mxu0 0.0
  %402 = vmatmul.mubr.f32.gmra.mrb[0].mxu0 %v155
  %v403 = vpop.f32.mrb[0].mxu0
  %v404 = vadd.f32 %v59, %v403
  %v405 = vpop.f32.mrb[0].mxu0
  %v406 = vadd.f32 %v63, %v405
  %407 = vmatprep.mubr.f32.mxu0 0.0
  %408 = vmatmul.mubr.f32.gmra.mrb[0].mxu0 %v158
  %v409 = vpop.f32.mrb[0].mxu0
  %v410 = vadd.f32 %v59, %v409
  %v411 = vpop.f32.mrb[0].mxu0
  %v412 = vadd.f32 %v63, %v411
  %413 = vmatprep.mubr.f32.mxu0 0.0
  %414 = vmatmul.mubr.f32.gmra.mrb[0].mxu0 %v161
  %v415 = vpop.f32.mrb[0].mxu0
  %v416 = vadd.f32 %v59, %v415
  %v417 = vpop.f32.mrb[0].mxu0
  %v418 = vadd.f32 %v63, %v417
  %419 = vdwg.mxu0
  %420 = vst [vmem:[%s3] sm:$0xff] %v230
  %vm421 = vcmask 80896
  %422 = vst.msk [vmem:[%s3 + $0x8] sm:$0xff] %vm421, %v232
  %423 = vst [vmem:[%s3 + $0x10] sm:$0xff] %v236
  %424 = vst.msk [vmem:[%s3 + $0x18] sm:$0xff] %vm421, %v238
  %425 = vst [vmem:[%s3 + $0x20] sm:$0xff] %v242
  %426 = vst.msk [vmem:[%s3 + $0x28] sm:$0xff] %vm421, %v244
  %427 = vst [vmem:[%s3 + $0x30] sm:$0xff] %v248
  %428 = vst.msk [vmem:[%s3 + $0x38] sm:$0xff] %vm421, %v250
  %429 = vst [vmem:[%s3 + $0x40] sm:$0xff] %v254
  %430 = vst.msk [vmem:[%s3 + $0x48] sm:$0xff] %vm421, %v256
  %431 = vst [vmem:[%s3 + $0x50] sm:$0xff] %v260
  %432 = vst.msk [vmem:[%s3 + $0x58] sm:$0xff] %vm421, %v262
  %433 = vst [vmem:[%s3 + $0x60] sm:$0xff] %v266
  %434 = vst.msk [vmem:[%s3 + $0x68] sm:$0xff] %vm421, %v268
  %435 = vst [vmem:[%s3 + $0x70] sm:$0xff] %v272
  %436 = vst.msk [vmem:[%s3 + $0x78] sm:$0xff] %vm421, %v274
  %437 = vst [vmem:[%s3 + $0x80] sm:$0xff] %v278
  %438 = vst.msk [vmem:[%s3 + $0x88] sm:$0xff] %vm421, %v280
  %439 = vst [vmem:[%s3 + $0x90] sm:$0xff] %v284
  %440 = vst.msk [vmem:[%s3 + $0x98] sm:$0xff] %vm421, %v286
  %441 = vst [vmem:[%s3 + $0xa0] sm:$0xff] %v290
  %442 = vst.msk [vmem:[%s3 + $0xa8] sm:$0xff] %vm421, %v292
  %443 = vst [vmem:[%s3 + $0xb0] sm:$0xff] %v296
  %444 = vst.msk [vmem:[%s3 + $0xb8] sm:$0xff] %vm421, %v298
  %445 = vst [vmem:[%s3 + $0xc0] sm:$0xff] %v302
  %446 = vst.msk [vmem:[%s3 + $0xc8] sm:$0xff] %vm421, %v304
  %447 = vst [vmem:[%s3 + $0xd0] sm:$0xff] %v308
  %448 = vst.msk [vmem:[%s3 + $0xd8] sm:$0xff] %vm421, %v310
  %449 = vst [vmem:[%s3 + $0xe0] sm:$0xff] %v314
  %450 = vst.msk [vmem:[%s3 + $0xe8] sm:$0xff] %vm421, %v316
  %451 = vst [vmem:[%s3 + $0xf0] sm:$0xff] %v320
  %452 = vst.msk [vmem:[%s3 + $0xf8] sm:$0xff] %vm421, %v322
  %453 = vst [vmem:[%s3 + $0x100] sm:$0xff] %v326
  %454 = vst.msk [vmem:[%s3 + $0x108] sm:$0xff] %vm421, %v328
  %455 = vst [vmem:[%s3 + $0x110] sm:$0xff] %v332
  %456 = vst.msk [vmem:[%s3 + $0x118] sm:$0xff] %vm421, %v334
  %457 = vst [vmem:[%s3 + $0x120] sm:$0xff] %v338
  %458 = vst.msk [vmem:[%s3 + $0x128] sm:$0xff] %vm421, %v340
  %459 = vst [vmem:[%s3 + $0x130] sm:$0xff] %v344
  %460 = vst.msk [vmem:[%s3 + $0x138] sm:$0xff] %vm421, %v346
  %461 = vst [vmem:[%s3 + $0x140] sm:$0xff] %v350
  %462 = vst.msk [vmem:[%s3 + $0x148] sm:$0xff] %vm421, %v352
  %463 = vst [vmem:[%s3 + $0x150] sm:$0xff] %v356
  %464 = vst.msk [vmem:[%s3 + $0x158] sm:$0xff] %vm421, %v358
  %465 = vst [vmem:[%s3 + $0x160] sm:$0xff] %v362
  %466 = vst.msk [vmem:[%s3 + $0x168] sm:$0xff] %vm421, %v364
  %467 = vst [vmem:[%s3 + $0x170] sm:$0xff] %v368
  %468 = vst.msk [vmem:[%s3 + $0x178] sm:$0xff] %vm421, %v370
  %469 = vst [vmem:[%s3 + $0x180] sm:$0xff] %v374
  %470 = vst.msk [vmem:[%s3 + $0x188] sm:$0xff] %vm421, %v376
  %471 = vst [vmem:[%s3 + $0x190] sm:$0xff] %v380
  %472 = vst.msk [vmem:[%s3 + $0x198] sm:$0xff] %vm421, %v382
  %473 = vst [vmem:[%s3 + $0x1a0] sm:$0xff] %v386
  %474 = vst.msk [vmem:[%s3 + $0x1a8] sm:$0xff] %vm421, %v388
  %475 = vst [vmem:[%s3 + $0x1b0] sm:$0xff] %v392
  %476 = vst.msk [vmem:[%s3 + $0x1b8] sm:$0xff] %vm421, %v394
  %477 = vst [vmem:[%s3 + $0x1c0] sm:$0xff] %v398
  %478 = vst.msk [vmem:[%s3 + $0x1c8] sm:$0xff] %vm421, %v400
  %479 = vst [vmem:[%s3 + $0x1d0] sm:$0xff] %v404
  %480 = vst.msk [vmem:[%s3 + $0x1d8] sm:$0xff] %vm421, %v406
  %481 = vst [vmem:[%s3 + $0x1e0] sm:$0xff] %v410
  %482 = vst.msk [vmem:[%s3 + $0x1e8] sm:$0xff] %vm421, %v412
  %483 = vst [vmem:[%s3 + $0x1f0] sm:$0xff] %v416
  %484 = vst.msk [vmem:[%s3 + $0x1f8] sm:$0xff] %vm421, %v418
  // Predicated region
  $region14: #{aggregation_forward.3} parent=0 // pred_check
    _
  $region15: #{aggregation_forward.3} parent=0 // pred_check_branch
    %486 = sbr.rel (0) target = $region17
  $region16: #{aggregation_forward.3} parent=0 // pred_region
    _
  $region17: #{aggregation_forward.3} parent=0 // pred_fallthru
    _
  // Predicated region
  $region18: #{aggregation_forward.3} parent=0 // pred_check
    _
  $region19: #{aggregation_forward.3} parent=0 // pred_check_branch
    %488 = sbr.rel (0) target = $region21
  $region20: #{aggregation_forward.3} parent=0 // pred_region
    _
  $region21: #{aggregation_forward.3} parent=0 // pred_fallthru
    _

// kernel: aggregation_forward.4
$region0: #{aggregation_forward.4}
  #allocation0 [shape = 'u32[]', space=smem, size = 0x4, offset = 0x4, fixed_abs, tag = 'smem constant byte address 0x4 - core index']
  #allocation1 [shape = 'u32[144,128]{1,0:T(1,128)}', space=vmem, size = 0x12000, scoped, tag = 'internal scratch']
  #allocation2 [shape = 's32[1]{0}', space=sflag, size = 0x4, scoped, tag = 'scoped memory for aggregation_forward.4']
  #allocation3 [shape = 'u8[512]{0}', space=smem, size = 0x200, scoped, tag = 'prefetched SMEM operand 0']
  %s0 = inlined_call_operand.vmem [shape: s32[2], index: 0, kind: input, shape index: {}]
  %s1 = inlined_call_operand.vmem [shape: s8[256,256], index: 1, kind: input, shape index: {}]
  %s2 = inlined_call_operand.vmem [shape: s8[256,256], index: 2, kind: input, shape index: {}]
  %s3 = inlined_call_operand.vmem [shape: bf16[256,3], index: 3, kind: input, shape index: {}]
  %s4 = inlined_call_operand.vmem [shape: f32[256,3], index: 4, kind: output, shape index: {}]
  %s5 = sld [smem:[#allocation0]]
  $region57: #{aggregation_forward.4} parent=0
    _
  %s7 = ssub.s32 1, %s5
  %s8 = scalar_select 0, %s7, %s5
  %s9 = sshll.u32 %s0, 4
  %s10 = int_to_ptr.vmem [resolvable:$true] %s9
  %12 = dma.vmem_to_smem %s10, 16, [#allocation3], [#allocation2]
  %13 = dma.done [#allocation2], 16
  %14 = sfence
  loop: start=0, step=1, limit=4
  $region2: #{aggregation_forward.4} parent=0 // loop_pre_header
    _
  $region3: #{aggregation_forward.4} parent=0 // loop_header
    %s16 = sphi 0, %s20
    %p17 = scmp.ge.s32.totalorder %s16, 4
    %s23 = sphi 0, %s35
    %s24 = sphi 0, %s31
    %s25 = sphi 0, %s23
    %s26 = sphi 0, %s24
    %s27 = sphi 0, %s25
    %s28 = sphi 0, %s26
    %s40 = sphi 0, %s42
    %s43 = sphi 0, %s40
    %s44 = sphi 0, %s43
    %s60 = sphi 0, %s44
    %s68 = sphi 0, %s70
    %s71 = sphi 0, %s68
    %s72 = sphi 0, %s71
    %s88 = sphi 0, %s72
    %s94 = sphi 0, %s96
    %s97 = sphi 0, %s94
    %s98 = sphi 0, %s97
    %s114 = sphi 0, %s98
    %s120 = sphi 0, %s122
    %s123 = sphi 0, %s120
    %s124 = sphi 0, %s123
    %s140 = sphi 0, %s124
  $region4: #{aggregation_forward.4} parent=0 // loop_header_branch
    %19 = sbr.rel (%p17) target = $region8
  $region5: #{aggregation_forward.4} parent=0 // loop_body
    %s21 = ssub.s32 %s16, 1
    %s22 = ssub.s32 %s16, 2
    %s29 = sadd.s32 1, %s24
    %p30 = scmp.ge.s32.totalorder %s29, 1
    %s31 = scalar_select %p30, 0, %s29
    %s32 = sadd.s32 1, %s23
    %s33 = scalar_select %p30, %s32, %s23
    %p34 = scmp.ge.s32.totalorder %s33, 2
    %s35 = scalar_select %p34, 0, %s33
    %s36 = ssub.s32 %s23, %s35
    %s37 = ssub.s32 %s24, %s31
    %s38 = sor.u32 %s36, %s37
    %p39 = scmp.eq.s32.totalorder %s38, 0
    %s41 = sadd.s32 %s40, 1
    %s42 = scalar_select %p39, %s40, %s41
    %p45 = pneg %p39
    %p46 = scmp.eq.s32.totalorder %s16, 1
    %p47 = por %p45, %p46
    %p48 = scmp.ne.s32.totalorder %s40, %s43
    %p49 = scmp.eq.s32.totalorder %s16, 0
    %p50 = por %p48, %p49
    %p51 = scmp.ne.s32.totalorder %s40, %s43
    %p52 = scmp.eq.s32.totalorder %s21, 1
    %p53 = por %p51, %p52
    %p54 = scmp.ne.s32.totalorder %s43, %s44
    %p55 = scmp.eq.s32.totalorder %s21, 0
    %p56 = por %p54, %p55
    %p57 = scmp.ne.s32.totalorder %s43, %s44
    %p58 = scmp.eq.s32.totalorder %s22, 1
    %p59 = por %p57, %p58
    %p61 = scmp.ne.s32.totalorder %s44, %s60
    %p62 = scmp.eq.s32.totalorder %s22, 0
    %p63 = por %p61, %p62
    %s64 = ssub.s32 %s23, %s35
    %s65 = ssub.s32 %s24, %s31
    %s66 = sor.u32 %s64, %s65
    %p67 = scmp.eq.s32.totalorder %s66, 0
    %s69 = sadd.s32 %s68, 1
    %s70 = scalar_select %p67, %s68, %s69
    %p73 = pneg %p67
    %p74 = scmp.eq.s32.totalorder %s16, 1
    %p75 = por %p73, %p74
    %p76 = scmp.ne.s32.totalorder %s68, %s71
    %p77 = scmp.eq.s32.totalorder %s16, 0
    %p78 = por %p76, %p77
    %p79 = scmp.ne.s32.totalorder %s68, %s71
    %p80 = scmp.eq.s32.totalorder %s21, 1
    %p81 = por %p79, %p80
    %p82 = scmp.ne.s32.totalorder %s71, %s72
    %p83 = scmp.eq.s32.totalorder %s21, 0
    %p84 = por %p82, %p83
    %p85 = scmp.ne.s32.totalorder %s71, %s72
    %p86 = scmp.eq.s32.totalorder %s22, 1
    %p87 = por %p85, %p86
    %p89 = scmp.ne.s32.totalorder %s72, %s88
    %p90 = scmp.eq.s32.totalorder %s22, 0
    %p91 = por %p89, %p90
    %s92 = ssub.s32 %s24, %s31
    %p93 = scmp.eq.s32.totalorder %s92, 0
    %s95 = sadd.s32 %s94, 1
    %s96 = scalar_select %p93, %s94, %s95
    %p99 = pneg %p93
    %p100 = scmp.eq.s32.totalorder %s16, 1
    %p101 = por %p99, %p100
    %p102 = scmp.ne.s32.totalorder %s94, %s97
    %p103 = scmp.eq.s32.totalorder %s16, 0
    %p104 = por %p102, %p103
    %p105 = scmp.ne.s32.totalorder %s94, %s97
    %p106 = scmp.eq.s32.totalorder %s21, 1
    %p107 = por %p105, %p106
    %p108 = scmp.ne.s32.totalorder %s97, %s98
    %p109 = scmp.eq.s32.totalorder %s21, 0
    %p110 = por %p108, %p109
    %p111 = scmp.ne.s32.totalorder %s97, %s98
    %p112 = scmp.eq.s32.totalorder %s22, 1
    %p113 = por %p111, %p112
    %p115 = scmp.ne.s32.totalorder %s98, %s114
    %p116 = scmp.eq.s32.totalorder %s22, 0
    %p117 = por %p115, %p116
    %s118 = ssub.s32 %s23, %s35
    %p119 = scmp.eq.s32.totalorder %s118, 0
    %s121 = sadd.s32 %s120, 1
    %s122 = scalar_select %p119, %s120, %s121
    %p125 = pneg %p119
    %p126 = scmp.eq.s32.totalorder %s16, 1
    %p127 = por %p125, %p126
    %p128 = scmp.ne.s32.totalorder %s120, %s123
    %p129 = scmp.eq.s32.totalorder %s16, 0
    %p130 = por %p128, %p129
    %p131 = scmp.ne.s32.totalorder %s120, %s123
    %p132 = scmp.eq.s32.totalorder %s21, 1
    %p133 = por %p131, %p132
    %p134 = scmp.ne.s32.totalorder %s123, %s124
    %p135 = scmp.eq.s32.totalorder %s21, 0
    %p136 = por %p134, %p135
    %p137 = scmp.ne.s32.totalorder %s123, %s124
    %p138 = scmp.eq.s32.totalorder %s22, 1
    %p139 = por %p137, %p138
    %p141 = scmp.ne.s32.totalorder %s124, %s140
    %p142 = scmp.eq.s32.totalorder %s22, 0
    %p143 = por %p141, %p142
    %p144 = scmp.le.s32.totalorder 1, %s16
    %p145 = scmp.lt.s32.totalorder %s16, 3
    %p146 = pnand %p144, %p145
    %p147 = pneg %p146
    // Predicated region
    $region9: #{aggregation_forward.4} parent=5 // pred_check
      _
    $region10: #{aggregation_forward.4} parent=5 // pred_check_branch
      %149 = sbr.rel (%p146) target = $region12
    $region11: #{aggregation_forward.4} parent=5 // pred_region
      %s150 = ssub.s32 %s16, 1
      // Predicated region
      $region13: #{aggregation_forward.4} parent=11 // pred_check
        %p151 = pneg %p110
      $region14: #{aggregation_forward.4} parent=11 // pred_check_branch
        %153 = sbr.rel (%p151) target = $region16
      $region15: #{aggregation_forward.4} parent=11 // pred_region
        %s154 = smul.u32 32, %s26
        %p155 = scmp.lt.s32.totalorder %s154, 31
        %s156 = scalar_select %p155, %s154, 31
        %s157 = smul.addr %s156, 4
        %s158 = scalar_lea.vmem %s3, %s157
        %s159 = smul.u32 32, %s26
      $region16: #{aggregation_forward.4} parent=11 // pred_fallthru
        _
    $region12: #{aggregation_forward.4} parent=5 // pred_fallthru
      _
    %p160 = scmp.lt.s32.totalorder %s16, 2
    // Predicated region
    $region17: #{aggregation_forward.4} parent=5 // pred_check
      %p161 = pneg %p160
    $region18: #{aggregation_forward.4} parent=5 // pred_check_branch
      %163 = sbr.rel (%p161) target = $region20
    $region19: #{aggregation_forward.4} parent=5 // pred_region
      // Predicated region
      $region21: #{aggregation_forward.4} parent=19 // pred_check
        %p164 = pneg %p50
      $region22: #{aggregation_forward.4} parent=19 // pred_check_branch
        %166 = sbr.rel (%p164) target = $region24
      $region23: #{aggregation_forward.4} parent=19 // pred_region
        %s167 = smul.u32 4, %s23
        %s168 = smul.u32 2, %s24
        %p169 = scmp.lt.s32.totalorder %s167, 7
        %s170 = scalar_select %p169, %s167, 7
        %p171 = scmp.lt.s32.totalorder %s168, 1
        %s172 = scalar_select %p171, %s168, 1
        %s173 = smul.addr %s170, 2
        %s174 = sadd.s32 %s172, %s173
        %s175 = smul.addr %s174, 8
        %s176 = scalar_lea.vmem %s1, %s175
        %s177 = smul.u32 4, %s23
        %s178 = smul.u32 2, %s24
      $region24: #{aggregation_forward.4} parent=19 // pred_fallthru
        _
      // Predicated region
      $region25: #{aggregation_forward.4} parent=19 // pred_check
        %p179 = pneg %p78
      $region26: #{aggregation_forward.4} parent=19 // pred_check_branch
        %181 = sbr.rel (%p179) target = $region28
      $region27: #{aggregation_forward.4} parent=19 // pred_region
        %s182 = smul.u32 4, %s23
        %s183 = smul.u32 2, %s24
        %p184 = scmp.lt.s32.totalorder %s182, 7
        %s185 = scalar_select %p184, %s182, 7
        %p186 = scmp.lt.s32.totalorder %s183, 1
        %s187 = scalar_select %p186, %s183, 1
        %s188 = smul.addr %s185, 2
        %s189 = sadd.s32 %s187, %s188
        %s190 = smul.addr %s189, 8
        %s191 = scalar_lea.vmem %s2, %s190
        %s192 = smul.u32 4, %s23
        %s193 = smul.u32 2, %s24
      $region28: #{aggregation_forward.4} parent=19 // pred_fallthru
        _
    $region20: #{aggregation_forward.4} parent=5 // pred_fallthru
      _
    %p194 = scmp.le.s32.totalorder 1, %s16
    %p195 = scmp.lt.s32.totalorder %s16, 3
    %p196 = pnand %p194, %p195
    %p197 = pneg %p196
    // Predicated region
    $region29: #{aggregation_forward.4} parent=5 // pred_check
      _
    $region30: #{aggregation_forward.4} parent=5 // pred_check_branch
      %199 = sbr.rel (%p196) target = $region32
    $region31: #{aggregation_forward.4} parent=5 // pred_region
      %s200 = ssub.s32 %s16, 1
      %s201 = smul.u32 4, %s25
      %s202 = smul.u32 2, %s26
      %p203 = scmp.lt.s32.totalorder %s201, 7
      %s204 = scalar_select %p203, %s201, 7
      %p205 = scmp.lt.s32.totalorder %s202, 1
      %s206 = scalar_select %p205, %s202, 1
      %s207 = smul.addr %s204, 2
      %s208 = sadd.s32 %s206, %s207
      %s209 = smul.addr %s208, 8
      %s210 = scalar_lea.vmem %s1, %s209
      %p211 = pneg %p56
      %p212 = pneg %p53
      %s213 = smul.u32 4, %s25
      %s214 = smul.u32 2, %s26
      %p215 = scmp.lt.s32.totalorder %s213, 7
      %s216 = scalar_select %p215, %s213, 7
      %p217 = scmp.lt.s32.totalorder %s214, 1
      %s218 = scalar_select %p217, %s214, 1
      %s219 = smul.addr %s216, 2
      %s220 = sadd.s32 %s218, %s219
      %s221 = smul.addr %s220, 8
      %s222 = scalar_lea.vmem %s2, %s221
      %p223 = pneg %p84
      %p224 = pneg %p81
      %s225 = smul.u32 32, %s26
      %p226 = scmp.lt.s32.totalorder %s225, 31
      %s227 = scalar_select %p226, %s225, 31
      %s228 = smul.addr %s227, 4
      %s229 = scalar_lea.vmem %s3, %s228
      %p230 = pneg %p110
      %p231 = pneg %p107
      %p232 = pneg %p136
      %p233 = pneg %p133
      %s234 = smul.u32 16, %s25
      %p235 = scmp.lt.s32.totalorder %s234, 31
      %s236 = scalar_select %p235, %s234, 31
      %s237 = smul.addr %s236, 8
      %s238 = scalar_lea.vmem %s4, %s237
      %s239 = smul.u32 4, %s25
      %s240 = smul.u32 2, %s26
      %p241 = scmp.lt.s32.totalorder %s239, 7
      %s242 = scalar_select %p241, %s239, 7
      %p243 = scmp.lt.s32.totalorder %s240, 1
      %s244 = scalar_select %p243, %s240, 1
      %s245 = smul.addr %s242, 2
      %s246 = sadd.s32 %s244, %s245
      %s247 = smul.addr %s246, 8
      %s248 = scalar_lea.vmem %s1, %s247
      %s249 = smul.u32 4, %s25
      %s250 = smul.u32 2, %s26
      %s251 = smul.u32 4, %s25
      %s252 = smul.u32 2, %s26
      %p253 = scmp.lt.s32.totalorder %s251, 7
      %s254 = scalar_select %p253, %s251, 7
      %p255 = scmp.lt.s32.totalorder %s252, 1
      %s256 = scalar_select %p255, %s252, 1
      %s257 = smul.addr %s254, 2
      %s258 = sadd.s32 %s256, %s257
      %s259 = smul.addr %s258, 8
      %s260 = scalar_lea.vmem %s2, %s259
      %s261 = smul.u32 4, %s25
      %s262 = smul.u32 2, %s26
      %s263 = smul.u32 32, %s26
      %p264 = scmp.lt.s32.totalorder %s263, 31
      %s265 = scalar_select %p264, %s263, 31
      %s266 = smul.addr %s265, 4
      %s267 = scalar_lea.vmem %s3, %s266
      %s268 = smul.u32 32, %s26
      %s269 = smul.u32 16, %s25
      %p270 = scmp.lt.s32.totalorder %s269, 31
      %s271 = scalar_select %p270, %s269, 31
      %s272 = smul.addr %s271, 8
      %s273 = scalar_lea.vmem %s4, %s272
      %s274 = smul.u32 16, %s25
      %p276 = scmp.eq.s32.totalorder %s26, 0
      // Predicated region
      $region33: #{aggregation_forward.4} parent=31 // pred_check
        %p277 = pneg %p276
      $region34: #{aggregation_forward.4} parent=31 // pred_check_branch
        %279 = sbr.rel (%p277) target = $region36
      $region35: #{aggregation_forward.4} parent=31 // pred_region
        %vm280 = vcmask 23552
        %281 = vst.msk [vmem:[%s273] sm:$0xff] %vm280, 0.0
        %282 = vst.msk [vmem:[%s273 + $0x8] sm:$0xff] %vm280, 0.0
        %283 = vst.msk [vmem:[%s273 + $0x10] sm:$0xff] %vm280, 0.0
        %284 = vst.msk [vmem:[%s273 + $0x18] sm:$0xff] %vm280, 0.0
        %285 = vst.msk [vmem:[%s273 + $0x20] sm:$0xff] %vm280, 0.0
        %286 = vst.msk [vmem:[%s273 + $0x28] sm:$0xff] %vm280, 0.0
        %287 = vst.msk [vmem:[%s273 + $0x30] sm:$0xff] %vm280, 0.0
        %288 = vst.msk [vmem:[%s273 + $0x38] sm:$0xff] %vm280, 0.0
        %289 = vst.msk [vmem:[%s273 + $0x40] sm:$0xff] %vm280, 0.0
        %290 = vst.msk [vmem:[%s273 + $0x48] sm:$0xff] %vm280, 0.0
        %291 = vst.msk [vmem:[%s273 + $0x50] sm:$0xff] %vm280, 0.0
        %292 = vst.msk [vmem:[%s273 + $0x58] sm:$0xff] %vm280, 0.0
        %293 = vst.msk [vmem:[%s273 + $0x60] sm:$0xff] %vm280, 0.0
        %294 = vst.msk [vmem:[%s273 + $0x68] sm:$0xff] %vm280, 0.0
        %295 = vst.msk [vmem:[%s273 + $0x70] sm:$0xff] %vm280, 0.0
        %296 = vst.msk [vmem:[%s273 + $0x78] sm:$0xff] %vm280, 0.0
      $region36: #{aggregation_forward.4} parent=31 // pred_fallthru
        _
      %s297 = sadd.s32 %s25, %s26
      %s298 = sld [smem:[#allocation3 + %s297]]
      %p299 = scmp.ne.s32.totalorder %s298, 0
      // Predicated region
      $region37: #{aggregation_forward.4} parent=31 // pred_check
        %p300 = pneg %p299
      $region38: #{aggregation_forward.4} parent=31 // pred_check_branch
        %302 = sbr.rel (%p300) target = $region40
      $region39: #{aggregation_forward.4} parent=31 // pred_region
        %v303 = vld [vmem:[%s248] sm:$0xff]
        %v304 = vld [vmem:[%s248 + $0x8] sm:$0xff]
        %v305 = vld [vmem:[%s248 + $0x10] sm:$0xff]
        %v306 = vld [vmem:[%s248 + $0x18] sm:$0xff]
        %v307 = vld [vmem:[%s248 + $0x20] sm:$0xff]
        %v308 = vld [vmem:[%s248 + $0x28] sm:$0xff]
        %v309 = vld [vmem:[%s248 + $0x30] sm:$0xff]
        %v310 = vld [vmem:[%s248 + $0x38] sm:$0xff]
        %v311 = vunpack.c.0.s8 %v303
        %v312 = vunpack.c.0.s8 %v304
        %v313 = vunpack.c.1.s8 %v303
        %v314 = vunpack.c.1.s8 %v304
        %v315 = vunpack.c.2.s8 %v303
        %v316 = vunpack.c.2.s8 %v304
        %v317 = vunpack.c.3.s8 %v303
        %v318 = vunpack.c.3.s8 %v304
        %v319 = vunpack.c.0.s8 %v305
        %v320 = vunpack.c.0.s8 %v306
        %v321 = vunpack.c.1.s8 %v305
        %v322 = vunpack.c.1.s8 %v306
        %v323 = vunpack.c.2.s8 %v305
        %v324 = vunpack.c.2.s8 %v306
        %v325 = vunpack.c.3.s8 %v305
        %v326 = vunpack.c.3.s8 %v306
        %v327 = vunpack.c.0.s8 %v307
        %v328 = vunpack.c.0.s8 %v308
        %v329 = vunpack.c.1.s8 %v307
        %v330 = vunpack.c.1.s8 %v308
        %v331 = vunpack.c.2.s8 %v307
        %v332 = vunpack.c.2.s8 %v308
        %v333 = vunpack.c.3.s8 %v307
        %v334 = vunpack.c.3.s8 %v308
        %v335 = vunpack.c.0.s8 %v309
        %v336 = vunpack.c.0.s8 %v310
        %v337 = vunpack.c.1.s8 %v309
        %v338 = vunpack.c.1.s8 %v310
        %v339 = vunpack.c.2.s8 %v309
        %v340 = vunpack.c.2.s8 %v310
        %v341 = vunpack.c.3.s8 %v309
        %v342 = vunpack.c.3.s8 %v310
        %v343 = vcvt.s32.f32 %v311
        %v344 = vcvt.s32.f32 %v312
        %v345 = vcvt.s32.f32 %v313
        %v346 = vcvt.s32.f32 %v314
        %v347 = vcvt.s32.f32 %v315
        %v348 = vcvt.s32.f32 %v316
        %v349 = vcvt.s32.f32 %v317
        %v350 = vcvt.s32.f32 %v318
        %v351 = vcvt.s32.f32 %v319
        %v352 = vcvt.s32.f32 %v320
        %v353 = vcvt.s32.f32 %v321
        %v354 = vcvt.s32.f32 %v322
        %v355 = vcvt.s32.f32 %v323
        %v356 = vcvt.s32.f32 %v324
        %v357 = vcvt.s32.f32 %v325
        %v358 = vcvt.s32.f32 %v326
        %v359 = vcvt.s32.f32 %v327
        %v360 = vcvt.s32.f32 %v328
        %v361 = vcvt.s32.f32 %v329
        %v362 = vcvt.s32.f32 %v330
        %v363 = vcvt.s32.f32 %v331
        %v364 = vcvt.s32.f32 %v332
        %v365 = vcvt.s32.f32 %v333
        %v366 = vcvt.s32.f32 %v334
        %v367 = vcvt.s32.f32 %v335
        %v368 = vcvt.s32.f32 %v336
        %v369 = vcvt.s32.f32 %v337
        %v370 = vcvt.s32.f32 %v338
        %v371 = vcvt.s32.f32 %v339
        %v372 = vcvt.s32.f32 %v340
        %v373 = vcvt.s32.f32 %v341
        %v374 = vcvt.s32.f32 %v342
        %v375 = vld [vmem:[%s260] sm:$0xff]
        %v376 = vld [vmem:[%s260 + $0x8] sm:$0xff]
        %v377 = vld [vmem:[%s260 + $0x10] sm:$0xff]
        %v378 = vld [vmem:[%s260 + $0x18] sm:$0xff]
        %v379 = vld [vmem:[%s260 + $0x20] sm:$0xff]
        %v380 = vld [vmem:[%s260 + $0x28] sm:$0xff]
        %v381 = vld [vmem:[%s260 + $0x30] sm:$0xff]
        %v382 = vld [vmem:[%s260 + $0x38] sm:$0xff]
        %v383 = vunpack.c.0.s8 %v375
        %v384 = vunpack.c.0.s8 %v376
        %v385 = vunpack.c.1.s8 %v375
        %v386 = vunpack.c.1.s8 %v376
        %v387 = vunpack.c.2.s8 %v375
        %v388 = vunpack.c.2.s8 %v376
        %v389 = vunpack.c.3.s8 %v375
        %v390 = vunpack.c.3.s8 %v376
        %v391 = vunpack.c.0.s8 %v377
        %v392 = vunpack.c.0.s8 %v378
        %v393 = vunpack.c.1.s8 %v377
        %v394 = vunpack.c.1.s8 %v378
        %v395 = vunpack.c.2.s8 %v377
        %v396 = vunpack.c.2.s8 %v378
        %v397 = vunpack.c.3.s8 %v377
        %v398 = vunpack.c.3.s8 %v378
        %v399 = vunpack.c.0.s8 %v379
        %v400 = vunpack.c.0.s8 %v380
        %v401 = vunpack.c.1.s8 %v379
        %v402 = vunpack.c.1.s8 %v380
        %v403 = vunpack.c.2.s8 %v379
        %v404 = vunpack.c.2.s8 %v380
        %v405 = vunpack.c.3.s8 %v379
        %v406 = vunpack.c.3.s8 %v380
        %v407 = vunpack.c.0.s8 %v381
        %v408 = vunpack.c.0.s8 %v382
        %v409 = vunpack.c.1.s8 %v381
        %v410 = vunpack.c.1.s8 %v382
        %v411 = vunpack.c.2.s8 %v381
        %v412 = vunpack.c.2.s8 %v382
        %v413 = vunpack.c.3.s8 %v381
        %v414 = vunpack.c.3.s8 %v382
        %v415 = vcvt.s32.f32 %v383
        %v416 = vcvt.s32.f32 %v384
        %v417 = vcvt.s32.f32 %v385
        %v418 = vcvt.s32.f32 %v386
        %v419 = vcvt.s32.f32 %v387
        %v420 = vcvt.s32.f32 %v388
        %v421 = vcvt.s32.f32 %v389
        %v422 = vcvt.s32.f32 %v390
        %v423 = vcvt.s32.f32 %v391
        %v424 = vcvt.s32.f32 %v392
        %v425 = vcvt.s32.f32 %v393
        %v426 = vcvt.s32.f32 %v394
        %v427 = vcvt.s32.f32 %v395
        %v428 = vcvt.s32.f32 %v396
        %v429 = vcvt.s32.f32 %v397
        %v430 = vcvt.s32.f32 %v398
        %v431 = vcvt.s32.f32 %v399
        %v432 = vcvt.s32.f32 %v400
        %v433 = vcvt.s32.f32 %v401
        %v434 = vcvt.s32.f32 %v402
        %v435 = vcvt.s32.f32 %v403
        %v436 = vcvt.s32.f32 %v404
        %v437 = vcvt.s32.f32 %v405
        %v438 = vcvt.s32.f32 %v406
        %v439 = vcvt.s32.f32 %v407
        %v440 = vcvt.s32.f32 %v408
        %v441 = vcvt.s32.f32 %v409
        %v442 = vcvt.s32.f32 %v410
        %v443 = vcvt.s32.f32 %v411
        %v444 = vcvt.s32.f32 %v412
        %v445 = vcvt.s32.f32 %v413
        %v446 = vcvt.s32.f32 %v414
        %v447 = vmul.f32 %v343, %v415
        %v448 = vmul.f32 %v344, %v416
        %v449 = vmul.f32 %v345, %v417
        %v450 = vmul.f32 %v346, %v418
        %v451 = vmul.f32 %v347, %v419
        %v452 = vmul.f32 %v348, %v420
        %v453 = vmul.f32 %v349, %v421
        %v454 = vmul.f32 %v350, %v422
        %v455 = vmul.f32 %v351, %v423
        %v456 = vmul.f32 %v352, %v424
        %v457 = vmul.f32 %v353, %v425
        %v458 = vmul.f32 %v354, %v426
        %v459 = vmul.f32 %v355, %v427
        %v460 = vmul.f32 %v356, %v428
        %v461 = vmul.f32 %v357, %v429
        %v462 = vmul.f32 %v358, %v430
        %v463 = vmul.f32 %v359, %v431
        %v464 = vmul.f32 %v360, %v432
        %v465 = vmul.f32 %v361, %v433
        %v466 = vmul.f32 %v362, %v434
        %v467 = vmul.f32 %v363, %v435
        %v468 = vmul.f32 %v364, %v436
        %v469 = vmul.f32 %v365, %v437
        %v470 = vmul.f32 %v366, %v438
        %v471 = vmul.f32 %v367, %v439
        %v472 = vmul.f32 %v368, %v440
        %v473 = vmul.f32 %v369, %v441
        %v474 = vmul.f32 %v370, %v442
        %v475 = vmul.f32 %v371, %v443
        %v476 = vmul.f32 %v372, %v444
        %v477 = vmul.f32 %v373, %v445
        %v478 = vmul.f32 %v374, %v446
        %v479 = vpack.c.bf16 %v449, %v447
        %v480 = vpack.c.bf16 %v450, %v448
        %v481 = vpack.c.bf16 %v453, %v451
        %v482 = vpack.c.bf16 %v454, %v452
        %v483 = vpack.c.bf16 %v457, %v455
        %v484 = vpack.c.bf16 %v458, %v456
        %v485 = vpack.c.bf16 %v461, %v459
        %v486 = vpack.c.bf16 %v462, %v460
        %v487 = vpack.c.bf16 %v465, %v463
        %v488 = vpack.c.bf16 %v466, %v464
        %v489 = vpack.c.bf16 %v469, %v467
        %v490 = vpack.c.bf16 %v470, %v468
        %v491 = vpack.c.bf16 %v473, %v471
        %v492 = vpack.c.bf16 %v474, %v472
        %v493 = vpack.c.bf16 %v477, %v475
        %v494 = vpack.c.bf16 %v478, %v476
        %v495 = vld [vmem:[%s273] sm:$0xff]
        %v496 = vld [vmem:[%s273 + $0x8] sm:$0xff]
        %v497 = vld [vmem:[%s273 + $0x10] sm:$0xff]
        %v498 = vld [vmem:[%s273 + $0x18] sm:$0xff]
        %v499 = vld [vmem:[%s273 + $0x20] sm:$0xff]
        %v500 = vld [vmem:[%s273 + $0x28] sm:$0xff]
        %v501 = vld [vmem:[%s273 + $0x30] sm:$0xff]
        %v502 = vld [vmem:[%s273 + $0x38] sm:$0xff]
        %v503 = vld [vmem:[%s273 + $0x40] sm:$0xff]
        %v504 = vld [vmem:[%s273 + $0x48] sm:$0xff]
        %v505 = vld [vmem:[%s273 + $0x50] sm:$0xff]
        %v506 = vld [vmem:[%s273 + $0x58] sm:$0xff]
        %v507 = vld [vmem:[%s273 + $0x60] sm:$0xff]
        %v508 = vld [vmem:[%s273 + $0x68] sm:$0xff]
        %v509 = vld [vmem:[%s273 + $0x70] sm:$0xff]
        %v510 = vld [vmem:[%s273 + $0x78] sm:$0xff]
        %v511 = vld [vmem:[%s267] sm:$0xf]
        %v512 = vld [vmem:[%s267 + $0x4] sm:$0xf]
        %v513 = vld [vmem:[%s267 + $0x8] sm:$0xf]
        %v514 = vld [vmem:[%s267 + $0xc] sm:$0xf]
        %v515 = vld [vmem:[%s267 + $0x10] sm:$0xf]
        %v516 = vld [vmem:[%s267 + $0x14] sm:$0xf]
        %v517 = vld [vmem:[%s267 + $0x18] sm:$0xf]
        %v518 = vld [vmem:[%s267 + $0x1c] sm:$0xf]
        %v519 = vld [vmem:[%s267 + $0x20] sm:$0xf]
        %v520 = vld [vmem:[%s267 + $0x24] sm:$0xf]
        %v521 = vld [vmem:[%s267 + $0x28] sm:$0xf]
        %v522 = vld [vmem:[%s267 + $0x2c] sm:$0xf]
        %v523 = vld [vmem:[%s267 + $0x30] sm:$0xf]
        %v524 = vld [vmem:[%s267 + $0x34] sm:$0xf]
        %v525 = vld [vmem:[%s267 + $0x38] sm:$0xf]
        %v526 = vld [vmem:[%s267 + $0x3c] sm:$0xf]
        %v527 = vld [vmem:[%s267 + $0x40] sm:$0xf]
        %v528 = vld [vmem:[%s267 + $0x44] sm:$0xf]
        %v529 = vld [vmem:[%s267 + $0x48] sm:$0xf]
        %v530 = vld [vmem:[%s267 + $0x4c] sm:$0xf]
        %v531 = vld [vmem:[%s267 + $0x50] sm:$0xf]
        %v532 = vld [vmem:[%s267 + $0x54] sm:$0xf]
        %v533 = vld [vmem:[%s267 + $0x58] sm:$0xf]
        %v534 = vld [vmem:[%s267 + $0x5c] sm:$0xf]
        %v535 = vld [vmem:[%s267 + $0x60] sm:$0xf]
        %v536 = vld [vmem:[%s267 + $0x64] sm:$0xf]
        %v537 = vld [vmem:[%s267 + $0x68] sm:$0xf]
        %v538 = vld [vmem:[%s267 + $0x6c] sm:$0xf]
        %v539 = vld [vmem:[%s267 + $0x70] sm:$0xf]
        %v540 = vld [vmem:[%s267 + $0x74] sm:$0xf]
        %v541 = vld [vmem:[%s267 + $0x78] sm:$0xf]
        %v542 = vld [vmem:[%s267 + $0x7c] sm:$0xf]
        %v575 = vunpack.c.l.b16 %v511
        %v576 = vunpack.c.l.b16 %v512
        %v577 = vunpack.c.l.b16 %v513
        %v578 = vunpack.c.l.b16 %v514
        %v579 = vunpack.c.l.b16 %v515
        %v580 = vunpack.c.l.b16 %v516
        %v581 = vunpack.c.l.b16 %v517
        %v582 = vunpack.c.l.b16 %v518
        %v583 = vunpack.c.l.b16 %v519
        %v584 = vunpack.c.l.b16 %v520
        %v585 = vunpack.c.l.b16 %v521
        %v586 = vunpack.c.l.b16 %v522
        %v587 = vunpack.c.l.b16 %v523
        %v588 = vunpack.c.l.b16 %v524
        %v589 = vunpack.c.l.b16 %v525
        %v590 = vunpack.c.l.b16 %v526
        %v591 = vunpack.c.l.b16 %v527
        %v592 = vunpack.c.l.b16 %v528
        %v593 = vunpack.c.l.b16 %v529
        %v594 = vunpack.c.l.b16 %v530
        %v595 = vunpack.c.l.b16 %v531
        %v596 = vunpack.c.l.b16 %v532
        %v597 = vunpack.c.l.b16 %v533
        %v598 = vunpack.c.l.b16 %v534
        %v599 = vunpack.c.l.b16 %v535
        %v600 = vunpack.c.l.b16 %v536
        %v601 = vunpack.c.l.b16 %v537
        %v602 = vunpack.c.l.b16 %v538
        %v603 = vunpack.c.l.b16 %v539
        %v604 = vunpack.c.l.b16 %v540
        %v605 = vunpack.c.l.b16 %v541
        %v606 = vunpack.c.l.b16 %v542
        %v607 = vpack.c.b16 %v576, %v575
        %v608 = vpack.c.b16 %v578, %v577
        %v609 = vpack.c.b16 %v580, %v579
        %v610 = vpack.c.b16 %v582, %v581
        %v611 = vpack.c.b16 %v584, %v583
        %v612 = vpack.c.b16 %v586, %v585
        %v613 = vpack.c.b16 %v588, %v587
        %v614 = vpack.c.b16 %v590, %v589
        %v615 = vpack.c.b16 %v592, %v591
        %v616 = vpack.c.b16 %v594, %v593
        %v617 = vpack.c.b16 %v596, %v595
        %v618 = vpack.c.b16 %v598, %v597
        %v619 = vpack.c.b16 %v600, %v599
        %v620 = vpack.c.b16 %v602, %v601
        %v621 = vpack.c.b16 %v604, %v603
        %v622 = vpack.c.b16 %v606, %v605
        %639 = vmatprep.subr.bf16.mxu0 0
        %640 = vmatpush1.bf16.msra.mxu0 %v607
        %641 = vmatprep.subr.bf16.mxu0 0
        %642 = vmatpush1.bf16.msra.mxu0 %v608
        %643 = vmatprep.subr.bf16.mxu0 0
        %644 = vmatpush1.bf16.msra.mxu0 %v609
        %645 = vmatprep.subr.bf16.mxu0 0
        %646 = vmatpush1.bf16.msra.mxu0 %v610
        %647 = vmatprep.subr.bf16.mxu0 0
        %648 = vmatpush1.bf16.msra.mxu0 %v611
        %649 = vmatprep.subr.bf16.mxu0 0
        %650 = vmatpush1.bf16.msra.mxu0 %v612
        %651 = vmatprep.subr.bf16.mxu0 0
        %652 = vmatpush1.bf16.msra.mxu0 %v613
        %653 = vmatprep.subr.bf16.mxu0 0
        %654 = vmatpush1.bf16.msra.mxu0 %v614
        %655 = vmatprep.subr.bf16.mxu0 0
        %656 = vmatpush1.bf16.msra.mxu0 %v615
        %657 = vmatprep.subr.bf16.mxu0 0
        %658 = vmatpush1.bf16.msra.mxu0 %v616
        %659 = vmatprep.subr.bf16.mxu0 0
        %660 = vmatpush1.bf16.msra.mxu0 %v617
        %661 = vmatprep.subr.bf16.mxu0 0
        %662 = vmatpush1.bf16.msra.mxu0 %v618
        %663 = vmatprep.subr.bf16.mxu0 0
        %664 = vmatpush1.bf16.msra.mxu0 %v619
        %665 = vmatprep.subr.bf16.mxu0 0
        %666 = vmatpush1.bf16.msra.mxu0 %v620
        %667 = vmatprep.subr.bf16.mxu0 0
        %668 = vmatpush1.bf16.msra.mxu0 %v621
        %669 = vmatprep.subr.bf16.mxu0 0
        %670 = vmatpush1.bf16.msra.mxu0 %v622
        %671 = vmatprep.mubr.bf16.mxu0 %v480
        %672 = vmatmul.mubr.bf16.gmra.mrb[0].mxu0 %v479
        %v673 = vpop.f32.mrb[0].mxu0
        %v674 = vadd.f32 0.0, %v673
        %v675 = vpop.f32.mrb[0].mxu0
        %v676 = vpop.f32.mrb[0].mxu0
        %v677 = vadd.f32 0.0, %v676
        %v678 = vpop.f32.mrb[0].mxu0
        %679 = vmatprep.mubr.bf16.mxu0 %v482
        %680 = vmatmul.mubr.bf16.gmra.mrb[0].mxu0 %v481
        %v681 = vpop.f32.mrb[0].mxu0
        %v682 = vadd.f32 0.0, %v681
        %v683 = vpop.f32.mrb[0].mxu0
        %v684 = vpop.f32.mrb[0].mxu0
        %v685 = vadd.f32 0.0, %v684
        %v686 = vpop.f32.mrb[0].mxu0
        %687 = vmatprep.mubr.bf16.mxu0 %v484
        %688 = vmatmul.mubr.bf16.gmra.mrb[0].mxu0 %v483
        %v689 = vpop.f32.mrb[0].mxu0
        %v690 = vadd.f32 0.0, %v689
        %v691 = vpop.f32.mrb[0].mxu0
        %v692 = vpop.f32.mrb[0].mxu0
        %v693 = vadd.f32 0.0, %v692
        %v694 = vpop.f32.mrb[0].mxu0
        %695 = vmatprep.mubr.bf16.mxu0 %v486
        %696 = vmatmul.mubr.bf16.gmra.mrb[0].mxu0 %v485
        %v697 = vpop.f32.mrb[0].mxu0
        %v698 = vadd.f32 0.0, %v697
        %v699 = vpop.f32.mrb[0].mxu0
        %v700 = vpop.f32.mrb[0].mxu0
        %v701 = vadd.f32 0.0, %v700
        %v702 = vpop.f32.mrb[0].mxu0
        %703 = vmatprep.mubr.bf16.mxu0 %v488
        %704 = vmatmul.mubr.bf16.gmra.mrb[0].mxu0 %v487
        %v705 = vpop.f32.mrb[0].mxu0
        %v706 = vadd.f32 0.0, %v705
        %v707 = vpop.f32.mrb[0].mxu0
        %v708 = vpop.f32.mrb[0].mxu0
        %v709 = vadd.f32 0.0, %v708
        %v710 = vpop.f32.mrb[0].mxu0
        %711 = vmatprep.mubr.bf16.mxu0 %v490
        %712 = vmatmul.mubr.bf16.gmra.mrb[0].mxu0 %v489
        %v713 = vpop.f32.mrb[0].mxu0
        %v714 = vadd.f32 0.0, %v713
        %v715 = vpop.f32.mrb[0].mxu0
        %v716 = vpop.f32.mrb[0].mxu0
        %v717 = vadd.f32 0.0, %v716
        %v718 = vpop.f32.mrb[0].mxu0
        %719 = vmatprep.mubr.bf16.mxu0 %v492
        %720 = vmatmul.mubr.bf16.gmra.mrb[0].mxu0 %v491
        %v721 = vpop.f32.mrb[0].mxu0
        %v722 = vadd.f32 0.0, %v721
        %v723 = vpop.f32.mrb[0].mxu0
        %v724 = vpop.f32.mrb[0].mxu0
        %v725 = vadd.f32 0.0, %v724
        %v726 = vpop.f32.mrb[0].mxu0
        %727 = vmatprep.mubr.bf16.mxu0 %v494
        %728 = vmatmul.mubr.bf16.gmra.mrb[0].mxu0 %v493
        %v729 = vpop.f32.mrb[0].mxu0
        %v730 = vadd.f32 0.0, %v729
        %v731 = vpop.f32.mrb[0].mxu0
        %v732 = vpop.f32.mrb[0].mxu0
        %v733 = vadd.f32 0.0, %v732
        %v734 = vpop.f32.mrb[0].mxu0
        %735 = vdwg.mxu0
        %v736 = vadd.f32 %v495, %v674
        %v737 = vadd.f32 %v496, %v677
        %v738 = vadd.f32 %v497, %v682
        %v739 = vadd.f32 %v498, %v685
        %v740 = vadd.f32 %v499, %v690
        %v741 = vadd.f32 %v500, %v693
        %v742 = vadd.f32 %v501, %v698
        %v743 = vadd.f32 %v502, %v701
        %v744 = vadd.f32 %v503, %v706
        %v745 = vadd.f32 %v504, %v709
        %v746 = vadd.f32 %v505, %v714
        %v747 = vadd.f32 %v506, %v717
        %v748 = vadd.f32 %v507, %v722
        %v749 = vadd.f32 %v508, %v725
        %v750 = vadd.f32 %v509, %v730
        %v751 = vadd.f32 %v510, %v733
        %vm752 = vcmask 23552
        %753 = vst.msk [vmem:[%s273] sm:$0xff] %vm752, %v736
        %754 = vst.msk [vmem:[%s273 + $0x8] sm:$0xff] %vm752, %v737
        %755 = vst.msk [vmem:[%s273 + $0x10] sm:$0xff] %vm752, %v738
        %756 = vst.msk [vmem:[%s273 + $0x18] sm:$0xff] %vm752, %v739
        %757 = vst.msk [vmem:[%s273 + $0x20] sm:$0xff] %vm752, %v740
        %758 = vst.msk [vmem:[%s273 + $0x28] sm:$0xff] %vm752, %v741
        %759 = vst.msk [vmem:[%s273 + $0x30] sm:$0xff] %vm752, %v742
        %760 = vst.msk [vmem:[%s273 + $0x38] sm:$0xff] %vm752, %v743
        %761 = vst.msk [vmem:[%s273 + $0x40] sm:$0xff] %vm752, %v744
        %762 = vst.msk [vmem:[%s273 + $0x48] sm:$0xff] %vm752, %v745
        %763 = vst.msk [vmem:[%s273 + $0x50] sm:$0xff] %vm752, %v746
        %764 = vst.msk [vmem:[%s273 + $0x58] sm:$0xff] %vm752, %v747
        %765 = vst.msk [vmem:[%s273 + $0x60] sm:$0xff] %vm752, %v748
        %766 = vst.msk [vmem:[%s273 + $0x68] sm:$0xff] %vm752, %v749
        %767 = vst.msk [vmem:[%s273 + $0x70] sm:$0xff] %vm752, %v750
        %768 = vst.msk [vmem:[%s273 + $0x78] sm:$0xff] %vm752, %v751
      $region40: #{aggregation_forward.4} parent=31 // pred_fallthru
        _
      // Predicated region
      $region41: #{aggregation_forward.4} parent=31 // pred_check
        %p769 = pneg %p276
      $region42: #{aggregation_forward.4} parent=31 // pred_check_branch
        %771 = sbr.rel (%p769) target = $region44
      $region43: #{aggregation_forward.4} parent=31 // pred_region
        %v772 = vld [vmem:[%s273] sm:$0xff]
        %v773 = vld [vmem:[%s273 + $0x8] sm:$0xff]
        %v774 = vld [vmem:[%s273 + $0x10] sm:$0xff]
        %v775 = vld [vmem:[%s273 + $0x18] sm:$0xff]
        %v776 = vld [vmem:[%s273 + $0x20] sm:$0xff]
        %v777 = vld [vmem:[%s273 + $0x28] sm:$0xff]
        %v778 = vld [vmem:[%s273 + $0x30] sm:$0xff]
        %v779 = vld [vmem:[%s273 + $0x38] sm:$0xff]
        %v780 = vld [vmem:[%s273 + $0x40] sm:$0xff]
        %v781 = vld [vmem:[%s273 + $0x48] sm:$0xff]
        %v782 = vld [vmem:[%s273 + $0x50] sm:$0xff]
        %v783 = vld [vmem:[%s273 + $0x58] sm:$0xff]
        %v784 = vld [vmem:[%s273 + $0x60] sm:$0xff]
        %v785 = vld [vmem:[%s273 + $0x68] sm:$0xff]
        %v786 = vld [vmem:[%s273 + $0x70] sm:$0xff]
        %v787 = vld [vmem:[%s273 + $0x78] sm:$0xff]
        %v788 = vmax.f32 %v772, 1e-12
        %v789 = vmax.f32 %v773, 1e-12
        %v790 = vmax.f32 %v774, 1e-12
        %v791 = vmax.f32 %v775, 1e-12
        %v792 = vmax.f32 %v776, 1e-12
        %v793 = vmax.f32 %v777, 1e-12
        %v794 = vmax.f32 %v778, 1e-12
        %v795 = vmax.f32 %v779, 1e-12
        %v796 = vmax.f32 %v780, 1e-12
        %v797 = vmax.f32 %v781, 1e-12
        %v798 = vmax.f32 %v782, 1e-12
        %v799 = vmax.f32 %v783, 1e-12
        %v800 = vmax.f32 %v784, 1e-12
        %v801 = vmax.f32 %v785, 1e-12
        %v802 = vmax.f32 %v786, 1e-12
        %v803 = vmax.f32 %v787, 1e-12
        %v804 = vrcp.pop %v788
        %v805 = vrcp.pop %v789
        %v806 = vrcp.pop %v790
        %v807 = vrcp.pop %v791
        %v808 = vrcp.pop %v792
        %v809 = vrcp.pop %v793
        %v810 = vrcp.pop %v794
        %v811 = vrcp.pop %v795
        %v812 = vrcp.pop %v796
        %v813 = vrcp.pop %v797
        %v814 = vrcp.pop %v798
        %v815 = vrcp.pop %v799
        %v816 = vrcp.pop %v800
        %v817 = vrcp.pop %v801
        %v818 = vrcp.pop %v802
        %v819 = vrcp.pop %v803
        %821 = vset.pattern.permute.xlu0 2
        %822 = vperm.xlu0 %821, %v804
        %v823 = vpop.permute.xlu0 %822
        %826 = vset.pattern.permute.xlu0 2
        %827 = vperm.xlu0 %826, %v805
        %v828 = vpop.permute.xlu0 %827
        %831 = vset.pattern.permute.xlu0 2
        %832 = vperm.xlu0 %831, %v806
        %v833 = vpop.permute.xlu0 %832
        %836 = vset.pattern.permute.xlu0 2
        %837 = vperm.xlu0 %836, %v807
        %v838 = vpop.permute.xlu0 %837
        %841 = vset.pattern.permute.xlu0 2
        %842 = vperm.xlu0 %841, %v808
        %v843 = vpop.permute.xlu0 %842
        %846 = vset.pattern.permute.xlu0 2
        %847 = vperm.xlu0 %846, %v809
        %v848 = vpop.permute.xlu0 %847
        %851 = vset.pattern.permute.xlu0 2
        %852 = vperm.xlu0 %851, %v810
        %v853 = vpop.permute.xlu0 %852
        %856 = vset.pattern.permute.xlu0 2
        %857 = vperm.xlu0 %856, %v811
        %v858 = vpop.permute.xlu0 %857
        %861 = vset.pattern.permute.xlu0 2
        %862 = vperm.xlu0 %861, %v812
        %v863 = vpop.permute.xlu0 %862
        %866 = vset.pattern.permute.xlu0 2
        %867 = vperm.xlu0 %866, %v813
        %v868 = vpop.permute.xlu0 %867
        %871 = vset.pattern.permute.xlu0 2
        %872 = vperm.xlu0 %871, %v814
        %v873 = vpop.permute.xlu0 %872
        %876 = vset.pattern.permute.xlu0 2
        %877 = vperm.xlu0 %876, %v815
        %v878 = vpop.permute.xlu0 %877
        %881 = vset.pattern.permute.xlu0 2
        %882 = vperm.xlu0 %881, %v816
        %v883 = vpop.permute.xlu0 %882
        %886 = vset.pattern.permute.xlu0 2
        %887 = vperm.xlu0 %886, %v817
        %v888 = vpop.permute.xlu0 %887
        %891 = vset.pattern.permute.xlu0 2
        %892 = vperm.xlu0 %891, %v818
        %v893 = vpop.permute.xlu0 %892
        %896 = vset.pattern.permute.xlu0 2
        %897 = vperm.xlu0 %896, %v819
        %v898 = vpop.permute.xlu0 %897
        %v900 = vmul.f32 %v772, %v823
        %v901 = vmul.f32 %v773, %v828
        %v902 = vmul.f32 %v774, %v833
        %v903 = vmul.f32 %v775, %v838
        %v904 = vmul.f32 %v776, %v843
        %v905 = vmul.f32 %v777, %v848
        %v906 = vmul.f32 %v778, %v853
        %v907 = vmul.f32 %v779, %v858
        %v908 = vmul.f32 %v780, %v863
        %v909 = vmul.f32 %v781, %v868
        %v910 = vmul.f32 %v782, %v873
        %v911 = vmul.f32 %v783, %v878
        %v912 = vmul.f32 %v784, %v883
        %v913 = vmul.f32 %v785, %v888
        %v914 = vmul.f32 %v786, %v893
        %v915 = vmul.f32 %v787, %v898
        %vm916 = vcmask 23552
        %917 = vst.msk [vmem:[%s273] sm:$0xff] %vm916, %v900
        %918 = vst.msk [vmem:[%s273 + $0x8] sm:$0xff] %vm916, %v901
        %919 = vst.msk [vmem:[%s273 + $0x10] sm:$0xff] %vm916, %v902
        %920 = vst.msk [vmem:[%s273 + $0x18] sm:$0xff] %vm916, %v903
        %921 = vst.msk [vmem:[%s273 + $0x20] sm:$0xff] %vm916, %v904
        %922 = vst.msk [vmem:[%s273 + $0x28] sm:$0xff] %vm916, %v905
        %923 = vst.msk [vmem:[%s273 + $0x30] sm:$0xff] %vm916, %v906
        %924 = vst.msk [vmem:[%s273 + $0x38] sm:$0xff] %vm916, %v907
        %925 = vst.msk [vmem:[%s273 + $0x40] sm:$0xff] %vm916, %v908
        %926 = vst.msk [vmem:[%s273 + $0x48] sm:$0xff] %vm916, %v909
        %927 = vst.msk [vmem:[%s273 + $0x50] sm:$0xff] %vm916, %v910
        %928 = vst.msk [vmem:[%s273 + $0x58] sm:$0xff] %vm916, %v911
        %929 = vst.msk [vmem:[%s273 + $0x60] sm:$0xff] %vm916, %v912
        %930 = vst.msk [vmem:[%s273 + $0x68] sm:$0xff] %vm916, %v913
        %931 = vst.msk [vmem:[%s273 + $0x70] sm:$0xff] %vm916, %v914
        %932 = vst.msk [vmem:[%s273 + $0x78] sm:$0xff] %vm916, %v915
      $region44: #{aggregation_forward.4} parent=31 // pred_fallthru
        _
      %s933 = smul.u32 16, %s25
      %p934 = scmp.lt.s32.totalorder %s933, 31
      %s935 = scalar_select %p934, %s933, 31
      %s936 = smul.addr %s935, 8
      %s937 = scalar_lea.vmem %s4, %s936
      // Predicated region
      $region45: #{aggregation_forward.4} parent=31 // pred_check
        %p938 = pneg %p133
      $region46: #{aggregation_forward.4} parent=31 // pred_check_branch
        %940 = sbr.rel (%p938) target = $region48
      $region47: #{aggregation_forward.4} parent=31 // pred_region
        %s941 = smul.u32 16, %s25
      $region48: #{aggregation_forward.4} parent=31 // pred_fallthru
        _
    $region32: #{aggregation_forward.4} parent=5 // pred_fallthru
      _
    %p942 = scmp.le.s32.totalorder 2, %s16
    // Predicated region
    $region49: #{aggregation_forward.4} parent=5 // pred_check
      %p943 = pneg %p942
    $region50: #{aggregation_forward.4} parent=5 // pred_check_branch
      %945 = sbr.rel (%p943) target = $region52
    $region51: #{aggregation_forward.4} parent=5 // pred_region
      %s946 = ssub.s32 %s16, 2
      // Predicated region
      $region53: #{aggregation_forward.4} parent=51 // pred_check
        %p947 = pneg %p139
      $region54: #{aggregation_forward.4} parent=51 // pred_check_branch
        %949 = sbr.rel (%p947) target = $region56
      $region55: #{aggregation_forward.4} parent=51 // pred_region
        %s950 = smul.u32 16, %s27
        %p951 = scmp.lt.s32.totalorder %s950, 31
        %s952 = scalar_select %p951, %s950, 31
        %s953 = smul.addr %s952, 8
        %s954 = scalar_lea.vmem %s4, %s953
      $region56: #{aggregation_forward.4} parent=51 // pred_fallthru
        _
    $region52: #{aggregation_forward.4} parent=5 // pred_fallthru
      _
  $region6: #{aggregation_forward.4} parent=0 // loop_footer
    %s20 = sadd.s32 1, %s16
  $region7: #{aggregation_forward.4} parent=0 // loop_footer_branch
    %15 = sbr.rel target = $region3
  $region8: #{aggregation_forward.4} parent=0 // loop_exit
    _

// kernel: aggregation_forward.5
$region0: #{aggregation_forward.5}
  #allocation0 [shape = 'u32[]', space=smem, size = 0x4, offset = 0x4, fixed_abs, tag = 'smem constant byte address 0x4 - core index']
  #allocation1 [shape = 'u32[144,128]{1,0:T(1,128)}', space=vmem, size = 0x12000, scoped, tag = 'internal scratch']
  #allocation2 [shape = 'f32[128,4]{1,0:T(8,128)}', space=vmem, size = 0x10000, scoped, tag = 'scratch operand']
  #allocation3 [shape = 'f32[128,4]{1,0:T(8,128)}', space=vmem, size = 0x10000, scoped, tag = 'scratch operand']
  #allocation4 [shape = 's32[1]{0}', space=sflag, size = 0x4, scoped, tag = 'scoped memory for aggregation_forward.5']
  #allocation5 [shape = 'u8[512]{0}', space=smem, size = 0x200, scoped, tag = 'prefetched SMEM operand 0']
  %s0 = inlined_call_operand.vmem [shape: s32[2], index: 0, kind: input, shape index: {}]
  %s1 = inlined_call_operand.vmem [shape: s8[256,256], index: 1, kind: input, shape index: {}]
  %s2 = inlined_call_operand.vmem [shape: f32[5,256], index: 2, kind: input, shape index: {}]
  %s3 = inlined_call_operand.vmem [shape: f32[256,5], index: 3, kind: input, shape index: {}]
  %s4 = inlined_call_operand.vmem [shape: bf16[256,128], index: 4, kind: input, shape index: {}]
  %s5 = inlined_call_operand.hbm [shape: f32[256,128], index: 5, kind: output, shape index: {}]
  %s6 = sld [smem:[#allocation0]]
  $region61: #{aggregation_forward.5} parent=0
    _
  %s8 = ssub.s32 1, %s6
  %s9 = scalar_select 0, %s8, %s6
  %s10 = sshll.u32 %s0, 4
  %s11 = int_to_ptr.vmem [resolvable:$true] %s10
  %13 = dma.vmem_to_smem %s11, 16, [#allocation5], [#allocation4]
  %14 = dma.done [#allocation4], 16
  %15 = sfence
  $region1: #{aggregation_forward.5} parent=0
    #allocation6 [shape = 'u8[131072]{0}', space=vmem, size = 0x20000, scoped, tag = 'output window, operand 0']
    #allocation7 [shape = 's32[2]{0}', space=sflag, size = 0x8, scoped, tag = 'scoped memory for aggregation_forward.5']
    %16 = vsyncpa [#allocation7], 0
    %s17 = scalar_lea.sflag [#allocation7], 1
    %18 = vsyncpa %s17, 0
    loop: start=0, step=1, limit=4
    $region2: #{aggregation_forward.5} parent=1 // loop_pre_header
      _
    $region3: #{aggregation_forward.5} parent=1 // loop_header
      %s20 = sphi 0, %s24
      %p21 = scmp.ge.s32.totalorder %s20, 4
      %s27 = sphi 0, %s39
      %s28 = sphi 0, %s35
      %s29 = sphi 0, %s27
      %s30 = sphi 0, %s28
      %s31 = sphi 0, %s29
      %s32 = sphi 0, %s30
      %s44 = sphi 0, %s46
      %s47 = sphi 0, %s44
      %s48 = sphi 0, %s47
      %s64 = sphi 0, %s48
      %s70 = sphi 0, %s72
      %s73 = sphi 0, %s70
      %s74 = sphi 0, %s73
      %s90 = sphi 0, %s74
      %s96 = sphi 0, %s98
      %s99 = sphi 0, %s96
      %s100 = sphi 0, %s99
      %s116 = sphi 0, %s100
      %s122 = sphi 0, %s124
      %s125 = sphi 0, %s122
      %s126 = sphi 0, %s125
      %s142 = sphi 0, %s126
      %s148 = sphi 0, %s150
      %s151 = sphi 0, %s148
      %s152 = sphi 0, %s151
      %s168 = sphi 0, %s152
    $region4: #{aggregation_forward.5} parent=1 // loop_header_branch
      %23 = sbr.rel (%p21) target = $region8
    $region5: #{aggregation_forward.5} parent=1 // loop_body
      %s25 = ssub.s32 %s20, 1
      %s26 = ssub.s32 %s20, 2
      %s33 = sadd.s32 1, %s28
      %p34 = scmp.ge.s32.totalorder %s33, 1
      %s35 = scalar_select %p34, 0, %s33
      %s36 = sadd.s32 1, %s27
      %s37 = scalar_select %p34, %s36, %s27
      %p38 = scmp.ge.s32.totalorder %s37, 2
      %s39 = scalar_select %p38, 0, %s37
      %s40 = ssub.s32 %s27, %s39
      %s41 = ssub.s32 %s28, %s35
      %s42 = sor.u32 %s40, %s41
      %p43 = scmp.eq.s32.totalorder %s42, 0
      %s45 = sadd.s32 %s44, 1
      %s46 = scalar_select %p43, %s44, %s45
      %p49 = pneg %p43
      %p50 = scmp.eq.s32.totalorder %s20, 1
      %p51 = por %p49, %p50
      %p52 = scmp.ne.s32.totalorder %s44, %s47
      %p53 = scmp.eq.s32.totalorder %s20, 0
      %p54 = por %p52, %p53
      %p55 = scmp.ne.s32.totalorder %s44, %s47
      %p56 = scmp.eq.s32.totalorder %s25, 1
      %p57 = por %p55, %p56
      %p58 = scmp.ne.s32.totalorder %s47, %s48
      %p59 = scmp.eq.s32.totalorder %s25, 0
      %p60 = por %p58, %p59
      %p61 = scmp.ne.s32.totalorder %s47, %s48
      %p62 = scmp.eq.s32.totalorder %s26, 1
      %p63 = por %p61, %p62
      %p65 = scmp.ne.s32.totalorder %s48, %s64
      %p66 = scmp.eq.s32.totalorder %s26, 0
      %p67 = por %p65, %p66
      %s68 = ssub.s32 %s28, %s35
      %p69 = scmp.eq.s32.totalorder %s68, 0
      %s71 = sadd.s32 %s70, 1
      %s72 = scalar_select %p69, %s70, %s71
      %p75 = pneg %p69
      %p76 = scmp.eq.s32.totalorder %s20, 1
      %p77 = por %p75, %p76
      %p78 = scmp.ne.s32.totalorder %s70, %s73
      %p79 = scmp.eq.s32.totalorder %s20, 0
      %p80 = por %p78, %p79
      %p81 = scmp.ne.s32.totalorder %s70, %s73
      %p82 = scmp.eq.s32.totalorder %s25, 1
      %p83 = por %p81, %p82
      %p84 = scmp.ne.s32.totalorder %s73, %s74
      %p85 = scmp.eq.s32.totalorder %s25, 0
      %p86 = por %p84, %p85
      %p87 = scmp.ne.s32.totalorder %s73, %s74
      %p88 = scmp.eq.s32.totalorder %s26, 1
      %p89 = por %p87, %p88
      %p91 = scmp.ne.s32.totalorder %s74, %s90
      %p92 = scmp.eq.s32.totalorder %s26, 0
      %p93 = por %p91, %p92
      %s94 = ssub.s32 %s27, %s39
      %p95 = scmp.eq.s32.totalorder %s94, 0
      %s97 = sadd.s32 %s96, 1
      %s98 = scalar_select %p95, %s96, %s97
      %p101 = pneg %p95
      %p102 = scmp.eq.s32.totalorder %s20, 1
      %p103 = por %p101, %p102
      %p104 = scmp.ne.s32.totalorder %s96, %s99
      %p105 = scmp.eq.s32.totalorder %s20, 0
      %p106 = por %p104, %p105
      %p107 = scmp.ne.s32.totalorder %s96, %s99
      %p108 = scmp.eq.s32.totalorder %s25, 1
      %p109 = por %p107, %p108
      %p110 = scmp.ne.s32.totalorder %s99, %s100
      %p111 = scmp.eq.s32.totalorder %s25, 0
      %p112 = por %p110, %p111
      %p113 = scmp.ne.s32.totalorder %s99, %s100
      %p114 = scmp.eq.s32.totalorder %s26, 1
      %p115 = por %p113, %p114
      %p117 = scmp.ne.s32.totalorder %s100, %s116
      %p118 = scmp.eq.s32.totalorder %s26, 0
      %p119 = por %p117, %p118
      %s120 = ssub.s32 %s28, %s35
      %p121 = scmp.eq.s32.totalorder %s120, 0
      %s123 = sadd.s32 %s122, 1
      %s124 = scalar_select %p121, %s122, %s123
      %p127 = pneg %p121
      %p128 = scmp.eq.s32.totalorder %s20, 1
      %p129 = por %p127, %p128
      %p130 = scmp.ne.s32.totalorder %s122, %s125
      %p131 = scmp.eq.s32.totalorder %s20, 0
      %p132 = por %p130, %p131
      %p133 = scmp.ne.s32.totalorder %s122, %s125
      %p134 = scmp.eq.s32.totalorder %s25, 1
      %p135 = por %p133, %p134
      %p136 = scmp.ne.s32.totalorder %s125, %s126
      %p137 = scmp.eq.s32.totalorder %s25, 0
      %p138 = por %p136, %p137
      %p139 = scmp.ne.s32.totalorder %s125, %s126
      %p140 = scmp.eq.s32.totalorder %s26, 1
      %p141 = por %p139, %p140
      %p143 = scmp.ne.s32.totalorder %s126, %s142
      %p144 = scmp.eq.s32.totalorder %s26, 0
      %p145 = por %p143, %p144
      %s146 = ssub.s32 %s27, %s39
      %p147 = scmp.eq.s32.totalorder %s146, 0
      %s149 = sadd.s32 %s148, 1
      %s150 = scalar_select %p147, %s148, %s149
      %p153 = pneg %p147
      %p154 = scmp.eq.s32.totalorder %s20, 1
      %p155 = por %p153, %p154
      %p156 = scmp.ne.s32.totalorder %s148, %s151
      %p157 = scmp.eq.s32.totalorder %s20, 0
      %p158 = por %p156, %p157
      %p159 = scmp.ne.s32.totalorder %s148, %s151
      %p160 = scmp.eq.s32.totalorder %s25, 1
      %p161 = por %p159, %p160
      %p162 = scmp.ne.s32.totalorder %s151, %s152
      %p163 = scmp.eq.s32.totalorder %s25, 0
      %p164 = por %p162, %p163
      %p165 = scmp.ne.s32.totalorder %s151, %s152
      %p166 = scmp.eq.s32.totalorder %s26, 1
      %p167 = por %p165, %p166
      %p169 = scmp.ne.s32.totalorder %s152, %s168
      %p170 = scmp.eq.s32.totalorder %s26, 0
      %p171 = por %p169, %p170
      %p172 = scmp.le.s32.totalorder 1, %s20
      %p173 = scmp.lt.s32.totalorder %s20, 3
      %p174 = pnand %p172, %p173
      %p175 = pneg %p174
      // Predicated region
      $region9: #{aggregation_forward.5} parent=5 // pred_check
        _
      $region10: #{aggregation_forward.5} parent=5 // pred_check_branch
        %177 = sbr.rel (%p174) target = $region12
      $region11: #{aggregation_forward.5} parent=5 // pred_region
        %s178 = ssub.s32 %s20, 1
        // Predicated region
        $region13: #{aggregation_forward.5} parent=11 // pred_check
          %p179 = pneg %p86
        $region14: #{aggregation_forward.5} parent=11 // pred_check_branch
          %181 = sbr.rel (%p179) target = $region16
        $region15: #{aggregation_forward.5} parent=11 // pred_region
          %s182 = smul.u32 2, %s30
          %p183 = scmp.lt.s32.totalorder %s182, 1
          %s184 = scalar_select %p183, %s182, 1
          %s185 = smul.addr %s184, 8
          %s186 = scalar_lea.vmem %s2, %s185
          %s187 = smul.u32 2, %s30
        $region16: #{aggregation_forward.5} parent=11 // pred_fallthru
          _
        // Predicated region
        $region17: #{aggregation_forward.5} parent=11 // pred_check
          %p188 = pneg %p138
        $region18: #{aggregation_forward.5} parent=11 // pred_check_branch
          %190 = sbr.rel (%p188) target = $region20
        $region19: #{aggregation_forward.5} parent=11 // pred_region
          %s191 = smul.u32 32, %s30
          %p192 = scmp.lt.s32.totalorder %s191, 31
          %s193 = scalar_select %p192, %s191, 31
          %s194 = smul.addr %s193, 4
          %s195 = scalar_lea.vmem %s4, %s194
          %s196 = smul.u32 32, %s30
        $region20: #{aggregation_forward.5} parent=11 // pred_fallthru
          _
      $region12: #{aggregation_forward.5} parent=5 // pred_fallthru
        _
      %p197 = scmp.lt.s32.totalorder %s20, 2
      // Predicated region
      $region21: #{aggregation_forward.5} parent=5 // pred_check
        %p198 = pneg %p197
      $region22: #{aggregation_forward.5} parent=5 // pred_check_branch
        %200 = sbr.rel (%p198) target = $region24
      $region23: #{aggregation_forward.5} parent=5 // pred_region
        // Predicated region
        $region25: #{aggregation_forward.5} parent=23 // pred_check
          %p201 = pneg %p54
        $region26: #{aggregation_forward.5} parent=23 // pred_check_branch
          %203 = sbr.rel (%p201) target = $region28
        $region27: #{aggregation_forward.5} parent=23 // pred_region
          %s204 = smul.u32 4, %s27
          %s205 = smul.u32 2, %s28
          %p206 = scmp.lt.s32.totalorder %s204, 7
          %s207 = scalar_select %p206, %s204, 7
          %p208 = scmp.lt.s32.totalorder %s205, 1
          %s209 = scalar_select %p208, %s205, 1
          %s210 = smul.addr %s207, 2
          %s211 = sadd.s32 %s209, %s210
          %s212 = smul.addr %s211, 8
          %s213 = scalar_lea.vmem %s1, %s212
          %s214 = smul.u32 4, %s27
          %s215 = smul.u32 2, %s28
        $region28: #{aggregation_forward.5} parent=23 // pred_fallthru
          _
        // Predicated region
        $region29: #{aggregation_forward.5} parent=23 // pred_check
          %p216 = pneg %p106
        $region30: #{aggregation_forward.5} parent=23 // pred_check_branch
          %218 = sbr.rel (%p216) target = $region32
        $region31: #{aggregation_forward.5} parent=23 // pred_region
          %s219 = smul.u32 16, %s27
          %p220 = scmp.lt.s32.totalorder %s219, 31
          %s221 = scalar_select %p220, %s219, 31
          %s222 = smul.addr %s221, 8
          %s223 = scalar_lea.vmem %s3, %s222
          %s224 = smul.u32 16, %s27
        $region32: #{aggregation_forward.5} parent=23 // pred_fallthru
          _
      $region24: #{aggregation_forward.5} parent=5 // pred_fallthru
        _
      %p225 = scmp.le.s32.totalorder 1, %s20
      %p226 = scmp.lt.s32.totalorder %s20, 3
      %p227 = pnand %p225, %p226
      %p228 = pneg %p227
      // Predicated region
      $region33: #{aggregation_forward.5} parent=5 // pred_check
        _
      $region34: #{aggregation_forward.5} parent=5 // pred_check_branch
        %230 = sbr.rel (%p227) target = $region36
      $region35: #{aggregation_forward.5} parent=5 // pred_region
        %s231 = ssub.s32 %s20, 1
        %s232 = smul.u32 4, %s29
        %s233 = smul.u32 2, %s30
        %p234 = scmp.lt.s32.totalorder %s232, 7
        %s235 = scalar_select %p234, %s232, 7
        %p236 = scmp.lt.s32.totalorder %s233, 1
        %s237 = scalar_select %p236, %s233, 1
        %s238 = smul.addr %s235, 2
        %s239 = sadd.s32 %s237, %s238
        %s240 = smul.addr %s239, 8
        %s241 = scalar_lea.vmem %s1, %s240
        %p242 = pneg %p60
        %p243 = pneg %p57
        %s244 = smul.u32 2, %s30
        %p245 = scmp.lt.s32.totalorder %s244, 1
        %s246 = scalar_select %p245, %s244, 1
        %s247 = smul.addr %s246, 8
        %s248 = scalar_lea.vmem %s2, %s247
        %p249 = pneg %p86
        %p250 = pneg %p83
        %s251 = smul.u32 16, %s29
        %p252 = scmp.lt.s32.totalorder %s251, 31
        %s253 = scalar_select %p252, %s251, 31
        %s254 = smul.addr %s253, 8
        %s255 = scalar_lea.vmem %s3, %s254
        %p256 = pneg %p112
        %p257 = pneg %p109
        %s258 = smul.u32 32, %s30
        %p259 = scmp.lt.s32.totalorder %s258, 31
        %s260 = scalar_select %p259, %s258, 31
        %s261 = smul.addr %s260, 4
        %s262 = scalar_lea.vmem %s4, %s261
        %p263 = pneg %p138
        %p264 = pneg %p135
        %p265 = pneg %p164
        %p266 = pneg %p161
        %s267 = sand.u32 %s151, 1
        %s268 = scalar_lea.sflag [#allocation7], %s267
        %s269 = sand.u32 %s151, 1
        %s270 = smul.addr %s269, 128
        %s271 = scalar_lea.vmem [#allocation6], %s270
        %s272 = smul.u32 4, %s29
        %s273 = smul.u32 2, %s30
        %p274 = scmp.lt.s32.totalorder %s272, 7
        %s275 = scalar_select %p274, %s272, 7
        %p276 = scmp.lt.s32.totalorder %s273, 1
        %s277 = scalar_select %p276, %s273, 1
        %s278 = smul.addr %s275, 2
        %s279 = sadd.s32 %s277, %s278
        %s280 = smul.addr %s279, 8
        %s281 = scalar_lea.vmem %s1, %s280
        %s282 = smul.u32 4, %s29
        %s283 = smul.u32 2, %s30
        %s284 = smul.u32 2, %s30
        %p285 = scmp.lt.s32.totalorder %s284, 1
        %s286 = scalar_select %p285, %s284, 1
        %s287 = smul.addr %s286, 8
        %s288 = scalar_lea.vmem %s2, %s287
        %s289 = smul.u32 2, %s30
        %s290 = smul.u32 16, %s29
        %p291 = scmp.lt.s32.totalorder %s290, 31
        %s292 = scalar_select %p291, %s290, 31
        %s293 = smul.addr %s292, 8
        %s294 = scalar_lea.vmem %s3, %s293
        %s295 = smul.u32 16, %s29
        %s296 = smul.u32 32, %s30
        %p297 = scmp.lt.s32.totalorder %s296, 31
        %s298 = scalar_select %p297, %s296, 31
        %s299 = smul.addr %s298, 4
        %s300 = scalar_lea.vmem %s4, %s299
        %s301 = smul.u32 32, %s30
        %s302 = smul.u32 16, %s29
        %p304 = scmp.eq.s32.totalorder %s30, 0
        // Predicated region
        $region37: #{aggregation_forward.5} parent=35 // pred_check
          %p305 = pneg %p304
        $region38: #{aggregation_forward.5} parent=35 // pred_check_branch
          %307 = sbr.rel (%p305) target = $region40
        $region39: #{aggregation_forward.5} parent=35 // pred_region
          %308 = vst [vmem:[%s271] sm:$0xff] 0.0
          %309 = vst [vmem:[%s271 + $0x8] sm:$0xff] 0.0
          %310 = vst [vmem:[%s271 + $0x10] sm:$0xff] 0.0
          %311 = vst [vmem:[%s271 + $0x18] sm:$0xff] 0.0
          %312 = vst [vmem:[%s271 + $0x20] sm:$0xff] 0.0
          %313 = vst [vmem:[%s271 + $0x28] sm:$0xff] 0.0
          %314 = vst [vmem:[%s271 + $0x30] sm:$0xff] 0.0
          %315 = vst [vmem:[%s271 + $0x38] sm:$0xff] 0.0
          %316 = vst [vmem:[%s271 + $0x40] sm:$0xff] 0.0
          %317 = vst [vmem:[%s271 + $0x48] sm:$0xff] 0.0
          %318 = vst [vmem:[%s271 + $0x50] sm:$0xff] 0.0
          %319 = vst [vmem:[%s271 + $0x58] sm:$0xff] 0.0
          %320 = vst [vmem:[%s271 + $0x60] sm:$0xff] 0.0
          %321 = vst [vmem:[%s271 + $0x68] sm:$0xff] 0.0
          %322 = vst [vmem:[%s271 + $0x70] sm:$0xff] 0.0
          %323 = vst [vmem:[%s271 + $0x78] sm:$0xff] 0.0
          %vm324 = vcmask 31744
          %325 = vst.msk [vmem:[#allocation2] sm:$0xff] %vm324, -1e+30
          %326 = vst.msk [vmem:[#allocation2 + $0x8] sm:$0xff] %vm324, -1e+30
          %327 = vst.msk [vmem:[#allocation2 + $0x10] sm:$0xff] %vm324, -1e+30
          %328 = vst.msk [vmem:[#allocation2 + $0x18] sm:$0xff] %vm324, -1e+30
          %329 = vst.msk [vmem:[#allocation2 + $0x20] sm:$0xff] %vm324, -1e+30
          %330 = vst.msk [vmem:[#allocation2 + $0x28] sm:$0xff] %vm324, -1e+30
          %331 = vst.msk [vmem:[#allocation2 + $0x30] sm:$0xff] %vm324, -1e+30
          %332 = vst.msk [vmem:[#allocation2 + $0x38] sm:$0xff] %vm324, -1e+30
          %333 = vst.msk [vmem:[#allocation2 + $0x40] sm:$0xff] %vm324, -1e+30
          %334 = vst.msk [vmem:[#allocation2 + $0x48] sm:$0xff] %vm324, -1e+30
          %335 = vst.msk [vmem:[#allocation2 + $0x50] sm:$0xff] %vm324, -1e+30
          %336 = vst.msk [vmem:[#allocation2 + $0x58] sm:$0xff] %vm324, -1e+30
          %337 = vst.msk [vmem:[#allocation2 + $0x60] sm:$0xff] %vm324, -1e+30
          %338 = vst.msk [vmem:[#allocation2 + $0x68] sm:$0xff] %vm324, -1e+30
          %339 = vst.msk [vmem:[#allocation2 + $0x70] sm:$0xff] %vm324, -1e+30
          %340 = vst.msk [vmem:[#allocation2 + $0x78] sm:$0xff] %vm324, -1e+30
          %341 = vst.msk [vmem:[#allocation3] sm:$0xff] %vm324, 0.0
          %342 = vst.msk [vmem:[#allocation3 + $0x8] sm:$0xff] %vm324, 0.0
          %343 = vst.msk [vmem:[#allocation3 + $0x10] sm:$0xff] %vm324, 0.0
          %344 = vst.msk [vmem:[#allocation3 + $0x18] sm:$0xff] %vm324, 0.0
          %345 = vst.msk [vmem:[#allocation3 + $0x20] sm:$0xff] %vm324, 0.0
          %346 = vst.msk [vmem:[#allocation3 + $0x28] sm:$0xff] %vm324, 0.0
          %347 = vst.msk [vmem:[#allocation3 + $0x30] sm:$0xff] %vm324, 0.0
          %348 = vst.msk [vmem:[#allocation3 + $0x38] sm:$0xff] %vm324, 0.0
          %349 = vst.msk [vmem:[#allocation3 + $0x40] sm:$0xff] %vm324, 0.0
          %350 = vst.msk [vmem:[#allocation3 + $0x48] sm:$0xff] %vm324, 0.0
          %351 = vst.msk [vmem:[#allocation3 + $0x50] sm:$0xff] %vm324, 0.0
          %352 = vst.msk [vmem:[#allocation3 + $0x58] sm:$0xff] %vm324, 0.0
          %353 = vst.msk [vmem:[#allocation3 + $0x60] sm:$0xff] %vm324, 0.0
          %354 = vst.msk [vmem:[#allocation3 + $0x68] sm:$0xff] %vm324, 0.0
          %355 = vst.msk [vmem:[#allocation3 + $0x70] sm:$0xff] %vm324, 0.0
          %356 = vst.msk [vmem:[#allocation3 + $0x78] sm:$0xff] %vm324, 0.0
        $region40: #{aggregation_forward.5} parent=35 // pred_fallthru
          _
        %s357 = sadd.s32 %s29, %s30
        %s358 = sld [smem:[#allocation5 + %s357]]
        %p359 = scmp.ne.s32.totalorder %s358, 0
        // Predicated region
        $region41: #{aggregation_forward.5} parent=35 // pred_check
          %p360 = pneg %p359
        $region42: #{aggregation_forward.5} parent=35 // pred_check_branch
          %362 = sbr.rel (%p360) target = $region44
        $region43: #{aggregation_forward.5} parent=35 // pred_region
          %v363 = vld [vmem:[%s281] sm:$0xff]
          %v364 = vld [vmem:[%s281 + $0x8] sm:$0xff]
          %v365 = vld [vmem:[%s281 + $0x10] sm:$0xff]
          %v366 = vld [vmem:[%s281 + $0x18] sm:$0xff]
          %v367 = vld [vmem:[%s281 + $0x20] sm:$0xff]
          %v368 = vld [vmem:[%s281 + $0x28] sm:$0xff]
          %v369 = vld [vmem:[%s281 + $0x30] sm:$0xff]
          %v370 = vld [vmem:[%s281 + $0x38] sm:$0xff]
          %v371 = vunpack.c.0.s8 %v363
          %v372 = vunpack.c.0.s8 %v364
          %v373 = vunpack.c.1.s8 %v363
          %v374 = vunpack.c.1.s8 %v364
          %v375 = vunpack.c.2.s8 %v363
          %v376 = vunpack.c.2.s8 %v364
          %v377 = vunpack.c.3.s8 %v363
          %v378 = vunpack.c.3.s8 %v364
          %v379 = vunpack.c.0.s8 %v365
          %v380 = vunpack.c.0.s8 %v366
          %v381 = vunpack.c.1.s8 %v365
          %v382 = vunpack.c.1.s8 %v366
          %v383 = vunpack.c.2.s8 %v365
          %v384 = vunpack.c.2.s8 %v366
          %v385 = vunpack.c.3.s8 %v365
          %v386 = vunpack.c.3.s8 %v366
          %v387 = vunpack.c.0.s8 %v367
          %v388 = vunpack.c.0.s8 %v368
          %v389 = vunpack.c.1.s8 %v367
          %v390 = vunpack.c.1.s8 %v368
          %v391 = vunpack.c.2.s8 %v367
          %v392 = vunpack.c.2.s8 %v368
          %v393 = vunpack.c.3.s8 %v367
          %v394 = vunpack.c.3.s8 %v368
          %v395 = vunpack.c.0.s8 %v369
          %v396 = vunpack.c.0.s8 %v370
          %v397 = vunpack.c.1.s8 %v369
          %v398 = vunpack.c.1.s8 %v370
          %v399 = vunpack.c.2.s8 %v369
          %v400 = vunpack.c.2.s8 %v370
          %v401 = vunpack.c.3.s8 %v369
          %v402 = vunpack.c.3.s8 %v370
          %v403 = vcvt.s32.f32 %v371
          %v404 = vcvt.s32.f32 %v372
          %v405 = vcvt.s32.f32 %v373
          %v406 = vcvt.s32.f32 %v374
          %v407 = vcvt.s32.f32 %v375
          %v408 = vcvt.s32.f32 %v376
          %v409 = vcvt.s32.f32 %v377
          %v410 = vcvt.s32.f32 %v378
          %v411 = vcvt.s32.f32 %v379
          %v412 = vcvt.s32.f32 %v380
          %v413 = vcvt.s32.f32 %v381
          %v414 = vcvt.s32.f32 %v382
          %v415 = vcvt.s32.f32 %v383
          %v416 = vcvt.s32.f32 %v384
          %v417 = vcvt.s32.f32 %v385
          %v418 = vcvt.s32.f32 %v386
          %v419 = vcvt.s32.f32 %v387
          %v420 = vcvt.s32.f32 %v388
          %v421 = vcvt.s32.f32 %v389
          %v422 = vcvt.s32.f32 %v390
          %v423 = vcvt.s32.f32 %v391
          %v424 = vcvt.s32.f32 %v392
          %v425 = vcvt.s32.f32 %v393
          %v426 = vcvt.s32.f32 %v394
          %v427 = vcvt.s32.f32 %v395
          %v428 = vcvt.s32.f32 %v396
          %v429 = vcvt.s32.f32 %v397
          %v430 = vcvt.s32.f32 %v398
          %v431 = vcvt.s32.f32 %v399
          %v432 = vcvt.s32.f32 %v400
          %v433 = vcvt.s32.f32 %v401
          %v434 = vcvt.s32.f32 %v402
          %vm435 = vcmp.gt.f32.partialorder %v403, 0.0
          %vm436 = vcmp.gt.f32.partialorder %v404, 0.0
          %vm437 = vcmp.gt.f32.partialorder %v405, 0.0
          %vm438 = vcmp.gt.f32.partialorder %v406, 0.0
          %vm439 = vcmp.gt.f32.partialorder %v407, 0.0
          %vm440 = vcmp.gt.f32.partialorder %v408, 0.0
          %vm441 = vcmp.gt.f32.partialorder %v409, 0.0
          %vm442 = vcmp.gt.f32.partialorder %v410, 0.0
          %vm443 = vcmp.gt.f32.partialorder %v411, 0.0
          %vm444 = vcmp.gt.f32.partialorder %v412, 0.0
          %vm445 = vcmp.gt.f32.partialorder %v413, 0.0
          %vm446 = vcmp.gt.f32.partialorder %v414, 0.0
          %vm447 = vcmp.gt.f32.partialorder %v415, 0.0
          %vm448 = vcmp.gt.f32.partialorder %v416, 0.0
          %vm449 = vcmp.gt.f32.partialorder %v417, 0.0
          %vm450 = vcmp.gt.f32.partialorder %v418, 0.0
          %vm451 = vcmp.gt.f32.partialorder %v419, 0.0
          %vm452 = vcmp.gt.f32.partialorder %v420, 0.0
          %vm453 = vcmp.gt.f32.partialorder %v421, 0.0
          %vm454 = vcmp.gt.f32.partialorder %v422, 0.0
          %vm455 = vcmp.gt.f32.partialorder %v423, 0.0
          %vm456 = vcmp.gt.f32.partialorder %v424, 0.0
          %vm457 = vcmp.gt.f32.partialorder %v425, 0.0
          %vm458 = vcmp.gt.f32.partialorder %v426, 0.0
          %vm459 = vcmp.gt.f32.partialorder %v427, 0.0
          %vm460 = vcmp.gt.f32.partialorder %v428, 0.0
          %vm461 = vcmp.gt.f32.partialorder %v429, 0.0
          %vm462 = vcmp.gt.f32.partialorder %v430, 0.0
          %vm463 = vcmp.gt.f32.partialorder %v431, 0.0
          %vm464 = vcmp.gt.f32.partialorder %v432, 0.0
          %vm465 = vcmp.gt.f32.partialorder %v433, 0.0
          %vm466 = vcmp.gt.f32.partialorder %v434, 0.0
          %v467 = vld [vmem:[%s288] ss:$8 sm:$0x3]
          %v468 = vld [vmem:[%s294] sm:$0xff]
          %v469 = vld [vmem:[%s294 + $0x8] sm:$0xff]
          %v470 = vld [vmem:[%s294 + $0x10] sm:$0xff]
          %v471 = vld [vmem:[%s294 + $0x18] sm:$0xff]
          %v472 = vld [vmem:[%s294 + $0x20] sm:$0xff]
          %v473 = vld [vmem:[%s294 + $0x28] sm:$0xff]
          %v474 = vld [vmem:[%s294 + $0x30] sm:$0xff]
          %v475 = vld [vmem:[%s294 + $0x38] sm:$0xff]
          %v476 = vld [vmem:[%s294 + $0x40] sm:$0xff]
          %v477 = vld [vmem:[%s294 + $0x48] sm:$0xff]
          %v478 = vld [vmem:[%s294 + $0x50] sm:$0xff]
          %v479 = vld [vmem:[%s294 + $0x58] sm:$0xff]
          %v480 = vld [vmem:[%s294 + $0x60] sm:$0xff]
          %v481 = vld [vmem:[%s294 + $0x68] sm:$0xff]
          %v482 = vld [vmem:[%s294 + $0x70] sm:$0xff]
          %v483 = vld [vmem:[%s294 + $0x78] sm:$0xff]
          %v485 = vlaneseq
          %v486 = vshrl.u32 %v485, 7
          %v487 = vsub.s32 0, %v486
          %v488 = vrot.slane %v467, %v487
          %v489 = vlaneseq
          %v490 = vshrl.u32 %v489, 7
          %v491 = vsub.s32 1, %v490
          %v492 = vrot.slane %v467, %v491
          %496 = vset.pattern.permute.xlu0 0
          %497 = vperm.xlu0 %496, %v468
          %v498 = vpop.permute.xlu0 %497
          %501 = vset.pattern.permute.xlu0 0
          %502 = vperm.xlu0 %501, %v469
          %v503 = vpop.permute.xlu0 %502
          %506 = vset.pattern.permute.xlu0 0
          %507 = vperm.xlu0 %506, %v470
          %v508 = vpop.permute.xlu0 %507
          %511 = vset.pattern.permute.xlu0 0
          %512 = vperm.xlu0 %511, %v471
          %v513 = vpop.permute.xlu0 %512
          %516 = vset.pattern.permute.xlu0 0
          %517 = vperm.xlu0 %516, %v472
          %v518 = vpop.permute.xlu0 %517
          %521 = vset.pattern.permute.xlu0 0
          %522 = vperm.xlu0 %521, %v473
          %v523 = vpop.permute.xlu0 %522
          %526 = vset.pattern.permute.xlu0 0
          %527 = vperm.xlu0 %526, %v474
          %v528 = vpop.permute.xlu0 %527
          %531 = vset.pattern.permute.xlu0 0
          %532 = vperm.xlu0 %531, %v475
          %v533 = vpop.permute.xlu0 %532
          %536 = vset.pattern.permute.xlu0 0
          %537 = vperm.xlu0 %536, %v476
          %v538 = vpop.permute.xlu0 %537
          %541 = vset.pattern.permute.xlu0 0
          %542 = vperm.xlu0 %541, %v477
          %v543 = vpop.permute.xlu0 %542
          %546 = vset.pattern.permute.xlu0 0
          %547 = vperm.xlu0 %546, %v478
          %v548 = vpop.permute.xlu0 %547
          %551 = vset.pattern.permute.xlu0 0
          %552 = vperm.xlu0 %551, %v479
          %v553 = vpop.permute.xlu0 %552
          %556 = vset.pattern.permute.xlu0 0
          %557 = vperm.xlu0 %556, %v480
          %v558 = vpop.permute.xlu0 %557
          %561 = vset.pattern.permute.xlu0 0
          %562 = vperm.xlu0 %561, %v481
          %v563 = vpop.permute.xlu0 %562
          %566 = vset.pattern.permute.xlu0 0
          %567 = vperm.xlu0 %566, %v482
          %v568 = vpop.permute.xlu0 %567
          %571 = vset.pattern.permute.xlu0 0
          %572 = vperm.xlu0 %571, %v483
          %v573 = vpop.permute.xlu0 %572
          %v575 = vadd.f32 %v488, %v498
          %v576 = vadd.f32 %v492, %v498
          %v577 = vadd.f32 %v488, %v503
          %v578 = vadd.f32 %v492, %v503
          %v579 = vadd.f32 %v488, %v508
          %v580 = vadd.f32 %v492, %v508
          %v581 = vadd.f32 %v488, %v513
          %v582 = vadd.f32 %v492, %v513
          %v583 = vadd.f32 %v488, %v518
          %v584 = vadd.f32 %v492, %v518
          %v585 = vadd.f32 %v488, %v523
          %v586 = vadd.f32 %v492, %v523
          %v587 = vadd.f32 %v488, %v528
          %v588 = vadd.f32 %v492, %v528
          %v589 = vadd.f32 %v488, %v533
          %v590 = vadd.f32 %v492, %v533
          %v591 = vadd.f32 %v488, %v538
          %v592 = vadd.f32 %v492, %v538
          %v593 = vadd.f32 %v488, %v543
          %v594 = vadd.f32 %v492, %v543
          %v595 = vadd.f32 %v488, %v548
          %v596 = vadd.f32 %v492, %v548
          %v597 = vadd.f32 %v488, %v553
          %v598 = vadd.f32 %v492, %v553
          %v599 = vadd.f32 %v488, %v558
          %v600 = vadd.f32 %v492, %v558
          %v601 = vadd.f32 %v488, %v563
          %v602 = vadd.f32 %v492, %v563
          %v603 = vadd.f32 %v488, %v568
          %v604 = vadd.f32 %v492, %v568
          %v605 = vadd.f32 %v488, %v573
          %v606 = vadd.f32 %v492, %v573
          %v607 = vtanh.pop %v575
          %v608 = vtanh.pop %v576
          %v609 = vtanh.pop %v577
          %v610 = vtanh.pop %v578
          %v611 = vtanh.pop %v579
          %v612 = vtanh.pop %v580
          %v613 = vtanh.pop %v581
          %v614 = vtanh.pop %v582
          %v615 = vtanh.pop %v583
          %v616 = vtanh.pop %v584
          %v617 = vtanh.pop %v585
          %v618 = vtanh.pop %v586
          %v619 = vtanh.pop %v587
          %v620 = vtanh.pop %v588
          %v621 = vtanh.pop %v589
          %v622 = vtanh.pop %v590
          %v623 = vtanh.pop %v591
          %v624 = vtanh.pop %v592
          %v625 = vtanh.pop %v593
          %v626 = vtanh.pop %v594
          %v627 = vtanh.pop %v595
          %v628 = vtanh.pop %v596
          %v629 = vtanh.pop %v597
          %v630 = vtanh.pop %v598
          %v631 = vtanh.pop %v599
          %v632 = vtanh.pop %v600
          %v633 = vtanh.pop %v601
          %v634 = vtanh.pop %v602
          %v635 = vtanh.pop %v603
          %v636 = vtanh.pop %v604
          %v637 = vtanh.pop %v605
          %v638 = vtanh.pop %v606
          %v639 = vld [vmem:[#allocation2] sm:$0xff]
          %v640 = vld [vmem:[#allocation2 + $0x8] sm:$0xff]
          %v641 = vld [vmem:[#allocation2 + $0x10] sm:$0xff]
          %v642 = vld [vmem:[#allocation2 + $0x18] sm:$0xff]
          %v643 = vld [vmem:[#allocation2 + $0x20] sm:$0xff]
          %v644 = vld [vmem:[#allocation2 + $0x28] sm:$0xff]
          %v645 = vld [vmem:[#allocation2 + $0x30] sm:$0xff]
          %v646 = vld [vmem:[#allocation2 + $0x38] sm:$0xff]
          %v647 = vld [vmem:[#allocation2 + $0x40] sm:$0xff]
          %v648 = vld [vmem:[#allocation2 + $0x48] sm:$0xff]
          %v649 = vld [vmem:[#allocation2 + $0x50] sm:$0xff]
          %v650 = vld [vmem:[#allocation2 + $0x58] sm:$0xff]
          %v651 = vld [vmem:[#allocation2 + $0x60] sm:$0xff]
          %v652 = vld [vmem:[#allocation2 + $0x68] sm:$0xff]
          %v653 = vld [vmem:[#allocation2 + $0x70] sm:$0xff]
          %v654 = vld [vmem:[#allocation2 + $0x78] sm:$0xff]
          %v655 = vld [vmem:[#allocation3] sm:$0xff]
          %v656 = vld [vmem:[#allocation3 + $0x8] sm:$0xff]
          %v657 = vld [vmem:[#allocation3 + $0x10] sm:$0xff]
          %v658 = vld [vmem:[#allocation3 + $0x18] sm:$0xff]
          %v659 = vld [vmem:[#allocation3 + $0x20] sm:$0xff]
          %v660 = vld [vmem:[#allocation3 + $0x28] sm:$0xff]
          %v661 = vld [vmem:[#allocation3 + $0x30] sm:$0xff]
          %v662 = vld [vmem:[#allocation3 + $0x38] sm:$0xff]
          %v663 = vld [vmem:[#allocation3 + $0x40] sm:$0xff]
          %v664 = vld [vmem:[#allocation3 + $0x48] sm:$0xff]
          %v665 = vld [vmem:[#allocation3 + $0x50] sm:$0xff]
          %v666 = vld [vmem:[#allocation3 + $0x58] sm:$0xff]
          %v667 = vld [vmem:[#allocation3 + $0x60] sm:$0xff]
          %v668 = vld [vmem:[#allocation3 + $0x68] sm:$0xff]
          %v669 = vld [vmem:[#allocation3 + $0x70] sm:$0xff]
          %v670 = vld [vmem:[#allocation3 + $0x78] sm:$0xff]
          %s671 = scalar_lea.vmem %s288, 1
          %v672 = vld [vmem:[%s671] ss:$8 sm:$0x3]
          %v674 = vlaneseq
          %v675 = vshrl.u32 %v674, 7
          %v676 = vsub.s32 0, %v675
          %v677 = vrot.slane %v672, %v676
          %v678 = vlaneseq
          %v679 = vshrl.u32 %v678, 7
          %v680 = vsub.s32 1, %v679
          %v681 = vrot.slane %v672, %v680
          %v684 = vmul.f32 %v607, %v677
          %v685 = vmul.f32 %v608, %v681
          %v686 = vmul.f32 %v609, %v677
          %v687 = vmul.f32 %v610, %v681
          %v688 = vmul.f32 %v611, %v677
          %v689 = vmul.f32 %v612, %v681
          %v690 = vmul.f32 %v613, %v677
          %v691 = vmul.f32 %v614, %v681
          %v692 = vmul.f32 %v615, %v677
          %v693 = vmul.f32 %v616, %v681
          %v694 = vmul.f32 %v617, %v677
          %v695 = vmul.f32 %v618, %v681
          %v696 = vmul.f32 %v619, %v677
          %v697 = vmul.f32 %v620, %v681
          %v698 = vmul.f32 %v621, %v677
          %v699 = vmul.f32 %v622, %v681
          %v700 = vmul.f32 %v623, %v677
          %v701 = vmul.f32 %v624, %v681
          %v702 = vmul.f32 %v625, %v677
          %v703 = vmul.f32 %v626, %v681
          %v704 = vmul.f32 %v627, %v677
          %v705 = vmul.f32 %v628, %v681
          %v706 = vmul.f32 %v629, %v677
          %v707 = vmul.f32 %v630, %v681
          %v708 = vmul.f32 %v631, %v677
          %v709 = vmul.f32 %v632, %v681
          %v710 = vmul.f32 %v633, %v677
          %v711 = vmul.f32 %v634, %v681
          %v712 = vmul.f32 %v635, %v677
          %v713 = vmul.f32 %v636, %v681
          %v714 = vmul.f32 %v637, %v677
          %v715 = vmul.f32 %v638, %v681
          %716 = vset.pattern.permute.xlu0 1
          %717 = vperm.xlu0 %716, %v468
          %v718 = vpop.permute.xlu0 %717
          %720 = vset.pattern.permute.xlu0 1
          %721 = vperm.xlu0 %720, %v469
          %v722 = vpop.permute.xlu0 %721
          %724 = vset.pattern.permute.xlu0 1
          %725 = vperm.xlu0 %724, %v470
          %v726 = vpop.permute.xlu0 %725
          %728 = vset.pattern.permute.xlu0 1
          %729 = vperm.xlu0 %728, %v471
          %v730 = vpop.permute.xlu0 %729
          %732 = vset.pattern.permute.xlu0 1
          %733 = vperm.xlu0 %732, %v472
          %v734 = vpop.permute.xlu0 %733
          %736 = vset.pattern.permute.xlu0 1
          %737 = vperm.xlu0 %736, %v473
          %v738 = vpop.permute.xlu0 %737
          %740 = vset.pattern.permute.xlu0 1
          %741 = vperm.xlu0 %740, %v474
          %v742 = vpop.permute.xlu0 %741
          %744 = vset.pattern.permute.xlu0 1
          %745 = vperm.xlu0 %744, %v475
          %v746 = vpop.permute.xlu0 %745
          %748 = vset.pattern.permute.xlu0 1
          %749 = vperm.xlu0 %748, %v476
          %v750 = vpop.permute.xlu0 %749
          %752 = vset.pattern.permute.xlu0 1
          %753 = vperm.xlu0 %752, %v477
          %v754 = vpop.permute.xlu0 %753
          %756 = vset.pattern.permute.xlu0 1
          %757 = vperm.xlu0 %756, %v478
          %v758 = vpop.permute.xlu0 %757
          %760 = vset.pattern.permute.xlu0 1
          %761 = vperm.xlu0 %760, %v479
          %v762 = vpop.permute.xlu0 %761
          %764 = vset.pattern.permute.xlu0 1
          %765 = vperm.xlu0 %764, %v480
          %v766 = vpop.permute.xlu0 %765
          %768 = vset.pattern.permute.xlu0 1
          %769 = vperm.xlu0 %768, %v481
          %v770 = vpop.permute.xlu0 %769
          %772 = vset.pattern.permute.xlu0 1
          %773 = vperm.xlu0 %772, %v482
          %v774 = vpop.permute.xlu0 %773
          %776 = vset.pattern.permute.xlu0 1
          %777 = vperm.xlu0 %776, %v483
          %v778 = vpop.permute.xlu0 %777
          %v780 = vadd.f32 %v684, %v718
          %v781 = vadd.f32 %v685, %v718
          %v782 = vadd.f32 %v686, %v722
          %v783 = vadd.f32 %v687, %v722
          %v784 = vadd.f32 %v688, %v726
          %v785 = vadd.f32 %v689, %v726
          %v786 = vadd.f32 %v690, %v730
          %v787 = vadd.f32 %v691, %v730
          %v788 = vadd.f32 %v692, %v734
          %v789 = vadd.f32 %v693, %v734
          %v790 = vadd.f32 %v694, %v738
          %v791 = vadd.f32 %v695, %v738
          %v792 = vadd.f32 %v696, %v742
          %v793 = vadd.f32 %v697, %v742
          %v794 = vadd.f32 %v698, %v746
          %v795 = vadd.f32 %v699, %v746
          %v796 = vadd.f32 %v700, %v750
          %v797 = vadd.f32 %v701, %v750
          %v798 = vadd.f32 %v702, %v754
          %v799 = vadd.f32 %v703, %v754
          %v800 = vadd.f32 %v704, %v758
          %v801 = vadd.f32 %v705, %v758
          %v802 = vadd.f32 %v706, %v762
          %v803 = vadd.f32 %v707, %v762
          %v804 = vadd.f32 %v708, %v766
          %v805 = vadd.f32 %v709, %v766
          %v806 = vadd.f32 %v710, %v770
          %v807 = vadd.f32 %v711, %v770
          %v808 = vadd.f32 %v712, %v774
          %v809 = vadd.f32 %v713, %v774
          %v810 = vadd.f32 %v714, %v778
          %v811 = vadd.f32 %v715, %v778
          %v812 = vmul.f32 %v780, 0.01
          %v813 = vmul.f32 %v781, 0.01
          %v814 = vmul.f32 %v782, 0.01
          %v815 = vmul.f32 %v783, 0.01
          %v816 = vmul.f32 %v784, 0.01
          %v817 = vmul.f32 %v785, 0.01
          %v818 = vmul.f32 %v786, 0.01
          %v819 = vmul.f32 %v787, 0.01
          %v820 = vmul.f32 %v788, 0.01
          %v821 = vmul.f32 %v789, 0.01
          %v822 = vmul.f32 %v790, 0.01
          %v823 = vmul.f32 %v791, 0.01
          %v824 = vmul.f32 %v792, 0.01
          %v825 = vmul.f32 %v793, 0.01
          %v826 = vmul.f32 %v794, 0.01
          %v827 = vmul.f32 %v795, 0.01
          %v828 = vmul.f32 %v796, 0.01
          %v829 = vmul.f32 %v797, 0.01
          %v830 = vmul.f32 %v798, 0.01
          %v831 = vmul.f32 %v799, 0.01
          %v832 = vmul.f32 %v800, 0.01
          %v833 = vmul.f32 %v801, 0.01
          %v834 = vmul.f32 %v802, 0.01
          %v835 = vmul.f32 %v803, 0.01
          %v836 = vmul.f32 %v804, 0.01
          %v837 = vmul.f32 %v805, 0.01
          %v838 = vmul.f32 %v806, 0.01
          %v839 = vmul.f32 %v807, 0.01
          %v840 = vmul.f32 %v808, 0.01
          %v841 = vmul.f32 %v809, 0.01
          %v842 = vmul.f32 %v810, 0.01
          %v843 = vmul.f32 %v811, 0.01
          %v844 = vmax.f32 %v780, %v812
          %v845 = vmax.f32 %v781, %v813
          %v846 = vmax.f32 %v782, %v814
          %v847 = vmax.f32 %v783, %v815
          %v848 = vmax.f32 %v784, %v816
          %v849 = vmax.f32 %v785, %v817
          %v850 = vmax.f32 %v786, %v818
          %v851 = vmax.f32 %v787, %v819
          %v852 = vmax.f32 %v788, %v820
          %v853 = vmax.f32 %v789, %v821
          %v854 = vmax.f32 %v790, %v822
          %v855 = vmax.f32 %v791, %v823
          %v856 = vmax.f32 %v792, %v824
          %v857 = vmax.f32 %v793, %v825
          %v858 = vmax.f32 %v794, %v826
          %v859 = vmax.f32 %v795, %v827
          %v860 = vmax.f32 %v796, %v828
          %v861 = vmax.f32 %v797, %v829
          %v862 = vmax.f32 %v798, %v830
          %v863 = vmax.f32 %v799, %v831
          %v864 = vmax.f32 %v800, %v832
          %v865 = vmax.f32 %v801, %v833
          %v866 = vmax.f32 %v802, %v834
          %v867 = vmax.f32 %v803, %v835
          %v868 = vmax.f32 %v804, %v836
          %v869 = vmax.f32 %v805, %v837
          %v870 = vmax.f32 %v806, %v838
          %v871 = vmax.f32 %v807, %v839
          %v872 = vmax.f32 %v808, %v840
          %v873 = vmax.f32 %v809, %v841
          %v874 = vmax.f32 %v810, %v842
          %v875 = vmax.f32 %v811, %v843
          %v876 = vsel %vm435, %v844, -1e+30
          %v877 = vsel %vm436, %v845, -1e+30
          %v878 = vsel %vm437, %v846, -1e+30
          %v879 = vsel %vm438, %v847, -1e+30
          %v880 = vsel %vm439, %v848, -1e+30
          %v881 = vsel %vm440, %v849, -1e+30
          %v882 = vsel %vm441, %v850, -1e+30
          %v883 = vsel %vm442, %v851, -1e+30
          %v884 = vsel %vm443, %v852, -1e+30
          %v885 = vsel %vm444, %v853, -1e+30
          %v886 = vsel %vm445, %v854, -1e+30
          %v887 = vsel %vm446, %v855, -1e+30
          %v888 = vsel %vm447, %v856, -1e+30
          %v889 = vsel %vm448, %v857, -1e+30
          %v890 = vsel %vm449, %v858, -1e+30
          %v891 = vsel %vm450, %v859, -1e+30
          %v892 = vsel %vm451, %v860, -1e+30
          %v893 = vsel %vm452, %v861, -1e+30
          %v894 = vsel %vm453, %v862, -1e+30
          %v895 = vsel %vm454, %v863, -1e+30
          %v896 = vsel %vm455, %v864, -1e+30
          %v897 = vsel %vm456, %v865, -1e+30
          %v898 = vsel %vm457, %v866, -1e+30
          %v899 = vsel %vm458, %v867, -1e+30
          %v900 = vsel %vm459, %v868, -1e+30
          %v901 = vsel %vm460, %v869, -1e+30
          %v902 = vsel %vm461, %v870, -1e+30
          %v903 = vsel %vm462, %v871, -1e+30
          %v904 = vsel %vm463, %v872, -1e+30
          %v905 = vsel %vm464, %v873, -1e+30
          %v906 = vsel %vm465, %v874, -1e+30
          %v907 = vsel %vm466, %v875, -1e+30
          %v908 = vmax.f32 %v876, %v877
          %909 = vmax.xlane.f32.xlu0 %v908
          %v910 = vpop.xlane.xlu0 %909
          %v911 = vmax.f32 %v878, %v879
          %912 = vmax.xlane.f32.xlu0 %v911
          %v913 = vpop.xlane.xlu0 %912
          %v914 = vmax.f32 %v880, %v881
          %915 = vmax.xlane.f32.xlu0 %v914
          %v916 = vpop.xlane.xlu0 %915
          %v917 = vmax.f32 %v882, %v883
          %918 = vmax.xlane.f32.xlu0 %v917
          %v919 = vpop.xlane.xlu0 %918
          %v920 = vmax.f32 %v884, %v885
          %921 = vmax.xlane.f32.xlu0 %v920
          %v922 = vpop.xlane.xlu0 %921
          %v923 = vmax.f32 %v886, %v887
          %924 = vmax.xlane.f32.xlu0 %v923
          %v925 = vpop.xlane.xlu0 %924
          %v926 = vmax.f32 %v888, %v889
          %927 = vmax.xlane.f32.xlu0 %v926
          %v928 = vpop.xlane.xlu0 %927
          %v929 = vmax.f32 %v890, %v891
          %930 = vmax.xlane.f32.xlu0 %v929
          %v931 = vpop.xlane.xlu0 %930
          %v932 = vmax.f32 %v892, %v893
          %933 = vmax.xlane.f32.xlu0 %v932
          %v934 = vpop.xlane.xlu0 %933
          %v935 = vmax.f32 %v894, %v895
          %936 = vmax.xlane.f32.xlu0 %v935
          %v937 = vpop.xlane.xlu0 %936
          %v938 = vmax.f32 %v896, %v897
          %939 = vmax.xlane.f32.xlu0 %v938
          %v940 = vpop.xlane.xlu0 %939
          %v941 = vmax.f32 %v898, %v899
          %942 = vmax.xlane.f32.xlu0 %v941
          %v943 = vpop.xlane.xlu0 %942
          %v944 = vmax.f32 %v900, %v901
          %945 = vmax.xlane.f32.xlu0 %v944
          %v946 = vpop.xlane.xlu0 %945
          %v947 = vmax.f32 %v902, %v903
          %948 = vmax.xlane.f32.xlu0 %v947
          %v949 = vpop.xlane.xlu0 %948
          %v950 = vmax.f32 %v904, %v905
          %951 = vmax.xlane.f32.xlu0 %v950
          %v952 = vpop.xlane.xlu0 %951
          %v953 = vmax.f32 %v906, %v907
          %954 = vmax.xlane.f32.xlu0 %v953
          %v955 = vpop.xlane.xlu0 %954
          %v956 = vmax.f32 %v639, %v910
          %v957 = vmax.f32 %v640, %v913
          %v958 = vmax.f32 %v641, %v916
          %v959 = vmax.f32 %v642, %v919
          %v960 = vmax.f32 %v643, %v922
          %v961 = vmax.f32 %v644, %v925
          %v962 = vmax.f32 %v645, %v928
          %v963 = vmax.f32 %v646, %v931
          %v964 = vmax.f32 %v647, %v934
          %v965 = vmax.f32 %v648, %v937
          %v966 = vmax.f32 %v649, %v940
          %v967 = vmax.f32 %v650, %v943
          %v968 = vmax.f32 %v651, %v946
          %v969 = vmax.f32 %v652, %v949
          %v970 = vmax.f32 %v653, %v952
          %v971 = vmax.f32 %v654, %v955
          %v972 = vsub.f32 %v639, %v956
          %v973 = vsub.f32 %v640, %v957
          %v974 = vsub.f32 %v641, %v958
          %v975 = vsub.f32 %v642, %v959
          %v976 = vsub.f32 %v643, %v960
          %v977 = vsub.f32 %v644, %v961
          %v978 = vsub.f32 %v645, %v962
          %v979 = vsub.f32 %v646, %v963
          %v980 = vsub.f32 %v647, %v964
          %v981 = vsub.f32 %v648, %v965
          %v982 = vsub.f32 %v649, %v966
          %v983 = vsub.f32 %v650, %v967
          %v984 = vsub.f32 %v651, %v968
          %v985 = vsub.f32 %v652, %v969
          %v986 = vsub.f32 %v653, %v970
          %v987 = vsub.f32 %v654, %v971
          %v988 = vmul.f32 %v972, 1.442695
          %v989 = vpow.pop %v988
          %v990 = vmul.f32 %v973, 1.442695
          %v991 = vpow.pop %v990
          %v992 = vmul.f32 %v974, 1.442695
          %v993 = vpow.pop %v992
          %v994 = vmul.f32 %v975, 1.442695
          %v995 = vpow.pop %v994
          %v996 = vmul.f32 %v976, 1.442695
          %v997 = vpow.pop %v996
          %v998 = vmul.f32 %v977, 1.442695
          %v999 = vpow.pop %v998
          %v1000 = vmul.f32 %v978, 1.442695
          %v1001 = vpow.pop %v1000
          %v1002 = vmul.f32 %v979, 1.442695
          %v1003 = vpow.pop %v1002
          %v1004 = vmul.f32 %v980, 1.442695
          %v1005 = vpow.pop %v1004
          %v1006 = vmul.f32 %v981, 1.442695
          %v1007 = vpow.pop %v1006
          %v1008 = vmul.f32 %v982, 1.442695
          %v1009 = vpow.pop %v1008
          %v1010 = vmul.f32 %v983, 1.442695
          %v1011 = vpow.pop %v1010
          %v1012 = vmul.f32 %v984, 1.442695
          %v1013 = vpow.pop %v1012
          %v1014 = vmul.f32 %v985, 1.442695
          %v1015 = vpow.pop %v1014
          %v1016 = vmul.f32 %v986, 1.442695
          %v1017 = vpow.pop %v1016
          %v1018 = vmul.f32 %v987, 1.442695
          %v1019 = vpow.pop %v1018
          %1021 = vset.pattern.permute.xlu0 0
          %1022 = vperm.xlu0 %1021, %v956
          %v1023 = vpop.permute.xlu0 %1022
          %1026 = vset.pattern.permute.xlu0 0
          %1027 = vperm.xlu0 %1026, %v957
          %v1028 = vpop.permute.xlu0 %1027
          %1031 = vset.pattern.permute.xlu0 0
          %1032 = vperm.xlu0 %1031, %v958
          %v1033 = vpop.permute.xlu0 %1032
          %1036 = vset.pattern.permute.xlu0 0
          %1037 = vperm.xlu0 %1036, %v959
          %v1038 = vpop.permute.xlu0 %1037
          %1041 = vset.pattern.permute.xlu0 0
          %1042 = vperm.xlu0 %1041, %v960
          %v1043 = vpop.permute.xlu0 %1042
          %1046 = vset.pattern.permute.xlu0 0
          %1047 = vperm.xlu0 %1046, %v961
          %v1048 = vpop.permute.xlu0 %1047
          %1051 = vset.pattern.permute.xlu0 0
          %1052 = vperm.xlu0 %1051, %v962
          %v1053 = vpop.permute.xlu0 %1052
          %1056 = vset.pattern.permute.xlu0 0
          %1057 = vperm.xlu0 %1056, %v963
          %v1058 = vpop.permute.xlu0 %1057
          %1061 = vset.pattern.permute.xlu0 0
          %1062 = vperm.xlu0 %1061, %v964
          %v1063 = vpop.permute.xlu0 %1062
          %1066 = vset.pattern.permute.xlu0 0
          %1067 = vperm.xlu0 %1066, %v965
          %v1068 = vpop.permute.xlu0 %1067
          %1071 = vset.pattern.permute.xlu0 0
          %1072 = vperm.xlu0 %1071, %v966
          %v1073 = vpop.permute.xlu0 %1072
          %1076 = vset.pattern.permute.xlu0 0
          %1077 = vperm.xlu0 %1076, %v967
          %v1078 = vpop.permute.xlu0 %1077
          %1081 = vset.pattern.permute.xlu0 0
          %1082 = vperm.xlu0 %1081, %v968
          %v1083 = vpop.permute.xlu0 %1082
          %1086 = vset.pattern.permute.xlu0 0
          %1087 = vperm.xlu0 %1086, %v969
          %v1088 = vpop.permute.xlu0 %1087
          %1091 = vset.pattern.permute.xlu0 0
          %1092 = vperm.xlu0 %1091, %v970
          %v1093 = vpop.permute.xlu0 %1092
          %1096 = vset.pattern.permute.xlu0 0
          %1097 = vperm.xlu0 %1096, %v971
          %v1098 = vpop.permute.xlu0 %1097
          %v1100 = vsub.f32 %v876, %v1023
          %v1101 = vsub.f32 %v877, %v1023
          %v1102 = vsub.f32 %v878, %v1028
          %v1103 = vsub.f32 %v879, %v1028
          %v1104 = vsub.f32 %v880, %v1033
          %v1105 = vsub.f32 %v881, %v1033
          %v1106 = vsub.f32 %v882, %v1038
          %v1107 = vsub.f32 %v883, %v1038
          %v1108 = vsub.f32 %v884, %v1043
          %v1109 = vsub.f32 %v885, %v1043
          %v1110 = vsub.f32 %v886, %v1048
          %v1111 = vsub.f32 %v887, %v1048
          %v1112 = vsub.f32 %v888, %v1053
          %v1113 = vsub.f32 %v889, %v1053
          %v1114 = vsub.f32 %v890, %v1058
          %v1115 = vsub.f32 %v891, %v1058
          %v1116 = vsub.f32 %v892, %v1063
          %v1117 = vsub.f32 %v893, %v1063
          %v1118 = vsub.f32 %v894, %v1068
          %v1119 = vsub.f32 %v895, %v1068
          %v1120 = vsub.f32 %v896, %v1073
          %v1121 = vsub.f32 %v897, %v1073
          %v1122 = vsub.f32 %v898, %v1078
          %v1123 = vsub.f32 %v899, %v1078
          %v1124 = vsub.f32 %v900, %v1083
          %v1125 = vsub.f32 %v901, %v1083
          %v1126 = vsub.f32 %v902, %v1088
          %v1127 = vsub.f32 %v903, %v1088
          %v1128 = vsub.f32 %v904, %v1093
          %v1129 = vsub.f32 %v905, %v1093
          %v1130 = vsub.f32 %v906, %v1098
          %v1131 = vsub.f32 %v907, %v1098
          %v1132 = vmul.f32 %v1100, 1.442695
          %v1133 = vpow.pop %v1132
          %v1134 = vmul.f32 %v1101, 1.442695
          %v1135 = vpow.pop %v1134
          %v1136 = vmul.f32 %v1102, 1.442695
          %v1137 = vpow.pop %v1136
          %v1138 = vmul.f32 %v1103, 1.442695
          %v1139 = vpow.pop %v1138
          %v1140 = vmul.f32 %v1104, 1.442695
          %v1141 = vpow.pop %v1140
          %v1142 = vmul.f32 %v1105, 1.442695
          %v1143 = vpow.pop %v1142
          %v1144 = vmul.f32 %v1106, 1.442695
          %v1145 = vpow.pop %v1144
          %v1146 = vmul.f32 %v1107, 1.442695
          %v1147 = vpow.pop %v1146
          %v1148 = vmul.f32 %v1108, 1.442695
          %v1149 = vpow.pop %v1148
          %v1150 = vmul.f32 %v1109, 1.442695
          %v1151 = vpow.pop %v1150
          %v1152 = vmul.f32 %v1110, 1.442695
          %v1153 = vpow.pop %v1152
          %v1154 = vmul.f32 %v1111, 1.442695
          %v1155 = vpow.pop %v1154
          %v1156 = vmul.f32 %v1112, 1.442695
          %v1157 = vpow.pop %v1156
          %v1158 = vmul.f32 %v1113, 1.442695
          %v1159 = vpow.pop %v1158
          %v1160 = vmul.f32 %v1114, 1.442695
          %v1161 = vpow.pop %v1160
          %v1162 = vmul.f32 %v1115, 1.442695
          %v1163 = vpow.pop %v1162
          %v1164 = vmul.f32 %v1116, 1.442695
          %v1165 = vpow.pop %v1164
          %v1166 = vmul.f32 %v1117, 1.442695
          %v1167 = vpow.pop %v1166
          %v1168 = vmul.f32 %v1118, 1.442695
          %v1169 = vpow.pop %v1168
          %v1170 = vmul.f32 %v1119, 1.442695
          %v1171 = vpow.pop %v1170
          %v1172 = vmul.f32 %v1120, 1.442695
          %v1173 = vpow.pop %v1172
          %v1174 = vmul.f32 %v1121, 1.442695
          %v1175 = vpow.pop %v1174
          %v1176 = vmul.f32 %v1122, 1.442695
          %v1177 = vpow.pop %v1176
          %v1178 = vmul.f32 %v1123, 1.442695
          %v1179 = vpow.pop %v1178
          %v1180 = vmul.f32 %v1124, 1.442695
          %v1181 = vpow.pop %v1180
          %v1182 = vmul.f32 %v1125, 1.442695
          %v1183 = vpow.pop %v1182
          %v1184 = vmul.f32 %v1126, 1.442695
          %v1185 = vpow.pop %v1184
          %v1186 = vmul.f32 %v1127, 1.442695
          %v1187 = vpow.pop %v1186
          %v1188 = vmul.f32 %v1128, 1.442695
          %v1189 = vpow.pop %v1188
          %v1190 = vmul.f32 %v1129, 1.442695
          %v1191 = vpow.pop %v1190
          %v1192 = vmul.f32 %v1130, 1.442695
          %v1193 = vpow.pop %v1192
          %v1194 = vmul.f32 %v1131, 1.442695
          %v1195 = vpow.pop %v1194
          %v1196 = vmul.f32 %v989, %v655
          %v1197 = vmul.f32 %v991, %v656
          %v1198 = vmul.f32 %v993, %v657
          %v1199 = vmul.f32 %v995, %v658
          %v1200 = vmul.f32 %v997, %v659
          %v1201 = vmul.f32 %v999, %v660
          %v1202 = vmul.f32 %v1001, %v661
          %v1203 = vmul.f32 %v1003, %v662
          %v1204 = vmul.f32 %v1005, %v663
          %v1205 = vmul.f32 %v1007, %v664
          %v1206 = vmul.f32 %v1009, %v665
          %v1207 = vmul.f32 %v1011, %v666
          %v1208 = vmul.f32 %v1013, %v667
          %v1209 = vmul.f32 %v1015, %v668
          %v1210 = vmul.f32 %v1017, %v669
          %v1211 = vmul.f32 %v1019, %v670
          %v1212 = vadd.f32 %v1133, %v1135
          %1213 = vadd.xlane.f32.xlu0 %v1212
          %v1214 = vpop.xlane.xlu0 %1213
          %v1215 = vadd.f32 %v1137, %v1139
          %1216 = vadd.xlane.f32.xlu0 %v1215
          %v1217 = vpop.xlane.xlu0 %1216
          %v1218 = vadd.f32 %v1141, %v1143
          %1219 = vadd.xlane.f32.xlu0 %v1218
          %v1220 = vpop.xlane.xlu0 %1219
          %v1221 = vadd.f32 %v1145, %v1147
          %1222 = vadd.xlane.f32.xlu0 %v1221
          %v1223 = vpop.xlane.xlu0 %1222
          %v1224 = vadd.f32 %v1149, %v1151
          %1225 = vadd.xlane.f32.xlu0 %v1224
          %v1226 = vpop.xlane.xlu0 %1225
          %v1227 = vadd.f32 %v1153, %v1155
          %1228 = vadd.xlane.f32.xlu0 %v1227
          %v1229 = vpop.xlane.xlu0 %1228
          %v1230 = vadd.f32 %v1157, %v1159
          %1231 = vadd.xlane.f32.xlu0 %v1230
          %v1232 = vpop.xlane.xlu0 %1231
          %v1233 = vadd.f32 %v1161, %v1163
          %1234 = vadd.xlane.f32.xlu0 %v1233
          %v1235 = vpop.xlane.xlu0 %1234
          %v1236 = vadd.f32 %v1165, %v1167
          %1237 = vadd.xlane.f32.xlu0 %v1236
          %v1238 = vpop.xlane.xlu0 %1237
          %v1239 = vadd.f32 %v1169, %v1171
          %1240 = vadd.xlane.f32.xlu0 %v1239
          %v1241 = vpop.xlane.xlu0 %1240
          %v1242 = vadd.f32 %v1173, %v1175
          %1243 = vadd.xlane.f32.xlu0 %v1242
          %v1244 = vpop.xlane.xlu0 %1243
          %v1245 = vadd.f32 %v1177, %v1179
          %1246 = vadd.xlane.f32.xlu0 %v1245
          %v1247 = vpop.xlane.xlu0 %1246
          %v1248 = vadd.f32 %v1181, %v1183
          %1249 = vadd.xlane.f32.xlu0 %v1248
          %v1250 = vpop.xlane.xlu0 %1249
          %v1251 = vadd.f32 %v1185, %v1187
          %1252 = vadd.xlane.f32.xlu0 %v1251
          %v1253 = vpop.xlane.xlu0 %1252
          %v1254 = vadd.f32 %v1189, %v1191
          %1255 = vadd.xlane.f32.xlu0 %v1254
          %v1256 = vpop.xlane.xlu0 %1255
          %v1257 = vadd.f32 %v1193, %v1195
          %1258 = vadd.xlane.f32.xlu0 %v1257
          %v1259 = vpop.xlane.xlu0 %1258
          %v1260 = vadd.f32 %v1196, %v1214
          %v1261 = vadd.f32 %v1197, %v1217
          %v1262 = vadd.f32 %v1198, %v1220
          %v1263 = vadd.f32 %v1199, %v1223
          %v1264 = vadd.f32 %v1200, %v1226
          %v1265 = vadd.f32 %v1201, %v1229
          %v1266 = vadd.f32 %v1202, %v1232
          %v1267 = vadd.f32 %v1203, %v1235
          %v1268 = vadd.f32 %v1204, %v1238
          %v1269 = vadd.f32 %v1205, %v1241
          %v1270 = vadd.f32 %v1206, %v1244
          %v1271 = vadd.f32 %v1207, %v1247
          %v1272 = vadd.f32 %v1208, %v1250
          %v1273 = vadd.f32 %v1209, %v1253
          %v1274 = vadd.f32 %v1210, %v1256
          %v1275 = vadd.f32 %v1211, %v1259
          %v1276 = vmul.f32 %v1133, %v607
          %v1277 = vmul.f32 %v1135, %v608
          %v1278 = vmul.f32 %v1137, %v609
          %v1279 = vmul.f32 %v1139, %v610
          %v1280 = vmul.f32 %v1141, %v611
          %v1281 = vmul.f32 %v1143, %v612
          %v1282 = vmul.f32 %v1145, %v613
          %v1283 = vmul.f32 %v1147, %v614
          %v1284 = vmul.f32 %v1149, %v615
          %v1285 = vmul.f32 %v1151, %v616
          %v1286 = vmul.f32 %v1153, %v617
          %v1287 = vmul.f32 %v1155, %v618
          %v1288 = vmul.f32 %v1157, %v619
          %v1289 = vmul.f32 %v1159, %v620
          %v1290 = vmul.f32 %v1161, %v621
          %v1291 = vmul.f32 %v1163, %v622
          %v1292 = vmul.f32 %v1165, %v623
          %v1293 = vmul.f32 %v1167, %v624
          %v1294 = vmul.f32 %v1169, %v625
          %v1295 = vmul.f32 %v1171, %v626
          %v1296 = vmul.f32 %v1173, %v627
          %v1297 = vmul.f32 %v1175, %v628
          %v1298 = vmul.f32 %v1177, %v629
          %v1299 = vmul.f32 %v1179, %v630
          %v1300 = vmul.f32 %v1181, %v631
          %v1301 = vmul.f32 %v1183, %v632
          %v1302 = vmul.f32 %v1185, %v633
          %v1303 = vmul.f32 %v1187, %v634
          %v1304 = vmul.f32 %v1189, %v635
          %v1305 = vmul.f32 %v1191, %v636
          %v1306 = vmul.f32 %v1193, %v637
          %v1307 = vmul.f32 %v1195, %v638
          %v1308 = vpack.c.bf16 %v1278, %v1276
          %v1309 = vpack.c.bf16 %v1279, %v1277
          %v1310 = vpack.c.bf16 %v1282, %v1280
          %v1311 = vpack.c.bf16 %v1283, %v1281
          %v1312 = vpack.c.bf16 %v1286, %v1284
          %v1313 = vpack.c.bf16 %v1287, %v1285
          %v1314 = vpack.c.bf16 %v1290, %v1288
          %v1315 = vpack.c.bf16 %v1291, %v1289
          %v1316 = vpack.c.bf16 %v1294, %v1292
          %v1317 = vpack.c.bf16 %v1295, %v1293
          %v1318 = vpack.c.bf16 %v1298, %v1296
          %v1319 = vpack.c.bf16 %v1299, %v1297
          %v1320 = vpack.c.bf16 %v1302, %v1300
          %v1321 = vpack.c.bf16 %v1303, %v1301
          %v1322 = vpack.c.bf16 %v1306, %v1304
          %v1323 = vpack.c.bf16 %v1307, %v1305
          %v1324 = vld [vmem:[%s300] sm:$0xf]
          %v1325 = vld [vmem:[%s300 + $0x4] sm:$0xf]
          %v1326 = vld [vmem:[%s300 + $0x8] sm:$0xf]
          %v1327 = vld [vmem:[%s300 + $0xc] sm:$0xf]
          %v1328 = vld [vmem:[%s300 + $0x10] sm:$0xf]
          %v1329 = vld [vmem:[%s300 + $0x14] sm:$0xf]
          %v1330 = vld [vmem:[%s300 + $0x18] sm:$0xf]
          %v1331 = vld [vmem:[%s300 + $0x1c] sm:$0xf]
          %v1332 = vld [vmem:[%s300 + $0x20] sm:$0xf]
          %v1333 = vld [vmem:[%s300 + $0x24] sm:$0xf]
          %v1334 = vld [vmem:[%s300 + $0x28] sm:$0xf]
          %v1335 = vld [vmem:[%s300 + $0x2c] sm:$0xf]
          %v1336 = vld [vmem:[%s300 + $0x30] sm:$0xf]
          %v1337 = vld [vmem:[%s300 + $0x34] sm:$0xf]
          %v1338 = vld [vmem:[%s300 + $0x38] sm:$0xf]
          %v1339 = vld [vmem:[%s300 + $0x3c] sm:$0xf]
          %v1340 = vld [vmem:[%s300 + $0x40] sm:$0xf]
          %v1341 = vld [vmem:[%s300 + $0x44] sm:$0xf]
          %v1342 = vld [vmem:[%s300 + $0x48] sm:$0xf]
          %v1343 = vld [vmem:[%s300 + $0x4c] sm:$0xf]
          %v1344 = vld [vmem:[%s300 + $0x50] sm:$0xf]
          %v1345 = vld [vmem:[%s300 + $0x54] sm:$0xf]
          %v1346 = vld [vmem:[%s300 + $0x58] sm:$0xf]
          %v1347 = vld [vmem:[%s300 + $0x5c] sm:$0xf]
          %v1348 = vld [vmem:[%s300 + $0x60] sm:$0xf]
          %v1349 = vld [vmem:[%s300 + $0x64] sm:$0xf]
          %v1350 = vld [vmem:[%s300 + $0x68] sm:$0xf]
          %v1351 = vld [vmem:[%s300 + $0x6c] sm:$0xf]
          %v1352 = vld [vmem:[%s300 + $0x70] sm:$0xf]
          %v1353 = vld [vmem:[%s300 + $0x74] sm:$0xf]
          %v1354 = vld [vmem:[%s300 + $0x78] sm:$0xf]
          %v1355 = vld [vmem:[%s300 + $0x7c] sm:$0xf]
          %v1388 = vunpack.c.l.b16 %v1324
          %v1389 = vunpack.c.l.b16 %v1325
          %v1390 = vunpack.c.l.b16 %v1326
          %v1391 = vunpack.c.l.b16 %v1327
          %v1392 = vunpack.c.l.b16 %v1328
          %v1393 = vunpack.c.l.b16 %v1329
          %v1394 = vunpack.c.l.b16 %v1330
          %v1395 = vunpack.c.l.b16 %v1331
          %v1396 = vunpack.c.l.b16 %v1332
          %v1397 = vunpack.c.l.b16 %v1333
          %v1398 = vunpack.c.l.b16 %v1334
          %v1399 = vunpack.c.l.b16 %v1335
          %v1400 = vunpack.c.l.b16 %v1336
          %v1401 = vunpack.c.l.b16 %v1337
          %v1402 = vunpack.c.l.b16 %v1338
          %v1403 = vunpack.c.l.b16 %v1339
          %v1404 = vunpack.c.l.b16 %v1340
          %v1405 = vunpack.c.l.b16 %v1341
          %v1406 = vunpack.c.l.b16 %v1342
          %v1407 = vunpack.c.l.b16 %v1343
          %v1408 = vunpack.c.l.b16 %v1344
          %v1409 = vunpack.c.l.b16 %v1345
          %v1410 = vunpack.c.l.b16 %v1346
          %v1411 = vunpack.c.l.b16 %v1347
          %v1412 = vunpack.c.l.b16 %v1348
          %v1413 = vunpack.c.l.b16 %v1349
          %v1414 = vunpack.c.l.b16 %v1350
          %v1415 = vunpack.c.l.b16 %v1351
          %v1416 = vunpack.c.l.b16 %v1352
          %v1417 = vunpack.c.l.b16 %v1353
          %v1418 = vunpack.c.l.b16 %v1354
          %v1419 = vunpack.c.l.b16 %v1355
          %v1420 = vpack.c.b16 %v1389, %v1388
          %v1421 = vpack.c.b16 %v1391, %v1390
          %v1422 = vpack.c.b16 %v1393, %v1392
          %v1423 = vpack.c.b16 %v1395, %v1394
          %v1424 = vpack.c.b16 %v1397, %v1396
          %v1425 = vpack.c.b16 %v1399, %v1398
          %v1426 = vpack.c.b16 %v1401, %v1400
          %v1427 = vpack.c.b16 %v1403, %v1402
          %v1428 = vpack.c.b16 %v1405, %v1404
          %v1429 = vpack.c.b16 %v1407, %v1406
          %v1430 = vpack.c.b16 %v1409, %v1408
          %v1431 = vpack.c.b16 %v1411, %v1410
          %v1432 = vpack.c.b16 %v1413, %v1412
          %v1433 = vpack.c.b16 %v1415, %v1414
          %v1434 = vpack.c.b16 %v1417, %v1416
          %v1435 = vpack.c.b16 %v1419, %v1418
          %1452 = vmatprep.subr.bf16.mxu0 0
          %1453 = vmatpush1.bf16.msra.mxu0 %v1420
          %1454 = vmatprep.subr.bf16.mxu0 0
          %1455 = vmatpush1.bf16.msra.mxu0 %v1421
          %1456 = vmatprep.subr.bf16.mxu0 0
          %1457 = vmatpush1.bf16.msra.mxu0 %v1422
          %1458 = vmatprep.subr.bf16.mxu0 0
          %1459 = vmatpush1.bf16.msra.mxu0 %v1423
          %1460 = vmatprep.subr.bf16.mxu0 0
          %1461 = vmatpush1.bf16.msra.mxu0 %v1424
          %1462 = vmatprep.subr.bf16.mxu0 0
          %1463 = vmatpush1.bf16.msra.mxu0 %v1425
          %1464 = vmatprep.subr.bf16.mxu0 0
          %1465 = vmatpush1.bf16.msra.mxu0 %v1426
          %1466 = vmatprep.subr.bf16.mxu0 0
          %1467 = vmatpush1.bf16.msra.mxu0 %v1427
          %1468 = vmatprep.subr.bf16.mxu0 0
          %1469 = vmatpush1.bf16.msra.mxu0 %v1428
          %1470 = vmatprep.subr.bf16.mxu0 0
          %1471 = vmatpush1.bf16.msra.mxu0 %v1429
          %1472 = vmatprep.subr.bf16.mxu0 0
          %1473 = vmatpush1.bf16.msra.mxu0 %v1430
          %1474 = vmatprep.subr.bf16.mxu0 0
          %1475 = vmatpush1.bf16.msra.mxu0 %v1431
          %1476 = vmatprep.subr.bf16.mxu0 0
          %1477 = vmatpush1.bf16.msra.mxu0 %v1432
          %1478 = vmatprep.subr.bf16.mxu0 0
          %1479 = vmatpush1.bf16.msra.mxu0 %v1433
          %1480 = vmatprep.subr.bf16.mxu0 0
          %1481 = vmatpush1.bf16.msra.mxu0 %v1434
          %1482 = vmatprep.subr.bf16.mxu0 0
          %1483 = vmatpush1.bf16.msra.mxu0 %v1435
          %1484 = vmatprep.mubr.bf16.mxu0 %v1309
          %1485 = vmatmul.mubr.bf16.gmra.mrb[0].mxu0 %v1308
          %v1486 = vpop.f32.mrb[0].mxu0
          %v1487 = vadd.f32 0.0, %v1486
          %v1488 = vpop.f32.mrb[0].mxu0
          %v1489 = vpop.f32.mrb[0].mxu0
          %v1490 = vadd.f32 0.0, %v1489
          %v1491 = vpop.f32.mrb[0].mxu0
          %1492 = vmatprep.mubr.bf16.mxu0 %v1311
          %1493 = vmatmul.mubr.bf16.gmra.mrb[0].mxu0 %v1310
          %v1494 = vpop.f32.mrb[0].mxu0
          %v1495 = vadd.f32 0.0, %v1494
          %v1496 = vpop.f32.mrb[0].mxu0
          %v1497 = vpop.f32.mrb[0].mxu0
          %v1498 = vadd.f32 0.0, %v1497
          %v1499 = vpop.f32.mrb[0].mxu0
          %1500 = vmatprep.mubr.bf16.mxu0 %v1313
          %1501 = vmatmul.mubr.bf16.gmra.mrb[0].mxu0 %v1312
          %v1502 = vpop.f32.mrb[0].mxu0
          %v1503 = vadd.f32 0.0, %v1502
          %v1504 = vpop.f32.mrb[0].mxu0
          %v1505 = vpop.f32.mrb[0].mxu0
          %v1506 = vadd.f32 0.0, %v1505
          %v1507 = vpop.f32.mrb[0].mxu0
          %1508 = vmatprep.mubr.bf16.mxu0 %v1315
          %1509 = vmatmul.mubr.bf16.gmra.mrb[0].mxu0 %v1314
          %v1510 = vpop.f32.mrb[0].mxu0
          %v1511 = vadd.f32 0.0, %v1510
          %v1512 = vpop.f32.mrb[0].mxu0
          %v1513 = vpop.f32.mrb[0].mxu0
          %v1514 = vadd.f32 0.0, %v1513
          %v1515 = vpop.f32.mrb[0].mxu0
          %1516 = vmatprep.mubr.bf16.mxu0 %v1317
          %1517 = vmatmul.mubr.bf16.gmra.mrb[0].mxu0 %v1316
          %v1518 = vpop.f32.mrb[0].mxu0
          %v1519 = vadd.f32 0.0, %v1518
          %v1520 = vpop.f32.mrb[0].mxu0
          %v1521 = vpop.f32.mrb[0].mxu0
          %v1522 = vadd.f32 0.0, %v1521
          %v1523 = vpop.f32.mrb[0].mxu0
          %1524 = vmatprep.mubr.bf16.mxu0 %v1319
          %1525 = vmatmul.mubr.bf16.gmra.mrb[0].mxu0 %v1318
          %v1526 = vpop.f32.mrb[0].mxu0
          %v1527 = vadd.f32 0.0, %v1526
          %v1528 = vpop.f32.mrb[0].mxu0
          %v1529 = vpop.f32.mrb[0].mxu0
          %v1530 = vadd.f32 0.0, %v1529
          %v1531 = vpop.f32.mrb[0].mxu0
          %1532 = vmatprep.mubr.bf16.mxu0 %v1321
          %1533 = vmatmul.mubr.bf16.gmra.mrb[0].mxu0 %v1320
          %v1534 = vpop.f32.mrb[0].mxu0
          %v1535 = vadd.f32 0.0, %v1534
          %v1536 = vpop.f32.mrb[0].mxu0
          %v1537 = vpop.f32.mrb[0].mxu0
          %v1538 = vadd.f32 0.0, %v1537
          %v1539 = vpop.f32.mrb[0].mxu0
          %1540 = vmatprep.mubr.bf16.mxu0 %v1323
          %1541 = vmatmul.mubr.bf16.gmra.mrb[0].mxu0 %v1322
          %v1542 = vpop.f32.mrb[0].mxu0
          %v1543 = vadd.f32 0.0, %v1542
          %v1544 = vpop.f32.mrb[0].mxu0
          %v1545 = vpop.f32.mrb[0].mxu0
          %v1546 = vadd.f32 0.0, %v1545
          %v1547 = vpop.f32.mrb[0].mxu0
          %1548 = vdwg.mxu0
          %s1549 = scalar_lea.vmem %s288, 2
          %v1550 = vld [vmem:[%s1549] ss:$8 sm:$0x3]
          %v1552 = vlaneseq
          %v1553 = vshrl.u32 %v1552, 7
          %v1554 = vsub.s32 0, %v1553
          %v1555 = vrot.slane %v1550, %v1554
          %v1556 = vlaneseq
          %v1557 = vshrl.u32 %v1556, 7
          %v1558 = vsub.s32 1, %v1557
          %v1559 = vrot.slane %v1550, %v1558
          %v1562 = vmul.f32 %v607, %v1555
          %v1563 = vmul.f32 %v608, %v1559
          %v1564 = vmul.f32 %v609, %v1555
          %v1565 = vmul.f32 %v610, %v1559
          %v1566 = vmul.f32 %v611, %v1555
          %v1567 = vmul.f32 %v612, %v1559
          %v1568 = vmul.f32 %v613, %v1555
          %v1569 = vmul.f32 %v614, %v1559
          %v1570 = vmul.f32 %v615, %v1555
          %v1571 = vmul.f32 %v616, %v1559
          %v1572 = vmul.f32 %v617, %v1555
          %v1573 = vmul.f32 %v618, %v1559
          %v1574 = vmul.f32 %v619, %v1555
          %v1575 = vmul.f32 %v620, %v1559
          %v1576 = vmul.f32 %v621, %v1555
          %v1577 = vmul.f32 %v622, %v1559
          %v1578 = vmul.f32 %v623, %v1555
          %v1579 = vmul.f32 %v624, %v1559
          %v1580 = vmul.f32 %v625, %v1555
          %v1581 = vmul.f32 %v626, %v1559
          %v1582 = vmul.f32 %v627, %v1555
          %v1583 = vmul.f32 %v628, %v1559
          %v1584 = vmul.f32 %v629, %v1555
          %v1585 = vmul.f32 %v630, %v1559
          %v1586 = vmul.f32 %v631, %v1555
          %v1587 = vmul.f32 %v632, %v1559
          %v1588 = vmul.f32 %v633, %v1555
          %v1589 = vmul.f32 %v634, %v1559
          %v1590 = vmul.f32 %v635, %v1555
          %v1591 = vmul.f32 %v636, %v1559
          %v1592 = vmul.f32 %v637, %v1555
          %v1593 = vmul.f32 %v638, %v1559
          %1594 = vset.pattern.permute.xlu0 2
          %1595 = vperm.xlu0 %1594, %v468
          %v1596 = vpop.permute.xlu0 %1595
          %1598 = vset.pattern.permute.xlu0 2
          %1599 = vperm.xlu0 %1598, %v469
          %v1600 = vpop.permute.xlu0 %1599
          %1602 = vset.pattern.permute.xlu0 2
          %1603 = vperm.xlu0 %1602, %v470
          %v1604 = vpop.permute.xlu0 %1603
          %1606 = vset.pattern.permute.xlu0 2
          %1607 = vperm.xlu0 %1606, %v471
          %v1608 = vpop.permute.xlu0 %1607
          %1610 = vset.pattern.permute.xlu0 2
          %1611 = vperm.xlu0 %1610, %v472
          %v1612 = vpop.permute.xlu0 %1611
          %1614 = vset.pattern.permute.xlu0 2
          %1615 = vperm.xlu0 %1614, %v473
          %v1616 = vpop.permute.xlu0 %1615
          %1618 = vset.pattern.permute.xlu0 2
          %1619 = vperm.xlu0 %1618, %v474
          %v1620 = vpop.permute.xlu0 %1619
          %1622 = vset.pattern.permute.xlu0 2
          %1623 = vperm.xlu0 %1622, %v475
          %v1624 = vpop.permute.xlu0 %1623
          %1626 = vset.pattern.permute.xlu0 2
          %1627 = vperm.xlu0 %1626, %v476
          %v1628 = vpop.permute.xlu0 %1627
          %1630 = vset.pattern.permute.xlu0 2
          %1631 = vperm.xlu0 %1630, %v477
          %v1632 = vpop.permute.xlu0 %1631
          %1634 = vset.pattern.permute.xlu0 2
          %1635 = vperm.xlu0 %1634, %v478
          %v1636 = vpop.permute.xlu0 %1635
          %1638 = vset.pattern.permute.xlu0 2
          %1639 = vperm.xlu0 %1638, %v479
          %v1640 = vpop.permute.xlu0 %1639
          %1642 = vset.pattern.permute.xlu0 2
          %1643 = vperm.xlu0 %1642, %v480
          %v1644 = vpop.permute.xlu0 %1643
          %1646 = vset.pattern.permute.xlu0 2
          %1647 = vperm.xlu0 %1646, %v481
          %v1648 = vpop.permute.xlu0 %1647
          %1650 = vset.pattern.permute.xlu0 2
          %1651 = vperm.xlu0 %1650, %v482
          %v1652 = vpop.permute.xlu0 %1651
          %1654 = vset.pattern.permute.xlu0 2
          %1655 = vperm.xlu0 %1654, %v483
          %v1656 = vpop.permute.xlu0 %1655
          %v1658 = vadd.f32 %v1562, %v1596
          %v1659 = vadd.f32 %v1563, %v1596
          %v1660 = vadd.f32 %v1564, %v1600
          %v1661 = vadd.f32 %v1565, %v1600
          %v1662 = vadd.f32 %v1566, %v1604
          %v1663 = vadd.f32 %v1567, %v1604
          %v1664 = vadd.f32 %v1568, %v1608
          %v1665 = vadd.f32 %v1569, %v1608
          %v1666 = vadd.f32 %v1570, %v1612
          %v1667 = vadd.f32 %v1571, %v1612
          %v1668 = vadd.f32 %v1572, %v1616
          %v1669 = vadd.f32 %v1573, %v1616
          %v1670 = vadd.f32 %v1574, %v1620
          %v1671 = vadd.f32 %v1575, %v1620
          %v1672 = vadd.f32 %v1576, %v1624
          %v1673 = vadd.f32 %v1577, %v1624
          %v1674 = vadd.f32 %v1578, %v1628
          %v1675 = vadd.f32 %v1579, %v1628
          %v1676 = vadd.f32 %v1580, %v1632
          %v1677 = vadd.f32 %v1581, %v1632
          %v1678 = vadd.f32 %v1582, %v1636
          %v1679 = vadd.f32 %v1583, %v1636
          %v1680 = vadd.f32 %v1584, %v1640
          %v1681 = vadd.f32 %v1585, %v1640
          %v1682 = vadd.f32 %v1586, %v1644
          %v1683 = vadd.f32 %v1587, %v1644
          %v1684 = vadd.f32 %v1588, %v1648
          %v1685 = vadd.f32 %v1589, %v1648
          %v1686 = vadd.f32 %v1590, %v1652
          %v1687 = vadd.f32 %v1591, %v1652
          %v1688 = vadd.f32 %v1592, %v1656
          %v1689 = vadd.f32 %v1593, %v1656
          %v1690 = vmul.f32 %v1658, 0.01
          %v1691 = vmul.f32 %v1659, 0.01
          %v1692 = vmul.f32 %v1660, 0.01
          %v1693 = vmul.f32 %v1661, 0.01
          %v1694 = vmul.f32 %v1662, 0.01
          %v1695 = vmul.f32 %v1663, 0.01
          %v1696 = vmul.f32 %v1664, 0.01
          %v1697 = vmul.f32 %v1665, 0.01
          %v1698 = vmul.f32 %v1666, 0.01
          %v1699 = vmul.f32 %v1667, 0.01
          %v1700 = vmul.f32 %v1668, 0.01
          %v1701 = vmul.f32 %v1669, 0.01
          %v1702 = vmul.f32 %v1670, 0.01
          %v1703 = vmul.f32 %v1671, 0.01
          %v1704 = vmul.f32 %v1672, 0.01
          %v1705 = vmul.f32 %v1673, 0.01
          %v1706 = vmul.f32 %v1674, 0.01
          %v1707 = vmul.f32 %v1675, 0.01
          %v1708 = vmul.f32 %v1676, 0.01
          %v1709 = vmul.f32 %v1677, 0.01
          %v1710 = vmul.f32 %v1678, 0.01
          %v1711 = vmul.f32 %v1679, 0.01
          %v1712 = vmul.f32 %v1680, 0.01
          %v1713 = vmul.f32 %v1681, 0.01
          %v1714 = vmul.f32 %v1682, 0.01
          %v1715 = vmul.f32 %v1683, 0.01
          %v1716 = vmul.f32 %v1684, 0.01
          %v1717 = vmul.f32 %v1685, 0.01
          %v1718 = vmul.f32 %v1686, 0.01
          %v1719 = vmul.f32 %v1687, 0.01
          %v1720 = vmul.f32 %v1688, 0.01
          %v1721 = vmul.f32 %v1689, 0.01
          %v1722 = vmax.f32 %v1658, %v1690
          %v1723 = vmax.f32 %v1659, %v1691
          %v1724 = vmax.f32 %v1660, %v1692
          %v1725 = vmax.f32 %v1661, %v1693
          %v1726 = vmax.f32 %v1662, %v1694
          %v1727 = vmax.f32 %v1663, %v1695
          %v1728 = vmax.f32 %v1664, %v1696
          %v1729 = vmax.f32 %v1665, %v1697
          %v1730 = vmax.f32 %v1666, %v1698
          %v1731 = vmax.f32 %v1667, %v1699
          %v1732 = vmax.f32 %v1668, %v1700
          %v1733 = vmax.f32 %v1669, %v1701
          %v1734 = vmax.f32 %v1670, %v1702
          %v1735 = vmax.f32 %v1671, %v1703
          %v1736 = vmax.f32 %v1672, %v1704
          %v1737 = vmax.f32 %v1673, %v1705
          %v1738 = vmax.f32 %v1674, %v1706
          %v1739 = vmax.f32 %v1675, %v1707
          %v1740 = vmax.f32 %v1676, %v1708
          %v1741 = vmax.f32 %v1677, %v1709
          %v1742 = vmax.f32 %v1678, %v1710
          %v1743 = vmax.f32 %v1679, %v1711
          %v1744 = vmax.f32 %v1680, %v1712
          %v1745 = vmax.f32 %v1681, %v1713
          %v1746 = vmax.f32 %v1682, %v1714
          %v1747 = vmax.f32 %v1683, %v1715
          %v1748 = vmax.f32 %v1684, %v1716
          %v1749 = vmax.f32 %v1685, %v1717
          %v1750 = vmax.f32 %v1686, %v1718
          %v1751 = vmax.f32 %v1687, %v1719
          %v1752 = vmax.f32 %v1688, %v1720
          %v1753 = vmax.f32 %v1689, %v1721
          %v1754 = vsel %vm435, %v1722, -1e+30
          %v1755 = vsel %vm436, %v1723, -1e+30
          %v1756 = vsel %vm437, %v1724, -1e+30
          %v1757 = vsel %vm438, %v1725, -1e+30
          %v1758 = vsel %vm439, %v1726, -1e+30
          %v1759 = vsel %vm440, %v1727, -1e+30
          %v1760 = vsel %vm441, %v1728, -1e+30
          %v1761 = vsel %vm442, %v1729, -1e+30
          %v1762 = vsel %vm443, %v1730, -1e+30
          %v1763 = vsel %vm444, %v1731, -1e+30
          %v1764 = vsel %vm445, %v1732, -1e+30
          %v1765 = vsel %vm446, %v1733, -1e+30
          %v1766 = vsel %vm447, %v1734, -1e+30
          %v1767 = vsel %vm448, %v1735, -1e+30
          %v1768 = vsel %vm449, %v1736, -1e+30
          %v1769 = vsel %vm450, %v1737, -1e+30
          %v1770 = vsel %vm451, %v1738, -1e+30
          %v1771 = vsel %vm452, %v1739, -1e+30
          %v1772 = vsel %vm453, %v1740, -1e+30
          %v1773 = vsel %vm454, %v1741, -1e+30
          %v1774 = vsel %vm455, %v1742, -1e+30
          %v1775 = vsel %vm456, %v1743, -1e+30
          %v1776 = vsel %vm457, %v1744, -1e+30
          %v1777 = vsel %vm458, %v1745, -1e+30
          %v1778 = vsel %vm459, %v1746, -1e+30
          %v1779 = vsel %vm460, %v1747, -1e+30
          %v1780 = vsel %vm461, %v1748, -1e+30
          %v1781 = vsel %vm462, %v1749, -1e+30
          %v1782 = vsel %vm463, %v1750, -1e+30
          %v1783 = vsel %vm464, %v1751, -1e+30
          %v1784 = vsel %vm465, %v1752, -1e+30
          %v1785 = vsel %vm466, %v1753, -1e+30
          %v1786 = vmax.f32 %v1754, %v1755
          %1787 = vmax.xlane.f32.xlu0 %v1786
          %v1788 = vpop.xlane.xlu0 %1787
          %v1789 = vmax.f32 %v1756, %v1757
          %1790 = vmax.xlane.f32.xlu0 %v1789
          %v1791 = vpop.xlane.xlu0 %1790
          %v1792 = vmax.f32 %v1758, %v1759
          %1793 = vmax.xlane.f32.xlu0 %v1792
          %v1794 = vpop.xlane.xlu0 %1793
          %v1795 = vmax.f32 %v1760, %v1761
          %1796 = vmax.xlane.f32.xlu0 %v1795
          %v1797 = vpop.xlane.xlu0 %1796
          %v1798 = vmax.f32 %v1762, %v1763
          %1799 = vmax.xlane.f32.xlu0 %v1798
          %v1800 = vpop.xlane.xlu0 %1799
          %v1801 = vmax.f32 %v1764, %v1765
          %1802 = vmax.xlane.f32.xlu0 %v1801
          %v1803 = vpop.xlane.xlu0 %1802
          %v1804 = vmax.f32 %v1766, %v1767
          %1805 = vmax.xlane.f32.xlu0 %v1804
          %v1806 = vpop.xlane.xlu0 %1805
          %v1807 = vmax.f32 %v1768, %v1769
          %1808 = vmax.xlane.f32.xlu0 %v1807
          %v1809 = vpop.xlane.xlu0 %1808
          %v1810 = vmax.f32 %v1770, %v1771
          %1811 = vmax.xlane.f32.xlu0 %v1810
          %v1812 = vpop.xlane.xlu0 %1811
          %v1813 = vmax.f32 %v1772, %v1773
          %1814 = vmax.xlane.f32.xlu0 %v1813
          %v1815 = vpop.xlane.xlu0 %1814
          %v1816 = vmax.f32 %v1774, %v1775
          %1817 = vmax.xlane.f32.xlu0 %v1816
          %v1818 = vpop.xlane.xlu0 %1817
          %v1819 = vmax.f32 %v1776, %v1777
          %1820 = vmax.xlane.f32.xlu0 %v1819
          %v1821 = vpop.xlane.xlu0 %1820
          %v1822 = vmax.f32 %v1778, %v1779
          %1823 = vmax.xlane.f32.xlu0 %v1822
          %v1824 = vpop.xlane.xlu0 %1823
          %v1825 = vmax.f32 %v1780, %v1781
          %1826 = vmax.xlane.f32.xlu0 %v1825
          %v1827 = vpop.xlane.xlu0 %1826
          %v1828 = vmax.f32 %v1782, %v1783
          %1829 = vmax.xlane.f32.xlu0 %v1828
          %v1830 = vpop.xlane.xlu0 %1829
          %v1831 = vmax.f32 %v1784, %v1785
          %1832 = vmax.xlane.f32.xlu0 %v1831
          %v1833 = vpop.xlane.xlu0 %1832
          %v1834 = vmax.f32 %v639, %v1788
          %v1835 = vmax.f32 %v640, %v1791
          %v1836 = vmax.f32 %v641, %v1794
          %v1837 = vmax.f32 %v642, %v1797
          %v1838 = vmax.f32 %v643, %v1800
          %v1839 = vmax.f32 %v644, %v1803
          %v1840 = vmax.f32 %v645, %v1806
          %v1841 = vmax.f32 %v646, %v1809
          %v1842 = vmax.f32 %v647, %v1812
          %v1843 = vmax.f32 %v648, %v1815
          %v1844 = vmax.f32 %v649, %v1818
          %v1845 = vmax.f32 %v650, %v1821
          %v1846 = vmax.f32 %v651, %v1824
          %v1847 = vmax.f32 %v652, %v1827
          %v1848 = vmax.f32 %v653, %v1830
          %v1849 = vmax.f32 %v654, %v1833
          %v1850 = vsub.f32 %v639, %v1834
          %v1851 = vsub.f32 %v640, %v1835
          %v1852 = vsub.f32 %v641, %v1836
          %v1853 = vsub.f32 %v642, %v1837
          %v1854 = vsub.f32 %v643, %v1838
          %v1855 = vsub.f32 %v644, %v1839
          %v1856 = vsub.f32 %v645, %v1840
          %v1857 = vsub.f32 %v646, %v1841
          %v1858 = vsub.f32 %v647, %v1842
          %v1859 = vsub.f32 %v648, %v1843
          %v1860 = vsub.f32 %v649, %v1844
          %v1861 = vsub.f32 %v650, %v1845
          %v1862 = vsub.f32 %v651, %v1846
          %v1863 = vsub.f32 %v652, %v1847
          %v1864 = vsub.f32 %v653, %v1848
          %v1865 = vsub.f32 %v654, %v1849
          %v1866 = vmul.f32 %v1850, 1.442695
          %v1867 = vpow.pop %v1866
          %v1868 = vmul.f32 %v1851, 1.442695
          %v1869 = vpow.pop %v1868
          %v1870 = vmul.f32 %v1852, 1.442695
          %v1871 = vpow.pop %v1870
          %v1872 = vmul.f32 %v1853, 1.442695
          %v1873 = vpow.pop %v1872
          %v1874 = vmul.f32 %v1854, 1.442695
          %v1875 = vpow.pop %v1874
          %v1876 = vmul.f32 %v1855, 1.442695
          %v1877 = vpow.pop %v1876
          %v1878 = vmul.f32 %v1856, 1.442695
          %v1879 = vpow.pop %v1878
          %v1880 = vmul.f32 %v1857, 1.442695
          %v1881 = vpow.pop %v1880
          %v1882 = vmul.f32 %v1858, 1.442695
          %v1883 = vpow.pop %v1882
          %v1884 = vmul.f32 %v1859, 1.442695
          %v1885 = vpow.pop %v1884
          %v1886 = vmul.f32 %v1860, 1.442695
          %v1887 = vpow.pop %v1886
          %v1888 = vmul.f32 %v1861, 1.442695
          %v1889 = vpow.pop %v1888
          %v1890 = vmul.f32 %v1862, 1.442695
          %v1891 = vpow.pop %v1890
          %v1892 = vmul.f32 %v1863, 1.442695
          %v1893 = vpow.pop %v1892
          %v1894 = vmul.f32 %v1864, 1.442695
          %v1895 = vpow.pop %v1894
          %v1896 = vmul.f32 %v1865, 1.442695
          %v1897 = vpow.pop %v1896
          %1899 = vset.pattern.permute.xlu0 1
          %1900 = vperm.xlu0 %1899, %v1834
          %v1901 = vpop.permute.xlu0 %1900
          %1904 = vset.pattern.permute.xlu0 1
          %1905 = vperm.xlu0 %1904, %v1835
          %v1906 = vpop.permute.xlu0 %1905
          %1909 = vset.pattern.permute.xlu0 1
          %1910 = vperm.xlu0 %1909, %v1836
          %v1911 = vpop.permute.xlu0 %1910
          %1914 = vset.pattern.permute.xlu0 1
          %1915 = vperm.xlu0 %1914, %v1837
          %v1916 = vpop.permute.xlu0 %1915
          %1919 = vset.pattern.permute.xlu0 1
          %1920 = vperm.xlu0 %1919, %v1838
          %v1921 = vpop.permute.xlu0 %1920
          %1924 = vset.pattern.permute.xlu0 1
          %1925 = vperm.xlu0 %1924, %v1839
          %v1926 = vpop.permute.xlu0 %1925
          %1929 = vset.pattern.permute.xlu0 1
          %1930 = vperm.xlu0 %1929, %v1840
          %v1931 = vpop.permute.xlu0 %1930
          %1934 = vset.pattern.permute.xlu0 1
          %1935 = vperm.xlu0 %1934, %v1841
          %v1936 = vpop.permute.xlu0 %1935
          %1939 = vset.pattern.permute.xlu0 1
          %1940 = vperm.xlu0 %1939, %v1842
          %v1941 = vpop.permute.xlu0 %1940
          %1944 = vset.pattern.permute.xlu0 1
          %1945 = vperm.xlu0 %1944, %v1843
          %v1946 = vpop.permute.xlu0 %1945
          %1949 = vset.pattern.permute.xlu0 1
          %1950 = vperm.xlu0 %1949, %v1844
          %v1951 = vpop.permute.xlu0 %1950
          %1954 = vset.pattern.permute.xlu0 1
          %1955 = vperm.xlu0 %1954, %v1845
          %v1956 = vpop.permute.xlu0 %1955
          %1959 = vset.pattern.permute.xlu0 1
          %1960 = vperm.xlu0 %1959, %v1846
          %v1961 = vpop.permute.xlu0 %1960
          %1964 = vset.pattern.permute.xlu0 1
          %1965 = vperm.xlu0 %1964, %v1847
          %v1966 = vpop.permute.xlu0 %1965
          %1969 = vset.pattern.permute.xlu0 1
          %1970 = vperm.xlu0 %1969, %v1848
          %v1971 = vpop.permute.xlu0 %1970
          %1974 = vset.pattern.permute.xlu0 1
          %1975 = vperm.xlu0 %1974, %v1849
          %v1976 = vpop.permute.xlu0 %1975
          %v1978 = vsub.f32 %v1754, %v1901
          %v1979 = vsub.f32 %v1755, %v1901
          %v1980 = vsub.f32 %v1756, %v1906
          %v1981 = vsub.f32 %v1757, %v1906
          %v1982 = vsub.f32 %v1758, %v1911
          %v1983 = vsub.f32 %v1759, %v1911
          %v1984 = vsub.f32 %v1760, %v1916
          %v1985 = vsub.f32 %v1761, %v1916
          %v1986 = vsub.f32 %v1762, %v1921
          %v1987 = vsub.f32 %v1763, %v1921
          %v1988 = vsub.f32 %v1764, %v1926
          %v1989 = vsub.f32 %v1765, %v1926
          %v1990 = vsub.f32 %v1766, %v1931
          %v1991 = vsub.f32 %v1767, %v1931
          %v1992 = vsub.f32 %v1768, %v1936
          %v1993 = vsub.f32 %v1769, %v1936
          %v1994 = vsub.f32 %v1770, %v1941
          %v1995 = vsub.f32 %v1771, %v1941
          %v1996 = vsub.f32 %v1772, %v1946
          %v1997 = vsub.f32 %v1773, %v1946
          %v1998 = vsub.f32 %v1774, %v1951
          %v1999 = vsub.f32 %v1775, %v1951
          %v2000 = vsub.f32 %v1776, %v1956
          %v2001 = vsub.f32 %v1777, %v1956
          %v2002 = vsub.f32 %v1778, %v1961
          %v2003 = vsub.f32 %v1779, %v1961
          %v2004 = vsub.f32 %v1780, %v1966
          %v2005 = vsub.f32 %v1781, %v1966
          %v2006 = vsub.f32 %v1782, %v1971
          %v2007 = vsub.f32 %v1783, %v1971
          %v2008 = vsub.f32 %v1784, %v1976
          %v2009 = vsub.f32 %v1785, %v1976
          %v2010 = vmul.f32 %v1978, 1.442695
          %v2011 = vpow.pop %v2010
          %v2012 = vmul.f32 %v1979, 1.442695
          %v2013 = vpow.pop %v2012
          %v2014 = vmul.f32 %v1980, 1.442695
          %v2015 = vpow.pop %v2014
          %v2016 = vmul.f32 %v1981, 1.442695
          %v2017 = vpow.pop %v2016
          %v2018 = vmul.f32 %v1982, 1.442695
          %v2019 = vpow.pop %v2018
          %v2020 = vmul.f32 %v1983, 1.442695
          %v2021 = vpow.pop %v2020
          %v2022 = vmul.f32 %v1984, 1.442695
          %v2023 = vpow.pop %v2022
          %v2024 = vmul.f32 %v1985, 1.442695
          %v2025 = vpow.pop %v2024
          %v2026 = vmul.f32 %v1986, 1.442695
          %v2027 = vpow.pop %v2026
          %v2028 = vmul.f32 %v1987, 1.442695
          %v2029 = vpow.pop %v2028
          %v2030 = vmul.f32 %v1988, 1.442695
          %v2031 = vpow.pop %v2030
          %v2032 = vmul.f32 %v1989, 1.442695
          %v2033 = vpow.pop %v2032
          %v2034 = vmul.f32 %v1990, 1.442695
          %v2035 = vpow.pop %v2034
          %v2036 = vmul.f32 %v1991, 1.442695
          %v2037 = vpow.pop %v2036
          %v2038 = vmul.f32 %v1992, 1.442695
          %v2039 = vpow.pop %v2038
          %v2040 = vmul.f32 %v1993, 1.442695
          %v2041 = vpow.pop %v2040
          %v2042 = vmul.f32 %v1994, 1.442695
          %v2043 = vpow.pop %v2042
          %v2044 = vmul.f32 %v1995, 1.442695
          %v2045 = vpow.pop %v2044
          %v2046 = vmul.f32 %v1996, 1.442695
          %v2047 = vpow.pop %v2046
          %v2048 = vmul.f32 %v1997, 1.442695
          %v2049 = vpow.pop %v2048
          %v2050 = vmul.f32 %v1998, 1.442695
          %v2051 = vpow.pop %v2050
          %v2052 = vmul.f32 %v1999, 1.442695
          %v2053 = vpow.pop %v2052
          %v2054 = vmul.f32 %v2000, 1.442695
          %v2055 = vpow.pop %v2054
          %v2056 = vmul.f32 %v2001, 1.442695
          %v2057 = vpow.pop %v2056
          %v2058 = vmul.f32 %v2002, 1.442695
          %v2059 = vpow.pop %v2058
          %v2060 = vmul.f32 %v2003, 1.442695
          %v2061 = vpow.pop %v2060
          %v2062 = vmul.f32 %v2004, 1.442695
          %v2063 = vpow.pop %v2062
          %v2064 = vmul.f32 %v2005, 1.442695
          %v2065 = vpow.pop %v2064
          %v2066 = vmul.f32 %v2006, 1.442695
          %v2067 = vpow.pop %v2066
          %v2068 = vmul.f32 %v2007, 1.442695
          %v2069 = vpow.pop %v2068
          %v2070 = vmul.f32 %v2008, 1.442695
          %v2071 = vpow.pop %v2070
          %v2072 = vmul.f32 %v2009, 1.442695
          %v2073 = vpow.pop %v2072
          %v2074 = vmul.f32 %v1867, %v655
          %v2075 = vmul.f32 %v1869, %v656
          %v2076 = vmul.f32 %v1871, %v657
          %v2077 = vmul.f32 %v1873, %v658
          %v2078 = vmul.f32 %v1875, %v659
          %v2079 = vmul.f32 %v1877, %v660
          %v2080 = vmul.f32 %v1879, %v661
          %v2081 = vmul.f32 %v1881, %v662
          %v2082 = vmul.f32 %v1883, %v663
          %v2083 = vmul.f32 %v1885, %v664
          %v2084 = vmul.f32 %v1887, %v665
          %v2085 = vmul.f32 %v1889, %v666
          %v2086 = vmul.f32 %v1891, %v667
          %v2087 = vmul.f32 %v1893, %v668
          %v2088 = vmul.f32 %v1895, %v669
          %v2089 = vmul.f32 %v1897, %v670
          %v2090 = vadd.f32 %v2011, %v2013
          %2091 = vadd.xlane.f32.xlu0 %v2090
          %v2092 = vpop.xlane.xlu0 %2091
          %v2093 = vadd.f32 %v2015, %v2017
          %2094 = vadd.xlane.f32.xlu0 %v2093
          %v2095 = vpop.xlane.xlu0 %2094
          %v2096 = vadd.f32 %v2019, %v2021
          %2097 = vadd.xlane.f32.xlu0 %v2096
          %v2098 = vpop.xlane.xlu0 %2097
          %v2099 = vadd.f32 %v2023, %v2025
          %2100 = vadd.xlane.f32.xlu0 %v2099
          %v2101 = vpop.xlane.xlu0 %2100
          %v2102 = vadd.f32 %v2027, %v2029
          %2103 = vadd.xlane.f32.xlu0 %v2102
          %v2104 = vpop.xlane.xlu0 %2103
          %v2105 = vadd.f32 %v2031, %v2033
          %2106 = vadd.xlane.f32.xlu0 %v2105
          %v2107 = vpop.xlane.xlu0 %2106
          %v2108 = vadd.f32 %v2035, %v2037
          %2109 = vadd.xlane.f32.xlu0 %v2108
          %v2110 = vpop.xlane.xlu0 %2109
          %v2111 = vadd.f32 %v2039, %v2041
          %2112 = vadd.xlane.f32.xlu0 %v2111
          %v2113 = vpop.xlane.xlu0 %2112
          %v2114 = vadd.f32 %v2043, %v2045
          %2115 = vadd.xlane.f32.xlu0 %v2114
          %v2116 = vpop.xlane.xlu0 %2115
          %v2117 = vadd.f32 %v2047, %v2049
          %2118 = vadd.xlane.f32.xlu0 %v2117
          %v2119 = vpop.xlane.xlu0 %2118
          %v2120 = vadd.f32 %v2051, %v2053
          %2121 = vadd.xlane.f32.xlu0 %v2120
          %v2122 = vpop.xlane.xlu0 %2121
          %v2123 = vadd.f32 %v2055, %v2057
          %2124 = vadd.xlane.f32.xlu0 %v2123
          %v2125 = vpop.xlane.xlu0 %2124
          %v2126 = vadd.f32 %v2059, %v2061
          %2127 = vadd.xlane.f32.xlu0 %v2126
          %v2128 = vpop.xlane.xlu0 %2127
          %v2129 = vadd.f32 %v2063, %v2065
          %2130 = vadd.xlane.f32.xlu0 %v2129
          %v2131 = vpop.xlane.xlu0 %2130
          %v2132 = vadd.f32 %v2067, %v2069
          %2133 = vadd.xlane.f32.xlu0 %v2132
          %v2134 = vpop.xlane.xlu0 %2133
          %v2135 = vadd.f32 %v2071, %v2073
          %2136 = vadd.xlane.f32.xlu0 %v2135
          %v2137 = vpop.xlane.xlu0 %2136
          %v2138 = vadd.f32 %v2074, %v2092
          %v2139 = vadd.f32 %v2075, %v2095
          %v2140 = vadd.f32 %v2076, %v2098
          %v2141 = vadd.f32 %v2077, %v2101
          %v2142 = vadd.f32 %v2078, %v2104
          %v2143 = vadd.f32 %v2079, %v2107
          %v2144 = vadd.f32 %v2080, %v2110
          %v2145 = vadd.f32 %v2081, %v2113
          %v2146 = vadd.f32 %v2082, %v2116
          %v2147 = vadd.f32 %v2083, %v2119
          %v2148 = vadd.f32 %v2084, %v2122
          %v2149 = vadd.f32 %v2085, %v2125
          %v2150 = vadd.f32 %v2086, %v2128
          %v2151 = vadd.f32 %v2087, %v2131
          %v2152 = vadd.f32 %v2088, %v2134
          %v2153 = vadd.f32 %v2089, %v2137
          %v2154 = vmul.f32 %v2011, %v607
          %v2155 = vmul.f32 %v2013, %v608
          %v2156 = vmul.f32 %v2015, %v609
          %v2157 = vmul.f32 %v2017, %v610
          %v2158 = vmul.f32 %v2019, %v611
          %v2159 = vmul.f32 %v2021, %v612
          %v2160 = vmul.f32 %v2023, %v613
          %v2161 = vmul.f32 %v2025, %v614
          %v2162 = vmul.f32 %v2027, %v615
          %v2163 = vmul.f32 %v2029, %v616
          %v2164 = vmul.f32 %v2031, %v617
          %v2165 = vmul.f32 %v2033, %v618
          %v2166 = vmul.f32 %v2035, %v619
          %v2167 = vmul.f32 %v2037, %v620
          %v2168 = vmul.f32 %v2039, %v621
          %v2169 = vmul.f32 %v2041, %v622
          %v2170 = vmul.f32 %v2043, %v623
          %v2171 = vmul.f32 %v2045, %v624
          %v2172 = vmul.f32 %v2047, %v625
          %v2173 = vmul.f32 %v2049, %v626
          %v2174 = vmul.f32 %v2051, %v627
          %v2175 = vmul.f32 %v2053, %v628
          %v2176 = vmul.f32 %v2055, %v629
          %v2177 = vmul.f32 %v2057, %v630
          %v2178 = vmul.f32 %v2059, %v631
          %v2179 = vmul.f32 %v2061, %v632
          %v2180 = vmul.f32 %v2063, %v633
          %v2181 = vmul.f32 %v2065, %v634
          %v2182 = vmul.f32 %v2067, %v635
          %v2183 = vmul.f32 %v2069, %v636
          %v2184 = vmul.f32 %v2071, %v637
          %v2185 = vmul.f32 %v2073, %v638
          %v2186 = vpack.c.bf16 %v2156, %v2154
          %v2187 = vpack.c.bf16 %v2157, %v2155
          %v2188 = vpack.c.bf16 %v2160, %v2158
          %v2189 = vpack.c.bf16 %v2161, %v2159
          %v2190 = vpack.c.bf16 %v2164, %v2162
          %v2191 = vpack.c.bf16 %v2165, %v2163
          %v2192 = vpack.c.bf16 %v2168, %v2166
          %v2193 = vpack.c.bf16 %v2169, %v2167
          %v2194 = vpack.c.bf16 %v2172, %v2170
          %v2195 = vpack.c.bf16 %v2173, %v2171
          %v2196 = vpack.c.bf16 %v2176, %v2174
          %v2197 = vpack.c.bf16 %v2177, %v2175
          %v2198 = vpack.c.bf16 %v2180, %v2178
          %v2199 = vpack.c.bf16 %v2181, %v2179
          %v2200 = vpack.c.bf16 %v2184, %v2182
          %v2201 = vpack.c.bf16 %v2185, %v2183
          %2202 = vrot.lane.b32.xlu0 %v1420, 96
          %v2203 = vpop.permute.xlu0 %2202
          %2204 = vrot.lane.b32.xlu0 %v1421, 96
          %v2205 = vpop.permute.xlu0 %2204
          %2206 = vrot.lane.b32.xlu0 %v1422, 96
          %v2207 = vpop.permute.xlu0 %2206
          %2208 = vrot.lane.b32.xlu0 %v1423, 96
          %v2209 = vpop.permute.xlu0 %2208
          %2210 = vrot.lane.b32.xlu0 %v1424, 96
          %v2211 = vpop.permute.xlu0 %2210
          %2212 = vrot.lane.b32.xlu0 %v1425, 96
          %v2213 = vpop.permute.xlu0 %2212
          %2214 = vrot.lane.b32.xlu0 %v1426, 96
          %v2215 = vpop.permute.xlu0 %2214
          %2216 = vrot.lane.b32.xlu0 %v1427, 96
          %v2217 = vpop.permute.xlu0 %2216
          %2218 = vrot.lane.b32.xlu0 %v1428, 96
          %v2219 = vpop.permute.xlu0 %2218
          %2220 = vrot.lane.b32.xlu0 %v1429, 96
          %v2221 = vpop.permute.xlu0 %2220
          %2222 = vrot.lane.b32.xlu0 %v1430, 96
          %v2223 = vpop.permute.xlu0 %2222
          %2224 = vrot.lane.b32.xlu0 %v1431, 96
          %v2225 = vpop.permute.xlu0 %2224
          %2226 = vrot.lane.b32.xlu0 %v1432, 96
          %v2227 = vpop.permute.xlu0 %2226
          %2228 = vrot.lane.b32.xlu0 %v1433, 96
          %v2229 = vpop.permute.xlu0 %2228
          %2230 = vrot.lane.b32.xlu0 %v1434, 96
          %v2231 = vpop.permute.xlu0 %2230
          %2232 = vrot.lane.b32.xlu0 %v1435, 96
          %v2233 = vpop.permute.xlu0 %2232
          %2250 = vmatprep.subr.bf16.mxu0 0
          %2251 = vmatpush1.bf16.msra.mxu0 %v2203
          %2252 = vmatprep.subr.bf16.mxu0 0
          %2253 = vmatpush1.bf16.msra.mxu0 %v2205
          %2254 = vmatprep.subr.bf16.mxu0 0
          %2255 = vmatpush1.bf16.msra.mxu0 %v2207
          %2256 = vmatprep.subr.bf16.mxu0 0
          %2257 = vmatpush1.bf16.msra.mxu0 %v2209
          %2258 = vmatprep.subr.bf16.mxu0 0
          %2259 = vmatpush1.bf16.msra.mxu0 %v2211
          %2260 = vmatprep.subr.bf16.mxu0 0
          %2261 = vmatpush1.bf16.msra.mxu0 %v2213
          %2262 = vmatprep.subr.bf16.mxu0 0
          %2263 = vmatpush1.bf16.msra.mxu0 %v2215
          %2264 = vmatprep.subr.bf16.mxu0 0
          %2265 = vmatpush1.bf16.msra.mxu0 %v2217
          %2266 = vmatprep.subr.bf16.mxu0 0
          %2267 = vmatpush1.bf16.msra.mxu0 %v2219
          %2268 = vmatprep.subr.bf16.mxu0 0
          %2269 = vmatpush1.bf16.msra.mxu0 %v2221
          %2270 = vmatprep.subr.bf16.mxu0 0
          %2271 = vmatpush1.bf16.msra.mxu0 %v2223
          %2272 = vmatprep.subr.bf16.mxu0 0
          %2273 = vmatpush1.bf16.msra.mxu0 %v2225
          %2274 = vmatprep.subr.bf16.mxu0 0
          %2275 = vmatpush1.bf16.msra.mxu0 %v2227
          %2276 = vmatprep.subr.bf16.mxu0 0
          %2277 = vmatpush1.bf16.msra.mxu0 %v2229
          %2278 = vmatprep.subr.bf16.mxu0 0
          %2279 = vmatpush1.bf16.msra.mxu0 %v2231
          %2280 = vmatprep.subr.bf16.mxu0 0
          %2281 = vmatpush1.bf16.msra.mxu0 %v2233
          %2282 = vmatprep.mubr.bf16.mxu0 %v2187
          %2283 = vmatmul.mubr.bf16.gmra.mrb[0].mxu0 %v2186
          %v2284 = vpop.f32.mrb[0].mxu0
          %v2285 = vadd.f32 0.0, %v2284
          %v2286 = vpop.f32.mrb[0].mxu0
          %v2287 = vpop.f32.mrb[0].mxu0
          %v2288 = vadd.f32 0.0, %v2287
          %v2289 = vpop.f32.mrb[0].mxu0
          %2290 = vmatprep.mubr.bf16.mxu0 %v2189
          %2291 = vmatmul.mubr.bf16.gmra.mrb[0].mxu0 %v2188
          %v2292 = vpop.f32.mrb[0].mxu0
          %v2293 = vadd.f32 0.0, %v2292
          %v2294 = vpop.f32.mrb[0].mxu0
          %v2295 = vpop.f32.mrb[0].mxu0
          %v2296 = vadd.f32 0.0, %v2295
          %v2297 = vpop.f32.mrb[0].mxu0
          %2298 = vmatprep.mubr.bf16.mxu0 %v2191
          %2299 = vmatmul.mubr.bf16.gmra.mrb[0].mxu0 %v2190
          %v2300 = vpop.f32.mrb[0].mxu0
          %v2301 = vadd.f32 0.0, %v2300
          %v2302 = vpop.f32.mrb[0].mxu0
          %v2303 = vpop.f32.mrb[0].mxu0
          %v2304 = vadd.f32 0.0, %v2303
          %v2305 = vpop.f32.mrb[0].mxu0
          %2306 = vmatprep.mubr.bf16.mxu0 %v2193
          %2307 = vmatmul.mubr.bf16.gmra.mrb[0].mxu0 %v2192
          %v2308 = vpop.f32.mrb[0].mxu0
          %v2309 = vadd.f32 0.0, %v2308
          %v2310 = vpop.f32.mrb[0].mxu0
          %v2311 = vpop.f32.mrb[0].mxu0
          %v2312 = vadd.f32 0.0, %v2311
          %v2313 = vpop.f32.mrb[0].mxu0
          %2314 = vmatprep.mubr.bf16.mxu0 %v2195
          %2315 = vmatmul.mubr.bf16.gmra.mrb[0].mxu0 %v2194
          %v2316 = vpop.f32.mrb[0].mxu0
          %v2317 = vadd.f32 0.0, %v2316
          %v2318 = vpop.f32.mrb[0].mxu0
          %v2319 = vpop.f32.mrb[0].mxu0
          %v2320 = vadd.f32 0.0, %v2319
          %v2321 = vpop.f32.mrb[0].mxu0
          %2322 = vmatprep.mubr.bf16.mxu0 %v2197
          %2323 = vmatmul.mubr.bf16.gmra.mrb[0].mxu0 %v2196
          %v2324 = vpop.f32.mrb[0].mxu0
          %v2325 = vadd.f32 0.0, %v2324
          %v2326 = vpop.f32.mrb[0].mxu0
          %v2327 = vpop.f32.mrb[0].mxu0
          %v2328 = vadd.f32 0.0, %v2327
          %v2329 = vpop.f32.mrb[0].mxu0
          %2330 = vmatprep.mubr.bf16.mxu0 %v2199
          %2331 = vmatmul.mubr.bf16.gmra.mrb[0].mxu0 %v2198
          %v2332 = vpop.f32.mrb[0].mxu0
          %v2333 = vadd.f32 0.0, %v2332
          %v2334 = vpop.f32.mrb[0].mxu0
          %v2335 = vpop.f32.mrb[0].mxu0
          %v2336 = vadd.f32 0.0, %v2335
          %v2337 = vpop.f32.mrb[0].mxu0
          %2338 = vmatprep.mubr.bf16.mxu0 %v2201
          %2339 = vmatmul.mubr.bf16.gmra.mrb[0].mxu0 %v2200
          %v2340 = vpop.f32.mrb[0].mxu0
          %v2341 = vadd.f32 0.0, %v2340
          %v2342 = vpop.f32.mrb[0].mxu0
          %v2343 = vpop.f32.mrb[0].mxu0
          %v2344 = vadd.f32 0.0, %v2343
          %v2345 = vpop.f32.mrb[0].mxu0
          %2346 = vdwg.mxu0
          %s2347 = scalar_lea.vmem %s288, 3
          %v2348 = vld [vmem:[%s2347] ss:$8 sm:$0x3]
          %v2350 = vlaneseq
          %v2351 = vshrl.u32 %v2350, 7
          %v2352 = vsub.s32 0, %v2351
          %v2353 = vrot.slane %v2348, %v2352
          %v2354 = vlaneseq
          %v2355 = vshrl.u32 %v2354, 7
          %v2356 = vsub.s32 1, %v2355
          %v2357 = vrot.slane %v2348, %v2356
          %v2360 = vmul.f32 %v607, %v2353
          %v2361 = vmul.f32 %v608, %v2357
          %v2362 = vmul.f32 %v609, %v2353
          %v2363 = vmul.f32 %v610, %v2357
          %v2364 = vmul.f32 %v611, %v2353
          %v2365 = vmul.f32 %v612, %v2357
          %v2366 = vmul.f32 %v613, %v2353
          %v2367 = vmul.f32 %v614, %v2357
          %v2368 = vmul.f32 %v615, %v2353
          %v2369 = vmul.f32 %v616, %v2357
          %v2370 = vmul.f32 %v617, %v2353
          %v2371 = vmul.f32 %v618, %v2357
          %v2372 = vmul.f32 %v619, %v2353
          %v2373 = vmul.f32 %v620, %v2357
          %v2374 = vmul.f32 %v621, %v2353
          %v2375 = vmul.f32 %v622, %v2357
          %v2376 = vmul.f32 %v623, %v2353
          %v2377 = vmul.f32 %v624, %v2357
          %v2378 = vmul.f32 %v625, %v2353
          %v2379 = vmul.f32 %v626, %v2357
          %v2380 = vmul.f32 %v627, %v2353
          %v2381 = vmul.f32 %v628, %v2357
          %v2382 = vmul.f32 %v629, %v2353
          %v2383 = vmul.f32 %v630, %v2357
          %v2384 = vmul.f32 %v631, %v2353
          %v2385 = vmul.f32 %v632, %v2357
          %v2386 = vmul.f32 %v633, %v2353
          %v2387 = vmul.f32 %v634, %v2357
          %v2388 = vmul.f32 %v635, %v2353
          %v2389 = vmul.f32 %v636, %v2357
          %v2390 = vmul.f32 %v637, %v2353
          %v2391 = vmul.f32 %v638, %v2357
          %2392 = vset.pattern.permute.xlu0 3
          %2393 = vperm.xlu0 %2392, %v468
          %v2394 = vpop.permute.xlu0 %2393
          %2396 = vset.pattern.permute.xlu0 3
          %2397 = vperm.xlu0 %2396, %v469
          %v2398 = vpop.permute.xlu0 %2397
          %2400 = vset.pattern.permute.xlu0 3
          %2401 = vperm.xlu0 %2400, %v470
          %v2402 = vpop.permute.xlu0 %2401
          %2404 = vset.pattern.permute.xlu0 3
          %2405 = vperm.xlu0 %2404, %v471
          %v2406 = vpop.permute.xlu0 %2405
          %2408 = vset.pattern.permute.xlu0 3
          %2409 = vperm.xlu0 %2408, %v472
          %v2410 = vpop.permute.xlu0 %2409
          %2412 = vset.pattern.permute.xlu0 3
          %2413 = vperm.xlu0 %2412, %v473
          %v2414 = vpop.permute.xlu0 %2413
          %2416 = vset.pattern.permute.xlu0 3
          %2417 = vperm.xlu0 %2416, %v474
          %v2418 = vpop.permute.xlu0 %2417
          %2420 = vset.pattern.permute.xlu0 3
          %2421 = vperm.xlu0 %2420, %v475
          %v2422 = vpop.permute.xlu0 %2421
          %2424 = vset.pattern.permute.xlu0 3
          %2425 = vperm.xlu0 %2424, %v476
          %v2426 = vpop.permute.xlu0 %2425
          %2428 = vset.pattern.permute.xlu0 3
          %2429 = vperm.xlu0 %2428, %v477
          %v2430 = vpop.permute.xlu0 %2429
          %2432 = vset.pattern.permute.xlu0 3
          %2433 = vperm.xlu0 %2432, %v478
          %v2434 = vpop.permute.xlu0 %2433
          %2436 = vset.pattern.permute.xlu0 3
          %2437 = vperm.xlu0 %2436, %v479
          %v2438 = vpop.permute.xlu0 %2437
          %2440 = vset.pattern.permute.xlu0 3
          %2441 = vperm.xlu0 %2440, %v480
          %v2442 = vpop.permute.xlu0 %2441
          %2444 = vset.pattern.permute.xlu0 3
          %2445 = vperm.xlu0 %2444, %v481
          %v2446 = vpop.permute.xlu0 %2445
          %2448 = vset.pattern.permute.xlu0 3
          %2449 = vperm.xlu0 %2448, %v482
          %v2450 = vpop.permute.xlu0 %2449
          %2452 = vset.pattern.permute.xlu0 3
          %2453 = vperm.xlu0 %2452, %v483
          %v2454 = vpop.permute.xlu0 %2453
          %v2456 = vadd.f32 %v2360, %v2394
          %v2457 = vadd.f32 %v2361, %v2394
          %v2458 = vadd.f32 %v2362, %v2398
          %v2459 = vadd.f32 %v2363, %v2398
          %v2460 = vadd.f32 %v2364, %v2402
          %v2461 = vadd.f32 %v2365, %v2402
          %v2462 = vadd.f32 %v2366, %v2406
          %v2463 = vadd.f32 %v2367, %v2406
          %v2464 = vadd.f32 %v2368, %v2410
          %v2465 = vadd.f32 %v2369, %v2410
          %v2466 = vadd.f32 %v2370, %v2414
          %v2467 = vadd.f32 %v2371, %v2414
          %v2468 = vadd.f32 %v2372, %v2418
          %v2469 = vadd.f32 %v2373, %v2418
          %v2470 = vadd.f32 %v2374, %v2422
          %v2471 = vadd.f32 %v2375, %v2422
          %v2472 = vadd.f32 %v2376, %v2426
          %v2473 = vadd.f32 %v2377, %v2426
          %v2474 = vadd.f32 %v2378, %v2430
          %v2475 = vadd.f32 %v2379, %v2430
          %v2476 = vadd.f32 %v2380, %v2434
          %v2477 = vadd.f32 %v2381, %v2434
          %v2478 = vadd.f32 %v2382, %v2438
          %v2479 = vadd.f32 %v2383, %v2438
          %v2480 = vadd.f32 %v2384, %v2442
          %v2481 = vadd.f32 %v2385, %v2442
          %v2482 = vadd.f32 %v2386, %v2446
          %v2483 = vadd.f32 %v2387, %v2446
          %v2484 = vadd.f32 %v2388, %v2450
          %v2485 = vadd.f32 %v2389, %v2450
          %v2486 = vadd.f32 %v2390, %v2454
          %v2487 = vadd.f32 %v2391, %v2454
          %v2488 = vmul.f32 %v2456, 0.01
          %v2489 = vmul.f32 %v2457, 0.01
          %v2490 = vmul.f32 %v2458, 0.01
          %v2491 = vmul.f32 %v2459, 0.01
          %v2492 = vmul.f32 %v2460, 0.01
          %v2493 = vmul.f32 %v2461, 0.01
          %v2494 = vmul.f32 %v2462, 0.01
          %v2495 = vmul.f32 %v2463, 0.01
          %v2496 = vmul.f32 %v2464, 0.01
          %v2497 = vmul.f32 %v2465, 0.01
          %v2498 = vmul.f32 %v2466, 0.01
          %v2499 = vmul.f32 %v2467, 0.01
          %v2500 = vmul.f32 %v2468, 0.01
          %v2501 = vmul.f32 %v2469, 0.01
          %v2502 = vmul.f32 %v2470, 0.01
          %v2503 = vmul.f32 %v2471, 0.01
          %v2504 = vmul.f32 %v2472, 0.01
          %v2505 = vmul.f32 %v2473, 0.01
          %v2506 = vmul.f32 %v2474, 0.01
          %v2507 = vmul.f32 %v2475, 0.01
          %v2508 = vmul.f32 %v2476, 0.01
          %v2509 = vmul.f32 %v2477, 0.01
          %v2510 = vmul.f32 %v2478, 0.01
          %v2511 = vmul.f32 %v2479, 0.01
          %v2512 = vmul.f32 %v2480, 0.01
          %v2513 = vmul.f32 %v2481, 0.01
          %v2514 = vmul.f32 %v2482, 0.01
          %v2515 = vmul.f32 %v2483, 0.01
          %v2516 = vmul.f32 %v2484, 0.01
          %v2517 = vmul.f32 %v2485, 0.01
          %v2518 = vmul.f32 %v2486, 0.01
          %v2519 = vmul.f32 %v2487, 0.01
          %v2520 = vmax.f32 %v2456, %v2488
          %v2521 = vmax.f32 %v2457, %v2489
          %v2522 = vmax.f32 %v2458, %v2490
          %v2523 = vmax.f32 %v2459, %v2491
          %v2524 = vmax.f32 %v2460, %v2492
          %v2525 = vmax.f32 %v2461, %v2493
          %v2526 = vmax.f32 %v2462, %v2494
          %v2527 = vmax.f32 %v2463, %v2495
          %v2528 = vmax.f32 %v2464, %v2496
          %v2529 = vmax.f32 %v2465, %v2497
          %v2530 = vmax.f32 %v2466, %v2498
          %v2531 = vmax.f32 %v2467, %v2499
          %v2532 = vmax.f32 %v2468, %v2500
          %v2533 = vmax.f32 %v2469, %v2501
          %v2534 = vmax.f32 %v2470, %v2502
          %v2535 = vmax.f32 %v2471, %v2503
          %v2536 = vmax.f32 %v2472, %v2504
          %v2537 = vmax.f32 %v2473, %v2505
          %v2538 = vmax.f32 %v2474, %v2506
          %v2539 = vmax.f32 %v2475, %v2507
          %v2540 = vmax.f32 %v2476, %v2508
          %v2541 = vmax.f32 %v2477, %v2509
          %v2542 = vmax.f32 %v2478, %v2510
          %v2543 = vmax.f32 %v2479, %v2511
          %v2544 = vmax.f32 %v2480, %v2512
          %v2545 = vmax.f32 %v2481, %v2513
          %v2546 = vmax.f32 %v2482, %v2514
          %v2547 = vmax.f32 %v2483, %v2515
          %v2548 = vmax.f32 %v2484, %v2516
          %v2549 = vmax.f32 %v2485, %v2517
          %v2550 = vmax.f32 %v2486, %v2518
          %v2551 = vmax.f32 %v2487, %v2519
          %v2552 = vsel %vm435, %v2520, -1e+30
          %v2553 = vsel %vm436, %v2521, -1e+30
          %v2554 = vsel %vm437, %v2522, -1e+30
          %v2555 = vsel %vm438, %v2523, -1e+30
          %v2556 = vsel %vm439, %v2524, -1e+30
          %v2557 = vsel %vm440, %v2525, -1e+30
          %v2558 = vsel %vm441, %v2526, -1e+30
          %v2559 = vsel %vm442, %v2527, -1e+30
          %v2560 = vsel %vm443, %v2528, -1e+30
          %v2561 = vsel %vm444, %v2529, -1e+30
          %v2562 = vsel %vm445, %v2530, -1e+30
          %v2563 = vsel %vm446, %v2531, -1e+30
          %v2564 = vsel %vm447, %v2532, -1e+30
          %v2565 = vsel %vm448, %v2533, -1e+30
          %v2566 = vsel %vm449, %v2534, -1e+30
          %v2567 = vsel %vm450, %v2535, -1e+30
          %v2568 = vsel %vm451, %v2536, -1e+30
          %v2569 = vsel %vm452, %v2537, -1e+30
          %v2570 = vsel %vm453, %v2538, -1e+30
          %v2571 = vsel %vm454, %v2539, -1e+30
          %v2572 = vsel %vm455, %v2540, -1e+30
          %v2573 = vsel %vm456, %v2541, -1e+30
          %v2574 = vsel %vm457, %v2542, -1e+30
          %v2575 = vsel %vm458, %v2543, -1e+30
          %v2576 = vsel %vm459, %v2544, -1e+30
          %v2577 = vsel %vm460, %v2545, -1e+30
          %v2578 = vsel %vm461, %v2546, -1e+30
          %v2579 = vsel %vm462, %v2547, -1e+30
          %v2580 = vsel %vm463, %v2548, -1e+30
          %v2581 = vsel %vm464, %v2549, -1e+30
          %v2582 = vsel %vm465, %v2550, -1e+30
          %v2583 = vsel %vm466, %v2551, -1e+30
          %v2584 = vmax.f32 %v2552, %v2553
          %2585 = vmax.xlane.f32.xlu0 %v2584
          %v2586 = vpop.xlane.xlu0 %2585
          %v2587 = vmax.f32 %v2554, %v2555
          %2588 = vmax.xlane.f32.xlu0 %v2587
          %v2589 = vpop.xlane.xlu0 %2588
          %v2590 = vmax.f32 %v2556, %v2557
          %2591 = vmax.xlane.f32.xlu0 %v2590
          %v2592 = vpop.xlane.xlu0 %2591
          %v2593 = vmax.f32 %v2558, %v2559
          %2594 = vmax.xlane.f32.xlu0 %v2593
          %v2595 = vpop.xlane.xlu0 %2594
          %v2596 = vmax.f32 %v2560, %v2561
          %2597 = vmax.xlane.f32.xlu0 %v2596
          %v2598 = vpop.xlane.xlu0 %2597
          %v2599 = vmax.f32 %v2562, %v2563
          %2600 = vmax.xlane.f32.xlu0 %v2599
          %v2601 = vpop.xlane.xlu0 %2600
          %v2602 = vmax.f32 %v2564, %v2565
          %2603 = vmax.xlane.f32.xlu0 %v2602
          %v2604 = vpop.xlane.xlu0 %2603
          %v2605 = vmax.f32 %v2566, %v2567
          %2606 = vmax.xlane.f32.xlu0 %v2605
          %v2607 = vpop.xlane.xlu0 %2606
          %v2608 = vmax.f32 %v2568, %v2569
          %2609 = vmax.xlane.f32.xlu0 %v2608
          %v2610 = vpop.xlane.xlu0 %2609
          %v2611 = vmax.f32 %v2570, %v2571
          %2612 = vmax.xlane.f32.xlu0 %v2611
          %v2613 = vpop.xlane.xlu0 %2612
          %v2614 = vmax.f32 %v2572, %v2573
          %2615 = vmax.xlane.f32.xlu0 %v2614
          %v2616 = vpop.xlane.xlu0 %2615
          %v2617 = vmax.f32 %v2574, %v2575
          %2618 = vmax.xlane.f32.xlu0 %v2617
          %v2619 = vpop.xlane.xlu0 %2618
          %v2620 = vmax.f32 %v2576, %v2577
          %2621 = vmax.xlane.f32.xlu0 %v2620
          %v2622 = vpop.xlane.xlu0 %2621
          %v2623 = vmax.f32 %v2578, %v2579
          %2624 = vmax.xlane.f32.xlu0 %v2623
          %v2625 = vpop.xlane.xlu0 %2624
          %v2626 = vmax.f32 %v2580, %v2581
          %2627 = vmax.xlane.f32.xlu0 %v2626
          %v2628 = vpop.xlane.xlu0 %2627
          %v2629 = vmax.f32 %v2582, %v2583
          %2630 = vmax.xlane.f32.xlu0 %v2629
          %v2631 = vpop.xlane.xlu0 %2630
          %v2632 = vmax.f32 %v639, %v2586
          %v2633 = vmax.f32 %v640, %v2589
          %v2634 = vmax.f32 %v641, %v2592
          %v2635 = vmax.f32 %v642, %v2595
          %v2636 = vmax.f32 %v643, %v2598
          %v2637 = vmax.f32 %v644, %v2601
          %v2638 = vmax.f32 %v645, %v2604
          %v2639 = vmax.f32 %v646, %v2607
          %v2640 = vmax.f32 %v647, %v2610
          %v2641 = vmax.f32 %v648, %v2613
          %v2642 = vmax.f32 %v649, %v2616
          %v2643 = vmax.f32 %v650, %v2619
          %v2644 = vmax.f32 %v651, %v2622
          %v2645 = vmax.f32 %v652, %v2625
          %v2646 = vmax.f32 %v653, %v2628
          %v2647 = vmax.f32 %v654, %v2631
          %v2648 = vsub.f32 %v639, %v2632
          %v2649 = vsub.f32 %v640, %v2633
          %v2650 = vsub.f32 %v641, %v2634
          %v2651 = vsub.f32 %v642, %v2635
          %v2652 = vsub.f32 %v643, %v2636
          %v2653 = vsub.f32 %v644, %v2637
          %v2654 = vsub.f32 %v645, %v2638
          %v2655 = vsub.f32 %v646, %v2639
          %v2656 = vsub.f32 %v647, %v2640
          %v2657 = vsub.f32 %v648, %v2641
          %v2658 = vsub.f32 %v649, %v2642
          %v2659 = vsub.f32 %v650, %v2643
          %v2660 = vsub.f32 %v651, %v2644
          %v2661 = vsub.f32 %v652, %v2645
          %v2662 = vsub.f32 %v653, %v2646
          %v2663 = vsub.f32 %v654, %v2647
          %v2664 = vmul.f32 %v2648, 1.442695
          %v2665 = vpow.pop %v2664
          %v2666 = vmul.f32 %v2649, 1.442695
          %v2667 = vpow.pop %v2666
          %v2668 = vmul.f32 %v2650, 1.442695
          %v2669 = vpow.pop %v2668
          %v2670 = vmul.f32 %v2651, 1.442695
          %v2671 = vpow.pop %v2670
          %v2672 = vmul.f32 %v2652, 1.442695
          %v2673 = vpow.pop %v2672
          %v2674 = vmul.f32 %v2653, 1.442695
          %v2675 = vpow.pop %v2674
          %v2676 = vmul.f32 %v2654, 1.442695
          %v2677 = vpow.pop %v2676
          %v2678 = vmul.f32 %v2655, 1.442695
          %v2679 = vpow.pop %v2678
          %v2680 = vmul.f32 %v2656, 1.442695
          %v2681 = vpow.pop %v2680
          %v2682 = vmul.f32 %v2657, 1.442695
          %v2683 = vpow.pop %v2682
          %v2684 = vmul.f32 %v2658, 1.442695
          %v2685 = vpow.pop %v2684
          %v2686 = vmul.f32 %v2659, 1.442695
          %v2687 = vpow.pop %v2686
          %v2688 = vmul.f32 %v2660, 1.442695
          %v2689 = vpow.pop %v2688
          %v2690 = vmul.f32 %v2661, 1.442695
          %v2691 = vpow.pop %v2690
          %v2692 = vmul.f32 %v2662, 1.442695
          %v2693 = vpow.pop %v2692
          %v2694 = vmul.f32 %v2663, 1.442695
          %v2695 = vpow.pop %v2694
          %2697 = vset.pattern.permute.xlu0 2
          %2698 = vperm.xlu0 %2697, %v2632
          %v2699 = vpop.permute.xlu0 %2698
          %2702 = vset.pattern.permute.xlu0 2
          %2703 = vperm.xlu0 %2702, %v2633
          %v2704 = vpop.permute.xlu0 %2703
          %2707 = vset.pattern.permute.xlu0 2
          %2708 = vperm.xlu0 %2707, %v2634
          %v2709 = vpop.permute.xlu0 %2708
          %2712 = vset.pattern.permute.xlu0 2
          %2713 = vperm.xlu0 %2712, %v2635
          %v2714 = vpop.permute.xlu0 %2713
          %2717 = vset.pattern.permute.xlu0 2
          %2718 = vperm.xlu0 %2717, %v2636
          %v2719 = vpop.permute.xlu0 %2718
          %2722 = vset.pattern.permute.xlu0 2
          %2723 = vperm.xlu0 %2722, %v2637
          %v2724 = vpop.permute.xlu0 %2723
          %2727 = vset.pattern.permute.xlu0 2
          %2728 = vperm.xlu0 %2727, %v2638
          %v2729 = vpop.permute.xlu0 %2728
          %2732 = vset.pattern.permute.xlu0 2
          %2733 = vperm.xlu0 %2732, %v2639
          %v2734 = vpop.permute.xlu0 %2733
          %2737 = vset.pattern.permute.xlu0 2
          %2738 = vperm.xlu0 %2737, %v2640
          %v2739 = vpop.permute.xlu0 %2738
          %2742 = vset.pattern.permute.xlu0 2
          %2743 = vperm.xlu0 %2742, %v2641
          %v2744 = vpop.permute.xlu0 %2743
          %2747 = vset.pattern.permute.xlu0 2
          %2748 = vperm.xlu0 %2747, %v2642
          %v2749 = vpop.permute.xlu0 %2748
          %2752 = vset.pattern.permute.xlu0 2
          %2753 = vperm.xlu0 %2752, %v2643
          %v2754 = vpop.permute.xlu0 %2753
          %2757 = vset.pattern.permute.xlu0 2
          %2758 = vperm.xlu0 %2757, %v2644
          %v2759 = vpop.permute.xlu0 %2758
          %2762 = vset.pattern.permute.xlu0 2
          %2763 = vperm.xlu0 %2762, %v2645
          %v2764 = vpop.permute.xlu0 %2763
          %2767 = vset.pattern.permute.xlu0 2
          %2768 = vperm.xlu0 %2767, %v2646
          %v2769 = vpop.permute.xlu0 %2768
          %2772 = vset.pattern.permute.xlu0 2
          %2773 = vperm.xlu0 %2772, %v2647
          %v2774 = vpop.permute.xlu0 %2773
          %v2776 = vsub.f32 %v2552, %v2699
          %v2777 = vsub.f32 %v2553, %v2699
          %v2778 = vsub.f32 %v2554, %v2704
          %v2779 = vsub.f32 %v2555, %v2704
          %v2780 = vsub.f32 %v2556, %v2709
          %v2781 = vsub.f32 %v2557, %v2709
          %v2782 = vsub.f32 %v2558, %v2714
          %v2783 = vsub.f32 %v2559, %v2714
          %v2784 = vsub.f32 %v2560, %v2719
          %v2785 = vsub.f32 %v2561, %v2719
          %v2786 = vsub.f32 %v2562, %v2724
          %v2787 = vsub.f32 %v2563, %v2724
          %v2788 = vsub.f32 %v2564, %v2729
          %v2789 = vsub.f32 %v2565, %v2729
          %v2790 = vsub.f32 %v2566, %v2734
          %v2791 = vsub.f32 %v2567, %v2734
          %v2792 = vsub.f32 %v2568, %v2739
          %v2793 = vsub.f32 %v2569, %v2739
          %v2794 = vsub.f32 %v2570, %v2744
          %v2795 = vsub.f32 %v2571, %v2744
          %v2796 = vsub.f32 %v2572, %v2749
          %v2797 = vsub.f32 %v2573, %v2749
          %v2798 = vsub.f32 %v2574, %v2754
          %v2799 = vsub.f32 %v2575, %v2754
          %v2800 = vsub.f32 %v2576, %v2759
          %v2801 = vsub.f32 %v2577, %v2759
          %v2802 = vsub.f32 %v2578, %v2764
          %v2803 = vsub.f32 %v2579, %v2764
          %v2804 = vsub.f32 %v2580, %v2769
          %v2805 = vsub.f32 %v2581, %v2769
          %v2806 = vsub.f32 %v2582, %v2774
          %v2807 = vsub.f32 %v2583, %v2774
          %v2808 = vmul.f32 %v2776, 1.442695
          %v2809 = vpow.pop %v2808
          %v2810 = vmul.f32 %v2777, 1.442695
          %v2811 = vpow.pop %v2810
          %v2812 = vmul.f32 %v2778, 1.442695
          %v2813 = vpow.pop %v2812
          %v2814 = vmul.f32 %v2779, 1.442695
          %v2815 = vpow.pop %v2814
          %v2816 = vmul.f32 %v2780, 1.442695
          %v2817 = vpow.pop %v2816
          %v2818 = vmul.f32 %v2781, 1.442695
          %v2819 = vpow.pop %v2818
          %v2820 = vmul.f32 %v2782, 1.442695
          %v2821 = vpow.pop %v2820
          %v2822 = vmul.f32 %v2783, 1.442695
          %v2823 = vpow.pop %v2822
          %v2824 = vmul.f32 %v2784, 1.442695
          %v2825 = vpow.pop %v2824
          %v2826 = vmul.f32 %v2785, 1.442695
          %v2827 = vpow.pop %v2826
          %v2828 = vmul.f32 %v2786, 1.442695
          %v2829 = vpow.pop %v2828
          %v2830 = vmul.f32 %v2787, 1.442695
          %v2831 = vpow.pop %v2830
          %v2832 = vmul.f32 %v2788, 1.442695
          %v2833 = vpow.pop %v2832
          %v2834 = vmul.f32 %v2789, 1.442695
          %v2835 = vpow.pop %v2834
          %v2836 = vmul.f32 %v2790, 1.442695
          %v2837 = vpow.pop %v2836
          %v2838 = vmul.f32 %v2791, 1.442695
          %v2839 = vpow.pop %v2838
          %v2840 = vmul.f32 %v2792, 1.442695
          %v2841 = vpow.pop %v2840
          %v2842 = vmul.f32 %v2793, 1.442695
          %v2843 = vpow.pop %v2842
          %v2844 = vmul.f32 %v2794, 1.442695
          %v2845 = vpow.pop %v2844
          %v2846 = vmul.f32 %v2795, 1.442695
          %v2847 = vpow.pop %v2846
          %v2848 = vmul.f32 %v2796, 1.442695
          %v2849 = vpow.pop %v2848
          %v2850 = vmul.f32 %v2797, 1.442695
          %v2851 = vpow.pop %v2850
          %v2852 = vmul.f32 %v2798, 1.442695
          %v2853 = vpow.pop %v2852
          %v2854 = vmul.f32 %v2799, 1.442695
          %v2855 = vpow.pop %v2854
          %v2856 = vmul.f32 %v2800, 1.442695
          %v2857 = vpow.pop %v2856
          %v2858 = vmul.f32 %v2801, 1.442695
          %v2859 = vpow.pop %v2858
          %v2860 = vmul.f32 %v2802, 1.442695
          %v2861 = vpow.pop %v2860
          %v2862 = vmul.f32 %v2803, 1.442695
          %v2863 = vpow.pop %v2862
          %v2864 = vmul.f32 %v2804, 1.442695
          %v2865 = vpow.pop %v2864
          %v2866 = vmul.f32 %v2805, 1.442695
          %v2867 = vpow.pop %v2866
          %v2868 = vmul.f32 %v2806, 1.442695
          %v2869 = vpow.pop %v2868
          %v2870 = vmul.f32 %v2807, 1.442695
          %v2871 = vpow.pop %v2870
          %v2872 = vmul.f32 %v2665, %v655
          %v2873 = vmul.f32 %v2667, %v656
          %v2874 = vmul.f32 %v2669, %v657
          %v2875 = vmul.f32 %v2671, %v658
          %v2876 = vmul.f32 %v2673, %v659
          %v2877 = vmul.f32 %v2675, %v660
          %v2878 = vmul.f32 %v2677, %v661
          %v2879 = vmul.f32 %v2679, %v662
          %v2880 = vmul.f32 %v2681, %v663
          %v2881 = vmul.f32 %v2683, %v664
          %v2882 = vmul.f32 %v2685, %v665
          %v2883 = vmul.f32 %v2687, %v666
          %v2884 = vmul.f32 %v2689, %v667
          %v2885 = vmul.f32 %v2691, %v668
          %v2886 = vmul.f32 %v2693, %v669
          %v2887 = vmul.f32 %v2695, %v670
          %v2888 = vadd.f32 %v2809, %v2811
          %2889 = vadd.xlane.f32.xlu0 %v2888
          %v2890 = vpop.xlane.xlu0 %2889
          %v2891 = vadd.f32 %v2813, %v2815
          %2892 = vadd.xlane.f32.xlu0 %v2891
          %v2893 = vpop.xlane.xlu0 %2892
          %v2894 = vadd.f32 %v2817, %v2819
          %2895 = vadd.xlane.f32.xlu0 %v2894
          %v2896 = vpop.xlane.xlu0 %2895
          %v2897 = vadd.f32 %v2821, %v2823
          %2898 = vadd.xlane.f32.xlu0 %v2897
          %v2899 = vpop.xlane.xlu0 %2898
          %v2900 = vadd.f32 %v2825, %v2827
          %2901 = vadd.xlane.f32.xlu0 %v2900
          %v2902 = vpop.xlane.xlu0 %2901
          %v2903 = vadd.f32 %v2829, %v2831
          %2904 = vadd.xlane.f32.xlu0 %v2903
          %v2905 = vpop.xlane.xlu0 %2904
          %v2906 = vadd.f32 %v2833, %v2835
          %2907 = vadd.xlane.f32.xlu0 %v2906
          %v2908 = vpop.xlane.xlu0 %2907
          %v2909 = vadd.f32 %v2837, %v2839
          %2910 = vadd.xlane.f32.xlu0 %v2909
          %v2911 = vpop.xlane.xlu0 %2910
          %v2912 = vadd.f32 %v2841, %v2843
          %2913 = vadd.xlane.f32.xlu0 %v2912
          %v2914 = vpop.xlane.xlu0 %2913
          %v2915 = vadd.f32 %v2845, %v2847
          %2916 = vadd.xlane.f32.xlu0 %v2915
          %v2917 = vpop.xlane.xlu0 %2916
          %v2918 = vadd.f32 %v2849, %v2851
          %2919 = vadd.xlane.f32.xlu0 %v2918
          %v2920 = vpop.xlane.xlu0 %2919
          %v2921 = vadd.f32 %v2853, %v2855
          %2922 = vadd.xlane.f32.xlu0 %v2921
          %v2923 = vpop.xlane.xlu0 %2922
          %v2924 = vadd.f32 %v2857, %v2859
          %2925 = vadd.xlane.f32.xlu0 %v2924
          %v2926 = vpop.xlane.xlu0 %2925
          %v2927 = vadd.f32 %v2861, %v2863
          %2928 = vadd.xlane.f32.xlu0 %v2927
          %v2929 = vpop.xlane.xlu0 %2928
          %v2930 = vadd.f32 %v2865, %v2867
          %2931 = vadd.xlane.f32.xlu0 %v2930
          %v2932 = vpop.xlane.xlu0 %2931
          %v2933 = vadd.f32 %v2869, %v2871
          %2934 = vadd.xlane.f32.xlu0 %v2933
          %v2935 = vpop.xlane.xlu0 %2934
          %v2936 = vadd.f32 %v2872, %v2890
          %v2937 = vadd.f32 %v2873, %v2893
          %v2938 = vadd.f32 %v2874, %v2896
          %v2939 = vadd.f32 %v2875, %v2899
          %v2940 = vadd.f32 %v2876, %v2902
          %v2941 = vadd.f32 %v2877, %v2905
          %v2942 = vadd.f32 %v2878, %v2908
          %v2943 = vadd.f32 %v2879, %v2911
          %v2944 = vadd.f32 %v2880, %v2914
          %v2945 = vadd.f32 %v2881, %v2917
          %v2946 = vadd.f32 %v2882, %v2920
          %v2947 = vadd.f32 %v2883, %v2923
          %v2948 = vadd.f32 %v2884, %v2926
          %v2949 = vadd.f32 %v2885, %v2929
          %v2950 = vadd.f32 %v2886, %v2932
          %v2951 = vadd.f32 %v2887, %v2935
          %v2952 = vmul.f32 %v2809, %v607
          %v2953 = vmul.f32 %v2811, %v608
          %v2954 = vmul.f32 %v2813, %v609
          %v2955 = vmul.f32 %v2815, %v610
          %v2956 = vmul.f32 %v2817, %v611
          %v2957 = vmul.f32 %v2819, %v612
          %v2958 = vmul.f32 %v2821, %v613
          %v2959 = vmul.f32 %v2823, %v614
          %v2960 = vmul.f32 %v2825, %v615
          %v2961 = vmul.f32 %v2827, %v616
          %v2962 = vmul.f32 %v2829, %v617
          %v2963 = vmul.f32 %v2831, %v618
          %v2964 = vmul.f32 %v2833, %v619
          %v2965 = vmul.f32 %v2835, %v620
          %v2966 = vmul.f32 %v2837, %v621
          %v2967 = vmul.f32 %v2839, %v622
          %v2968 = vmul.f32 %v2841, %v623
          %v2969 = vmul.f32 %v2843, %v624
          %v2970 = vmul.f32 %v2845, %v625
          %v2971 = vmul.f32 %v2847, %v626
          %v2972 = vmul.f32 %v2849, %v627
          %v2973 = vmul.f32 %v2851, %v628
          %v2974 = vmul.f32 %v2853, %v629
          %v2975 = vmul.f32 %v2855, %v630
          %v2976 = vmul.f32 %v2857, %v631
          %v2977 = vmul.f32 %v2859, %v632
          %v2978 = vmul.f32 %v2861, %v633
          %v2979 = vmul.f32 %v2863, %v634
          %v2980 = vmul.f32 %v2865, %v635
          %v2981 = vmul.f32 %v2867, %v636
          %v2982 = vmul.f32 %v2869, %v637
          %v2983 = vmul.f32 %v2871, %v638
          %v2984 = vpack.c.bf16 %v2954, %v2952
          %v2985 = vpack.c.bf16 %v2955, %v2953
          %v2986 = vpack.c.bf16 %v2958, %v2956
          %v2987 = vpack.c.bf16 %v2959, %v2957
          %v2988 = vpack.c.bf16 %v2962, %v2960
          %v2989 = vpack.c.bf16 %v2963, %v2961
          %v2990 = vpack.c.bf16 %v2966, %v2964
          %v2991 = vpack.c.bf16 %v2967, %v2965
          %v2992 = vpack.c.bf16 %v2970, %v2968
          %v2993 = vpack.c.bf16 %v2971, %v2969
          %v2994 = vpack.c.bf16 %v2974, %v2972
          %v2995 = vpack.c.bf16 %v2975, %v2973
          %v2996 = vpack.c.bf16 %v2978, %v2976
          %v2997 = vpack.c.bf16 %v2979, %v2977
          %v2998 = vpack.c.bf16 %v2982, %v2980
          %v2999 = vpack.c.bf16 %v2983, %v2981
          %3000 = vrot.lane.b32.xlu0 %v1420, 64
          %v3001 = vpop.permute.xlu0 %3000
          %3002 = vrot.lane.b32.xlu0 %v1421, 64
          %v3003 = vpop.permute.xlu0 %3002
          %3004 = vrot.lane.b32.xlu0 %v1422, 64
          %v3005 = vpop.permute.xlu0 %3004
          %3006 = vrot.lane.b32.xlu0 %v1423, 64
          %v3007 = vpop.permute.xlu0 %3006
          %3008 = vrot.lane.b32.xlu0 %v1424, 64
          %v3009 = vpop.permute.xlu0 %3008
          %3010 = vrot.lane.b32.xlu0 %v1425, 64
          %v3011 = vpop.permute.xlu0 %3010
          %3012 = vrot.lane.b32.xlu0 %v1426, 64
          %v3013 = vpop.permute.xlu0 %3012
          %3014 = vrot.lane.b32.xlu0 %v1427, 64
          %v3015 = vpop.permute.xlu0 %3014
          %3016 = vrot.lane.b32.xlu0 %v1428, 64
          %v3017 = vpop.permute.xlu0 %3016
          %3018 = vrot.lane.b32.xlu0 %v1429, 64
          %v3019 = vpop.permute.xlu0 %3018
          %3020 = vrot.lane.b32.xlu0 %v1430, 64
          %v3021 = vpop.permute.xlu0 %3020
          %3022 = vrot.lane.b32.xlu0 %v1431, 64
          %v3023 = vpop.permute.xlu0 %3022
          %3024 = vrot.lane.b32.xlu0 %v1432, 64
          %v3025 = vpop.permute.xlu0 %3024
          %3026 = vrot.lane.b32.xlu0 %v1433, 64
          %v3027 = vpop.permute.xlu0 %3026
          %3028 = vrot.lane.b32.xlu0 %v1434, 64
          %v3029 = vpop.permute.xlu0 %3028
          %3030 = vrot.lane.b32.xlu0 %v1435, 64
          %v3031 = vpop.permute.xlu0 %3030
          %3048 = vmatprep.subr.bf16.mxu0 0
          %3049 = vmatpush1.bf16.msra.mxu0 %v3001
          %3050 = vmatprep.subr.bf16.mxu0 0
          %3051 = vmatpush1.bf16.msra.mxu0 %v3003
          %3052 = vmatprep.subr.bf16.mxu0 0
          %3053 = vmatpush1.bf16.msra.mxu0 %v3005
          %3054 = vmatprep.subr.bf16.mxu0 0
          %3055 = vmatpush1.bf16.msra.mxu0 %v3007
          %3056 = vmatprep.subr.bf16.mxu0 0
          %3057 = vmatpush1.bf16.msra.mxu0 %v3009
          %3058 = vmatprep.subr.bf16.mxu0 0
          %3059 = vmatpush1.bf16.msra.mxu0 %v3011
          %3060 = vmatprep.subr.bf16.mxu0 0
          %3061 = vmatpush1.bf16.msra.mxu0 %v3013
          %3062 = vmatprep.subr.bf16.mxu0 0
          %3063 = vmatpush1.bf16.msra.mxu0 %v3015
          %3064 = vmatprep.subr.bf16.mxu0 0
          %3065 = vmatpush1.bf16.msra.mxu0 %v3017
          %3066 = vmatprep.subr.bf16.mxu0 0
          %3067 = vmatpush1.bf16.msra.mxu0 %v3019
          %3068 = vmatprep.subr.bf16.mxu0 0
          %3069 = vmatpush1.bf16.msra.mxu0 %v3021
          %3070 = vmatprep.subr.bf16.mxu0 0
          %3071 = vmatpush1.bf16.msra.mxu0 %v3023
          %3072 = vmatprep.subr.bf16.mxu0 0
          %3073 = vmatpush1.bf16.msra.mxu0 %v3025
          %3074 = vmatprep.subr.bf16.mxu0 0
          %3075 = vmatpush1.bf16.msra.mxu0 %v3027
          %3076 = vmatprep.subr.bf16.mxu0 0
          %3077 = vmatpush1.bf16.msra.mxu0 %v3029
          %3078 = vmatprep.subr.bf16.mxu0 0
          %3079 = vmatpush1.bf16.msra.mxu0 %v3031
          %3080 = vmatprep.mubr.bf16.mxu0 %v2985
          %3081 = vmatmul.mubr.bf16.gmra.mrb[0].mxu0 %v2984
          %v3082 = vpop.f32.mrb[0].mxu0
          %v3083 = vadd.f32 0.0, %v3082
          %v3084 = vpop.f32.mrb[0].mxu0
          %v3085 = vpop.f32.mrb[0].mxu0
          %v3086 = vadd.f32 0.0, %v3085
          %v3087 = vpop.f32.mrb[0].mxu0
          %3088 = vmatprep.mubr.bf16.mxu0 %v2987
          %3089 = vmatmul.mubr.bf16.gmra.mrb[0].mxu0 %v2986
          %v3090 = vpop.f32.mrb[0].mxu0
          %v3091 = vadd.f32 0.0, %v3090
          %v3092 = vpop.f32.mrb[0].mxu0
          %v3093 = vpop.f32.mrb[0].mxu0
          %v3094 = vadd.f32 0.0, %v3093
          %v3095 = vpop.f32.mrb[0].mxu0
          %3096 = vmatprep.mubr.bf16.mxu0 %v2989
          %3097 = vmatmul.mubr.bf16.gmra.mrb[0].mxu0 %v2988
          %v3098 = vpop.f32.mrb[0].mxu0
          %v3099 = vadd.f32 0.0, %v3098
          %v3100 = vpop.f32.mrb[0].mxu0
          %v3101 = vpop.f32.mrb[0].mxu0
          %v3102 = vadd.f32 0.0, %v3101
          %v3103 = vpop.f32.mrb[0].mxu0
          %3104 = vmatprep.mubr.bf16.mxu0 %v2991
          %3105 = vmatmul.mubr.bf16.gmra.mrb[0].mxu0 %v2990
          %v3106 = vpop.f32.mrb[0].mxu0
          %v3107 = vadd.f32 0.0, %v3106
          %v3108 = vpop.f32.mrb[0].mxu0
          %v3109 = vpop.f32.mrb[0].mxu0
          %v3110 = vadd.f32 0.0, %v3109
          %v3111 = vpop.f32.mrb[0].mxu0
          %3112 = vmatprep.mubr.bf16.mxu0 %v2993
          %3113 = vmatmul.mubr.bf16.gmra.mrb[0].mxu0 %v2992
          %v3114 = vpop.f32.mrb[0].mxu0
          %v3115 = vadd.f32 0.0, %v3114
          %v3116 = vpop.f32.mrb[0].mxu0
          %v3117 = vpop.f32.mrb[0].mxu0
          %v3118 = vadd.f32 0.0, %v3117
          %v3119 = vpop.f32.mrb[0].mxu0
          %3120 = vmatprep.mubr.bf16.mxu0 %v2995
          %3121 = vmatmul.mubr.bf16.gmra.mrb[0].mxu0 %v2994
          %v3122 = vpop.f32.mrb[0].mxu0
          %v3123 = vadd.f32 0.0, %v3122
          %v3124 = vpop.f32.mrb[0].mxu0
          %v3125 = vpop.f32.mrb[0].mxu0
          %v3126 = vadd.f32 0.0, %v3125
          %v3127 = vpop.f32.mrb[0].mxu0
          %3128 = vmatprep.mubr.bf16.mxu0 %v2997
          %3129 = vmatmul.mubr.bf16.gmra.mrb[0].mxu0 %v2996
          %v3130 = vpop.f32.mrb[0].mxu0
          %v3131 = vadd.f32 0.0, %v3130
          %v3132 = vpop.f32.mrb[0].mxu0
          %v3133 = vpop.f32.mrb[0].mxu0
          %v3134 = vadd.f32 0.0, %v3133
          %v3135 = vpop.f32.mrb[0].mxu0
          %3136 = vmatprep.mubr.bf16.mxu0 %v2999
          %3137 = vmatmul.mubr.bf16.gmra.mrb[0].mxu0 %v2998
          %v3138 = vpop.f32.mrb[0].mxu0
          %v3139 = vadd.f32 0.0, %v3138
          %v3140 = vpop.f32.mrb[0].mxu0
          %v3141 = vpop.f32.mrb[0].mxu0
          %v3142 = vadd.f32 0.0, %v3141
          %v3143 = vpop.f32.mrb[0].mxu0
          %3144 = vdwg.mxu0
          %s3145 = scalar_lea.vmem %s288, 4
          %v3146 = vld [vmem:[%s3145] ss:$8 sm:$0x3]
          %v3148 = vlaneseq
          %v3149 = vshrl.u32 %v3148, 7
          %v3150 = vsub.s32 0, %v3149
          %v3151 = vrot.slane %v3146, %v3150
          %v3152 = vlaneseq
          %v3153 = vshrl.u32 %v3152, 7
          %v3154 = vsub.s32 1, %v3153
          %v3155 = vrot.slane %v3146, %v3154
          %v3158 = vmul.f32 %v607, %v3151
          %v3159 = vmul.f32 %v608, %v3155
          %v3160 = vmul.f32 %v609, %v3151
          %v3161 = vmul.f32 %v610, %v3155
          %v3162 = vmul.f32 %v611, %v3151
          %v3163 = vmul.f32 %v612, %v3155
          %v3164 = vmul.f32 %v613, %v3151
          %v3165 = vmul.f32 %v614, %v3155
          %v3166 = vmul.f32 %v615, %v3151
          %v3167 = vmul.f32 %v616, %v3155
          %v3168 = vmul.f32 %v617, %v3151
          %v3169 = vmul.f32 %v618, %v3155
          %v3170 = vmul.f32 %v619, %v3151
          %v3171 = vmul.f32 %v620, %v3155
          %v3172 = vmul.f32 %v621, %v3151
          %v3173 = vmul.f32 %v622, %v3155
          %v3174 = vmul.f32 %v623, %v3151
          %v3175 = vmul.f32 %v624, %v3155
          %v3176 = vmul.f32 %v625, %v3151
          %v3177 = vmul.f32 %v626, %v3155
          %v3178 = vmul.f32 %v627, %v3151
          %v3179 = vmul.f32 %v628, %v3155
          %v3180 = vmul.f32 %v629, %v3151
          %v3181 = vmul.f32 %v630, %v3155
          %v3182 = vmul.f32 %v631, %v3151
          %v3183 = vmul.f32 %v632, %v3155
          %v3184 = vmul.f32 %v633, %v3151
          %v3185 = vmul.f32 %v634, %v3155
          %v3186 = vmul.f32 %v635, %v3151
          %v3187 = vmul.f32 %v636, %v3155
          %v3188 = vmul.f32 %v637, %v3151
          %v3189 = vmul.f32 %v638, %v3155
          %3190 = vset.pattern.permute.xlu0 4
          %3191 = vperm.xlu0 %3190, %v468
          %v3192 = vpop.permute.xlu0 %3191
          %3194 = vset.pattern.permute.xlu0 4
          %3195 = vperm.xlu0 %3194, %v469
          %v3196 = vpop.permute.xlu0 %3195
          %3198 = vset.pattern.permute.xlu0 4
          %3199 = vperm.xlu0 %3198, %v470
          %v3200 = vpop.permute.xlu0 %3199
          %3202 = vset.pattern.permute.xlu0 4
          %3203 = vperm.xlu0 %3202, %v471
          %v3204 = vpop.permute.xlu0 %3203
          %3206 = vset.pattern.permute.xlu0 4
          %3207 = vperm.xlu0 %3206, %v472
          %v3208 = vpop.permute.xlu0 %3207
          %3210 = vset.pattern.permute.xlu0 4
          %3211 = vperm.xlu0 %3210, %v473
          %v3212 = vpop.permute.xlu0 %3211
          %3214 = vset.pattern.permute.xlu0 4
          %3215 = vperm.xlu0 %3214, %v474
          %v3216 = vpop.permute.xlu0 %3215
          %3218 = vset.pattern.permute.xlu0 4
          %3219 = vperm.xlu0 %3218, %v475
          %v3220 = vpop.permute.xlu0 %3219
          %3222 = vset.pattern.permute.xlu0 4
          %3223 = vperm.xlu0 %3222, %v476
          %v3224 = vpop.permute.xlu0 %3223
          %3226 = vset.pattern.permute.xlu0 4
          %3227 = vperm.xlu0 %3226, %v477
          %v3228 = vpop.permute.xlu0 %3227
          %3230 = vset.pattern.permute.xlu0 4
          %3231 = vperm.xlu0 %3230, %v478
          %v3232 = vpop.permute.xlu0 %3231
          %3234 = vset.pattern.permute.xlu0 4
          %3235 = vperm.xlu0 %3234, %v479
          %v3236 = vpop.permute.xlu0 %3235
          %3238 = vset.pattern.permute.xlu0 4
          %3239 = vperm.xlu0 %3238, %v480
          %v3240 = vpop.permute.xlu0 %3239
          %3242 = vset.pattern.permute.xlu0 4
          %3243 = vperm.xlu0 %3242, %v481
          %v3244 = vpop.permute.xlu0 %3243
          %3246 = vset.pattern.permute.xlu0 4
          %3247 = vperm.xlu0 %3246, %v482
          %v3248 = vpop.permute.xlu0 %3247
          %3250 = vset.pattern.permute.xlu0 4
          %3251 = vperm.xlu0 %3250, %v483
          %v3252 = vpop.permute.xlu0 %3251
          %v3254 = vadd.f32 %v3158, %v3192
          %v3255 = vadd.f32 %v3159, %v3192
          %v3256 = vadd.f32 %v3160, %v3196
          %v3257 = vadd.f32 %v3161, %v3196
          %v3258 = vadd.f32 %v3162, %v3200
          %v3259 = vadd.f32 %v3163, %v3200
          %v3260 = vadd.f32 %v3164, %v3204
          %v3261 = vadd.f32 %v3165, %v3204
          %v3262 = vadd.f32 %v3166, %v3208
          %v3263 = vadd.f32 %v3167, %v3208
          %v3264 = vadd.f32 %v3168, %v3212
          %v3265 = vadd.f32 %v3169, %v3212
          %v3266 = vadd.f32 %v3170, %v3216
          %v3267 = vadd.f32 %v3171, %v3216
          %v3268 = vadd.f32 %v3172, %v3220
          %v3269 = vadd.f32 %v3173, %v3220
          %v3270 = vadd.f32 %v3174, %v3224
          %v3271 = vadd.f32 %v3175, %v3224
          %v3272 = vadd.f32 %v3176, %v3228
          %v3273 = vadd.f32 %v3177, %v3228
          %v3274 = vadd.f32 %v3178, %v3232
          %v3275 = vadd.f32 %v3179, %v3232
          %v3276 = vadd.f32 %v3180, %v3236
          %v3277 = vadd.f32 %v3181, %v3236
          %v3278 = vadd.f32 %v3182, %v3240
          %v3279 = vadd.f32 %v3183, %v3240
          %v3280 = vadd.f32 %v3184, %v3244
          %v3281 = vadd.f32 %v3185, %v3244
          %v3282 = vadd.f32 %v3186, %v3248
          %v3283 = vadd.f32 %v3187, %v3248
          %v3284 = vadd.f32 %v3188, %v3252
          %v3285 = vadd.f32 %v3189, %v3252
          %v3286 = vmul.f32 %v3254, 0.01
          %v3287 = vmul.f32 %v3255, 0.01
          %v3288 = vmul.f32 %v3256, 0.01
          %v3289 = vmul.f32 %v3257, 0.01
          %v3290 = vmul.f32 %v3258, 0.01
          %v3291 = vmul.f32 %v3259, 0.01
          %v3292 = vmul.f32 %v3260, 0.01
          %v3293 = vmul.f32 %v3261, 0.01
          %v3294 = vmul.f32 %v3262, 0.01
          %v3295 = vmul.f32 %v3263, 0.01
          %v3296 = vmul.f32 %v3264, 0.01
          %v3297 = vmul.f32 %v3265, 0.01
          %v3298 = vmul.f32 %v3266, 0.01
          %v3299 = vmul.f32 %v3267, 0.01
          %v3300 = vmul.f32 %v3268, 0.01
          %v3301 = vmul.f32 %v3269, 0.01
          %v3302 = vmul.f32 %v3270, 0.01
          %v3303 = vmul.f32 %v3271, 0.01
          %v3304 = vmul.f32 %v3272, 0.01
          %v3305 = vmul.f32 %v3273, 0.01
          %v3306 = vmul.f32 %v3274, 0.01
          %v3307 = vmul.f32 %v3275, 0.01
          %v3308 = vmul.f32 %v3276, 0.01
          %v3309 = vmul.f32 %v3277, 0.01
          %v3310 = vmul.f32 %v3278, 0.01
          %v3311 = vmul.f32 %v3279, 0.01
          %v3312 = vmul.f32 %v3280, 0.01
          %v3313 = vmul.f32 %v3281, 0.01
          %v3314 = vmul.f32 %v3282, 0.01
          %v3315 = vmul.f32 %v3283, 0.01
          %v3316 = vmul.f32 %v3284, 0.01
          %v3317 = vmul.f32 %v3285, 0.01
          %v3318 = vmax.f32 %v3254, %v3286
          %v3319 = vmax.f32 %v3255, %v3287
          %v3320 = vmax.f32 %v3256, %v3288
          %v3321 = vmax.f32 %v3257, %v3289
          %v3322 = vmax.f32 %v3258, %v3290
          %v3323 = vmax.f32 %v3259, %v3291
          %v3324 = vmax.f32 %v3260, %v3292
          %v3325 = vmax.f32 %v3261, %v3293
          %v3326 = vmax.f32 %v3262, %v3294
          %v3327 = vmax.f32 %v3263, %v3295
          %v3328 = vmax.f32 %v3264, %v3296
          %v3329 = vmax.f32 %v3265, %v3297
          %v3330 = vmax.f32 %v3266, %v3298
          %v3331 = vmax.f32 %v3267, %v3299
          %v3332 = vmax.f32 %v3268, %v3300
          %v3333 = vmax.f32 %v3269, %v3301
          %v3334 = vmax.f32 %v3270, %v3302
          %v3335 = vmax.f32 %v3271, %v3303
          %v3336 = vmax.f32 %v3272, %v3304
          %v3337 = vmax.f32 %v3273, %v3305
          %v3338 = vmax.f32 %v3274, %v3306
          %v3339 = vmax.f32 %v3275, %v3307
          %v3340 = vmax.f32 %v3276, %v3308
          %v3341 = vmax.f32 %v3277, %v3309
          %v3342 = vmax.f32 %v3278, %v3310
          %v3343 = vmax.f32 %v3279, %v3311
          %v3344 = vmax.f32 %v3280, %v3312
          %v3345 = vmax.f32 %v3281, %v3313
          %v3346 = vmax.f32 %v3282, %v3314
          %v3347 = vmax.f32 %v3283, %v3315
          %v3348 = vmax.f32 %v3284, %v3316
          %v3349 = vmax.f32 %v3285, %v3317
          %v3350 = vsel %vm435, %v3318, -1e+30
          %v3351 = vsel %vm436, %v3319, -1e+30
          %v3352 = vsel %vm437, %v3320, -1e+30
          %v3353 = vsel %vm438, %v3321, -1e+30
          %v3354 = vsel %vm439, %v3322, -1e+30
          %v3355 = vsel %vm440, %v3323, -1e+30
          %v3356 = vsel %vm441, %v3324, -1e+30
          %v3357 = vsel %vm442, %v3325, -1e+30
          %v3358 = vsel %vm443, %v3326, -1e+30
          %v3359 = vsel %vm444, %v3327, -1e+30
          %v3360 = vsel %vm445, %v3328, -1e+30
          %v3361 = vsel %vm446, %v3329, -1e+30
          %v3362 = vsel %vm447, %v3330, -1e+30
          %v3363 = vsel %vm448, %v3331, -1e+30
          %v3364 = vsel %vm449, %v3332, -1e+30
          %v3365 = vsel %vm450, %v3333, -1e+30
          %v3366 = vsel %vm451, %v3334, -1e+30
          %v3367 = vsel %vm452, %v3335, -1e+30
          %v3368 = vsel %vm453, %v3336, -1e+30
          %v3369 = vsel %vm454, %v3337, -1e+30
          %v3370 = vsel %vm455, %v3338, -1e+30
          %v3371 = vsel %vm456, %v3339, -1e+30
          %v3372 = vsel %vm457, %v3340, -1e+30
          %v3373 = vsel %vm458, %v3341, -1e+30
          %v3374 = vsel %vm459, %v3342, -1e+30
          %v3375 = vsel %vm460, %v3343, -1e+30
          %v3376 = vsel %vm461, %v3344, -1e+30
          %v3377 = vsel %vm462, %v3345, -1e+30
          %v3378 = vsel %vm463, %v3346, -1e+30
          %v3379 = vsel %vm464, %v3347, -1e+30
          %v3380 = vsel %vm465, %v3348, -1e+30
          %v3381 = vsel %vm466, %v3349, -1e+30
          %v3382 = vmax.f32 %v3350, %v3351
          %3383 = vmax.xlane.f32.xlu0 %v3382
          %v3384 = vpop.xlane.xlu0 %3383
          %v3385 = vmax.f32 %v3352, %v3353
          %3386 = vmax.xlane.f32.xlu0 %v3385
          %v3387 = vpop.xlane.xlu0 %3386
          %v3388 = vmax.f32 %v3354, %v3355
          %3389 = vmax.xlane.f32.xlu0 %v3388
          %v3390 = vpop.xlane.xlu0 %3389
          %v3391 = vmax.f32 %v3356, %v3357
          %3392 = vmax.xlane.f32.xlu0 %v3391
          %v3393 = vpop.xlane.xlu0 %3392
          %v3394 = vmax.f32 %v3358, %v3359
          %3395 = vmax.xlane.f32.xlu0 %v3394
          %v3396 = vpop.xlane.xlu0 %3395
          %v3397 = vmax.f32 %v3360, %v3361
          %3398 = vmax.xlane.f32.xlu0 %v3397
          %v3399 = vpop.xlane.xlu0 %3398
          %v3400 = vmax.f32 %v3362, %v3363
          %3401 = vmax.xlane.f32.xlu0 %v3400
          %v3402 = vpop.xlane.xlu0 %3401
          %v3403 = vmax.f32 %v3364, %v3365
          %3404 = vmax.xlane.f32.xlu0 %v3403
          %v3405 = vpop.xlane.xlu0 %3404
          %v3406 = vmax.f32 %v3366, %v3367
          %3407 = vmax.xlane.f32.xlu0 %v3406
          %v3408 = vpop.xlane.xlu0 %3407
          %v3409 = vmax.f32 %v3368, %v3369
          %3410 = vmax.xlane.f32.xlu0 %v3409
          %v3411 = vpop.xlane.xlu0 %3410
          %v3412 = vmax.f32 %v3370, %v3371
          %3413 = vmax.xlane.f32.xlu0 %v3412
          %v3414 = vpop.xlane.xlu0 %3413
          %v3415 = vmax.f32 %v3372, %v3373
          %3416 = vmax.xlane.f32.xlu0 %v3415
          %v3417 = vpop.xlane.xlu0 %3416
          %v3418 = vmax.f32 %v3374, %v3375
          %3419 = vmax.xlane.f32.xlu0 %v3418
          %v3420 = vpop.xlane.xlu0 %3419
          %v3421 = vmax.f32 %v3376, %v3377
          %3422 = vmax.xlane.f32.xlu0 %v3421
          %v3423 = vpop.xlane.xlu0 %3422
          %v3424 = vmax.f32 %v3378, %v3379
          %3425 = vmax.xlane.f32.xlu0 %v3424
          %v3426 = vpop.xlane.xlu0 %3425
          %v3427 = vmax.f32 %v3380, %v3381
          %3428 = vmax.xlane.f32.xlu0 %v3427
          %v3429 = vpop.xlane.xlu0 %3428
          %v3430 = vmax.f32 %v639, %v3384
          %v3431 = vmax.f32 %v640, %v3387
          %v3432 = vmax.f32 %v641, %v3390
          %v3433 = vmax.f32 %v642, %v3393
          %v3434 = vmax.f32 %v643, %v3396
          %v3435 = vmax.f32 %v644, %v3399
          %v3436 = vmax.f32 %v645, %v3402
          %v3437 = vmax.f32 %v646, %v3405
          %v3438 = vmax.f32 %v647, %v3408
          %v3439 = vmax.f32 %v648, %v3411
          %v3440 = vmax.f32 %v649, %v3414
          %v3441 = vmax.f32 %v650, %v3417
          %v3442 = vmax.f32 %v651, %v3420
          %v3443 = vmax.f32 %v652, %v3423
          %v3444 = vmax.f32 %v653, %v3426
          %v3445 = vmax.f32 %v654, %v3429
          %v3446 = vsub.f32 %v639, %v3430
          %v3447 = vsub.f32 %v640, %v3431
          %v3448 = vsub.f32 %v641, %v3432
          %v3449 = vsub.f32 %v642, %v3433
          %v3450 = vsub.f32 %v643, %v3434
          %v3451 = vsub.f32 %v644, %v3435
          %v3452 = vsub.f32 %v645, %v3436
          %v3453 = vsub.f32 %v646, %v3437
          %v3454 = vsub.f32 %v647, %v3438
          %v3455 = vsub.f32 %v648, %v3439
          %v3456 = vsub.f32 %v649, %v3440
          %v3457 = vsub.f32 %v650, %v3441
          %v3458 = vsub.f32 %v651, %v3442
          %v3459 = vsub.f32 %v652, %v3443
          %v3460 = vsub.f32 %v653, %v3444
          %v3461 = vsub.f32 %v654, %v3445
          %v3462 = vmul.f32 %v3446, 1.442695
          %v3463 = vpow.pop %v3462
          %v3464 = vmul.f32 %v3447, 1.442695
          %v3465 = vpow.pop %v3464
          %v3466 = vmul.f32 %v3448, 1.442695
          %v3467 = vpow.pop %v3466
          %v3468 = vmul.f32 %v3449, 1.442695
          %v3469 = vpow.pop %v3468
          %v3470 = vmul.f32 %v3450, 1.442695
          %v3471 = vpow.pop %v3470
          %v3472 = vmul.f32 %v3451, 1.442695
          %v3473 = vpow.pop %v3472
          %v3474 = vmul.f32 %v3452, 1.442695
          %v3475 = vpow.pop %v3474
          %v3476 = vmul.f32 %v3453, 1.442695
          %v3477 = vpow.pop %v3476
          %v3478 = vmul.f32 %v3454, 1.442695
          %v3479 = vpow.pop %v3478
          %v3480 = vmul.f32 %v3455, 1.442695
          %v3481 = vpow.pop %v3480
          %v3482 = vmul.f32 %v3456, 1.442695
          %v3483 = vpow.pop %v3482
          %v3484 = vmul.f32 %v3457, 1.442695
          %v3485 = vpow.pop %v3484
          %v3486 = vmul.f32 %v3458, 1.442695
          %v3487 = vpow.pop %v3486
          %v3488 = vmul.f32 %v3459, 1.442695
          %v3489 = vpow.pop %v3488
          %v3490 = vmul.f32 %v3460, 1.442695
          %v3491 = vpow.pop %v3490
          %v3492 = vmul.f32 %v3461, 1.442695
          %v3493 = vpow.pop %v3492
          %3495 = vset.pattern.permute.xlu0 3
          %3496 = vperm.xlu0 %3495, %v3430
          %v3497 = vpop.permute.xlu0 %3496
          %3500 = vset.pattern.permute.xlu0 3
          %3501 = vperm.xlu0 %3500, %v3431
          %v3502 = vpop.permute.xlu0 %3501
          %3505 = vset.pattern.permute.xlu0 3
          %3506 = vperm.xlu0 %3505, %v3432
          %v3507 = vpop.permute.xlu0 %3506
          %3510 = vset.pattern.permute.xlu0 3
          %3511 = vperm.xlu0 %3510, %v3433
          %v3512 = vpop.permute.xlu0 %3511
          %3515 = vset.pattern.permute.xlu0 3
          %3516 = vperm.xlu0 %3515, %v3434
          %v3517 = vpop.permute.xlu0 %3516
          %3520 = vset.pattern.permute.xlu0 3
          %3521 = vperm.xlu0 %3520, %v3435
          %v3522 = vpop.permute.xlu0 %3521
          %3525 = vset.pattern.permute.xlu0 3
          %3526 = vperm.xlu0 %3525, %v3436
          %v3527 = vpop.permute.xlu0 %3526
          %3530 = vset.pattern.permute.xlu0 3
          %3531 = vperm.xlu0 %3530, %v3437
          %v3532 = vpop.permute.xlu0 %3531
          %3535 = vset.pattern.permute.xlu0 3
          %3536 = vperm.xlu0 %3535, %v3438
          %v3537 = vpop.permute.xlu0 %3536
          %3540 = vset.pattern.permute.xlu0 3
          %3541 = vperm.xlu0 %3540, %v3439
          %v3542 = vpop.permute.xlu0 %3541
          %3545 = vset.pattern.permute.xlu0 3
          %3546 = vperm.xlu0 %3545, %v3440
          %v3547 = vpop.permute.xlu0 %3546
          %3550 = vset.pattern.permute.xlu0 3
          %3551 = vperm.xlu0 %3550, %v3441
          %v3552 = vpop.permute.xlu0 %3551
          %3555 = vset.pattern.permute.xlu0 3
          %3556 = vperm.xlu0 %3555, %v3442
          %v3557 = vpop.permute.xlu0 %3556
          %3560 = vset.pattern.permute.xlu0 3
          %3561 = vperm.xlu0 %3560, %v3443
          %v3562 = vpop.permute.xlu0 %3561
          %3565 = vset.pattern.permute.xlu0 3
          %3566 = vperm.xlu0 %3565, %v3444
          %v3567 = vpop.permute.xlu0 %3566
          %3570 = vset.pattern.permute.xlu0 3
          %3571 = vperm.xlu0 %3570, %v3445
          %v3572 = vpop.permute.xlu0 %3571
          %v3574 = vsub.f32 %v3350, %v3497
          %v3575 = vsub.f32 %v3351, %v3497
          %v3576 = vsub.f32 %v3352, %v3502
          %v3577 = vsub.f32 %v3353, %v3502
          %v3578 = vsub.f32 %v3354, %v3507
          %v3579 = vsub.f32 %v3355, %v3507
          %v3580 = vsub.f32 %v3356, %v3512
          %v3581 = vsub.f32 %v3357, %v3512
          %v3582 = vsub.f32 %v3358, %v3517
          %v3583 = vsub.f32 %v3359, %v3517
          %v3584 = vsub.f32 %v3360, %v3522
          %v3585 = vsub.f32 %v3361, %v3522
          %v3586 = vsub.f32 %v3362, %v3527
          %v3587 = vsub.f32 %v3363, %v3527
          %v3588 = vsub.f32 %v3364, %v3532
          %v3589 = vsub.f32 %v3365, %v3532
          %v3590 = vsub.f32 %v3366, %v3537
          %v3591 = vsub.f32 %v3367, %v3537
          %v3592 = vsub.f32 %v3368, %v3542
          %v3593 = vsub.f32 %v3369, %v3542
          %v3594 = vsub.f32 %v3370, %v3547
          %v3595 = vsub.f32 %v3371, %v3547
          %v3596 = vsub.f32 %v3372, %v3552
          %v3597 = vsub.f32 %v3373, %v3552
          %v3598 = vsub.f32 %v3374, %v3557
          %v3599 = vsub.f32 %v3375, %v3557
          %v3600 = vsub.f32 %v3376, %v3562
          %v3601 = vsub.f32 %v3377, %v3562
          %v3602 = vsub.f32 %v3378, %v3567
          %v3603 = vsub.f32 %v3379, %v3567
          %v3604 = vsub.f32 %v3380, %v3572
          %v3605 = vsub.f32 %v3381, %v3572
          %v3606 = vmul.f32 %v3574, 1.442695
          %v3607 = vpow.pop %v3606
          %v3608 = vmul.f32 %v3575, 1.442695
          %v3609 = vpow.pop %v3608
          %v3610 = vmul.f32 %v3576, 1.442695
          %v3611 = vpow.pop %v3610
          %v3612 = vmul.f32 %v3577, 1.442695
          %v3613 = vpow.pop %v3612
          %v3614 = vmul.f32 %v3578, 1.442695
          %v3615 = vpow.pop %v3614
          %v3616 = vmul.f32 %v3579, 1.442695
          %v3617 = vpow.pop %v3616
          %v3618 = vmul.f32 %v3580, 1.442695
          %v3619 = vpow.pop %v3618
          %v3620 = vmul.f32 %v3581, 1.442695
          %v3621 = vpow.pop %v3620
          %v3622 = vmul.f32 %v3582, 1.442695
          %v3623 = vpow.pop %v3622
          %v3624 = vmul.f32 %v3583, 1.442695
          %v3625 = vpow.pop %v3624
          %v3626 = vmul.f32 %v3584, 1.442695
          %v3627 = vpow.pop %v3626
          %v3628 = vmul.f32 %v3585, 1.442695
          %v3629 = vpow.pop %v3628
          %v3630 = vmul.f32 %v3586, 1.442695
          %v3631 = vpow.pop %v3630
          %v3632 = vmul.f32 %v3587, 1.442695
          %v3633 = vpow.pop %v3632
          %v3634 = vmul.f32 %v3588, 1.442695
          %v3635 = vpow.pop %v3634
          %v3636 = vmul.f32 %v3589, 1.442695
          %v3637 = vpow.pop %v3636
          %v3638 = vmul.f32 %v3590, 1.442695
          %v3639 = vpow.pop %v3638
          %v3640 = vmul.f32 %v3591, 1.442695
          %v3641 = vpow.pop %v3640
          %v3642 = vmul.f32 %v3592, 1.442695
          %v3643 = vpow.pop %v3642
          %v3644 = vmul.f32 %v3593, 1.442695
          %v3645 = vpow.pop %v3644
          %v3646 = vmul.f32 %v3594, 1.442695
          %v3647 = vpow.pop %v3646
          %v3648 = vmul.f32 %v3595, 1.442695
          %v3649 = vpow.pop %v3648
          %v3650 = vmul.f32 %v3596, 1.442695
          %v3651 = vpow.pop %v3650
          %v3652 = vmul.f32 %v3597, 1.442695
          %v3653 = vpow.pop %v3652
          %v3654 = vmul.f32 %v3598, 1.442695
          %v3655 = vpow.pop %v3654
          %v3656 = vmul.f32 %v3599, 1.442695
          %v3657 = vpow.pop %v3656
          %v3658 = vmul.f32 %v3600, 1.442695
          %v3659 = vpow.pop %v3658
          %v3660 = vmul.f32 %v3601, 1.442695
          %v3661 = vpow.pop %v3660
          %v3662 = vmul.f32 %v3602, 1.442695
          %v3663 = vpow.pop %v3662
          %v3664 = vmul.f32 %v3603, 1.442695
          %v3665 = vpow.pop %v3664
          %v3666 = vmul.f32 %v3604, 1.442695
          %v3667 = vpow.pop %v3666
          %v3668 = vmul.f32 %v3605, 1.442695
          %v3669 = vpow.pop %v3668
          %v3670 = vmul.f32 %v3463, %v655
          %v3671 = vmul.f32 %v3465, %v656
          %v3672 = vmul.f32 %v3467, %v657
          %v3673 = vmul.f32 %v3469, %v658
          %v3674 = vmul.f32 %v3471, %v659
          %v3675 = vmul.f32 %v3473, %v660
          %v3676 = vmul.f32 %v3475, %v661
          %v3677 = vmul.f32 %v3477, %v662
          %v3678 = vmul.f32 %v3479, %v663
          %v3679 = vmul.f32 %v3481, %v664
          %v3680 = vmul.f32 %v3483, %v665
          %v3681 = vmul.f32 %v3485, %v666
          %v3682 = vmul.f32 %v3487, %v667
          %v3683 = vmul.f32 %v3489, %v668
          %v3684 = vmul.f32 %v3491, %v669
          %v3685 = vmul.f32 %v3493, %v670
          %v3686 = vadd.f32 %v3607, %v3609
          %3687 = vadd.xlane.f32.xlu0 %v3686
          %v3688 = vpop.xlane.xlu0 %3687
          %v3689 = vadd.f32 %v3611, %v3613
          %3690 = vadd.xlane.f32.xlu0 %v3689
          %v3691 = vpop.xlane.xlu0 %3690
          %v3692 = vadd.f32 %v3615, %v3617
          %3693 = vadd.xlane.f32.xlu0 %v3692
          %v3694 = vpop.xlane.xlu0 %3693
          %v3695 = vadd.f32 %v3619, %v3621
          %3696 = vadd.xlane.f32.xlu0 %v3695
          %v3697 = vpop.xlane.xlu0 %3696
          %v3698 = vadd.f32 %v3623, %v3625
          %3699 = vadd.xlane.f32.xlu0 %v3698
          %v3700 = vpop.xlane.xlu0 %3699
          %v3701 = vadd.f32 %v3627, %v3629
          %3702 = vadd.xlane.f32.xlu0 %v3701
          %v3703 = vpop.xlane.xlu0 %3702
          %v3704 = vadd.f32 %v3631, %v3633
          %3705 = vadd.xlane.f32.xlu0 %v3704
          %v3706 = vpop.xlane.xlu0 %3705
          %v3707 = vadd.f32 %v3635, %v3637
          %3708 = vadd.xlane.f32.xlu0 %v3707
          %v3709 = vpop.xlane.xlu0 %3708
          %v3710 = vadd.f32 %v3639, %v3641
          %3711 = vadd.xlane.f32.xlu0 %v3710
          %v3712 = vpop.xlane.xlu0 %3711
          %v3713 = vadd.f32 %v3643, %v3645
          %3714 = vadd.xlane.f32.xlu0 %v3713
          %v3715 = vpop.xlane.xlu0 %3714
          %v3716 = vadd.f32 %v3647, %v3649
          %3717 = vadd.xlane.f32.xlu0 %v3716
          %v3718 = vpop.xlane.xlu0 %3717
          %v3719 = vadd.f32 %v3651, %v3653
          %3720 = vadd.xlane.f32.xlu0 %v3719
          %v3721 = vpop.xlane.xlu0 %3720
          %v3722 = vadd.f32 %v3655, %v3657
          %3723 = vadd.xlane.f32.xlu0 %v3722
          %v3724 = vpop.xlane.xlu0 %3723
          %v3725 = vadd.f32 %v3659, %v3661
          %3726 = vadd.xlane.f32.xlu0 %v3725
          %v3727 = vpop.xlane.xlu0 %3726
          %v3728 = vadd.f32 %v3663, %v3665
          %3729 = vadd.xlane.f32.xlu0 %v3728
          %v3730 = vpop.xlane.xlu0 %3729
          %v3731 = vadd.f32 %v3667, %v3669
          %3732 = vadd.xlane.f32.xlu0 %v3731
          %v3733 = vpop.xlane.xlu0 %3732
          %v3734 = vadd.f32 %v3670, %v3688
          %v3735 = vadd.f32 %v3671, %v3691
          %v3736 = vadd.f32 %v3672, %v3694
          %v3737 = vadd.f32 %v3673, %v3697
          %v3738 = vadd.f32 %v3674, %v3700
          %v3739 = vadd.f32 %v3675, %v3703
          %v3740 = vadd.f32 %v3676, %v3706
          %v3741 = vadd.f32 %v3677, %v3709
          %v3742 = vadd.f32 %v3678, %v3712
          %v3743 = vadd.f32 %v3679, %v3715
          %v3744 = vadd.f32 %v3680, %v3718
          %v3745 = vadd.f32 %v3681, %v3721
          %v3746 = vadd.f32 %v3682, %v3724
          %v3747 = vadd.f32 %v3683, %v3727
          %v3748 = vadd.f32 %v3684, %v3730
          %v3749 = vadd.f32 %v3685, %v3733
          %v3750 = vmul.f32 %v3607, %v607
          %v3751 = vmul.f32 %v3609, %v608
          %v3752 = vmul.f32 %v3611, %v609
          %v3753 = vmul.f32 %v3613, %v610
          %v3754 = vmul.f32 %v3615, %v611
          %v3755 = vmul.f32 %v3617, %v612
          %v3756 = vmul.f32 %v3619, %v613
          %v3757 = vmul.f32 %v3621, %v614
          %v3758 = vmul.f32 %v3623, %v615
          %v3759 = vmul.f32 %v3625, %v616
          %v3760 = vmul.f32 %v3627, %v617
          %v3761 = vmul.f32 %v3629, %v618
          %v3762 = vmul.f32 %v3631, %v619
          %v3763 = vmul.f32 %v3633, %v620
          %v3764 = vmul.f32 %v3635, %v621
          %v3765 = vmul.f32 %v3637, %v622
          %v3766 = vmul.f32 %v3639, %v623
          %v3767 = vmul.f32 %v3641, %v624
          %v3768 = vmul.f32 %v3643, %v625
          %v3769 = vmul.f32 %v3645, %v626
          %v3770 = vmul.f32 %v3647, %v627
          %v3771 = vmul.f32 %v3649, %v628
          %v3772 = vmul.f32 %v3651, %v629
          %v3773 = vmul.f32 %v3653, %v630
          %v3774 = vmul.f32 %v3655, %v631
          %v3775 = vmul.f32 %v3657, %v632
          %v3776 = vmul.f32 %v3659, %v633
          %v3777 = vmul.f32 %v3661, %v634
          %v3778 = vmul.f32 %v3663, %v635
          %v3779 = vmul.f32 %v3665, %v636
          %v3780 = vmul.f32 %v3667, %v637
          %v3781 = vmul.f32 %v3669, %v638
          %v3782 = vpack.c.bf16 %v3752, %v3750
          %v3783 = vpack.c.bf16 %v3753, %v3751
          %v3784 = vpack.c.bf16 %v3756, %v3754
          %v3785 = vpack.c.bf16 %v3757, %v3755
          %v3786 = vpack.c.bf16 %v3760, %v3758
          %v3787 = vpack.c.bf16 %v3761, %v3759
          %v3788 = vpack.c.bf16 %v3764, %v3762
          %v3789 = vpack.c.bf16 %v3765, %v3763
          %v3790 = vpack.c.bf16 %v3768, %v3766
          %v3791 = vpack.c.bf16 %v3769, %v3767
          %v3792 = vpack.c.bf16 %v3772, %v3770
          %v3793 = vpack.c.bf16 %v3773, %v3771
          %v3794 = vpack.c.bf16 %v3776, %v3774
          %v3795 = vpack.c.bf16 %v3777, %v3775
          %v3796 = vpack.c.bf16 %v3780, %v3778
          %v3797 = vpack.c.bf16 %v3781, %v3779
          %3798 = vrot.lane.b32.xlu0 %v1420, 32
          %v3799 = vpop.permute.xlu0 %3798
          %3800 = vrot.lane.b32.xlu0 %v1421, 32
          %v3801 = vpop.permute.xlu0 %3800
          %3802 = vrot.lane.b32.xlu0 %v1422, 32
          %v3803 = vpop.permute.xlu0 %3802
          %3804 = vrot.lane.b32.xlu0 %v1423, 32
          %v3805 = vpop.permute.xlu0 %3804
          %3806 = vrot.lane.b32.xlu0 %v1424, 32
          %v3807 = vpop.permute.xlu0 %3806
          %3808 = vrot.lane.b32.xlu0 %v1425, 32
          %v3809 = vpop.permute.xlu0 %3808
          %3810 = vrot.lane.b32.xlu0 %v1426, 32
          %v3811 = vpop.permute.xlu0 %3810
          %3812 = vrot.lane.b32.xlu0 %v1427, 32
          %v3813 = vpop.permute.xlu0 %3812
          %3814 = vrot.lane.b32.xlu0 %v1428, 32
          %v3815 = vpop.permute.xlu0 %3814
          %3816 = vrot.lane.b32.xlu0 %v1429, 32
          %v3817 = vpop.permute.xlu0 %3816
          %3818 = vrot.lane.b32.xlu0 %v1430, 32
          %v3819 = vpop.permute.xlu0 %3818
          %3820 = vrot.lane.b32.xlu0 %v1431, 32
          %v3821 = vpop.permute.xlu0 %3820
          %3822 = vrot.lane.b32.xlu0 %v1432, 32
          %v3823 = vpop.permute.xlu0 %3822
          %3824 = vrot.lane.b32.xlu0 %v1433, 32
          %v3825 = vpop.permute.xlu0 %3824
          %3826 = vrot.lane.b32.xlu0 %v1434, 32
          %v3827 = vpop.permute.xlu0 %3826
          %3828 = vrot.lane.b32.xlu0 %v1435, 32
          %v3829 = vpop.permute.xlu0 %3828
          %3846 = vmatprep.subr.bf16.mxu0 0
          %3847 = vmatpush1.bf16.msra.mxu0 %v3799
          %3848 = vmatprep.subr.bf16.mxu0 0
          %3849 = vmatpush1.bf16.msra.mxu0 %v3801
          %3850 = vmatprep.subr.bf16.mxu0 0
          %3851 = vmatpush1.bf16.msra.mxu0 %v3803
          %3852 = vmatprep.subr.bf16.mxu0 0
          %3853 = vmatpush1.bf16.msra.mxu0 %v3805
          %3854 = vmatprep.subr.bf16.mxu0 0
          %3855 = vmatpush1.bf16.msra.mxu0 %v3807
          %3856 = vmatprep.subr.bf16.mxu0 0
          %3857 = vmatpush1.bf16.msra.mxu0 %v3809
          %3858 = vmatprep.subr.bf16.mxu0 0
          %3859 = vmatpush1.bf16.msra.mxu0 %v3811
          %3860 = vmatprep.subr.bf16.mxu0 0
          %3861 = vmatpush1.bf16.msra.mxu0 %v3813
          %3862 = vmatprep.subr.bf16.mxu0 0
          %3863 = vmatpush1.bf16.msra.mxu0 %v3815
          %3864 = vmatprep.subr.bf16.mxu0 0
          %3865 = vmatpush1.bf16.msra.mxu0 %v3817
          %3866 = vmatprep.subr.bf16.mxu0 0
          %3867 = vmatpush1.bf16.msra.mxu0 %v3819
          %3868 = vmatprep.subr.bf16.mxu0 0
          %3869 = vmatpush1.bf16.msra.mxu0 %v3821
          %3870 = vmatprep.subr.bf16.mxu0 0
          %3871 = vmatpush1.bf16.msra.mxu0 %v3823
          %3872 = vmatprep.subr.bf16.mxu0 0
          %3873 = vmatpush1.bf16.msra.mxu0 %v3825
          %3874 = vmatprep.subr.bf16.mxu0 0
          %3875 = vmatpush1.bf16.msra.mxu0 %v3827
          %3876 = vmatprep.subr.bf16.mxu0 0
          %3877 = vmatpush1.bf16.msra.mxu0 %v3829
          %3878 = vmatprep.mubr.bf16.mxu0 %v3783
          %3879 = vmatmul.mubr.bf16.gmra.mrb[0].mxu0 %v3782
          %v3880 = vpop.f32.mrb[0].mxu0
          %v3881 = vadd.f32 0.0, %v3880
          %v3882 = vpop.f32.mrb[0].mxu0
          %v3883 = vpop.f32.mrb[0].mxu0
          %v3884 = vadd.f32 0.0, %v3883
          %v3885 = vpop.f32.mrb[0].mxu0
          %3886 = vmatprep.mubr.bf16.mxu0 %v3785
          %3887 = vmatmul.mubr.bf16.gmra.mrb[0].mxu0 %v3784
          %v3888 = vpop.f32.mrb[0].mxu0
          %v3889 = vadd.f32 0.0, %v3888
          %v3890 = vpop.f32.mrb[0].mxu0
          %v3891 = vpop.f32.mrb[0].mxu0
          %v3892 = vadd.f32 0.0, %v3891
          %v3893 = vpop.f32.mrb[0].mxu0
          %3894 = vmatprep.mubr.bf16.mxu0 %v3787
          %3895 = vmatmul.mubr.bf16.gmra.mrb[0].mxu0 %v3786
          %v3896 = vpop.f32.mrb[0].mxu0
          %v3897 = vadd.f32 0.0, %v3896
          %v3898 = vpop.f32.mrb[0].mxu0
          %v3899 = vpop.f32.mrb[0].mxu0
          %v3900 = vadd.f32 0.0, %v3899
          %v3901 = vpop.f32.mrb[0].mxu0
          %3902 = vmatprep.mubr.bf16.mxu0 %v3789
          %3903 = vmatmul.mubr.bf16.gmra.mrb[0].mxu0 %v3788
          %v3904 = vpop.f32.mrb[0].mxu0
          %v3905 = vadd.f32 0.0, %v3904
          %v3906 = vpop.f32.mrb[0].mxu0
          %v3907 = vpop.f32.mrb[0].mxu0
          %v3908 = vadd.f32 0.0, %v3907
          %v3909 = vpop.f32.mrb[0].mxu0
          %3910 = vmatprep.mubr.bf16.mxu0 %v3791
          %3911 = vmatmul.mubr.bf16.gmra.mrb[0].mxu0 %v3790
          %v3912 = vpop.f32.mrb[0].mxu0
          %v3913 = vadd.f32 0.0, %v3912
          %v3914 = vpop.f32.mrb[0].mxu0
          %v3915 = vpop.f32.mrb[0].mxu0
          %v3916 = vadd.f32 0.0, %v3915
          %v3917 = vpop.f32.mrb[0].mxu0
          %3918 = vmatprep.mubr.bf16.mxu0 %v3793
          %3919 = vmatmul.mubr.bf16.gmra.mrb[0].mxu0 %v3792
          %v3920 = vpop.f32.mrb[0].mxu0
          %v3921 = vadd.f32 0.0, %v3920
          %v3922 = vpop.f32.mrb[0].mxu0
          %v3923 = vpop.f32.mrb[0].mxu0
          %v3924 = vadd.f32 0.0, %v3923
          %v3925 = vpop.f32.mrb[0].mxu0
          %3926 = vmatprep.mubr.bf16.mxu0 %v3795
          %3927 = vmatmul.mubr.bf16.gmra.mrb[0].mxu0 %v3794
          %v3928 = vpop.f32.mrb[0].mxu0
          %v3929 = vadd.f32 0.0, %v3928
          %v3930 = vpop.f32.mrb[0].mxu0
          %v3931 = vpop.f32.mrb[0].mxu0
          %v3932 = vadd.f32 0.0, %v3931
          %v3933 = vpop.f32.mrb[0].mxu0
          %3934 = vmatprep.mubr.bf16.mxu0 %v3797
          %3935 = vmatmul.mubr.bf16.gmra.mrb[0].mxu0 %v3796
          %v3936 = vpop.f32.mrb[0].mxu0
          %v3937 = vadd.f32 0.0, %v3936
          %v3938 = vpop.f32.mrb[0].mxu0
          %v3939 = vpop.f32.mrb[0].mxu0
          %v3940 = vadd.f32 0.0, %v3939
          %v3941 = vpop.f32.mrb[0].mxu0
          %3942 = vdwg.mxu0
          %vm3943 = vcmask 7168
          %v3944 = vsel %vm3943, %v956, %v1834
          %v3945 = vsel %vm3943, %v957, %v1835
          %v3946 = vsel %vm3943, %v958, %v1836
          %v3947 = vsel %vm3943, %v959, %v1837
          %v3948 = vsel %vm3943, %v960, %v1838
          %v3949 = vsel %vm3943, %v961, %v1839
          %v3950 = vsel %vm3943, %v962, %v1840
          %v3951 = vsel %vm3943, %v963, %v1841
          %v3952 = vsel %vm3943, %v964, %v1842
          %v3953 = vsel %vm3943, %v965, %v1843
          %v3954 = vsel %vm3943, %v966, %v1844
          %v3955 = vsel %vm3943, %v967, %v1845
          %v3956 = vsel %vm3943, %v968, %v1846
          %v3957 = vsel %vm3943, %v969, %v1847
          %v3958 = vsel %vm3943, %v970, %v1848
          %v3959 = vsel %vm3943, %v971, %v1849
          %vm3960 = vcmask 15360
          %v3961 = vsel %vm3960, %v3944, %v2632
          %v3962 = vsel %vm3960, %v3945, %v2633
          %v3963 = vsel %vm3960, %v3946, %v2634
          %v3964 = vsel %vm3960, %v3947, %v2635
          %v3965 = vsel %vm3960, %v3948, %v2636
          %v3966 = vsel %vm3960, %v3949, %v2637
          %v3967 = vsel %vm3960, %v3950, %v2638
          %v3968 = vsel %vm3960, %v3951, %v2639
          %v3969 = vsel %vm3960, %v3952, %v2640
          %v3970 = vsel %vm3960, %v3953, %v2641
          %v3971 = vsel %vm3960, %v3954, %v2642
          %v3972 = vsel %vm3960, %v3955, %v2643
          %v3973 = vsel %vm3960, %v3956, %v2644
          %v3974 = vsel %vm3960, %v3957, %v2645
          %v3975 = vsel %vm3960, %v3958, %v2646
          %v3976 = vsel %vm3960, %v3959, %v2647
          %vm3977 = vcmask 23552
          %v3978 = vsel %vm3977, %v3961, %v3430
          %v3979 = vsel %vm3977, %v3962, %v3431
          %v3980 = vsel %vm3977, %v3963, %v3432
          %v3981 = vsel %vm3977, %v3964, %v3433
          %v3982 = vsel %vm3977, %v3965, %v3434
          %v3983 = vsel %vm3977, %v3966, %v3435
          %v3984 = vsel %vm3977, %v3967, %v3436
          %v3985 = vsel %vm3977, %v3968, %v3437
          %v3986 = vsel %vm3977, %v3969, %v3438
          %v3987 = vsel %vm3977, %v3970, %v3439
          %v3988 = vsel %vm3977, %v3971, %v3440
          %v3989 = vsel %vm3977, %v3972, %v3441
          %v3990 = vsel %vm3977, %v3973, %v3442
          %v3991 = vsel %vm3977, %v3974, %v3443
          %v3992 = vsel %vm3977, %v3975, %v3444
          %v3993 = vsel %vm3977, %v3976, %v3445
          %vm3994 = vcmask 31744
          %3995 = vst.msk [vmem:[#allocation2] sm:$0xff] %vm3994, %v3978
          %3996 = vst.msk [vmem:[#allocation2 + $0x8] sm:$0xff] %vm3994, %v3979
          %3997 = vst.msk [vmem:[#allocation2 + $0x10] sm:$0xff] %vm3994, %v3980
          %3998 = vst.msk [vmem:[#allocation2 + $0x18] sm:$0xff] %vm3994, %v3981
          %3999 = vst.msk [vmem:[#allocation2 + $0x20] sm:$0xff] %vm3994, %v3982
          %4000 = vst.msk [vmem:[#allocation2 + $0x28] sm:$0xff] %vm3994, %v3983
          %4001 = vst.msk [vmem:[#allocation2 + $0x30] sm:$0xff] %vm3994, %v3984
          %4002 = vst.msk [vmem:[#allocation2 + $0x38] sm:$0xff] %vm3994, %v3985
          %4003 = vst.msk [vmem:[#allocation2 + $0x40] sm:$0xff] %vm3994, %v3986
          %4004 = vst.msk [vmem:[#allocation2 + $0x48] sm:$0xff] %vm3994, %v3987
          %4005 = vst.msk [vmem:[#allocation2 + $0x50] sm:$0xff] %vm3994, %v3988
          %4006 = vst.msk [vmem:[#allocation2 + $0x58] sm:$0xff] %vm3994, %v3989
          %4007 = vst.msk [vmem:[#allocation2 + $0x60] sm:$0xff] %vm3994, %v3990
          %4008 = vst.msk [vmem:[#allocation2 + $0x68] sm:$0xff] %vm3994, %v3991
          %4009 = vst.msk [vmem:[#allocation2 + $0x70] sm:$0xff] %vm3994, %v3992
          %4010 = vst.msk [vmem:[#allocation2 + $0x78] sm:$0xff] %vm3994, %v3993
          %v4011 = vsel %vm3943, %v1260, %v2138
          %v4012 = vsel %vm3943, %v1261, %v2139
          %v4013 = vsel %vm3943, %v1262, %v2140
          %v4014 = vsel %vm3943, %v1263, %v2141
          %v4015 = vsel %vm3943, %v1264, %v2142
          %v4016 = vsel %vm3943, %v1265, %v2143
          %v4017 = vsel %vm3943, %v1266, %v2144
          %v4018 = vsel %vm3943, %v1267, %v2145
          %v4019 = vsel %vm3943, %v1268, %v2146
          %v4020 = vsel %vm3943, %v1269, %v2147
          %v4021 = vsel %vm3943, %v1270, %v2148
          %v4022 = vsel %vm3943, %v1271, %v2149
          %v4023 = vsel %vm3943, %v1272, %v2150
          %v4024 = vsel %vm3943, %v1273, %v2151
          %v4025 = vsel %vm3943, %v1274, %v2152
          %v4026 = vsel %vm3943, %v1275, %v2153
          %v4027 = vsel %vm3960, %v4011, %v2936
          %v4028 = vsel %vm3960, %v4012, %v2937
          %v4029 = vsel %vm3960, %v4013, %v2938
          %v4030 = vsel %vm3960, %v4014, %v2939
          %v4031 = vsel %vm3960, %v4015, %v2940
          %v4032 = vsel %vm3960, %v4016, %v2941
          %v4033 = vsel %vm3960, %v4017, %v2942
          %v4034 = vsel %vm3960, %v4018, %v2943
          %v4035 = vsel %vm3960, %v4019, %v2944
          %v4036 = vsel %vm3960, %v4020, %v2945
          %v4037 = vsel %vm3960, %v4021, %v2946
          %v4038 = vsel %vm3960, %v4022, %v2947
          %v4039 = vsel %vm3960, %v4023, %v2948
          %v4040 = vsel %vm3960, %v4024, %v2949
          %v4041 = vsel %vm3960, %v4025, %v2950
          %v4042 = vsel %vm3960, %v4026, %v2951
          %v4043 = vsel %vm3977, %v4027, %v3734
          %v4044 = vsel %vm3977, %v4028, %v3735
          %v4045 = vsel %vm3977, %v4029, %v3736
          %v4046 = vsel %vm3977, %v4030, %v3737
          %v4047 = vsel %vm3977, %v4031, %v3738
          %v4048 = vsel %vm3977, %v4032, %v3739
          %v4049 = vsel %vm3977, %v4033, %v3740
          %v4050 = vsel %vm3977, %v4034, %v3741
          %v4051 = vsel %vm3977, %v4035, %v3742
          %v4052 = vsel %vm3977, %v4036, %v3743
          %v4053 = vsel %vm3977, %v4037, %v3744
          %v4054 = vsel %vm3977, %v4038, %v3745
          %v4055 = vsel %vm3977, %v4039, %v3746
          %v4056 = vsel %vm3977, %v4040, %v3747
          %v4057 = vsel %vm3977, %v4041, %v3748
          %v4058 = vsel %vm3977, %v4042, %v3749
          %4059 = vst.msk [vmem:[#allocation3] sm:$0xff] %vm3994, %v4043
          %4060 = vst.msk [vmem:[#allocation3 + $0x8] sm:$0xff] %vm3994, %v4044
          %4061 = vst.msk [vmem:[#allocation3 + $0x10] sm:$0xff] %vm3994, %v4045
          %4062 = vst.msk [vmem:[#allocation3 + $0x18] sm:$0xff] %vm3994, %v4046
          %4063 = vst.msk [vmem:[#allocation3 + $0x20] sm:$0xff] %vm3994, %v4047
          %4064 = vst.msk [vmem:[#allocation3 + $0x28] sm:$0xff] %vm3994, %v4048
          %4065 = vst.msk [vmem:[#allocation3 + $0x30] sm:$0xff] %vm3994, %v4049
          %4066 = vst.msk [vmem:[#allocation3 + $0x38] sm:$0xff] %vm3994, %v4050
          %4067 = vst.msk [vmem:[#allocation3 + $0x40] sm:$0xff] %vm3994, %v4051
          %4068 = vst.msk [vmem:[#allocation3 + $0x48] sm:$0xff] %vm3994, %v4052
          %4069 = vst.msk [vmem:[#allocation3 + $0x50] sm:$0xff] %vm3994, %v4053
          %4070 = vst.msk [vmem:[#allocation3 + $0x58] sm:$0xff] %vm3994, %v4054
          %4071 = vst.msk [vmem:[#allocation3 + $0x60] sm:$0xff] %vm3994, %v4055
          %4072 = vst.msk [vmem:[#allocation3 + $0x68] sm:$0xff] %vm3994, %v4056
          %4073 = vst.msk [vmem:[#allocation3 + $0x70] sm:$0xff] %vm3994, %v4057
          %4074 = vst.msk [vmem:[#allocation3 + $0x78] sm:$0xff] %vm3994, %v4058
          %4076 = vset.pattern.permute.xlu0 0
          %4077 = vperm.xlu0 %4076, %v989
          %v4078 = vpop.permute.xlu0 %4077
          %4081 = vset.pattern.permute.xlu0 0
          %4082 = vperm.xlu0 %4081, %v991
          %v4083 = vpop.permute.xlu0 %4082
          %4086 = vset.pattern.permute.xlu0 0
          %4087 = vperm.xlu0 %4086, %v993
          %v4088 = vpop.permute.xlu0 %4087
          %4091 = vset.pattern.permute.xlu0 0
          %4092 = vperm.xlu0 %4091, %v995
          %v4093 = vpop.permute.xlu0 %4092
          %4096 = vset.pattern.permute.xlu0 0
          %4097 = vperm.xlu0 %4096, %v997
          %v4098 = vpop.permute.xlu0 %4097
          %4101 = vset.pattern.permute.xlu0 0
          %4102 = vperm.xlu0 %4101, %v999
          %v4103 = vpop.permute.xlu0 %4102
          %4106 = vset.pattern.permute.xlu0 0
          %4107 = vperm.xlu0 %4106, %v1001
          %v4108 = vpop.permute.xlu0 %4107
          %4111 = vset.pattern.permute.xlu0 0
          %4112 = vperm.xlu0 %4111, %v1003
          %v4113 = vpop.permute.xlu0 %4112
          %4116 = vset.pattern.permute.xlu0 0
          %4117 = vperm.xlu0 %4116, %v1005
          %v4118 = vpop.permute.xlu0 %4117
          %4121 = vset.pattern.permute.xlu0 0
          %4122 = vperm.xlu0 %4121, %v1007
          %v4123 = vpop.permute.xlu0 %4122
          %4126 = vset.pattern.permute.xlu0 0
          %4127 = vperm.xlu0 %4126, %v1009
          %v4128 = vpop.permute.xlu0 %4127
          %4131 = vset.pattern.permute.xlu0 0
          %4132 = vperm.xlu0 %4131, %v1011
          %v4133 = vpop.permute.xlu0 %4132
          %4136 = vset.pattern.permute.xlu0 0
          %4137 = vperm.xlu0 %4136, %v1013
          %v4138 = vpop.permute.xlu0 %4137
          %4141 = vset.pattern.permute.xlu0 0
          %4142 = vperm.xlu0 %4141, %v1015
          %v4143 = vpop.permute.xlu0 %4142
          %4146 = vset.pattern.permute.xlu0 0
          %4147 = vperm.xlu0 %4146, %v1017
          %v4148 = vpop.permute.xlu0 %4147
          %4151 = vset.pattern.permute.xlu0 0
          %4152 = vperm.xlu0 %4151, %v1019
          %v4153 = vpop.permute.xlu0 %4152
          %4156 = vset.pattern.permute.xlu0 1
          %4157 = vperm.xlu0 %4156, %v1867
          %v4158 = vpop.permute.xlu0 %4157
          %4161 = vset.pattern.permute.xlu0 1
          %4162 = vperm.xlu0 %4161, %v1869
          %v4163 = vpop.permute.xlu0 %4162
          %4166 = vset.pattern.permute.xlu0 1
          %4167 = vperm.xlu0 %4166, %v1871
          %v4168 = vpop.permute.xlu0 %4167
          %4171 = vset.pattern.permute.xlu0 1
          %4172 = vperm.xlu0 %4171, %v1873
          %v4173 = vpop.permute.xlu0 %4172
          %4176 = vset.pattern.permute.xlu0 1
          %4177 = vperm.xlu0 %4176, %v1875
          %v4178 = vpop.permute.xlu0 %4177
          %4181 = vset.pattern.permute.xlu0 1
          %4182 = vperm.xlu0 %4181, %v1877
          %v4183 = vpop.permute.xlu0 %4182
          %4186 = vset.pattern.permute.xlu0 1
          %4187 = vperm.xlu0 %4186, %v1879
          %v4188 = vpop.permute.xlu0 %4187
          %4191 = vset.pattern.permute.xlu0 1
          %4192 = vperm.xlu0 %4191, %v1881
          %v4193 = vpop.permute.xlu0 %4192
          %4196 = vset.pattern.permute.xlu0 1
          %4197 = vperm.xlu0 %4196, %v1883
          %v4198 = vpop.permute.xlu0 %4197
          %4201 = vset.pattern.permute.xlu0 1
          %4202 = vperm.xlu0 %4201, %v1885
          %v4203 = vpop.permute.xlu0 %4202
          %4206 = vset.pattern.permute.xlu0 1
          %4207 = vperm.xlu0 %4206, %v1887
          %v4208 = vpop.permute.xlu0 %4207
          %4211 = vset.pattern.permute.xlu0 1
          %4212 = vperm.xlu0 %4211, %v1889
          %v4213 = vpop.permute.xlu0 %4212
          %4216 = vset.pattern.permute.xlu0 1
          %4217 = vperm.xlu0 %4216, %v1891
          %v4218 = vpop.permute.xlu0 %4217
          %4221 = vset.pattern.permute.xlu0 1
          %4222 = vperm.xlu0 %4221, %v1893
          %v4223 = vpop.permute.xlu0 %4222
          %4226 = vset.pattern.permute.xlu0 1
          %4227 = vperm.xlu0 %4226, %v1895
          %v4228 = vpop.permute.xlu0 %4227
          %4231 = vset.pattern.permute.xlu0 1
          %4232 = vperm.xlu0 %4231, %v1897
          %v4233 = vpop.permute.xlu0 %4232
          %4236 = vset.pattern.permute.xlu0 2
          %4237 = vperm.xlu0 %4236, %v2665
          %v4238 = vpop.permute.xlu0 %4237
          %4241 = vset.pattern.permute.xlu0 2
          %4242 = vperm.xlu0 %4241, %v2667
          %v4243 = vpop.permute.xlu0 %4242
          %4246 = vset.pattern.permute.xlu0 2
          %4247 = vperm.xlu0 %4246, %v2669
          %v4248 = vpop.permute.xlu0 %4247
          %4251 = vset.pattern.permute.xlu0 2
          %4252 = vperm.xlu0 %4251, %v2671
          %v4253 = vpop.permute.xlu0 %4252
          %4256 = vset.pattern.permute.xlu0 2
          %4257 = vperm.xlu0 %4256, %v2673
          %v4258 = vpop.permute.xlu0 %4257
          %4261 = vset.pattern.permute.xlu0 2
          %4262 = vperm.xlu0 %4261, %v2675
          %v4263 = vpop.permute.xlu0 %4262
          %4266 = vset.pattern.permute.xlu0 2
          %4267 = vperm.xlu0 %4266, %v2677
          %v4268 = vpop.permute.xlu0 %4267
          %4271 = vset.pattern.permute.xlu0 2
          %4272 = vperm.xlu0 %4271, %v2679
          %v4273 = vpop.permute.xlu0 %4272
          %4276 = vset.pattern.permute.xlu0 2
          %4277 = vperm.xlu0 %4276, %v2681
          %v4278 = vpop.permute.xlu0 %4277
          %4281 = vset.pattern.permute.xlu0 2
          %4282 = vperm.xlu0 %4281, %v2683
          %v4283 = vpop.permute.xlu0 %4282
          %4286 = vset.pattern.permute.xlu0 2
          %4287 = vperm.xlu0 %4286, %v2685
          %v4288 = vpop.permute.xlu0 %4287
          %4291 = vset.pattern.permute.xlu0 2
          %4292 = vperm.xlu0 %4291, %v2687
          %v4293 = vpop.permute.xlu0 %4292
          %4296 = vset.pattern.permute.xlu0 2
          %4297 = vperm.xlu0 %4296, %v2689
          %v4298 = vpop.permute.xlu0 %4297
          %4301 = vset.pattern.permute.xlu0 2
          %4302 = vperm.xlu0 %4301, %v2691
          %v4303 = vpop.permute.xlu0 %4302
          %4306 = vset.pattern.permute.xlu0 2
          %4307 = vperm.xlu0 %4306, %v2693
          %v4308 = vpop.permute.xlu0 %4307
          %4311 = vset.pattern.permute.xlu0 2
          %4312 = vperm.xlu0 %4311, %v2695
          %v4313 = vpop.permute.xlu0 %4312
          %4316 = vset.pattern.permute.xlu0 3
          %4317 = vperm.xlu0 %4316, %v3463
          %v4318 = vpop.permute.xlu0 %4317
          %4321 = vset.pattern.permute.xlu0 3
          %4322 = vperm.xlu0 %4321, %v3465
          %v4323 = vpop.permute.xlu0 %4322
          %4326 = vset.pattern.permute.xlu0 3
          %4327 = vperm.xlu0 %4326, %v3467
          %v4328 = vpop.permute.xlu0 %4327
          %4331 = vset.pattern.permute.xlu0 3
          %4332 = vperm.xlu0 %4331, %v3469
          %v4333 = vpop.permute.xlu0 %4332
          %4336 = vset.pattern.permute.xlu0 3
          %4337 = vperm.xlu0 %4336, %v3471
          %v4338 = vpop.permute.xlu0 %4337
          %4341 = vset.pattern.permute.xlu0 3
          %4342 = vperm.xlu0 %4341, %v3473
          %v4343 = vpop.permute.xlu0 %4342
          %4346 = vset.pattern.permute.xlu0 3
          %4347 = vperm.xlu0 %4346, %v3475
          %v4348 = vpop.permute.xlu0 %4347
          %4351 = vset.pattern.permute.xlu0 3
          %4352 = vperm.xlu0 %4351, %v3477
          %v4353 = vpop.permute.xlu0 %4352
          %4356 = vset.pattern.permute.xlu0 3
          %4357 = vperm.xlu0 %4356, %v3479
          %v4358 = vpop.permute.xlu0 %4357
          %4361 = vset.pattern.permute.xlu0 3
          %4362 = vperm.xlu0 %4361, %v3481
          %v4363 = vpop.permute.xlu0 %4362
          %4366 = vset.pattern.permute.xlu0 3
          %4367 = vperm.xlu0 %4366, %v3483
          %v4368 = vpop.permute.xlu0 %4367
          %4371 = vset.pattern.permute.xlu0 3
          %4372 = vperm.xlu0 %4371, %v3485
          %v4373 = vpop.permute.xlu0 %4372
          %4376 = vset.pattern.permute.xlu0 3
          %4377 = vperm.xlu0 %4376, %v3487
          %v4378 = vpop.permute.xlu0 %4377
          %4381 = vset.pattern.permute.xlu0 3
          %4382 = vperm.xlu0 %4381, %v3489
          %v4383 = vpop.permute.xlu0 %4382
          %4386 = vset.pattern.permute.xlu0 3
          %4387 = vperm.xlu0 %4386, %v3491
          %v4388 = vpop.permute.xlu0 %4387
          %4391 = vset.pattern.permute.xlu0 3
          %4392 = vperm.xlu0 %4391, %v3493
          %v4393 = vpop.permute.xlu0 %4392
          %vm4395 = vcmask 261120
          %v4396 = vsel %vm4395, %v4078, %v4158
          %v4397 = vsel %vm4395, %v4083, %v4163
          %v4398 = vsel %vm4395, %v4088, %v4168
          %v4399 = vsel %vm4395, %v4093, %v4173
          %v4400 = vsel %vm4395, %v4098, %v4178
          %v4401 = vsel %vm4395, %v4103, %v4183
          %v4402 = vsel %vm4395, %v4108, %v4188
          %v4403 = vsel %vm4395, %v4113, %v4193
          %v4404 = vsel %vm4395, %v4118, %v4198
          %v4405 = vsel %vm4395, %v4123, %v4203
          %v4406 = vsel %vm4395, %v4128, %v4208
          %v4407 = vsel %vm4395, %v4133, %v4213
          %v4408 = vsel %vm4395, %v4138, %v4218
          %v4409 = vsel %vm4395, %v4143, %v4223
          %v4410 = vsel %vm4395, %v4148, %v4228
          %v4411 = vsel %vm4395, %v4153, %v4233
          %vm4412 = vcmask 523264
          %v4413 = vsel %vm4412, %v4396, %v4238
          %v4414 = vsel %vm4412, %v4397, %v4243
          %v4415 = vsel %vm4412, %v4398, %v4248
          %v4416 = vsel %vm4412, %v4399, %v4253
          %v4417 = vsel %vm4412, %v4400, %v4258
          %v4418 = vsel %vm4412, %v4401, %v4263
          %v4419 = vsel %vm4412, %v4402, %v4268
          %v4420 = vsel %vm4412, %v4403, %v4273
          %v4421 = vsel %vm4412, %v4404, %v4278
          %v4422 = vsel %vm4412, %v4405, %v4283
          %v4423 = vsel %vm4412, %v4406, %v4288
          %v4424 = vsel %vm4412, %v4407, %v4293
          %v4425 = vsel %vm4412, %v4408, %v4298
          %v4426 = vsel %vm4412, %v4409, %v4303
          %v4427 = vsel %vm4412, %v4410, %v4308
          %v4428 = vsel %vm4412, %v4411, %v4313
          %vm4429 = vcmask 785408
          %v4430 = vsel %vm4429, %v4413, %v4318
          %v4431 = vsel %vm4429, %v4414, %v4323
          %v4432 = vsel %vm4429, %v4415, %v4328
          %v4433 = vsel %vm4429, %v4416, %v4333
          %v4434 = vsel %vm4429, %v4417, %v4338
          %v4435 = vsel %vm4429, %v4418, %v4343
          %v4436 = vsel %vm4429, %v4419, %v4348
          %v4437 = vsel %vm4429, %v4420, %v4353
          %v4438 = vsel %vm4429, %v4421, %v4358
          %v4439 = vsel %vm4429, %v4422, %v4363
          %v4440 = vsel %vm4429, %v4423, %v4368
          %v4441 = vsel %vm4429, %v4424, %v4373
          %v4442 = vsel %vm4429, %v4425, %v4378
          %v4443 = vsel %vm4429, %v4426, %v4383
          %v4444 = vsel %vm4429, %v4427, %v4388
          %v4445 = vsel %vm4429, %v4428, %v4393
          %v4446 = vld [vmem:[%s271] sm:$0xff]
          %v4447 = vld [vmem:[%s271 + $0x8] sm:$0xff]
          %v4448 = vld [vmem:[%s271 + $0x10] sm:$0xff]
          %v4449 = vld [vmem:[%s271 + $0x18] sm:$0xff]
          %v4450 = vld [vmem:[%s271 + $0x20] sm:$0xff]
          %v4451 = vld [vmem:[%s271 + $0x28] sm:$0xff]
          %v4452 = vld [vmem:[%s271 + $0x30] sm:$0xff]
          %v4453 = vld [vmem:[%s271 + $0x38] sm:$0xff]
          %v4454 = vld [vmem:[%s271 + $0x40] sm:$0xff]
          %v4455 = vld [vmem:[%s271 + $0x48] sm:$0xff]
          %v4456 = vld [vmem:[%s271 + $0x50] sm:$0xff]
          %v4457 = vld [vmem:[%s271 + $0x58] sm:$0xff]
          %v4458 = vld [vmem:[%s271 + $0x60] sm:$0xff]
          %v4459 = vld [vmem:[%s271 + $0x68] sm:$0xff]
          %v4460 = vld [vmem:[%s271 + $0x70] sm:$0xff]
          %v4461 = vld [vmem:[%s271 + $0x78] sm:$0xff]
          %v4462 = vmul.f32 %v4430, %v4446
          %v4463 = vmul.f32 %v4431, %v4447
          %v4464 = vmul.f32 %v4432, %v4448
          %v4465 = vmul.f32 %v4433, %v4449
          %v4466 = vmul.f32 %v4434, %v4450
          %v4467 = vmul.f32 %v4435, %v4451
          %v4468 = vmul.f32 %v4436, %v4452
          %v4469 = vmul.f32 %v4437, %v4453
          %v4470 = vmul.f32 %v4438, %v4454
          %v4471 = vmul.f32 %v4439, %v4455
          %v4472 = vmul.f32 %v4440, %v4456
          %v4473 = vmul.f32 %v4441, %v4457
          %v4474 = vmul.f32 %v4442, %v4458
          %v4475 = vmul.f32 %v4443, %v4459
          %v4476 = vmul.f32 %v4444, %v4460
          %v4477 = vmul.f32 %v4445, %v4461
          %4494 = vrot.lane.b32.xlu0 %v2285, 32
          %v4495 = vpop.permute.xlu0 %4494
          %4496 = vrot.lane.b32.xlu0 %v2288, 32
          %v4497 = vpop.permute.xlu0 %4496
          %4498 = vrot.lane.b32.xlu0 %v2293, 32
          %v4499 = vpop.permute.xlu0 %4498
          %4500 = vrot.lane.b32.xlu0 %v2296, 32
          %v4501 = vpop.permute.xlu0 %4500
          %4502 = vrot.lane.b32.xlu0 %v2301, 32
          %v4503 = vpop.permute.xlu0 %4502
          %4504 = vrot.lane.b32.xlu0 %v2304, 32
          %v4505 = vpop.permute.xlu0 %4504
          %4506 = vrot.lane.b32.xlu0 %v2309, 32
          %v4507 = vpop.permute.xlu0 %4506
          %4508 = vrot.lane.b32.xlu0 %v2312, 32
          %v4509 = vpop.permute.xlu0 %4508
          %4510 = vrot.lane.b32.xlu0 %v2317, 32
          %v4511 = vpop.permute.xlu0 %4510
          %4512 = vrot.lane.b32.xlu0 %v2320, 32
          %v4513 = vpop.permute.xlu0 %4512
          %4514 = vrot.lane.b32.xlu0 %v2325, 32
          %v4515 = vpop.permute.xlu0 %4514
          %4516 = vrot.lane.b32.xlu0 %v2328, 32
          %v4517 = vpop.permute.xlu0 %4516
          %4518 = vrot.lane.b32.xlu0 %v2333, 32
          %v4519 = vpop.permute.xlu0 %4518
          %4520 = vrot.lane.b32.xlu0 %v2336, 32
          %v4521 = vpop.permute.xlu0 %4520
          %4522 = vrot.lane.b32.xlu0 %v2341, 32
          %v4523 = vpop.permute.xlu0 %4522
          %4524 = vrot.lane.b32.xlu0 %v2344, 32
          %v4525 = vpop.permute.xlu0 %4524
          %4558 = vrot.lane.b32.xlu0 %v3083, 64
          %v4559 = vpop.permute.xlu0 %4558
          %4560 = vrot.lane.b32.xlu0 %v3086, 64
          %v4561 = vpop.permute.xlu0 %4560
          %4562 = vrot.lane.b32.xlu0 %v3091, 64
          %v4563 = vpop.permute.xlu0 %4562
          %4564 = vrot.lane.b32.xlu0 %v3094, 64
          %v4565 = vpop.permute.xlu0 %4564
          %4566 = vrot.lane.b32.xlu0 %v3099, 64
          %v4567 = vpop.permute.xlu0 %4566
          %4568 = vrot.lane.b32.xlu0 %v3102, 64
          %v4569 = vpop.permute.xlu0 %4568
          %4570 = vrot.lane.b32.xlu0 %v3107, 64
          %v4571 = vpop.permute.xlu0 %4570
          %4572 = vrot.lane.b32.xlu0 %v3110, 64
          %v4573 = vpop.permute.xlu0 %4572
          %4574 = vrot.lane.b32.xlu0 %v3115, 64
          %v4575 = vpop.permute.xlu0 %4574
          %4576 = vrot.lane.b32.xlu0 %v3118, 64
          %v4577 = vpop.permute.xlu0 %4576
          %4578 = vrot.lane.b32.xlu0 %v3123, 64
          %v4579 = vpop.permute.xlu0 %4578
          %4580 = vrot.lane.b32.xlu0 %v3126, 64
          %v4581 = vpop.permute.xlu0 %4580
          %4582 = vrot.lane.b32.xlu0 %v3131, 64
          %v4583 = vpop.permute.xlu0 %4582
          %4584 = vrot.lane.b32.xlu0 %v3134, 64
          %v4585 = vpop.permute.xlu0 %4584
          %4586 = vrot.lane.b32.xlu0 %v3139, 64
          %v4587 = vpop.permute.xlu0 %4586
          %4588 = vrot.lane.b32.xlu0 %v3142, 64
          %v4589 = vpop.permute.xlu0 %4588
          %4622 = vrot.lane.b32.xlu0 %v3881, 96
          %v4623 = vpop.permute.xlu0 %4622
          %4624 = vrot.lane.b32.xlu0 %v3884, 96
          %v4625 = vpop.permute.xlu0 %4624
          %4626 = vrot.lane.b32.xlu0 %v3889, 96
          %v4627 = vpop.permute.xlu0 %4626
          %4628 = vrot.lane.b32.xlu0 %v3892, 96
          %v4629 = vpop.permute.xlu0 %4628
          %4630 = vrot.lane.b32.xlu0 %v3897, 96
          %v4631 = vpop.permute.xlu0 %4630
          %4632 = vrot.lane.b32.xlu0 %v3900, 96
          %v4633 = vpop.permute.xlu0 %4632
          %4634 = vrot.lane.b32.xlu0 %v3905, 96
          %v4635 = vpop.permute.xlu0 %4634
          %4636 = vrot.lane.b32.xlu0 %v3908, 96
          %v4637 = vpop.permute.xlu0 %4636
          %4638 = vrot.lane.b32.xlu0 %v3913, 96
          %v4639 = vpop.permute.xlu0 %4638
          %4640 = vrot.lane.b32.xlu0 %v3916, 96
          %v4641 = vpop.permute.xlu0 %4640
          %4642 = vrot.lane.b32.xlu0 %v3921, 96
          %v4643 = vpop.permute.xlu0 %4642
          %4644 = vrot.lane.b32.xlu0 %v3924, 96
          %v4645 = vpop.permute.xlu0 %4644
          %4646 = vrot.lane.b32.xlu0 %v3929, 96
          %v4647 = vpop.permute.xlu0 %4646
          %4648 = vrot.lane.b32.xlu0 %v3932, 96
          %v4649 = vpop.permute.xlu0 %4648
          %4650 = vrot.lane.b32.xlu0 %v3937, 96
          %v4651 = vpop.permute.xlu0 %4650
          %4652 = vrot.lane.b32.xlu0 %v3940, 96
          %v4653 = vpop.permute.xlu0 %4652
          %v4670 = vsel %vm4395, %v1487, %v4495
          %v4671 = vsel %vm4395, %v1490, %v4497
          %v4672 = vsel %vm4395, %v1495, %v4499
          %v4673 = vsel %vm4395, %v1498, %v4501
          %v4674 = vsel %vm4395, %v1503, %v4503
          %v4675 = vsel %vm4395, %v1506, %v4505
          %v4676 = vsel %vm4395, %v1511, %v4507
          %v4677 = vsel %vm4395, %v1514, %v4509
          %v4678 = vsel %vm4395, %v1519, %v4511
          %v4679 = vsel %vm4395, %v1522, %v4513
          %v4680 = vsel %vm4395, %v1527, %v4515
          %v4681 = vsel %vm4395, %v1530, %v4517
          %v4682 = vsel %vm4395, %v1535, %v4519
          %v4683 = vsel %vm4395, %v1538, %v4521
          %v4684 = vsel %vm4395, %v1543, %v4523
          %v4685 = vsel %vm4395, %v1546, %v4525
          %v4686 = vsel %vm4412, %v4670, %v4559
          %v4687 = vsel %vm4412, %v4671, %v4561
          %v4688 = vsel %vm4412, %v4672, %v4563
          %v4689 = vsel %vm4412, %v4673, %v4565
          %v4690 = vsel %vm4412, %v4674, %v4567
          %v4691 = vsel %vm4412, %v4675, %v4569
          %v4692 = vsel %vm4412, %v4676, %v4571
          %v4693 = vsel %vm4412, %v4677, %v4573
          %v4694 = vsel %vm4412, %v4678, %v4575
          %v4695 = vsel %vm4412, %v4679, %v4577
          %v4696 = vsel %vm4412, %v4680, %v4579
          %v4697 = vsel %vm4412, %v4681, %v4581
          %v4698 = vsel %vm4412, %v4682, %v4583
          %v4699 = vsel %vm4412, %v4683, %v4585
          %v4700 = vsel %vm4412, %v4684, %v4587
          %v4701 = vsel %vm4412, %v4685, %v4589
          %v4702 = vsel %vm4429, %v4686, %v4623
          %v4703 = vsel %vm4429, %v4687, %v4625
          %v4704 = vsel %vm4429, %v4688, %v4627
          %v4705 = vsel %vm4429, %v4689, %v4629
          %v4706 = vsel %vm4429, %v4690, %v4631
          %v4707 = vsel %vm4429, %v4691, %v4633
          %v4708 = vsel %vm4429, %v4692, %v4635
          %v4709 = vsel %vm4429, %v4693, %v4637
          %v4710 = vsel %vm4429, %v4694, %v4639
          %v4711 = vsel %vm4429, %v4695, %v4641
          %v4712 = vsel %vm4429, %v4696, %v4643
          %v4713 = vsel %vm4429, %v4697, %v4645
          %v4714 = vsel %vm4429, %v4698, %v4647
          %v4715 = vsel %vm4429, %v4699, %v4649
          %v4716 = vsel %vm4429, %v4700, %v4651
          %v4717 = vsel %vm4429, %v4701, %v4653
          %v4718 = vadd.f32 %v4462, %v4702
          %v4719 = vadd.f32 %v4463, %v4703
          %v4720 = vadd.f32 %v4464, %v4704
          %v4721 = vadd.f32 %v4465, %v4705
          %v4722 = vadd.f32 %v4466, %v4706
          %v4723 = vadd.f32 %v4467, %v4707
          %v4724 = vadd.f32 %v4468, %v4708
          %v4725 = vadd.f32 %v4469, %v4709
          %v4726 = vadd.f32 %v4470, %v4710
          %v4727 = vadd.f32 %v4471, %v4711
          %v4728 = vadd.f32 %v4472, %v4712
          %v4729 = vadd.f32 %v4473, %v4713
          %v4730 = vadd.f32 %v4474, %v4714
          %v4731 = vadd.f32 %v4475, %v4715
          %v4732 = vadd.f32 %v4476, %v4716
          %v4733 = vadd.f32 %v4477, %v4717
          %4734 = vst [vmem:[%s271] sm:$0xff] %v4718
          %4735 = vst [vmem:[%s271 + $0x8] sm:$0xff] %v4719
          %4736 = vst [vmem:[%s271 + $0x10] sm:$0xff] %v4720
          %4737 = vst [vmem:[%s271 + $0x18] sm:$0xff] %v4721
          %4738 = vst [vmem:[%s271 + $0x20] sm:$0xff] %v4722
          %4739 = vst [vmem:[%s271 + $0x28] sm:$0xff] %v4723
          %4740 = vst [vmem:[%s271 + $0x30] sm:$0xff] %v4724
          %4741 = vst [vmem:[%s271 + $0x38] sm:$0xff] %v4725
          %4742 = vst [vmem:[%s271 + $0x40] sm:$0xff] %v4726
          %4743 = vst [vmem:[%s271 + $0x48] sm:$0xff] %v4727
          %4744 = vst [vmem:[%s271 + $0x50] sm:$0xff] %v4728
          %4745 = vst [vmem:[%s271 + $0x58] sm:$0xff] %v4729
          %4746 = vst [vmem:[%s271 + $0x60] sm:$0xff] %v4730
          %4747 = vst [vmem:[%s271 + $0x68] sm:$0xff] %v4731
          %4748 = vst [vmem:[%s271 + $0x70] sm:$0xff] %v4732
          %4749 = vst [vmem:[%s271 + $0x78] sm:$0xff] %v4733
        $region44: #{aggregation_forward.5} parent=35 // pred_fallthru
          _
        // Predicated region
        $region45: #{aggregation_forward.5} parent=35 // pred_check
          %p4750 = pneg %p304
        $region46: #{aggregation_forward.5} parent=35 // pred_check_branch
          %4752 = sbr.rel (%p4750) target = $region48
        $region47: #{aggregation_forward.5} parent=35 // pred_region
          %v4753 = vld [vmem:[#allocation3] sm:$0xff]
          %v4754 = vld [vmem:[#allocation3 + $0x8] sm:$0xff]
          %v4755 = vld [vmem:[#allocation3 + $0x10] sm:$0xff]
          %v4756 = vld [vmem:[#allocation3 + $0x18] sm:$0xff]
          %v4757 = vld [vmem:[#allocation3 + $0x20] sm:$0xff]
          %v4758 = vld [vmem:[#allocation3 + $0x28] sm:$0xff]
          %v4759 = vld [vmem:[#allocation3 + $0x30] sm:$0xff]
          %v4760 = vld [vmem:[#allocation3 + $0x38] sm:$0xff]
          %v4761 = vld [vmem:[#allocation3 + $0x40] sm:$0xff]
          %v4762 = vld [vmem:[#allocation3 + $0x48] sm:$0xff]
          %v4763 = vld [vmem:[#allocation3 + $0x50] sm:$0xff]
          %v4764 = vld [vmem:[#allocation3 + $0x58] sm:$0xff]
          %v4765 = vld [vmem:[#allocation3 + $0x60] sm:$0xff]
          %v4766 = vld [vmem:[#allocation3 + $0x68] sm:$0xff]
          %v4767 = vld [vmem:[#allocation3 + $0x70] sm:$0xff]
          %v4768 = vld [vmem:[#allocation3 + $0x78] sm:$0xff]
          %v4769 = vmax.f32 %v4753, 1e-30
          %v4770 = vmax.f32 %v4754, 1e-30
          %v4771 = vmax.f32 %v4755, 1e-30
          %v4772 = vmax.f32 %v4756, 1e-30
          %v4773 = vmax.f32 %v4757, 1e-30
          %v4774 = vmax.f32 %v4758, 1e-30
          %v4775 = vmax.f32 %v4759, 1e-30
          %v4776 = vmax.f32 %v4760, 1e-30
          %v4777 = vmax.f32 %v4761, 1e-30
          %v4778 = vmax.f32 %v4762, 1e-30
          %v4779 = vmax.f32 %v4763, 1e-30
          %v4780 = vmax.f32 %v4764, 1e-30
          %v4781 = vmax.f32 %v4765, 1e-30
          %v4782 = vmax.f32 %v4766, 1e-30
          %v4783 = vmax.f32 %v4767, 1e-30
          %v4784 = vmax.f32 %v4768, 1e-30
          %v4785 = vrcp.pop %v4769
          %v4786 = vrcp.pop %v4770
          %v4787 = vrcp.pop %v4771
          %v4788 = vrcp.pop %v4772
          %v4789 = vrcp.pop %v4773
          %v4790 = vrcp.pop %v4774
          %v4791 = vrcp.pop %v4775
          %v4792 = vrcp.pop %v4776
          %v4793 = vrcp.pop %v4777
          %v4794 = vrcp.pop %v4778
          %v4795 = vrcp.pop %v4779
          %v4796 = vrcp.pop %v4780
          %v4797 = vrcp.pop %v4781
          %v4798 = vrcp.pop %v4782
          %v4799 = vrcp.pop %v4783
          %v4800 = vrcp.pop %v4784
          %4802 = vset.pattern.permute.xlu0 0
          %4803 = vperm.xlu0 %4802, %v4785
          %v4804 = vpop.permute.xlu0 %4803
          %4807 = vset.pattern.permute.xlu0 0
          %4808 = vperm.xlu0 %4807, %v4786
          %v4809 = vpop.permute.xlu0 %4808
          %4812 = vset.pattern.permute.xlu0 0
          %4813 = vperm.xlu0 %4812, %v4787
          %v4814 = vpop.permute.xlu0 %4813
          %4817 = vset.pattern.permute.xlu0 0
          %4818 = vperm.xlu0 %4817, %v4788
          %v4819 = vpop.permute.xlu0 %4818
          %4822 = vset.pattern.permute.xlu0 0
          %4823 = vperm.xlu0 %4822, %v4789
          %v4824 = vpop.permute.xlu0 %4823
          %4827 = vset.pattern.permute.xlu0 0
          %4828 = vperm.xlu0 %4827, %v4790
          %v4829 = vpop.permute.xlu0 %4828
          %4832 = vset.pattern.permute.xlu0 0
          %4833 = vperm.xlu0 %4832, %v4791
          %v4834 = vpop.permute.xlu0 %4833
          %4837 = vset.pattern.permute.xlu0 0
          %4838 = vperm.xlu0 %4837, %v4792
          %v4839 = vpop.permute.xlu0 %4838
          %4842 = vset.pattern.permute.xlu0 0
          %4843 = vperm.xlu0 %4842, %v4793
          %v4844 = vpop.permute.xlu0 %4843
          %4847 = vset.pattern.permute.xlu0 0
          %4848 = vperm.xlu0 %4847, %v4794
          %v4849 = vpop.permute.xlu0 %4848
          %4852 = vset.pattern.permute.xlu0 0
          %4853 = vperm.xlu0 %4852, %v4795
          %v4854 = vpop.permute.xlu0 %4853
          %4857 = vset.pattern.permute.xlu0 0
          %4858 = vperm.xlu0 %4857, %v4796
          %v4859 = vpop.permute.xlu0 %4858
          %4862 = vset.pattern.permute.xlu0 0
          %4863 = vperm.xlu0 %4862, %v4797
          %v4864 = vpop.permute.xlu0 %4863
          %4867 = vset.pattern.permute.xlu0 0
          %4868 = vperm.xlu0 %4867, %v4798
          %v4869 = vpop.permute.xlu0 %4868
          %4872 = vset.pattern.permute.xlu0 0
          %4873 = vperm.xlu0 %4872, %v4799
          %v4874 = vpop.permute.xlu0 %4873
          %4877 = vset.pattern.permute.xlu0 0
          %4878 = vperm.xlu0 %4877, %v4800
          %v4879 = vpop.permute.xlu0 %4878
          %4881 = vset.pattern.permute.xlu0 1
          %4882 = vperm.xlu0 %4881, %v4785
          %v4883 = vpop.permute.xlu0 %4882
          %4885 = vset.pattern.permute.xlu0 1
          %4886 = vperm.xlu0 %4885, %v4786
          %v4887 = vpop.permute.xlu0 %4886
          %4889 = vset.pattern.permute.xlu0 1
          %4890 = vperm.xlu0 %4889, %v4787
          %v4891 = vpop.permute.xlu0 %4890
          %4893 = vset.pattern.permute.xlu0 1
          %4894 = vperm.xlu0 %4893, %v4788
          %v4895 = vpop.permute.xlu0 %4894
          %4897 = vset.pattern.permute.xlu0 1
          %4898 = vperm.xlu0 %4897, %v4789
          %v4899 = vpop.permute.xlu0 %4898
          %4901 = vset.pattern.permute.xlu0 1
          %4902 = vperm.xlu0 %4901, %v4790
          %v4903 = vpop.permute.xlu0 %4902
          %4905 = vset.pattern.permute.xlu0 1
          %4906 = vperm.xlu0 %4905, %v4791
          %v4907 = vpop.permute.xlu0 %4906
          %4909 = vset.pattern.permute.xlu0 1
          %4910 = vperm.xlu0 %4909, %v4792
          %v4911 = vpop.permute.xlu0 %4910
          %4913 = vset.pattern.permute.xlu0 1
          %4914 = vperm.xlu0 %4913, %v4793
          %v4915 = vpop.permute.xlu0 %4914
          %4917 = vset.pattern.permute.xlu0 1
          %4918 = vperm.xlu0 %4917, %v4794
          %v4919 = vpop.permute.xlu0 %4918
          %4921 = vset.pattern.permute.xlu0 1
          %4922 = vperm.xlu0 %4921, %v4795
          %v4923 = vpop.permute.xlu0 %4922
          %4925 = vset.pattern.permute.xlu0 1
          %4926 = vperm.xlu0 %4925, %v4796
          %v4927 = vpop.permute.xlu0 %4926
          %4929 = vset.pattern.permute.xlu0 1
          %4930 = vperm.xlu0 %4929, %v4797
          %v4931 = vpop.permute.xlu0 %4930
          %4933 = vset.pattern.permute.xlu0 1
          %4934 = vperm.xlu0 %4933, %v4798
          %v4935 = vpop.permute.xlu0 %4934
          %4937 = vset.pattern.permute.xlu0 1
          %4938 = vperm.xlu0 %4937, %v4799
          %v4939 = vpop.permute.xlu0 %4938
          %4941 = vset.pattern.permute.xlu0 1
          %4942 = vperm.xlu0 %4941, %v4800
          %v4943 = vpop.permute.xlu0 %4942
          %4945 = vset.pattern.permute.xlu0 2
          %4946 = vperm.xlu0 %4945, %v4785
          %v4947 = vpop.permute.xlu0 %4946
          %4949 = vset.pattern.permute.xlu0 2
          %4950 = vperm.xlu0 %4949, %v4786
          %v4951 = vpop.permute.xlu0 %4950
          %4953 = vset.pattern.permute.xlu0 2
          %4954 = vperm.xlu0 %4953, %v4787
          %v4955 = vpop.permute.xlu0 %4954
          %4957 = vset.pattern.permute.xlu0 2
          %4958 = vperm.xlu0 %4957, %v4788
          %v4959 = vpop.permute.xlu0 %4958
          %4961 = vset.pattern.permute.xlu0 2
          %4962 = vperm.xlu0 %4961, %v4789
          %v4963 = vpop.permute.xlu0 %4962
          %4965 = vset.pattern.permute.xlu0 2
          %4966 = vperm.xlu0 %4965, %v4790
          %v4967 = vpop.permute.xlu0 %4966
          %4969 = vset.pattern.permute.xlu0 2
          %4970 = vperm.xlu0 %4969, %v4791
          %v4971 = vpop.permute.xlu0 %4970
          %4973 = vset.pattern.permute.xlu0 2
          %4974 = vperm.xlu0 %4973, %v4792
          %v4975 = vpop.permute.xlu0 %4974
          %4977 = vset.pattern.permute.xlu0 2
          %4978 = vperm.xlu0 %4977, %v4793
          %v4979 = vpop.permute.xlu0 %4978
          %4981 = vset.pattern.permute.xlu0 2
          %4982 = vperm.xlu0 %4981, %v4794
          %v4983 = vpop.permute.xlu0 %4982
          %4985 = vset.pattern.permute.xlu0 2
          %4986 = vperm.xlu0 %4985, %v4795
          %v4987 = vpop.permute.xlu0 %4986
          %4989 = vset.pattern.permute.xlu0 2
          %4990 = vperm.xlu0 %4989, %v4796
          %v4991 = vpop.permute.xlu0 %4990
          %4993 = vset.pattern.permute.xlu0 2
          %4994 = vperm.xlu0 %4993, %v4797
          %v4995 = vpop.permute.xlu0 %4994
          %4997 = vset.pattern.permute.xlu0 2
          %4998 = vperm.xlu0 %4997, %v4798
          %v4999 = vpop.permute.xlu0 %4998
          %5001 = vset.pattern.permute.xlu0 2
          %5002 = vperm.xlu0 %5001, %v4799
          %v5003 = vpop.permute.xlu0 %5002
          %5005 = vset.pattern.permute.xlu0 2
          %5006 = vperm.xlu0 %5005, %v4800
          %v5007 = vpop.permute.xlu0 %5006
          %5009 = vset.pattern.permute.xlu0 3
          %5010 = vperm.xlu0 %5009, %v4785
          %v5011 = vpop.permute.xlu0 %5010
          %5013 = vset.pattern.permute.xlu0 3
          %5014 = vperm.xlu0 %5013, %v4786
          %v5015 = vpop.permute.xlu0 %5014
          %5017 = vset.pattern.permute.xlu0 3
          %5018 = vperm.xlu0 %5017, %v4787
          %v5019 = vpop.permute.xlu0 %5018
          %5021 = vset.pattern.permute.xlu0 3
          %5022 = vperm.xlu0 %5021, %v4788
          %v5023 = vpop.permute.xlu0 %5022
          %5025 = vset.pattern.permute.xlu0 3
          %5026 = vperm.xlu0 %5025, %v4789
          %v5027 = vpop.permute.xlu0 %5026
          %5029 = vset.pattern.permute.xlu0 3
          %5030 = vperm.xlu0 %5029, %v4790
          %v5031 = vpop.permute.xlu0 %5030
          %5033 = vset.pattern.permute.xlu0 3
          %5034 = vperm.xlu0 %5033, %v4791
          %v5035 = vpop.permute.xlu0 %5034
          %5037 = vset.pattern.permute.xlu0 3
          %5038 = vperm.xlu0 %5037, %v4792
          %v5039 = vpop.permute.xlu0 %5038
          %5041 = vset.pattern.permute.xlu0 3
          %5042 = vperm.xlu0 %5041, %v4793
          %v5043 = vpop.permute.xlu0 %5042
          %5045 = vset.pattern.permute.xlu0 3
          %5046 = vperm.xlu0 %5045, %v4794
          %v5047 = vpop.permute.xlu0 %5046
          %5049 = vset.pattern.permute.xlu0 3
          %5050 = vperm.xlu0 %5049, %v4795
          %v5051 = vpop.permute.xlu0 %5050
          %5053 = vset.pattern.permute.xlu0 3
          %5054 = vperm.xlu0 %5053, %v4796
          %v5055 = vpop.permute.xlu0 %5054
          %5057 = vset.pattern.permute.xlu0 3
          %5058 = vperm.xlu0 %5057, %v4797
          %v5059 = vpop.permute.xlu0 %5058
          %5061 = vset.pattern.permute.xlu0 3
          %5062 = vperm.xlu0 %5061, %v4798
          %v5063 = vpop.permute.xlu0 %5062
          %5065 = vset.pattern.permute.xlu0 3
          %5066 = vperm.xlu0 %5065, %v4799
          %v5067 = vpop.permute.xlu0 %5066
          %5069 = vset.pattern.permute.xlu0 3
          %5070 = vperm.xlu0 %5069, %v4800
          %v5071 = vpop.permute.xlu0 %5070
          %vm5073 = vcmask 261120
          %v5074 = vsel %vm5073, %v4804, %v4883
          %v5075 = vsel %vm5073, %v4809, %v4887
          %v5076 = vsel %vm5073, %v4814, %v4891
          %v5077 = vsel %vm5073, %v4819, %v4895
          %v5078 = vsel %vm5073, %v4824, %v4899
          %v5079 = vsel %vm5073, %v4829, %v4903
          %v5080 = vsel %vm5073, %v4834, %v4907
          %v5081 = vsel %vm5073, %v4839, %v4911
          %v5082 = vsel %vm5073, %v4844, %v4915
          %v5083 = vsel %vm5073, %v4849, %v4919
          %v5084 = vsel %vm5073, %v4854, %v4923
          %v5085 = vsel %vm5073, %v4859, %v4927
          %v5086 = vsel %vm5073, %v4864, %v4931
          %v5087 = vsel %vm5073, %v4869, %v4935
          %v5088 = vsel %vm5073, %v4874, %v4939
          %v5089 = vsel %vm5073, %v4879, %v4943
          %vm5090 = vcmask 523264
          %v5091 = vsel %vm5090, %v5074, %v4947
          %v5092 = vsel %vm5090, %v5075, %v4951
          %v5093 = vsel %vm5090, %v5076, %v4955
          %v5094 = vsel %vm5090, %v5077, %v4959
          %v5095 = vsel %vm5090, %v5078, %v4963
          %v5096 = vsel %vm5090, %v5079, %v4967
          %v5097 = vsel %vm5090, %v5080, %v4971
          %v5098 = vsel %vm5090, %v5081, %v4975
          %v5099 = vsel %vm5090, %v5082, %v4979
          %v5100 = vsel %vm5090, %v5083, %v4983
          %v5101 = vsel %vm5090, %v5084, %v4987
          %v5102 = vsel %vm5090, %v5085, %v4991
          %v5103 = vsel %vm5090, %v5086, %v4995
          %v5104 = vsel %vm5090, %v5087, %v4999
          %v5105 = vsel %vm5090, %v5088, %v5003
          %v5106 = vsel %vm5090, %v5089, %v5007
          %vm5107 = vcmask 785408
          %v5108 = vsel %vm5107, %v5091, %v5011
          %v5109 = vsel %vm5107, %v5092, %v5015
          %v5110 = vsel %vm5107, %v5093, %v5019
          %v5111 = vsel %vm5107, %v5094, %v5023
          %v5112 = vsel %vm5107, %v5095, %v5027
          %v5113 = vsel %vm5107, %v5096, %v5031
          %v5114 = vsel %vm5107, %v5097, %v5035
          %v5115 = vsel %vm5107, %v5098, %v5039
          %v5116 = vsel %vm5107, %v5099, %v5043
          %v5117 = vsel %vm5107, %v5100, %v5047
          %v5118 = vsel %vm5107, %v5101, %v5051
          %v5119 = vsel %vm5107, %v5102, %v5055
          %v5120 = vsel %vm5107, %v5103, %v5059
          %v5121 = vsel %vm5107, %v5104, %v5063
          %v5122 = vsel %vm5107, %v5105, %v5067
          %v5123 = vsel %vm5107, %v5106, %v5071
          %v5124 = vld [vmem:[%s271] sm:$0xff]
          %v5125 = vld [vmem:[%s271 + $0x8] sm:$0xff]
          %v5126 = vld [vmem:[%s271 + $0x10] sm:$0xff]
          %v5127 = vld [vmem:[%s271 + $0x18] sm:$0xff]
          %v5128 = vld [vmem:[%s271 + $0x20] sm:$0xff]
          %v5129 = vld [vmem:[%s271 + $0x28] sm:$0xff]
          %v5130 = vld [vmem:[%s271 + $0x30] sm:$0xff]
          %v5131 = vld [vmem:[%s271 + $0x38] sm:$0xff]
          %v5132 = vld [vmem:[%s271 + $0x40] sm:$0xff]
          %v5133 = vld [vmem:[%s271 + $0x48] sm:$0xff]
          %v5134 = vld [vmem:[%s271 + $0x50] sm:$0xff]
          %v5135 = vld [vmem:[%s271 + $0x58] sm:$0xff]
          %v5136 = vld [vmem:[%s271 + $0x60] sm:$0xff]
          %v5137 = vld [vmem:[%s271 + $0x68] sm:$0xff]
          %v5138 = vld [vmem:[%s271 + $0x70] sm:$0xff]
          %v5139 = vld [vmem:[%s271 + $0x78] sm:$0xff]
          %v5140 = vmul.f32 %v5124, %v5108
          %v5141 = vmul.f32 %v5125, %v5109
          %v5142 = vmul.f32 %v5126, %v5110
          %v5143 = vmul.f32 %v5127, %v5111
          %v5144 = vmul.f32 %v5128, %v5112
          %v5145 = vmul.f32 %v5129, %v5113
          %v5146 = vmul.f32 %v5130, %v5114
          %v5147 = vmul.f32 %v5131, %v5115
          %v5148 = vmul.f32 %v5132, %v5116
          %v5149 = vmul.f32 %v5133, %v5117
          %v5150 = vmul.f32 %v5134, %v5118
          %v5151 = vmul.f32 %v5135, %v5119
          %v5152 = vmul.f32 %v5136, %v5120
          %v5153 = vmul.f32 %v5137, %v5121
          %v5154 = vmul.f32 %v5138, %v5122
          %v5155 = vmul.f32 %v5139, %v5123
          %5156 = vst [vmem:[%s271] sm:$0xff] %v5140
          %5157 = vst [vmem:[%s271 + $0x8] sm:$0xff] %v5141
          %5158 = vst [vmem:[%s271 + $0x10] sm:$0xff] %v5142
          %5159 = vst [vmem:[%s271 + $0x18] sm:$0xff] %v5143
          %5160 = vst [vmem:[%s271 + $0x20] sm:$0xff] %v5144
          %5161 = vst [vmem:[%s271 + $0x28] sm:$0xff] %v5145
          %5162 = vst [vmem:[%s271 + $0x30] sm:$0xff] %v5146
          %5163 = vst [vmem:[%s271 + $0x38] sm:$0xff] %v5147
          %5164 = vst [vmem:[%s271 + $0x40] sm:$0xff] %v5148
          %5165 = vst [vmem:[%s271 + $0x48] sm:$0xff] %v5149
          %5166 = vst [vmem:[%s271 + $0x50] sm:$0xff] %v5150
          %5167 = vst [vmem:[%s271 + $0x58] sm:$0xff] %v5151
          %5168 = vst [vmem:[%s271 + $0x60] sm:$0xff] %v5152
          %5169 = vst [vmem:[%s271 + $0x68] sm:$0xff] %v5153
          %5170 = vst [vmem:[%s271 + $0x70] sm:$0xff] %v5154
          %5171 = vst [vmem:[%s271 + $0x78] sm:$0xff] %v5155
        $region48: #{aggregation_forward.5} parent=35 // pred_fallthru
          _
        %s5172 = sand.u32 %s151, 1
        %s5173 = scalar_lea.sflag [#allocation7], %s5172
        %s5174 = sand.u32 %s151, 1
        %s5175 = smul.addr %s5174, 128
        %s5176 = scalar_lea.vmem [#allocation6], %s5175
        // Predicated region
        $region49: #{aggregation_forward.5} parent=35 // pred_check
          %p5177 = pneg %p161
        $region50: #{aggregation_forward.5} parent=35 // pred_check_branch
          %5179 = sbr.rel (%p5177) target = $region52
        $region51: #{aggregation_forward.5} parent=35 // pred_region
          %s5180 = smul.u32 16, %s29
          %s5182 = ssub.s32 2048, 2048
          %5183 = vsyncadd %s5173, %s5182
          %s5184 = smul.addr %s5180, 128
          %s5185 = scalar_lea.hbm %s5, %s5184
          %s5186 = sshll.u32 %s5176, 4
          %s5187 = int_to_ptr.vmem [resolvable:$true] %s5186
          %5192 = dma.vmem_to_hbm [thread:$0]  %s5187, 2048, %s5185, %s5173, 128, 128, 8
        $region52: #{aggregation_forward.5} parent=35 // pred_fallthru
          _
      $region36: #{aggregation_forward.5} parent=5 // pred_fallthru
        _
      %p5193 = scmp.le.s32.totalorder 2, %s20
      // Predicated region
      $region53: #{aggregation_forward.5} parent=5 // pred_check
        %p5194 = pneg %p5193
      $region54: #{aggregation_forward.5} parent=5 // pred_check_branch
        %5196 = sbr.rel (%p5194) target = $region56
      $region55: #{aggregation_forward.5} parent=5 // pred_region
        %s5197 = ssub.s32 %s20, 2
        // Predicated region
        $region57: #{aggregation_forward.5} parent=55 // pred_check
          %p5198 = pneg %p167
        $region58: #{aggregation_forward.5} parent=55 // pred_check_branch
          %5200 = sbr.rel (%p5198) target = $region60
        $region59: #{aggregation_forward.5} parent=55 // pred_region
          %s5201 = sand.u32 %s152, 1
          %s5202 = scalar_lea.sflag [#allocation7], %s5201
          %s5203 = sand.u32 %s152, 1
          %s5204 = smul.addr %s5203, 128
          %s5205 = scalar_lea.vmem [#allocation6], %s5204
          %5206 = dma.done %s5202, 2048
        $region60: #{aggregation_forward.5} parent=55 // pred_fallthru
          _
      $region56: #{aggregation_forward.5} parent=5 // pred_fallthru
        _
    $region6: #{aggregation_forward.5} parent=1 // loop_footer
      %s24 = sadd.s32 1, %s20
    $region7: #{aggregation_forward.5} parent=1 // loop_footer_branch
      %19 = sbr.rel target = $region3
    $region8: #{aggregation_forward.5} parent=1 // loop_exit
      _
    %5207 = vsyncpa [#allocation7], 1
    %s5208 = scalar_lea.sflag [#allocation7], 1
    %5209 = vsyncpa %s5208, 1

</llo_original>
